<compile_context>
chip_gen: v7x
topology: tpu7x:2x2x1
jax: 0.10.0
libtpu: 0.0.40
codegen_flags: <defaults>
</compile_context>

<pallas_src>
import functools
import numpy as np

import jax
import jax.numpy as jnp
from jax import lax
from jax.experimental import pallas as pl
from jax.experimental.pallas import tpu as pltpu


# ---------------------------------------------------------------------------
# Tanner-graph mask construction (plain-Python glue; mirrors generate_masks(H))
# ---------------------------------------------------------------------------
def generate_masks(H):
    m, n = H.shape
    edges = [(c, v) for c in range(m) for v in range(n) if H[c, v] != 0]
    E = len(edges)
    mask_v = np.zeros((E, E), np.float32)        # VC: same variable, other checks
    mask_c = np.zeros((E, E), np.float32)        # CV: same check, other variables
    mask_v_final = np.zeros((n, E), np.float32)  # marginal: all edges of variable v
    llr_expander = np.zeros((E, n), np.float32)  # copy llr_v onto every edge (c, v)
    for k, (c, v) in enumerate(edges):
        llr_expander[k, v] = 1.0
        mask_v_final[v, k] = 1.0
        for k2, (c2, v2) in enumerate(edges):
            if v2 == v and c2 != c:
                mask_v[k, k2] = 1.0
            if c2 == c and v2 != v:
                mask_c[k, k2] = 1.0
    return mask_c, mask_v, mask_v_final, llr_expander


def _round_up(x, m):
    return ((x + m - 1) // m) * m


def _pad2(a, rows, cols):
    out = np.zeros((rows, cols), np.float32)
    out[: a.shape[0], : a.shape[1]] = a
    return out


# ---------------------------------------------------------------------------
# Fused Pallas kernel: `iterations` BP iterations + final layer in one call
# ---------------------------------------------------------------------------
def _bp_fused_kernel(clamp_ref, x_ref, nllr_ref, mv_ref, le_ref, mc_ref, mvf_ref,
                     out_ref, *, iterations, unroll):
    # clamp_ref: (1, 1) f32 SMEM  runtime clamp value
    # x_ref    : (bt, E_pad) f32  initial edge messages (batch tile)
    # nllr_ref : (bt, n_pad) f32  negated channel LLRs
    # mv_ref   : (E_pad, E_pad) bf16  (w_msg * mask_v)^T
    # le_ref   : (n_pad, E_pad) bf16  (w_llr * llr_expander)^T
    # mc_ref   : (E_pad, E_pad) bf16  mask_c^T
    # mvf_ref  : (E_pad, n_pad) bf16  mask_v_final^T
    # out_ref  : (bt, n_pad) f32   1 - sigmoid(marginal)
    f32, bf16 = jnp.float32, jnp.bfloat16
    clamp_value = clamp_ref[0, 0]

    nllr = nllr_ref[...]                               # (bt, n_pad) f32
    # Iteration-invariant llr term of the VC pre-activation: hoisted.
    llr_bias = jnp.dot(nllr.astype(bf16), le_ref[...], preferred_element_type=f32)

    x0 = x_ref[...]                                    # (bt, E_pad) f32

    def body(_, x):
        # ---- variable-to-check (VC): masked linear + expanded llr, then tanh
        pre = jnp.dot(x.astype(bf16), mv_ref[...], preferred_element_type=f32)
        t = jnp.tanh(pre + llr_bias)

        # ---- check-to-variable (CV): masked product in the log domain.
        # Two separate bf16 MXU dots (no per-iteration concatenate / copies):
        # log|t| for the magnitude product, 0/1 indicator for the sign parity.
        log_abs = jnp.log(jnp.maximum(jnp.abs(t), 1e-12))
        neg = (t < 0.0).astype(bf16)                   # exact 0/1 in bf16
        log_prod = jnp.dot(log_abs.astype(bf16), mc_ref[...],
                           preferred_element_type=f32)
        n_neg = jnp.dot(neg, mc_ref[...], preferred_element_type=f32)

        # (-1) ** n_neg  (n_neg is an exact small integer-valued float)
        sign = 1.0 - 2.0 * (n_neg - 2.0 * jnp.floor(0.5 * n_neg))
        prod = jnp.clip(sign * jnp.exp(log_prod), -1.0 + 1e-6, 1.0 - 1e-6)
        # msg = 2 * atanh(prod).  Exact divide kept for fidelity; the
        # pl.reciprocal(1-prod, approx=True) trim is an optional follow-up.
        msg = jnp.log((1.0 + prod) / (1.0 - prod))
        return jnp.clip(msg, -clamp_value, clamp_value)

    x = lax.fori_loop(0, iterations, body, x0, unroll=unroll)

    # ---- final marginalisation + Sigmoid; module returns 1 - sigmoid(pre) ----
    pre = jnp.dot(x.astype(bf16), mvf_ref[...], preferred_element_type=f32) + nllr
    out_ref[...] = 1.0 / (1.0 + jnp.exp(pre))          # == 1 - sigmoid(pre)


# ---------------------------------------------------------------------------
# Module wrapper
# ---------------------------------------------------------------------------
class BeliefPropagationPallas:
    def __init__(self, H, iterations, batch_tile=128):
        mask_c, mask_v, mask_v_final, llr_expander = generate_masks(H)
        self.E = mask_v.shape[0]
        self.n = H.shape[1]
        self.iterations = int(iterations)
        # Raise to 256-512 for large batches on v5e/v6e (masks are
        # grid-invariant, per-tile activations are small).
        self.bt_req = int(batch_tile)

        # Lane padding: multiples of 128; in the large-E (MXU-bound) regime pad
        # to 256 to match the 2x256x256 MXUs of v6e/v7x (128 stays optimal for
        # small codes and for v5e).
        lane = 256 if self.E >= 1024 else 128
        self.E_pad = _round_up(self.E, lane)
        self.n_pad = _round_up(self.n, 128)

        # Deterministic parameter init: trainable VC edge weights = 1.0
        # (standard BP), so effective weights == masks.
        w_msg = np.ones_like(mask_v)
        w_llr = np.ones_like(llr_expander)

        # Unpadded, pre-transposed copies (for the reference implementation).
        self.mv_t_np = np.ascontiguousarray((w_msg * mask_v).T)          # (E, E)
        self.le_t_np = np.ascontiguousarray((w_llr * llr_expander).T)    # (n, E)
        self.mc_t_np = np.ascontiguousarray(mask_c.T)                    # (E, E)
        self.mvf_t_np = np.ascontiguousarray(mask_v_final.T)             # (E, n)

        # Padded bf16 mask operands (0/1 is exact in bf16): half the VMEM /
        # HBM-DMA footprint and native bf16 MXU passes.
        self.mv_t = jnp.asarray(_pad2(self.mv_t_np, self.E_pad, self.E_pad),
                                jnp.bfloat16)
        self.le_t = jnp.asarray(_pad2(self.le_t_np, self.n_pad, self.E_pad),
                                jnp.bfloat16)
        self.mc_t = jnp.asarray(_pad2(self.mc_t_np, self.E_pad, self.E_pad),
                                jnp.bfloat16)
        self.mvf_t = jnp.asarray(_pad2(self.mvf_t_np, self.E_pad, self.n_pad),
                                 jnp.bfloat16)

        # Generation-aware VMEM budget: query physical VMEM and leave headroom
        # (v7x: 64 MiB -> ~52 MiB cap, v5e/v6e: 128 MiB -> ~109 MiB cap).
        try:
            phys = int(pltpu.get_tpu_info().vmem_capacity_bytes)
        except Exception:
            phys = 64 << 20                    # conservative (v7x) fallback
        self._vmem_cap = min(int(phys * 0.85), phys - (12 << 20))
        self._mask_bytes = 2 * int(self.mv_t.size + self.le_t.size +
                                   self.mc_t.size + self.mvf_t.size)
        # TODO(synk): for codes whose bf16 masks exceed the cap, add a K-tiled
        # reduction axis over E-chunks ("arbitrary" grid axis + VMEM
        # accumulator); needed earliest on v7x (64 MiB).

    # ---- helpers ---------------------------------------------------------
    def _vmem_limit(self, bt):
        act = 4 * bt * (self.E_pad + 2 * self.n_pad)      # x / nllr / out tiles
        tmp = 12 * 4 * bt * self.E_pad                    # in-kernel f32 temps
        need = self._mask_bytes + 2 * act + tmp + (4 << 20)
        return int(min(max(need, 32 << 20), self._vmem_cap))

    def _choose_bt(self, B):
        Bp8 = _round_up(max(B, 8), 8)
        if Bp8 <= self.bt_req:
            # Small batches: split into >=2 sublane-aligned tiles so the
            # "parallel" batch axis can use both TensorCores on v7x.
            return max(8, _round_up(pl.cdiv(Bp8, 2), 8))
        return self.bt_req

    # ---- forward ---------------------------------------------------------
    def __call__(self, x, llr, clamp_value):
        B = x.shape[0]
        bt = self._choose_bt(B)
        Bp = _round_up(B, bt)

        # Zero-pad batch / feature axes; padded lanes & rows are provably inert
        # (zero mask rows/columns) and are sliced off afterwards.
        x_p = jnp.zeros((Bp, self.E_pad), jnp.float32).at[:B, : self.E].set(x)
        nllr_p = jnp.zeros((Bp, self.n_pad), jnp.float32).at[:B, : self.n].set(-llr)
        clamp_arr = jnp.asarray(clamp_value, jnp.float32).reshape(1, 1)

        out = self._run(clamp_arr, x_p, nllr_p, bt, Bp)
        return out[:B, : self.n]

    def _run(self, clamp_arr, x_p, nllr_p, bt, Bp):
        grid = (Bp // bt,)
        kernel = functools.partial(
            _bp_fused_kernel,
            iterations=self.iterations,
            # Full unroll for short loops (LLO visibility); partial unroll for
            # long ones to bound code size / vreg live ranges.
            unroll=(True if self.iterations <= 8 else 2),
        )

        def mask_spec(shape, single_buffered):
            if single_buffered:
                # Grid-invariant operand: single-buffered -> 1x resident VMEM.
                return pl.BlockSpec(shape, lambda i: (0, 0),
                                    pipeline_mode=pl.Buffered(1))
            return pl.BlockSpec(shape, lambda i: (0, 0))

        def build(single_buffered):
            in_specs = [
                pl.BlockSpec(memory_space=pltpu.MemorySpace.SMEM),     # clamp
                pl.BlockSpec((bt, self.E_pad), lambda i: (i, 0)),      # x
                pl.BlockSpec((bt, self.n_pad), lambda i: (i, 0)),      # -llr
                mask_spec((self.E_pad, self.E_pad), single_buffered),  # mv^T
                mask_spec((self.n_pad, self.E_pad), single_buffered),  # le^T
                mask_spec((self.E_pad, self.E_pad), single_buffered),  # mc^T
                mask_spec((self.E_pad, self.n_pad), single_buffered),  # mvf^T
            ]
            return pl.pallas_call(
                kernel,
                out_shape=jax.ShapeDtypeStruct((Bp, self.n_pad), jnp.float32),
                grid=grid,
                in_specs=in_specs,
                out_specs=pl.BlockSpec((bt, self.n_pad), lambda i: (i, 0)),
                compiler_params=pltpu.CompilerParams(
                    dimension_semantics=("parallel",),
                    vmem_limit_bytes=self._vmem_limit(bt),
                ),
            )

        args = (clamp_arr, x_p, nllr_p, self.mv_t, self.le_t, self.mc_t, self.mvf_t)
        try:
            return build(True)(*args)
        except Exception:
            # Fallback for JAX versions without single-buffered pipeline_mode
            # support; identical math, default double-buffered mask operands.
            return build(False)(*args)


# ---------------------------------------------------------------------------
# Plain-JAX (XLA) reference with the same numerics as the kernel (bf16 MXU
# operands, f32 accumulation & transcendentals) -- validates the Pallas kernel.
# ---------------------------------------------------------------------------
def bp_reference_jnp(x, llr, clamp_value, mv_t, le_t, mc_t, mvf_t, iterations):
    f32, bf16 = jnp.float32, jnp.bfloat16
    mv = jnp.asarray(mv_t, bf16)
    le = jnp.asarray(le_t, bf16)
    mc = jnp.asarray(mc_t, bf16)
    mvf = jnp.asarray(mvf_t, bf16)

    nllr = (-llr).astype(f32)
    llr_bias = jnp.dot(nllr.astype(bf16), le, preferred_element_type=f32)
    x = x.astype(f32)
    for _ in range(iterations):
        pre = jnp.dot(x.astype(bf16), mv, preferred_element_type=f32)
        t = jnp.tanh(pre + llr_bias)
        log_abs = jnp.log(jnp.maximum(jnp.abs(t), 1e-12))
        neg = (t < 0.0).astype(bf16)
        log_prod = jnp.dot(log_abs.astype(bf16), mc, preferred_element_type=f32)
        n_neg = jnp.dot(neg, mc, preferred_element_type=f32)
        sign = 1.0 - 2.0 * (n_neg - 2.0 * jnp.floor(0.5 * n_neg))
        prod = jnp.clip(sign * jnp.exp(log_prod), -1.0 + 1e-6, 1.0 - 1e-6)
        msg = jnp.log((1.0 + prod) / (1.0 - prod))
        x = jnp.clip(msg, -clamp_value, clamp_value)
    pre = jnp.dot(x.astype(bf16), mvf, preferred_element_type=f32) + nllr
    return 1.0 / (1.0 + jnp.exp(pre))                  # == 1 - sigmoid(pre)


if __name__ == "__main__":
    # Hamming(7,4) parity-check matrix: m=3 checks, n=7 variables, E=12 edges.
    H = np.array(
        [[1, 1, 0, 1, 1, 0, 0],
         [1, 0, 1, 1, 0, 1, 0],
         [0, 1, 1, 1, 0, 0, 1]], np.float32)
    iterations = 5
    clamp_value = 10.0

    model = BeliefPropagationPallas(H, iterations, batch_tile=128)
    B, E, n = 256, model.E, model.n      # batch grid of 2 tiles (both TCs on v7x)

    key = jax.random.PRNGKey(0)
    kx, kl = jax.random.split(key)
    x0 = 0.1 * jax.random.normal(kx, (B, E), jnp.float32)   # initial edge messages
    llr = 2.0 * jax.random.normal(kl, (B, n), jnp.float32)  # channel LLRs

    out = jax.block_until_ready(model(x0, llr, clamp_value))
    assert out.shape == (B, n) and out.dtype == jnp.float32

    ref = bp_reference_jnp(x0, llr, clamp_value, model.mv_t_np, model.le_t_np,
                           model.mc_t_np, model.mvf_t_np, iterations)
    np.testing.assert_allclose(np.asarray(out), np.asarray(ref),
                               rtol=5e-3, atol=5e-3)

    print("KERNEL_OK")
</pallas_src>

<mosaic_0001>
module attributes {stable_mosaic.version = 11 : i64} {
  func.func @_bp_fused_kernel(%arg0: i32, %arg1: memref<1x1xf32, #tpu.memory_space<smem>>, %arg2: memref<128x128xf32, #tpu.memory_space<vmem>>, %arg3: memref<128x128xf32, #tpu.memory_space<vmem>>, %arg4: memref<128x128xbf16, #tpu.memory_space<vmem>>, %arg5: memref<128x128xbf16, #tpu.memory_space<vmem>>, %arg6: memref<128x128xbf16, #tpu.memory_space<vmem>>, %arg7: memref<128x128xbf16, #tpu.memory_space<vmem>>, %arg8: memref<128x128xf32, #tpu.memory_space<vmem>>) attributes {dimension_semantics = [#tpu.dimension_semantics<parallel>], iteration_bounds = array<i64: 2>, scalar_prefetch = 0 : i64, scratch_operands = 0 : i64, tpu.core_type = #tpu.core_type<tc>, window_params = [{transform_indices = @transform_0, window_bounds = array<i64: 1, 1>}, {transform_indices = @transform_1, window_bounds = array<i64: 128, 128>}, {transform_indices = @transform_2, window_bounds = array<i64: 128, 128>}, {pipeline_mode = #tpu.pipeline_mode<synchronous>, transform_indices = @transform_3, window_bounds = array<i64: 128, 128>}, {pipeline_mode = #tpu.pipeline_mode<synchronous>, transform_indices = @transform_4, window_bounds = array<i64: 128, 128>}, {pipeline_mode = #tpu.pipeline_mode<synchronous>, transform_indices = @transform_5, window_bounds = array<i64: 128, 128>}, {pipeline_mode = #tpu.pipeline_mode<synchronous>, transform_indices = @transform_6, window_bounds = array<i64: 128, 128>}, {transform_indices = @transform_7, window_bounds = array<i64: 128, 128>}]} {
    %c0 = arith.constant 0 : index
    %c0_0 = arith.constant 0 : index
    %0 = memref.load %arg1[%c0, %c0_0] : memref<1x1xf32, #tpu.memory_space<smem>>
    %c0_1 = arith.constant 0 : index
    %c0_2 = arith.constant 0 : index
    %1 = vector.load %arg3[%c0_1, %c0_2] : memref<128x128xf32, #tpu.memory_space<vmem>>, vector<128x128xf32>
    %2 = arith.truncf %1 : vector<128x128xf32> to vector<128x128xbf16>
    %c0_3 = arith.constant 0 : index
    %c0_4 = arith.constant 0 : index
    %3 = vector.load %arg5[%c0_3, %c0_4] : memref<128x128xbf16, #tpu.memory_space<vmem>>, vector<128x128xbf16>
    %cst = arith.constant dense<0.000000e+00> : vector<128x128xf32>
    %4 = tpu.matmul %2, %3, %cst {dimension_numbers = #tpu.dot_dimension_numbers<[1], [0], [0], [1], [0, 0, 1, 1], [], []>} : vector<128x128xbf16>, vector<128x128xbf16>, vector<128x128xf32> -> vector<128x128xf32>
    %c0_5 = arith.constant 0 : index
    %c0_6 = arith.constant 0 : index
    %5 = vector.load %arg2[%c0_5, %c0_6] : memref<128x128xf32, #tpu.memory_space<vmem>>, vector<128x128xf32>
    %c0_i32 = arith.constant 0 : i32
    %6 = arith.truncf %5 : vector<128x128xf32> to vector<128x128xbf16>
    %c0_7 = arith.constant 0 : index
    %c0_8 = arith.constant 0 : index
    %7 = vector.load %arg4[%c0_7, %c0_8] : memref<128x128xbf16, #tpu.memory_space<vmem>>, vector<128x128xbf16>
    %cst_9 = arith.constant dense<0.000000e+00> : vector<128x128xf32>
    %8 = tpu.matmul %6, %7, %cst_9 {dimension_numbers = #tpu.dot_dimension_numbers<[1], [0], [0], [1], [0, 0, 1, 1], [], []>} : vector<128x128xbf16>, vector<128x128xbf16>, vector<128x128xf32> -> vector<128x128xf32>
    %9 = arith.addf %8, %4 : vector<128x128xf32>
    %10 = math.tanh %9 : vector<128x128xf32>
    %11 = math.absf %10 : vector<128x128xf32>
    %cst_10 = arith.constant 9.99999996E-13 : f32
    %12 = vector.broadcast %cst_10 : f32 to vector<128x128xf32>
    %13 = arith.maximumf %11, %12 : vector<128x128xf32>
    %14 = math.log %13 : vector<128x128xf32>
    %cst_11 = arith.constant 0.000000e+00 : f32
    %15 = vector.broadcast %cst_11 : f32 to vector<128x128xf32>
    %16 = arith.cmpf olt, %10, %15 : vector<128x128xf32>
    %17 = arith.extui %16 : vector<128x128xi1> to vector<128x128xi32>
    %18 = arith.sitofp %17 : vector<128x128xi32> to vector<128x128xf32>
    %19 = arith.truncf %18 : vector<128x128xf32> to vector<128x128xbf16>
    %20 = arith.truncf %14 : vector<128x128xf32> to vector<128x128xbf16>
    %c0_12 = arith.constant 0 : index
    %c0_13 = arith.constant 0 : index
    %21 = vector.load %arg6[%c0_12, %c0_13] : memref<128x128xbf16, #tpu.memory_space<vmem>>, vector<128x128xbf16>
    %cst_14 = arith.constant dense<0.000000e+00> : vector<128x128xf32>
    %22 = tpu.matmul %20, %21, %cst_14 {dimension_numbers = #tpu.dot_dimension_numbers<[1], [0], [0], [1], [0, 0, 1, 1], [], []>} : vector<128x128xbf16>, vector<128x128xbf16>, vector<128x128xf32> -> vector<128x128xf32>
    %c0_15 = arith.constant 0 : index
    %c0_16 = arith.constant 0 : index
    %23 = vector.load %arg6[%c0_15, %c0_16] : memref<128x128xbf16, #tpu.memory_space<vmem>>, vector<128x128xbf16>
    %cst_17 = arith.constant dense<0.000000e+00> : vector<128x128xf32>
    %24 = tpu.matmul %19, %23, %cst_17 {dimension_numbers = #tpu.dot_dimension_numbers<[1], [0], [0], [1], [0, 0, 1, 1], [], []>} : vector<128x128xbf16>, vector<128x128xbf16>, vector<128x128xf32> -> vector<128x128xf32>
    %cst_18 = arith.constant 5.000000e-01 : f32
    %25 = vector.broadcast %cst_18 : f32 to vector<128x128xf32>
    %26 = arith.mulf %25, %24 : vector<128x128xf32>
    %27 = math.floor %26 : vector<128x128xf32>
    %cst_19 = arith.constant 2.000000e+00 : f32
    %28 = vector.broadcast %cst_19 : f32 to vector<128x128xf32>
    %29 = arith.mulf %28, %27 : vector<128x128xf32>
    %30 = arith.subf %24, %29 : vector<128x128xf32>
    %cst_20 = arith.constant 2.000000e+00 : f32
    %31 = vector.broadcast %cst_20 : f32 to vector<128x128xf32>
    %32 = arith.mulf %31, %30 : vector<128x128xf32>
    %cst_21 = arith.constant 1.000000e+00 : f32
    %33 = vector.broadcast %cst_21 : f32 to vector<128x128xf32>
    %34 = arith.subf %33, %32 : vector<128x128xf32>
    %35 = math.exp %22 : vector<128x128xf32>
    %36 = arith.mulf %34, %35 : vector<128x128xf32>
    %cst_22 = arith.constant -0.999998986 : f32
    %cst_23 = arith.constant 0.999998986 : f32
    %37 = vector.broadcast %cst_22 : f32 to vector<128x128xf32>
    %38 = arith.maximumf %37, %36 : vector<128x128xf32>
    %39 = vector.broadcast %cst_23 : f32 to vector<128x128xf32>
    %40 = arith.minimumf %39, %38 : vector<128x128xf32>
    %cst_24 = arith.constant 1.000000e+00 : f32
    %41 = vector.broadcast %cst_24 : f32 to vector<128x128xf32>
    %42 = arith.addf %41, %40 : vector<128x128xf32>
    %cst_25 = arith.constant 1.000000e+00 : f32
    %43 = vector.broadcast %cst_25 : f32 to vector<128x128xf32>
    %44 = arith.subf %43, %40 : vector<128x128xf32>
    %45 = arith.divf %42, %44 : vector<128x128xf32>
    %46 = math.log %45 : vector<128x128xf32>
    %cst_26 = arith.constant 0.000000e+00 : f32
    %47 = arith.subf %cst_26, %0 : f32
    %48 = vector.broadcast %47 : f32 to vector<128x128xf32>
    %49 = arith.maximumf %48, %46 : vector<128x128xf32>
    %50 = vector.broadcast %0 : f32 to vector<128x128xf32>
    %51 = arith.minimumf %50, %49 : vector<128x128xf32>
    %c1_i32 = arith.constant 1 : i32
    %52 = arith.truncf %51 : vector<128x128xf32> to vector<128x128xbf16>
    %c0_27 = arith.constant 0 : index
    %c0_28 = arith.constant 0 : index
    %53 = vector.load %arg4[%c0_27, %c0_28] : memref<128x128xbf16, #tpu.memory_space<vmem>>, vector<128x128xbf16>
    %cst_29 = arith.constant dense<0.000000e+00> : vector<128x128xf32>
    %54 = tpu.matmul %52, %53, %cst_29 {dimension_numbers = #tpu.dot_dimension_numbers<[1], [0], [0], [1], [0, 0, 1, 1], [], []>} : vector<128x128xbf16>, vector<128x128xbf16>, vector<128x128xf32> -> vector<128x128xf32>
    %55 = arith.addf %54, %4 : vector<128x128xf32>
    %56 = math.tanh %55 : vector<128x128xf32>
    %57 = math.absf %56 : vector<128x128xf32>
    %cst_30 = arith.constant 9.99999996E-13 : f32
    %58 = vector.broadcast %cst_30 : f32 to vector<128x128xf32>
    %59 = arith.maximumf %57, %58 : vector<128x128xf32>
    %60 = math.log %59 : vector<128x128xf32>
    %cst_31 = arith.constant 0.000000e+00 : f32
    %61 = vector.broadcast %cst_31 : f32 to vector<128x128xf32>
    %62 = arith.cmpf olt, %56, %61 : vector<128x128xf32>
    %63 = arith.extui %62 : vector<128x128xi1> to vector<128x128xi32>
    %64 = arith.sitofp %63 : vector<128x128xi32> to vector<128x128xf32>
    %65 = arith.truncf %64 : vector<128x128xf32> to vector<128x128xbf16>
    %66 = arith.truncf %60 : vector<128x128xf32> to vector<128x128xbf16>
    %c0_32 = arith.constant 0 : index
    %c0_33 = arith.constant 0 : index
    %67 = vector.load %arg6[%c0_32, %c0_33] : memref<128x128xbf16, #tpu.memory_space<vmem>>, vector<128x128xbf16>
    %cst_34 = arith.constant dense<0.000000e+00> : vector<128x128xf32>
    %68 = tpu.matmul %66, %67, %cst_34 {dimension_numbers = #tpu.dot_dimension_numbers<[1], [0], [0], [1], [0, 0, 1, 1], [], []>} : vector<128x128xbf16>, vector<128x128xbf16>, vector<128x128xf32> -> vector<128x128xf32>
    %c0_35 = arith.constant 0 : index
    %c0_36 = arith.constant 0 : index
    %69 = vector.load %arg6[%c0_35, %c0_36] : memref<128x128xbf16, #tpu.memory_space<vmem>>, vector<128x128xbf16>
    %cst_37 = arith.constant dense<0.000000e+00> : vector<128x128xf32>
    %70 = tpu.matmul %65, %69, %cst_37 {dimension_numbers = #tpu.dot_dimension_numbers<[1], [0], [0], [1], [0, 0, 1, 1], [], []>} : vector<128x128xbf16>, vector<128x128xbf16>, vector<128x128xf32> -> vector<128x128xf32>
    %cst_38 = arith.constant 5.000000e-01 : f32
    %71 = vector.broadcast %cst_38 : f32 to vector<128x128xf32>
    %72 = arith.mulf %71, %70 : vector<128x128xf32>
    %73 = math.floor %72 : vector<128x128xf32>
    %cst_39 = arith.constant 2.000000e+00 : f32
    %74 = vector.broadcast %cst_39 : f32 to vector<128x128xf32>
    %75 = arith.mulf %74, %73 : vector<128x128xf32>
    %76 = arith.subf %70, %75 : vector<128x128xf32>
    %cst_40 = arith.constant 2.000000e+00 : f32
    %77 = vector.broadcast %cst_40 : f32 to vector<128x128xf32>
    %78 = arith.mulf %77, %76 : vector<128x128xf32>
    %cst_41 = arith.constant 1.000000e+00 : f32
    %79 = vector.broadcast %cst_41 : f32 to vector<128x128xf32>
    %80 = arith.subf %79, %78 : vector<128x128xf32>
    %81 = math.exp %68 : vector<128x128xf32>
    %82 = arith.mulf %80, %81 : vector<128x128xf32>
    %cst_42 = arith.constant -0.999998986 : f32
    %cst_43 = arith.constant 0.999998986 : f32
    %83 = vector.broadcast %cst_42 : f32 to vector<128x128xf32>
    %84 = arith.maximumf %83, %82 : vector<128x128xf32>
    %85 = vector.broadcast %cst_43 : f32 to vector<128x128xf32>
    %86 = arith.minimumf %85, %84 : vector<128x128xf32>
    %cst_44 = arith.constant 1.000000e+00 : f32
    %87 = vector.broadcast %cst_44 : f32 to vector<128x128xf32>
    %88 = arith.addf %87, %86 : vector<128x128xf32>
    %cst_45 = arith.constant 1.000000e+00 : f32
    %89 = vector.broadcast %cst_45 : f32 to vector<128x128xf32>
    %90 = arith.subf %89, %86 : vector<128x128xf32>
    %91 = arith.divf %88, %90 : vector<128x128xf32>
    %92 = math.log %91 : vector<128x128xf32>
    %cst_46 = arith.constant 0.000000e+00 : f32
    %93 = arith.subf %cst_46, %0 : f32
    %94 = vector.broadcast %93 : f32 to vector<128x128xf32>
    %95 = arith.maximumf %94, %92 : vector<128x128xf32>
    %96 = vector.broadcast %0 : f32 to vector<128x128xf32>
    %97 = arith.minimumf %96, %95 : vector<128x128xf32>
    %c2_i32 = arith.constant 2 : i32
    %98 = arith.truncf %97 : vector<128x128xf32> to vector<128x128xbf16>
    %c0_47 = arith.constant 0 : index
    %c0_48 = arith.constant 0 : index
    %99 = vector.load %arg4[%c0_47, %c0_48] : memref<128x128xbf16, #tpu.memory_space<vmem>>, vector<128x128xbf16>
    %cst_49 = arith.constant dense<0.000000e+00> : vector<128x128xf32>
    %100 = tpu.matmul %98, %99, %cst_49 {dimension_numbers = #tpu.dot_dimension_numbers<[1], [0], [0], [1], [0, 0, 1, 1], [], []>} : vector<128x128xbf16>, vector<128x128xbf16>, vector<128x128xf32> -> vector<128x128xf32>
    %101 = arith.addf %100, %4 : vector<128x128xf32>
    %102 = math.tanh %101 : vector<128x128xf32>
    %103 = math.absf %102 : vector<128x128xf32>
    %cst_50 = arith.constant 9.99999996E-13 : f32
    %104 = vector.broadcast %cst_50 : f32 to vector<128x128xf32>
    %105 = arith.maximumf %103, %104 : vector<128x128xf32>
    %106 = math.log %105 : vector<128x128xf32>
    %cst_51 = arith.constant 0.000000e+00 : f32
    %107 = vector.broadcast %cst_51 : f32 to vector<128x128xf32>
    %108 = arith.cmpf olt, %102, %107 : vector<128x128xf32>
    %109 = arith.extui %108 : vector<128x128xi1> to vector<128x128xi32>
    %110 = arith.sitofp %109 : vector<128x128xi32> to vector<128x128xf32>
    %111 = arith.truncf %110 : vector<128x128xf32> to vector<128x128xbf16>
    %112 = arith.truncf %106 : vector<128x128xf32> to vector<128x128xbf16>
    %c0_52 = arith.constant 0 : index
    %c0_53 = arith.constant 0 : index
    %113 = vector.load %arg6[%c0_52, %c0_53] : memref<128x128xbf16, #tpu.memory_space<vmem>>, vector<128x128xbf16>
    %cst_54 = arith.constant dense<0.000000e+00> : vector<128x128xf32>
    %114 = tpu.matmul %112, %113, %cst_54 {dimension_numbers = #tpu.dot_dimension_numbers<[1], [0], [0], [1], [0, 0, 1, 1], [], []>} : vector<128x128xbf16>, vector<128x128xbf16>, vector<128x128xf32> -> vector<128x128xf32>
    %c0_55 = arith.constant 0 : index
    %c0_56 = arith.constant 0 : index
    %115 = vector.load %arg6[%c0_55, %c0_56] : memref<128x128xbf16, #tpu.memory_space<vmem>>, vector<128x128xbf16>
    %cst_57 = arith.constant dense<0.000000e+00> : vector<128x128xf32>
    %116 = tpu.matmul %111, %115, %cst_57 {dimension_numbers = #tpu.dot_dimension_numbers<[1], [0], [0], [1], [0, 0, 1, 1], [], []>} : vector<128x128xbf16>, vector<128x128xbf16>, vector<128x128xf32> -> vector<128x128xf32>
    %cst_58 = arith.constant 5.000000e-01 : f32
    %117 = vector.broadcast %cst_58 : f32 to vector<128x128xf32>
    %118 = arith.mulf %117, %116 : vector<128x128xf32>
    %119 = math.floor %118 : vector<128x128xf32>
    %cst_59 = arith.constant 2.000000e+00 : f32
    %120 = vector.broadcast %cst_59 : f32 to vector<128x128xf32>
    %121 = arith.mulf %120, %119 : vector<128x128xf32>
    %122 = arith.subf %116, %121 : vector<128x128xf32>
    %cst_60 = arith.constant 2.000000e+00 : f32
    %123 = vector.broadcast %cst_60 : f32 to vector<128x128xf32>
    %124 = arith.mulf %123, %122 : vector<128x128xf32>
    %cst_61 = arith.constant 1.000000e+00 : f32
    %125 = vector.broadcast %cst_61 : f32 to vector<128x128xf32>
    %126 = arith.subf %125, %124 : vector<128x128xf32>
    %127 = math.exp %114 : vector<128x128xf32>
    %128 = arith.mulf %126, %127 : vector<128x128xf32>
    %cst_62 = arith.constant -0.999998986 : f32
    %cst_63 = arith.constant 0.999998986 : f32
    %129 = vector.broadcast %cst_62 : f32 to vector<128x128xf32>
    %130 = arith.maximumf %129, %128 : vector<128x128xf32>
    %131 = vector.broadcast %cst_63 : f32 to vector<128x128xf32>
    %132 = arith.minimumf %131, %130 : vector<128x128xf32>
    %cst_64 = arith.constant 1.000000e+00 : f32
    %133 = vector.broadcast %cst_64 : f32 to vector<128x128xf32>
    %134 = arith.addf %133, %132 : vector<128x128xf32>
    %cst_65 = arith.constant 1.000000e+00 : f32
    %135 = vector.broadcast %cst_65 : f32 to vector<128x128xf32>
    %136 = arith.subf %135, %132 : vector<128x128xf32>
    %137 = arith.divf %134, %136 : vector<128x128xf32>
    %138 = math.log %137 : vector<128x128xf32>
    %cst_66 = arith.constant 0.000000e+00 : f32
    %139 = arith.subf %cst_66, %0 : f32
    %140 = vector.broadcast %139 : f32 to vector<128x128xf32>
    %141 = arith.maximumf %140, %138 : vector<128x128xf32>
    %142 = vector.broadcast %0 : f32 to vector<128x128xf32>
    %143 = arith.minimumf %142, %141 : vector<128x128xf32>
    %c3_i32 = arith.constant 3 : i32
    %144 = arith.truncf %143 : vector<128x128xf32> to vector<128x128xbf16>
    %c0_67 = arith.constant 0 : index
    %c0_68 = arith.constant 0 : index
    %145 = vector.load %arg4[%c0_67, %c0_68] : memref<128x128xbf16, #tpu.memory_space<vmem>>, vector<128x128xbf16>
    %cst_69 = arith.constant dense<0.000000e+00> : vector<128x128xf32>
    %146 = tpu.matmul %144, %145, %cst_69 {dimension_numbers = #tpu.dot_dimension_numbers<[1], [0], [0], [1], [0, 0, 1, 1], [], []>} : vector<128x128xbf16>, vector<128x128xbf16>, vector<128x128xf32> -> vector<128x128xf32>
    %147 = arith.addf %146, %4 : vector<128x128xf32>
    %148 = math.tanh %147 : vector<128x128xf32>
    %149 = math.absf %148 : vector<128x128xf32>
    %cst_70 = arith.constant 9.99999996E-13 : f32
    %150 = vector.broadcast %cst_70 : f32 to vector<128x128xf32>
    %151 = arith.maximumf %149, %150 : vector<128x128xf32>
    %152 = math.log %151 : vector<128x128xf32>
    %cst_71 = arith.constant 0.000000e+00 : f32
    %153 = vector.broadcast %cst_71 : f32 to vector<128x128xf32>
    %154 = arith.cmpf olt, %148, %153 : vector<128x128xf32>
    %155 = arith.extui %154 : vector<128x128xi1> to vector<128x128xi32>
    %156 = arith.sitofp %155 : vector<128x128xi32> to vector<128x128xf32>
    %157 = arith.truncf %156 : vector<128x128xf32> to vector<128x128xbf16>
    %158 = arith.truncf %152 : vector<128x128xf32> to vector<128x128xbf16>
    %c0_72 = arith.constant 0 : index
    %c0_73 = arith.constant 0 : index
    %159 = vector.load %arg6[%c0_72, %c0_73] : memref<128x128xbf16, #tpu.memory_space<vmem>>, vector<128x128xbf16>
    %cst_74 = arith.constant dense<0.000000e+00> : vector<128x128xf32>
    %160 = tpu.matmul %158, %159, %cst_74 {dimension_numbers = #tpu.dot_dimension_numbers<[1], [0], [0], [1], [0, 0, 1, 1], [], []>} : vector<128x128xbf16>, vector<128x128xbf16>, vector<128x128xf32> -> vector<128x128xf32>
    %c0_75 = arith.constant 0 : index
    %c0_76 = arith.constant 0 : index
    %161 = vector.load %arg6[%c0_75, %c0_76] : memref<128x128xbf16, #tpu.memory_space<vmem>>, vector<128x128xbf16>
    %cst_77 = arith.constant dense<0.000000e+00> : vector<128x128xf32>
    %162 = tpu.matmul %157, %161, %cst_77 {dimension_numbers = #tpu.dot_dimension_numbers<[1], [0], [0], [1], [0, 0, 1, 1], [], []>} : vector<128x128xbf16>, vector<128x128xbf16>, vector<128x128xf32> -> vector<128x128xf32>
    %cst_78 = arith.constant 5.000000e-01 : f32
    %163 = vector.broadcast %cst_78 : f32 to vector<128x128xf32>
    %164 = arith.mulf %163, %162 : vector<128x128xf32>
    %165 = math.floor %164 : vector<128x128xf32>
    %cst_79 = arith.constant 2.000000e+00 : f32
    %166 = vector.broadcast %cst_79 : f32 to vector<128x128xf32>
    %167 = arith.mulf %166, %165 : vector<128x128xf32>
    %168 = arith.subf %162, %167 : vector<128x128xf32>
    %cst_80 = arith.constant 2.000000e+00 : f32
    %169 = vector.broadcast %cst_80 : f32 to vector<128x128xf32>
    %170 = arith.mulf %169, %168 : vector<128x128xf32>
    %cst_81 = arith.constant 1.000000e+00 : f32
    %171 = vector.broadcast %cst_81 : f32 to vector<128x128xf32>
    %172 = arith.subf %171, %170 : vector<128x128xf32>
    %173 = math.exp %160 : vector<128x128xf32>
    %174 = arith.mulf %172, %173 : vector<128x128xf32>
    %cst_82 = arith.constant -0.999998986 : f32
    %cst_83 = arith.constant 0.999998986 : f32
    %175 = vector.broadcast %cst_82 : f32 to vector<128x128xf32>
    %176 = arith.maximumf %175, %174 : vector<128x128xf32>
    %177 = vector.broadcast %cst_83 : f32 to vector<128x128xf32>
    %178 = arith.minimumf %177, %176 : vector<128x128xf32>
    %cst_84 = arith.constant 1.000000e+00 : f32
    %179 = vector.broadcast %cst_84 : f32 to vector<128x128xf32>
    %180 = arith.addf %179, %178 : vector<128x128xf32>
    %cst_85 = arith.constant 1.000000e+00 : f32
    %181 = vector.broadcast %cst_85 : f32 to vector<128x128xf32>
    %182 = arith.subf %181, %178 : vector<128x128xf32>
    %183 = arith.divf %180, %182 : vector<128x128xf32>
    %184 = math.log %183 : vector<128x128xf32>
    %cst_86 = arith.constant 0.000000e+00 : f32
    %185 = arith.subf %cst_86, %0 : f32
    %186 = vector.broadcast %185 : f32 to vector<128x128xf32>
    %187 = arith.maximumf %186, %184 : vector<128x128xf32>
    %188 = vector.broadcast %0 : f32 to vector<128x128xf32>
    %189 = arith.minimumf %188, %187 : vector<128x128xf32>
    %c4_i32 = arith.constant 4 : i32
    %190 = arith.truncf %189 : vector<128x128xf32> to vector<128x128xbf16>
    %c0_87 = arith.constant 0 : index
    %c0_88 = arith.constant 0 : index
    %191 = vector.load %arg4[%c0_87, %c0_88] : memref<128x128xbf16, #tpu.memory_space<vmem>>, vector<128x128xbf16>
    %cst_89 = arith.constant dense<0.000000e+00> : vector<128x128xf32>
    %192 = tpu.matmul %190, %191, %cst_89 {dimension_numbers = #tpu.dot_dimension_numbers<[1], [0], [0], [1], [0, 0, 1, 1], [], []>} : vector<128x128xbf16>, vector<128x128xbf16>, vector<128x128xf32> -> vector<128x128xf32>
    %193 = arith.addf %192, %4 : vector<128x128xf32>
    %194 = math.tanh %193 : vector<128x128xf32>
    %195 = math.absf %194 : vector<128x128xf32>
    %cst_90 = arith.constant 9.99999996E-13 : f32
    %196 = vector.broadcast %cst_90 : f32 to vector<128x128xf32>
    %197 = arith.maximumf %195, %196 : vector<128x128xf32>
    %198 = math.log %197 : vector<128x128xf32>
    %cst_91 = arith.constant 0.000000e+00 : f32
    %199 = vector.broadcast %cst_91 : f32 to vector<128x128xf32>
    %200 = arith.cmpf olt, %194, %199 : vector<128x128xf32>
    %201 = arith.extui %200 : vector<128x128xi1> to vector<128x128xi32>
    %202 = arith.sitofp %201 : vector<128x128xi32> to vector<128x128xf32>
    %203 = arith.truncf %202 : vector<128x128xf32> to vector<128x128xbf16>
    %204 = arith.truncf %198 : vector<128x128xf32> to vector<128x128xbf16>
    %c0_92 = arith.constant 0 : index
    %c0_93 = arith.constant 0 : index
    %205 = vector.load %arg6[%c0_92, %c0_93] : memref<128x128xbf16, #tpu.memory_space<vmem>>, vector<128x128xbf16>
    %cst_94 = arith.constant dense<0.000000e+00> : vector<128x128xf32>
    %206 = tpu.matmul %204, %205, %cst_94 {dimension_numbers = #tpu.dot_dimension_numbers<[1], [0], [0], [1], [0, 0, 1, 1], [], []>} : vector<128x128xbf16>, vector<128x128xbf16>, vector<128x128xf32> -> vector<128x128xf32>
    %c0_95 = arith.constant 0 : index
    %c0_96 = arith.constant 0 : index
    %207 = vector.load %arg6[%c0_95, %c0_96] : memref<128x128xbf16, #tpu.memory_space<vmem>>, vector<128x128xbf16>
    %cst_97 = arith.constant dense<0.000000e+00> : vector<128x128xf32>
    %208 = tpu.matmul %203, %207, %cst_97 {dimension_numbers = #tpu.dot_dimension_numbers<[1], [0], [0], [1], [0, 0, 1, 1], [], []>} : vector<128x128xbf16>, vector<128x128xbf16>, vector<128x128xf32> -> vector<128x128xf32>
    %cst_98 = arith.constant 5.000000e-01 : f32
    %209 = vector.broadcast %cst_98 : f32 to vector<128x128xf32>
    %210 = arith.mulf %209, %208 : vector<128x128xf32>
    %211 = math.floor %210 : vector<128x128xf32>
    %cst_99 = arith.constant 2.000000e+00 : f32
    %212 = vector.broadcast %cst_99 : f32 to vector<128x128xf32>
    %213 = arith.mulf %212, %211 : vector<128x128xf32>
    %214 = arith.subf %208, %213 : vector<128x128xf32>
    %cst_100 = arith.constant 2.000000e+00 : f32
    %215 = vector.broadcast %cst_100 : f32 to vector<128x128xf32>
    %216 = arith.mulf %215, %214 : vector<128x128xf32>
    %cst_101 = arith.constant 1.000000e+00 : f32
    %217 = vector.broadcast %cst_101 : f32 to vector<128x128xf32>
    %218 = arith.subf %217, %216 : vector<128x128xf32>
    %219 = math.exp %206 : vector<128x128xf32>
    %220 = arith.mulf %218, %219 : vector<128x128xf32>
    %cst_102 = arith.constant -0.999998986 : f32
    %cst_103 = arith.constant 0.999998986 : f32
    %221 = vector.broadcast %cst_102 : f32 to vector<128x128xf32>
    %222 = arith.maximumf %221, %220 : vector<128x128xf32>
    %223 = vector.broadcast %cst_103 : f32 to vector<128x128xf32>
    %224 = arith.minimumf %223, %222 : vector<128x128xf32>
    %cst_104 = arith.constant 1.000000e+00 : f32
    %225 = vector.broadcast %cst_104 : f32 to vector<128x128xf32>
    %226 = arith.addf %225, %224 : vector<128x128xf32>
    %cst_105 = arith.constant 1.000000e+00 : f32
    %227 = vector.broadcast %cst_105 : f32 to vector<128x128xf32>
    %228 = arith.subf %227, %224 : vector<128x128xf32>
    %229 = arith.divf %226, %228 : vector<128x128xf32>
    %230 = math.log %229 : vector<128x128xf32>
    %cst_106 = arith.constant 0.000000e+00 : f32
    %231 = arith.subf %cst_106, %0 : f32
    %232 = vector.broadcast %231 : f32 to vector<128x128xf32>
    %233 = arith.maximumf %232, %230 : vector<128x128xf32>
    %234 = vector.broadcast %0 : f32 to vector<128x128xf32>
    %235 = arith.minimumf %234, %233 : vector<128x128xf32>
    %236 = arith.truncf %235 : vector<128x128xf32> to vector<128x128xbf16>
    %c0_107 = arith.constant 0 : index
    %c0_108 = arith.constant 0 : index
    %237 = vector.load %arg7[%c0_107, %c0_108] : memref<128x128xbf16, #tpu.memory_space<vmem>>, vector<128x128xbf16>
    %cst_109 = arith.constant dense<0.000000e+00> : vector<128x128xf32>
    %238 = tpu.matmul %236, %237, %cst_109 {dimension_numbers = #tpu.dot_dimension_numbers<[1], [0], [0], [1], [0, 0, 1, 1], [], []>} : vector<128x128xbf16>, vector<128x128xbf16>, vector<128x128xf32> -> vector<128x128xf32>
    %239 = arith.addf %238, %1 : vector<128x128xf32>
    %240 = math.exp %239 : vector<128x128xf32>
    %cst_110 = arith.constant 1.000000e+00 : f32
    %241 = vector.broadcast %cst_110 : f32 to vector<128x128xf32>
    %242 = arith.addf %241, %240 : vector<128x128xf32>
    %cst_111 = arith.constant 1.000000e+00 : f32
    %243 = vector.broadcast %cst_111 : f32 to vector<128x128xf32>
    %244 = arith.divf %243, %242 : vector<128x128xf32>
    %c0_112 = arith.constant 0 : index
    %c0_113 = arith.constant 0 : index
    %245 = vector.load %arg8[%c0_112, %c0_113] : memref<128x128xf32, #tpu.memory_space<vmem>>, vector<128x128xf32>
    tpu.vector_store %arg8[%c0_112, %c0_113], %244 {strides = array<i32>} : memref<128x128xf32, #tpu.memory_space<vmem>>, vector<128x128xf32>,
    return
  }
  func.func @transform_0(%arg0: i32) -> (i32, i32) {
    %c0_i32 = arith.constant 0 : i32
    %c0_i32_0 = arith.constant 0 : i32
    %c0_i32_1 = arith.constant 0 : i32
    return %c0_i32, %c0_i32_0 : i32, i32
  }
  func.func @transform_1(%arg0: i32) -> (i32, i32) {
    %c0_i32 = arith.constant 0 : i32
    %c0_i32_0 = arith.constant 0 : i32
    return %arg0, %c0_i32 : i32, i32
  }
  func.func @transform_2(%arg0: i32) -> (i32, i32) {
    %c0_i32 = arith.constant 0 : i32
    %c0_i32_0 = arith.constant 0 : i32
    return %arg0, %c0_i32 : i32, i32
  }
  func.func @transform_3(%arg0: i32) -> (i32, i32) {
    %c0_i32 = arith.constant 0 : i32
    %c0_i32_0 = arith.constant 0 : i32
    %c0_i32_1 = arith.constant 0 : i32
    return %c0_i32, %c0_i32_0 : i32, i32
  }
  func.func @transform_4(%arg0: i32) -> (i32, i32) {
    %c0_i32 = arith.constant 0 : i32
    %c0_i32_0 = arith.constant 0 : i32
    %c0_i32_1 = arith.constant 0 : i32
    return %c0_i32, %c0_i32_0 : i32, i32
  }
  func.func @transform_5(%arg0: i32) -> (i32, i32) {
    %c0_i32 = arith.constant 0 : i32
    %c0_i32_0 = arith.constant 0 : i32
    %c0_i32_1 = arith.constant 0 : i32
    return %c0_i32, %c0_i32_0 : i32, i32
  }
  func.func @transform_6(%arg0: i32) -> (i32, i32) {
    %c0_i32 = arith.constant 0 : i32
    %c0_i32_0 = arith.constant 0 : i32
    %c0_i32_1 = arith.constant 0 : i32
    return %c0_i32, %c0_i32_0 : i32, i32
  }
  func.func @transform_7(%arg0: i32) -> (i32, i32) {
    %c0_i32 = arith.constant 0 : i32
    %c0_i32_0 = arith.constant 0 : i32
    return %arg0, %c0_i32 : i32, i32
  }
}

module attributes {stable_mosaic.version = 11 : i64} {
  func.func @_bp_fused_kernel(%arg0: i32, %arg1: memref<1x1xf32, #tpu.memory_space<smem>>, %arg2: memref<128x128xf32, #tpu.memory_space<vmem>>, %arg3: memref<128x128xf32, #tpu.memory_space<vmem>>, %arg4: memref<128x128xbf16, #tpu.memory_space<vmem>>, %arg5: memref<128x128xbf16, #tpu.memory_space<vmem>>, %arg6: memref<128x128xbf16, #tpu.memory_space<vmem>>, %arg7: memref<128x128xbf16, #tpu.memory_space<vmem>>, %arg8: memref<128x128xf32, #tpu.memory_space<vmem>>) attributes {dimension_semantics = [#tpu.dimension_semantics<parallel>], iteration_bounds = array<i64: 2>, scalar_prefetch = 0 : i64, scratch_operands = 0 : i64, tpu.core_type = #tpu.core_type<tc>, window_params = [{transform_indices = @transform_0, window_bounds = array<i64: 1, 1>}, {transform_indices = @transform_1, window_bounds = array<i64: 128, 128>}, {transform_indices = @transform_2, window_bounds = array<i64: 128, 128>}, {pipeline_mode = #tpu.pipeline_mode<synchronous>, transform_indices = @transform_3, window_bounds = array<i64: 128, 128>}, {pipeline_mode = #tpu.pipeline_mode<synchronous>, transform_indices = @transform_4, window_bounds = array<i64: 128, 128>}, {pipeline_mode = #tpu.pipeline_mode<synchronous>, transform_indices = @transform_5, window_bounds = array<i64: 128, 128>}, {pipeline_mode = #tpu.pipeline_mode<synchronous>, transform_indices = @transform_6, window_bounds = array<i64: 128, 128>}, {transform_indices = @transform_7, window_bounds = array<i64: 128, 128>}]} {
    %c0 = arith.constant 0 : index
    %c0_0 = arith.constant 0 : index
    %0 = memref.load %arg1[%c0, %c0_0] : memref<1x1xf32, #tpu.memory_space<smem>>
    %c0_1 = arith.constant 0 : index
    %c0_2 = arith.constant 0 : index
    %1 = vector.load %arg3[%c0_1, %c0_2] : memref<128x128xf32, #tpu.memory_space<vmem>>, vector<128x128xf32>
    %2 = arith.truncf %1 : vector<128x128xf32> to vector<128x128xbf16>
    %c0_3 = arith.constant 0 : index
    %c0_4 = arith.constant 0 : index
    %3 = vector.load %arg5[%c0_3, %c0_4] : memref<128x128xbf16, #tpu.memory_space<vmem>>, vector<128x128xbf16>
    %cst = arith.constant dense<0.000000e+00> : vector<128x128xf32>
    %4 = tpu.matmul %2, %3, %cst {dimension_numbers = #tpu.dot_dimension_numbers<[1], [0], [0], [1], [0, 0, 1, 1], [], []>} : vector<128x128xbf16>, vector<128x128xbf16>, vector<128x128xf32> -> vector<128x128xf32>
    %c0_5 = arith.constant 0 : index
    %c0_6 = arith.constant 0 : index
    %5 = vector.load %arg2[%c0_5, %c0_6] : memref<128x128xf32, #tpu.memory_space<vmem>>, vector<128x128xf32>
    %c0_i32 = arith.constant 0 : i32
    %6 = arith.truncf %5 : vector<128x128xf32> to vector<128x128xbf16>
    %c0_7 = arith.constant 0 : index
    %c0_8 = arith.constant 0 : index
    %7 = vector.load %arg4[%c0_7, %c0_8] : memref<128x128xbf16, #tpu.memory_space<vmem>>, vector<128x128xbf16>
    %cst_9 = arith.constant dense<0.000000e+00> : vector<128x128xf32>
    %8 = tpu.matmul %6, %7, %cst_9 {dimension_numbers = #tpu.dot_dimension_numbers<[1], [0], [0], [1], [0, 0, 1, 1], [], []>} : vector<128x128xbf16>, vector<128x128xbf16>, vector<128x128xf32> -> vector<128x128xf32>
    %9 = arith.addf %8, %4 : vector<128x128xf32>
    %10 = math.tanh %9 : vector<128x128xf32>
    %11 = math.absf %10 : vector<128x128xf32>
    %cst_10 = arith.constant 9.99999996E-13 : f32
    %12 = vector.broadcast %cst_10 : f32 to vector<128x128xf32>
    %13 = arith.maximumf %11, %12 : vector<128x128xf32>
    %14 = math.log %13 : vector<128x128xf32>
    %cst_11 = arith.constant 0.000000e+00 : f32
    %15 = vector.broadcast %cst_11 : f32 to vector<128x128xf32>
    %16 = arith.cmpf olt, %10, %15 : vector<128x128xf32>
    %17 = arith.extui %16 : vector<128x128xi1> to vector<128x128xi32>
    %18 = arith.sitofp %17 : vector<128x128xi32> to vector<128x128xf32>
    %19 = arith.truncf %18 : vector<128x128xf32> to vector<128x128xbf16>
    %20 = arith.truncf %14 : vector<128x128xf32> to vector<128x128xbf16>
    %c0_12 = arith.constant 0 : index
    %c0_13 = arith.constant 0 : index
    %21 = vector.load %arg6[%c0_12, %c0_13] : memref<128x128xbf16, #tpu.memory_space<vmem>>, vector<128x128xbf16>
    %cst_14 = arith.constant dense<0.000000e+00> : vector<128x128xf32>
    %22 = tpu.matmul %20, %21, %cst_14 {dimension_numbers = #tpu.dot_dimension_numbers<[1], [0], [0], [1], [0, 0, 1, 1], [], []>} : vector<128x128xbf16>, vector<128x128xbf16>, vector<128x128xf32> -> vector<128x128xf32>
    %c0_15 = arith.constant 0 : index
    %c0_16 = arith.constant 0 : index
    %23 = vector.load %arg6[%c0_15, %c0_16] : memref<128x128xbf16, #tpu.memory_space<vmem>>, vector<128x128xbf16>
    %cst_17 = arith.constant dense<0.000000e+00> : vector<128x128xf32>
    %24 = tpu.matmul %19, %23, %cst_17 {dimension_numbers = #tpu.dot_dimension_numbers<[1], [0], [0], [1], [0, 0, 1, 1], [], []>} : vector<128x128xbf16>, vector<128x128xbf16>, vector<128x128xf32> -> vector<128x128xf32>
    %cst_18 = arith.constant 5.000000e-01 : f32
    %25 = vector.broadcast %cst_18 : f32 to vector<128x128xf32>
    %26 = arith.mulf %25, %24 : vector<128x128xf32>
    %27 = math.floor %26 : vector<128x128xf32>
    %cst_19 = arith.constant 2.000000e+00 : f32
    %28 = vector.broadcast %cst_19 : f32 to vector<128x128xf32>
    %29 = arith.mulf %28, %27 : vector<128x128xf32>
    %30 = arith.subf %24, %29 : vector<128x128xf32>
    %cst_20 = arith.constant 2.000000e+00 : f32
    %31 = vector.broadcast %cst_20 : f32 to vector<128x128xf32>
    %32 = arith.mulf %31, %30 : vector<128x128xf32>
    %cst_21 = arith.constant 1.000000e+00 : f32
    %33 = vector.broadcast %cst_21 : f32 to vector<128x128xf32>
    %34 = arith.subf %33, %32 : vector<128x128xf32>
    %35 = math.exp %22 : vector<128x128xf32>
    %36 = arith.mulf %34, %35 : vector<128x128xf32>
    %cst_22 = arith.constant -0.999998986 : f32
    %cst_23 = arith.constant 0.999998986 : f32
    %37 = vector.broadcast %cst_22 : f32 to vector<128x128xf32>
    %38 = arith.maximumf %37, %36 : vector<128x128xf32>
    %39 = vector.broadcast %cst_23 : f32 to vector<128x128xf32>
    %40 = arith.minimumf %39, %38 : vector<128x128xf32>
    %cst_24 = arith.constant 1.000000e+00 : f32
    %41 = vector.broadcast %cst_24 : f32 to vector<128x128xf32>
    %42 = arith.addf %41, %40 : vector<128x128xf32>
    %cst_25 = arith.constant 1.000000e+00 : f32
    %43 = vector.broadcast %cst_25 : f32 to vector<128x128xf32>
    %44 = arith.subf %43, %40 : vector<128x128xf32>
    %45 = arith.divf %42, %44 : vector<128x128xf32>
    %46 = math.log %45 : vector<128x128xf32>
    %cst_26 = arith.constant 0.000000e+00 : f32
    %47 = arith.subf %cst_26, %0 : f32
    %48 = vector.broadcast %47 : f32 to vector<128x128xf32>
    %49 = arith.maximumf %48, %46 : vector<128x128xf32>
    %50 = vector.broadcast %0 : f32 to vector<128x128xf32>
    %51 = arith.minimumf %50, %49 : vector<128x128xf32>
    %c1_i32 = arith.constant 1 : i32
    %52 = arith.truncf %51 : vector<128x128xf32> to vector<128x128xbf16>
    %c0_27 = arith.constant 0 : index
    %c0_28 = arith.constant 0 : index
    %53 = vector.load %arg4[%c0_27, %c0_28] : memref<128x128xbf16, #tpu.memory_space<vmem>>, vector<128x128xbf16>
    %cst_29 = arith.constant dense<0.000000e+00> : vector<128x128xf32>
    %54 = tpu.matmul %52, %53, %cst_29 {dimension_numbers = #tpu.dot_dimension_numbers<[1], [0], [0], [1], [0, 0, 1, 1], [], []>} : vector<128x128xbf16>, vector<128x128xbf16>, vector<128x128xf32> -> vector<128x128xf32>
    %55 = arith.addf %54, %4 : vector<128x128xf32>
    %56 = math.tanh %55 : vector<128x128xf32>
    %57 = math.absf %56 : vector<128x128xf32>
    %cst_30 = arith.constant 9.99999996E-13 : f32
    %58 = vector.broadcast %cst_30 : f32 to vector<128x128xf32>
    %59 = arith.maximumf %57, %58 : vector<128x128xf32>
    %60 = math.log %59 : vector<128x128xf32>
    %cst_31 = arith.constant 0.000000e+00 : f32
    %61 = vector.broadcast %cst_31 : f32 to vector<128x128xf32>
    %62 = arith.cmpf olt, %56, %61 : vector<128x128xf32>
    %63 = arith.extui %62 : vector<128x128xi1> to vector<128x128xi32>
    %64 = arith.sitofp %63 : vector<128x128xi32> to vector<128x128xf32>
    %65 = arith.truncf %64 : vector<128x128xf32> to vector<128x128xbf16>
    %66 = arith.truncf %60 : vector<128x128xf32> to vector<128x128xbf16>
    %c0_32 = arith.constant 0 : index
    %c0_33 = arith.constant 0 : index
    %67 = vector.load %arg6[%c0_32, %c0_33] : memref<128x128xbf16, #tpu.memory_space<vmem>>, vector<128x128xbf16>
    %cst_34 = arith.constant dense<0.000000e+00> : vector<128x128xf32>
    %68 = tpu.matmul %66, %67, %cst_34 {dimension_numbers = #tpu.dot_dimension_numbers<[1], [0], [0], [1], [0, 0, 1, 1], [], []>} : vector<128x128xbf16>, vector<128x128xbf16>, vector<128x128xf32> -> vector<128x128xf32>
    %c0_35 = arith.constant 0 : index
    %c0_36 = arith.constant 0 : index
    %69 = vector.load %arg6[%c0_35, %c0_36] : memref<128x128xbf16, #tpu.memory_space<vmem>>, vector<128x128xbf16>
    %cst_37 = arith.constant dense<0.000000e+00> : vector<128x128xf32>
    %70 = tpu.matmul %65, %69, %cst_37 {dimension_numbers = #tpu.dot_dimension_numbers<[1], [0], [0], [1], [0, 0, 1, 1], [], []>} : vector<128x128xbf16>, vector<128x128xbf16>, vector<128x128xf32> -> vector<128x128xf32>
    %cst_38 = arith.constant 5.000000e-01 : f32
    %71 = vector.broadcast %cst_38 : f32 to vector<128x128xf32>
    %72 = arith.mulf %71, %70 : vector<128x128xf32>
    %73 = math.floor %72 : vector<128x128xf32>
    %cst_39 = arith.constant 2.000000e+00 : f32
    %74 = vector.broadcast %cst_39 : f32 to vector<128x128xf32>
    %75 = arith.mulf %74, %73 : vector<128x128xf32>
    %76 = arith.subf %70, %75 : vector<128x128xf32>
    %cst_40 = arith.constant 2.000000e+00 : f32
    %77 = vector.broadcast %cst_40 : f32 to vector<128x128xf32>
    %78 = arith.mulf %77, %76 : vector<128x128xf32>
    %cst_41 = arith.constant 1.000000e+00 : f32
    %79 = vector.broadcast %cst_41 : f32 to vector<128x128xf32>
    %80 = arith.subf %79, %78 : vector<128x128xf32>
    %81 = math.exp %68 : vector<128x128xf32>
    %82 = arith.mulf %80, %81 : vector<128x128xf32>
    %cst_42 = arith.constant -0.999998986 : f32
    %cst_43 = arith.constant 0.999998986 : f32
    %83 = vector.broadcast %cst_42 : f32 to vector<128x128xf32>
    %84 = arith.maximumf %83, %82 : vector<128x128xf32>
    %85 = vector.broadcast %cst_43 : f32 to vector<128x128xf32>
    %86 = arith.minimumf %85, %84 : vector<128x128xf32>
    %cst_44 = arith.constant 1.000000e+00 : f32
    %87 = vector.broadcast %cst_44 : f32 to vector<128x128xf32>
    %88 = arith.addf %87, %86 : vector<128x128xf32>
    %cst_45 = arith.constant 1.000000e+00 : f32
    %89 = vector.broadcast %cst_45 : f32 to vector<128x128xf32>
    %90 = arith.subf %89, %86 : vector<128x128xf32>
    %91 = arith.divf %88, %90 : vector<128x128xf32>
    %92 = math.log %91 : vector<128x128xf32>
    %cst_46 = arith.constant 0.000000e+00 : f32
    %93 = arith.subf %cst_46, %0 : f32
    %94 = vector.broadcast %93 : f32 to vector<128x128xf32>
    %95 = arith.maximumf %94, %92 : vector<128x128xf32>
    %96 = vector.broadcast %0 : f32 to vector<128x128xf32>
    %97 = arith.minimumf %96, %95 : vector<128x128xf32>
    %c2_i32 = arith.constant 2 : i32
    %98 = arith.truncf %97 : vector<128x128xf32> to vector<128x128xbf16>
    %c0_47 = arith.constant 0 : index
    %c0_48 = arith.constant 0 : index
    %99 = vector.load %arg4[%c0_47, %c0_48] : memref<128x128xbf16, #tpu.memory_space<vmem>>, vector<128x128xbf16>
    %cst_49 = arith.constant dense<0.000000e+00> : vector<128x128xf32>
    %100 = tpu.matmul %98, %99, %cst_49 {dimension_numbers = #tpu.dot_dimension_numbers<[1], [0], [0], [1], [0, 0, 1, 1], [], []>} : vector<128x128xbf16>, vector<128x128xbf16>, vector<128x128xf32> -> vector<128x128xf32>
    %101 = arith.addf %100, %4 : vector<128x128xf32>
    %102 = math.tanh %101 : vector<128x128xf32>
    %103 = math.absf %102 : vector<128x128xf32>
    %cst_50 = arith.constant 9.99999996E-13 : f32
    %104 = vector.broadcast %cst_50 : f32 to vector<128x128xf32>
    %105 = arith.maximumf %103, %104 : vector<128x128xf32>
    %106 = math.log %105 : vector<128x128xf32>
    %cst_51 = arith.constant 0.000000e+00 : f32
    %107 = vector.broadcast %cst_51 : f32 to vector<128x128xf32>
    %108 = arith.cmpf olt, %102, %107 : vector<128x128xf32>
    %109 = arith.extui %108 : vector<128x128xi1> to vector<128x128xi32>
    %110 = arith.sitofp %109 : vector<128x128xi32> to vector<128x128xf32>
    %111 = arith.truncf %110 : vector<128x128xf32> to vector<128x128xbf16>
    %112 = arith.truncf %106 : vector<128x128xf32> to vector<128x128xbf16>
    %c0_52 = arith.constant 0 : index
    %c0_53 = arith.constant 0 : index
    %113 = vector.load %arg6[%c0_52, %c0_53] : memref<128x128xbf16, #tpu.memory_space<vmem>>, vector<128x128xbf16>
    %cst_54 = arith.constant dense<0.000000e+00> : vector<128x128xf32>
    %114 = tpu.matmul %112, %113, %cst_54 {dimension_numbers = #tpu.dot_dimension_numbers<[1], [0], [0], [1], [0, 0, 1, 1], [], []>} : vector<128x128xbf16>, vector<128x128xbf16>, vector<128x128xf32> -> vector<128x128xf32>
    %c0_55 = arith.constant 0 : index
    %c0_56 = arith.constant 0 : index
    %115 = vector.load %arg6[%c0_55, %c0_56] : memref<128x128xbf16, #tpu.memory_space<vmem>>, vector<128x128xbf16>
    %cst_57 = arith.constant dense<0.000000e+00> : vector<128x128xf32>
    %116 = tpu.matmul %111, %115, %cst_57 {dimension_numbers = #tpu.dot_dimension_numbers<[1], [0], [0], [1], [0, 0, 1, 1], [], []>} : vector<128x128xbf16>, vector<128x128xbf16>, vector<128x128xf32> -> vector<128x128xf32>
    %cst_58 = arith.constant 5.000000e-01 : f32
    %117 = vector.broadcast %cst_58 : f32 to vector<128x128xf32>
    %118 = arith.mulf %117, %116 : vector<128x128xf32>
    %119 = math.floor %118 : vector<128x128xf32>
    %cst_59 = arith.constant 2.000000e+00 : f32
    %120 = vector.broadcast %cst_59 : f32 to vector<128x128xf32>
    %121 = arith.mulf %120, %119 : vector<128x128xf32>
    %122 = arith.subf %116, %121 : vector<128x128xf32>
    %cst_60 = arith.constant 2.000000e+00 : f32
    %123 = vector.broadcast %cst_60 : f32 to vector<128x128xf32>
    %124 = arith.mulf %123, %122 : vector<128x128xf32>
    %cst_61 = arith.constant 1.000000e+00 : f32
    %125 = vector.broadcast %cst_61 : f32 to vector<128x128xf32>
    %126 = arith.subf %125, %124 : vector<128x128xf32>
    %127 = math.exp %114 : vector<128x128xf32>
    %128 = arith.mulf %126, %127 : vector<128x128xf32>
    %cst_62 = arith.constant -0.999998986 : f32
    %cst_63 = arith.constant 0.999998986 : f32
    %129 = vector.broadcast %cst_62 : f32 to vector<128x128xf32>
    %130 = arith.maximumf %129, %128 : vector<128x128xf32>
    %131 = vector.broadcast %cst_63 : f32 to vector<128x128xf32>
    %132 = arith.minimumf %131, %130 : vector<128x128xf32>
    %cst_64 = arith.constant 1.000000e+00 : f32
    %133 = vector.broadcast %cst_64 : f32 to vector<128x128xf32>
    %134 = arith.addf %133, %132 : vector<128x128xf32>
    %cst_65 = arith.constant 1.000000e+00 : f32
    %135 = vector.broadcast %cst_65 : f32 to vector<128x128xf32>
    %136 = arith.subf %135, %132 : vector<128x128xf32>
    %137 = arith.divf %134, %136 : vector<128x128xf32>
    %138 = math.log %137 : vector<128x128xf32>
    %cst_66 = arith.constant 0.000000e+00 : f32
    %139 = arith.subf %cst_66, %0 : f32
    %140 = vector.broadcast %139 : f32 to vector<128x128xf32>
    %141 = arith.maximumf %140, %138 : vector<128x128xf32>
    %142 = vector.broadcast %0 : f32 to vector<128x128xf32>
    %143 = arith.minimumf %142, %141 : vector<128x128xf32>
    %c3_i32 = arith.constant 3 : i32
    %144 = arith.truncf %143 : vector<128x128xf32> to vector<128x128xbf16>
    %c0_67 = arith.constant 0 : index
    %c0_68 = arith.constant 0 : index
    %145 = vector.load %arg4[%c0_67, %c0_68] : memref<128x128xbf16, #tpu.memory_space<vmem>>, vector<128x128xbf16>
    %cst_69 = arith.constant dense<0.000000e+00> : vector<128x128xf32>
    %146 = tpu.matmul %144, %145, %cst_69 {dimension_numbers = #tpu.dot_dimension_numbers<[1], [0], [0], [1], [0, 0, 1, 1], [], []>} : vector<128x128xbf16>, vector<128x128xbf16>, vector<128x128xf32> -> vector<128x128xf32>
    %147 = arith.addf %146, %4 : vector<128x128xf32>
    %148 = math.tanh %147 : vector<128x128xf32>
    %149 = math.absf %148 : vector<128x128xf32>
    %cst_70 = arith.constant 9.99999996E-13 : f32
    %150 = vector.broadcast %cst_70 : f32 to vector<128x128xf32>
    %151 = arith.maximumf %149, %150 : vector<128x128xf32>
    %152 = math.log %151 : vector<128x128xf32>
    %cst_71 = arith.constant 0.000000e+00 : f32
    %153 = vector.broadcast %cst_71 : f32 to vector<128x128xf32>
    %154 = arith.cmpf olt, %148, %153 : vector<128x128xf32>
    %155 = arith.extui %154 : vector<128x128xi1> to vector<128x128xi32>
    %156 = arith.sitofp %155 : vector<128x128xi32> to vector<128x128xf32>
    %157 = arith.truncf %156 : vector<128x128xf32> to vector<128x128xbf16>
    %158 = arith.truncf %152 : vector<128x128xf32> to vector<128x128xbf16>
    %c0_72 = arith.constant 0 : index
    %c0_73 = arith.constant 0 : index
    %159 = vector.load %arg6[%c0_72, %c0_73] : memref<128x128xbf16, #tpu.memory_space<vmem>>, vector<128x128xbf16>
    %cst_74 = arith.constant dense<0.000000e+00> : vector<128x128xf32>
    %160 = tpu.matmul %158, %159, %cst_74 {dimension_numbers = #tpu.dot_dimension_numbers<[1], [0], [0], [1], [0, 0, 1, 1], [], []>} : vector<128x128xbf16>, vector<128x128xbf16>, vector<128x128xf32> -> vector<128x128xf32>
    %c0_75 = arith.constant 0 : index
    %c0_76 = arith.constant 0 : index
    %161 = vector.load %arg6[%c0_75, %c0_76] : memref<128x128xbf16, #tpu.memory_space<vmem>>, vector<128x128xbf16>
    %cst_77 = arith.constant dense<0.000000e+00> : vector<128x128xf32>
    %162 = tpu.matmul %157, %161, %cst_77 {dimension_numbers = #tpu.dot_dimension_numbers<[1], [0], [0], [1], [0, 0, 1, 1], [], []>} : vector<128x128xbf16>, vector<128x128xbf16>, vector<128x128xf32> -> vector<128x128xf32>
    %cst_78 = arith.constant 5.000000e-01 : f32
    %163 = vector.broadcast %cst_78 : f32 to vector<128x128xf32>
    %164 = arith.mulf %163, %162 : vector<128x128xf32>
    %165 = math.floor %164 : vector<128x128xf32>
    %cst_79 = arith.constant 2.000000e+00 : f32
    %166 = vector.broadcast %cst_79 : f32 to vector<128x128xf32>
    %167 = arith.mulf %166, %165 : vector<128x128xf32>
    %168 = arith.subf %162, %167 : vector<128x128xf32>
    %cst_80 = arith.constant 2.000000e+00 : f32
    %169 = vector.broadcast %cst_80 : f32 to vector<128x128xf32>
    %170 = arith.mulf %169, %168 : vector<128x128xf32>
    %cst_81 = arith.constant 1.000000e+00 : f32
    %171 = vector.broadcast %cst_81 : f32 to vector<128x128xf32>
    %172 = arith.subf %171, %170 : vector<128x128xf32>
    %173 = math.exp %160 : vector<128x128xf32>
    %174 = arith.mulf %172, %173 : vector<128x128xf32>
    %cst_82 = arith.constant -0.999998986 : f32
    %cst_83 = arith.constant 0.999998986 : f32
    %175 = vector.broadcast %cst_82 : f32 to vector<128x128xf32>
    %176 = arith.maximumf %175, %174 : vector<128x128xf32>
    %177 = vector.broadcast %cst_83 : f32 to vector<128x128xf32>
    %178 = arith.minimumf %177, %176 : vector<128x128xf32>
    %cst_84 = arith.constant 1.000000e+00 : f32
    %179 = vector.broadcast %cst_84 : f32 to vector<128x128xf32>
    %180 = arith.addf %179, %178 : vector<128x128xf32>
    %cst_85 = arith.constant 1.000000e+00 : f32
    %181 = vector.broadcast %cst_85 : f32 to vector<128x128xf32>
    %182 = arith.subf %181, %178 : vector<128x128xf32>
    %183 = arith.divf %180, %182 : vector<128x128xf32>
    %184 = math.log %183 : vector<128x128xf32>
    %cst_86 = arith.constant 0.000000e+00 : f32
    %185 = arith.subf %cst_86, %0 : f32
    %186 = vector.broadcast %185 : f32 to vector<128x128xf32>
    %187 = arith.maximumf %186, %184 : vector<128x128xf32>
    %188 = vector.broadcast %0 : f32 to vector<128x128xf32>
    %189 = arith.minimumf %188, %187 : vector<128x128xf32>
    %c4_i32 = arith.constant 4 : i32
    %190 = arith.truncf %189 : vector<128x128xf32> to vector<128x128xbf16>
    %c0_87 = arith.constant 0 : index
    %c0_88 = arith.constant 0 : index
    %191 = vector.load %arg4[%c0_87, %c0_88] : memref<128x128xbf16, #tpu.memory_space<vmem>>, vector<128x128xbf16>
    %cst_89 = arith.constant dense<0.000000e+00> : vector<128x128xf32>
    %192 = tpu.matmul %190, %191, %cst_89 {dimension_numbers = #tpu.dot_dimension_numbers<[1], [0], [0], [1], [0, 0, 1, 1], [], []>} : vector<128x128xbf16>, vector<128x128xbf16>, vector<128x128xf32> -> vector<128x128xf32>
    %193 = arith.addf %192, %4 : vector<128x128xf32>
    %194 = math.tanh %193 : vector<128x128xf32>
    %195 = math.absf %194 : vector<128x128xf32>
    %cst_90 = arith.constant 9.99999996E-13 : f32
    %196 = vector.broadcast %cst_90 : f32 to vector<128x128xf32>
    %197 = arith.maximumf %195, %196 : vector<128x128xf32>
    %198 = math.log %197 : vector<128x128xf32>
    %cst_91 = arith.constant 0.000000e+00 : f32
    %199 = vector.broadcast %cst_91 : f32 to vector<128x128xf32>
    %200 = arith.cmpf olt, %194, %199 : vector<128x128xf32>
    %201 = arith.extui %200 : vector<128x128xi1> to vector<128x128xi32>
    %202 = arith.sitofp %201 : vector<128x128xi32> to vector<128x128xf32>
    %203 = arith.truncf %202 : vector<128x128xf32> to vector<128x128xbf16>
    %204 = arith.truncf %198 : vector<128x128xf32> to vector<128x128xbf16>
    %c0_92 = arith.constant 0 : index
    %c0_93 = arith.constant 0 : index
    %205 = vector.load %arg6[%c0_92, %c0_93] : memref<128x128xbf16, #tpu.memory_space<vmem>>, vector<128x128xbf16>
    %cst_94 = arith.constant dense<0.000000e+00> : vector<128x128xf32>
    %206 = tpu.matmul %204, %205, %cst_94 {dimension_numbers = #tpu.dot_dimension_numbers<[1], [0], [0], [1], [0, 0, 1, 1], [], []>} : vector<128x128xbf16>, vector<128x128xbf16>, vector<128x128xf32> -> vector<128x128xf32>
    %c0_95 = arith.constant 0 : index
    %c0_96 = arith.constant 0 : index
    %207 = vector.load %arg6[%c0_95, %c0_96] : memref<128x128xbf16, #tpu.memory_space<vmem>>, vector<128x128xbf16>
    %cst_97 = arith.constant dense<0.000000e+00> : vector<128x128xf32>
    %208 = tpu.matmul %203, %207, %cst_97 {dimension_numbers = #tpu.dot_dimension_numbers<[1], [0], [0], [1], [0, 0, 1, 1], [], []>} : vector<128x128xbf16>, vector<128x128xbf16>, vector<128x128xf32> -> vector<128x128xf32>
    %cst_98 = arith.constant 5.000000e-01 : f32
    %209 = vector.broadcast %cst_98 : f32 to vector<128x128xf32>
    %210 = arith.mulf %209, %208 : vector<128x128xf32>
    %211 = math.floor %210 : vector<128x128xf32>
    %cst_99 = arith.constant 2.000000e+00 : f32
    %212 = vector.broadcast %cst_99 : f32 to vector<128x128xf32>
    %213 = arith.mulf %212, %211 : vector<128x128xf32>
    %214 = arith.subf %208, %213 : vector<128x128xf32>
    %cst_100 = arith.constant 2.000000e+00 : f32
    %215 = vector.broadcast %cst_100 : f32 to vector<128x128xf32>
    %216 = arith.mulf %215, %214 : vector<128x128xf32>
    %cst_101 = arith.constant 1.000000e+00 : f32
    %217 = vector.broadcast %cst_101 : f32 to vector<128x128xf32>
    %218 = arith.subf %217, %216 : vector<128x128xf32>
    %219 = math.exp %206 : vector<128x128xf32>
    %220 = arith.mulf %218, %219 : vector<128x128xf32>
    %cst_102 = arith.constant -0.999998986 : f32
    %cst_103 = arith.constant 0.999998986 : f32
    %221 = vector.broadcast %cst_102 : f32 to vector<128x128xf32>
    %222 = arith.maximumf %221, %220 : vector<128x128xf32>
    %223 = vector.broadcast %cst_103 : f32 to vector<128x128xf32>
    %224 = arith.minimumf %223, %222 : vector<128x128xf32>
    %cst_104 = arith.constant 1.000000e+00 : f32
    %225 = vector.broadcast %cst_104 : f32 to vector<128x128xf32>
    %226 = arith.addf %225, %224 : vector<128x128xf32>
    %cst_105 = arith.constant 1.000000e+00 : f32
    %227 = vector.broadcast %cst_105 : f32 to vector<128x128xf32>
    %228 = arith.subf %227, %224 : vector<128x128xf32>
    %229 = arith.divf %226, %228 : vector<128x128xf32>
    %230 = math.log %229 : vector<128x128xf32>
    %cst_106 = arith.constant 0.000000e+00 : f32
    %231 = arith.subf %cst_106, %0 : f32
    %232 = vector.broadcast %231 : f32 to vector<128x128xf32>
    %233 = arith.maximumf %232, %230 : vector<128x128xf32>
    %234 = vector.broadcast %0 : f32 to vector<128x128xf32>
    %235 = arith.minimumf %234, %233 : vector<128x128xf32>
    %236 = arith.truncf %235 : vector<128x128xf32> to vector<128x128xbf16>
    %c0_107 = arith.constant 0 : index
    %c0_108 = arith.constant 0 : index
    %237 = vector.load %arg7[%c0_107, %c0_108] : memref<128x128xbf16, #tpu.memory_space<vmem>>, vector<128x128xbf16>
    %cst_109 = arith.constant dense<0.000000e+00> : vector<128x128xf32>
    %238 = tpu.matmul %236, %237, %cst_109 {dimension_numbers = #tpu.dot_dimension_numbers<[1], [0], [0], [1], [0, 0, 1, 1], [], []>} : vector<128x128xbf16>, vector<128x128xbf16>, vector<128x128xf32> -> vector<128x128xf32>
    %239 = arith.addf %238, %1 : vector<128x128xf32>
    %240 = math.exp %239 : vector<128x128xf32>
    %cst_110 = arith.constant 1.000000e+00 : f32
    %241 = vector.broadcast %cst_110 : f32 to vector<128x128xf32>
    %242 = arith.addf %241, %240 : vector<128x128xf32>
    %cst_111 = arith.constant 1.000000e+00 : f32
    %243 = vector.broadcast %cst_111 : f32 to vector<128x128xf32>
    %244 = arith.divf %243, %242 : vector<128x128xf32>
    %c0_112 = arith.constant 0 : index
    %c0_113 = arith.constant 0 : index
    %245 = vector.load %arg8[%c0_112, %c0_113] : memref<128x128xf32, #tpu.memory_space<vmem>>, vector<128x128xf32>
    tpu.vector_store %arg8[%c0_112, %c0_113], %244 {strides = array<i32>} : memref<128x128xf32, #tpu.memory_space<vmem>>, vector<128x128xf32>,
    return
  }
  func.func @transform_0(%arg0: i32) -> (i32, i32) {
    %c0_i32 = arith.constant 0 : i32
    %c0_i32_0 = arith.constant 0 : i32
    %c0_i32_1 = arith.constant 0 : i32
    return %c0_i32, %c0_i32_0 : i32, i32
  }
  func.func @transform_1(%arg0: i32) -> (i32, i32) {
    %c0_i32 = arith.constant 0 : i32
    %c0_i32_0 = arith.constant 0 : i32
    return %arg0, %c0_i32 : i32, i32
  }
  func.func @transform_2(%arg0: i32) -> (i32, i32) {
    %c0_i32 = arith.constant 0 : i32
    %c0_i32_0 = arith.constant 0 : i32
    return %arg0, %c0_i32 : i32, i32
  }
  func.func @transform_3(%arg0: i32) -> (i32, i32) {
    %c0_i32 = arith.constant 0 : i32
    %c0_i32_0 = arith.constant 0 : i32
    %c0_i32_1 = arith.constant 0 : i32
    return %c0_i32, %c0_i32_0 : i32, i32
  }
  func.func @transform_4(%arg0: i32) -> (i32, i32) {
    %c0_i32 = arith.constant 0 : i32
    %c0_i32_0 = arith.constant 0 : i32
    %c0_i32_1 = arith.constant 0 : i32
    return %c0_i32, %c0_i32_0 : i32, i32
  }
  func.func @transform_5(%arg0: i32) -> (i32, i32) {
    %c0_i32 = arith.constant 0 : i32
    %c0_i32_0 = arith.constant 0 : i32
    %c0_i32_1 = arith.constant 0 : i32
    return %c0_i32, %c0_i32_0 : i32, i32
  }
  func.func @transform_6(%arg0: i32) -> (i32, i32) {
    %c0_i32 = arith.constant 0 : i32
    %c0_i32_0 = arith.constant 0 : i32
    %c0_i32_1 = arith.constant 0 : i32
    return %c0_i32, %c0_i32_0 : i32, i32
  }
  func.func @transform_7(%arg0: i32) -> (i32, i32) {
    %c0_i32 = arith.constant 0 : i32
    %c0_i32_0 = arith.constant 0 : i32
    return %arg0, %c0_i32 : i32, i32
  }
}

</mosaic_0001>

<llo_original>
// kernel: tpu_custom_call.1
$region0: #{tpu_custom_call.1}
  #allocation0 [shape = 'u32[]', space=smem, size = 0x4, offset = 0x4, fixed_abs, tag = 'smem constant byte address 0x4 - core index']
  #allocation1 [shape = 'u32[144,128]{1,0:T(1,128)}', space=vmem, size = 0x12000, scoped, tag = 'internal scratch']
  #allocation2 [shape = 'f32[1,1]{1,0:T(1,128)S(6)}', space=smem, size = 0x200, scoped, tag = 'scoped memory for tpu_custom_call.1']
  %s0 = inlined_call_operand.<no memory space> [shape: f32[1,1], index: 0, kind: input, shape index: {}]
  %s1 = inlined_call_operand.hbm [shape: f32[256,128], index: 1, kind: input, shape index: {}]
  %s2 = inlined_call_operand.hbm [shape: f32[256,128], index: 2, kind: input, shape index: {}]
  %s3 = inlined_call_operand.hbm [shape: bf16[128,128], index: 3, kind: input, shape index: {}]
  %s4 = inlined_call_operand.hbm [shape: bf16[128,128], index: 4, kind: input, shape index: {}]
  %s5 = inlined_call_operand.hbm [shape: bf16[128,128], index: 5, kind: input, shape index: {}]
  %s6 = inlined_call_operand.hbm [shape: bf16[128,128], index: 6, kind: input, shape index: {}]
  %s7 = inlined_call_operand.hbm [shape: f32[256,128], index: 7, kind: output, shape index: {}]
  %s8 = sld [smem:[#allocation0]]
  $region85: #{tpu_custom_call.1} parent=0
    _
  %s10 = ssub.s32 1, %s8
  %s11 = scalar_select 0, %s10, %s8
  %12 = sst [smem:[#allocation2]] %s0
  $region1: #{tpu_custom_call.1} parent=0
    #allocation3 [shape = 'u8[131072]{0}', space=vmem, size = 0x20000, scoped, tag = 'input window, operand 1']
    #allocation4 [shape = 's32[2]{0}', space=sflag, size = 0x8, scoped, tag = 'scoped memory for tpu_custom_call.1']
    #allocation5 [shape = 's32[2]{0}', space=sflag, size = 0x8, scoped, tag = 'scoped memory for tpu_custom_call.1']
    #allocation6 [shape = 'u8[131072]{0}', space=vmem, size = 0x20000, scoped, tag = 'input window, operand 2']
    #allocation7 [shape = 's32[2]{0}', space=sflag, size = 0x8, scoped, tag = 'scoped memory for tpu_custom_call.1']
    #allocation8 [shape = 'u8[32768]{0}', space=vmem, size = 0x8000, scoped, tag = 'input window, operand 3, single buffered']
    #allocation9 [shape = 'u8[32768]{0}', space=vmem, size = 0x8000, scoped, tag = 'input window, operand 4, single buffered']
    #allocation10 [shape = 's32[1]{0}', space=sflag, size = 0x4, scoped, tag = 'scoped memory for tpu_custom_call.1']
    #allocation11 [shape = 'u8[32768]{0}', space=vmem, size = 0x8000, scoped, tag = 'input window, operand 5, single buffered']
    #allocation12 [shape = 'u8[32768]{0}', space=vmem, size = 0x8000, scoped, tag = 'input window, operand 6, single buffered']
    #allocation13 [shape = 's32[1]{0}', space=sflag, size = 0x4, scoped, tag = 'scoped memory for tpu_custom_call.1']
    #allocation14 [shape = 'u8[131072]{0}', space=vmem, size = 0x20000, scoped, tag = 'output window, operand 0']
    %13 = vsyncpa [#allocation4], 0
    %s14 = scalar_lea.sflag [#allocation4], 1
    %15 = vsyncpa %s14, 0
    %16 = vsyncpa [#allocation7], 0
    %s17 = scalar_lea.sflag [#allocation7], 1
    %18 = vsyncpa %s17, 0
    %19 = vsyncpa [#allocation10], 0
    %20 = vsyncpa [#allocation13], 0
    %21 = vsyncpa [#allocation5], 0
    %s22 = scalar_lea.sflag [#allocation5], 1
    %23 = vsyncpa %s22, 0
    loop: start=0, step=1, limit=4
    $region2: #{tpu_custom_call.1} parent=1 // loop_pre_header
      _
    $region3: #{tpu_custom_call.1} parent=1 // loop_header
      %s25 = sphi 0, %s29
      %p26 = scmp.ge.s32.totalorder %s25, 4
      %s33 = sphi 0, %s33
      %s35 = sphi 0, %s33
      %s36 = sphi 0, %s35
      %s50 = sphi 0, %s36
      %s56 = sphi 0, %s58
      %s59 = sphi 0, %s56
      %s60 = sphi 0, %s59
      %s76 = sphi 0, %s60
      %s82 = sphi 0, %s84
      %s85 = sphi 0, %s82
      %s86 = sphi 0, %s85
      %s102 = sphi 0, %s86
      %s106 = sphi 0, %s106
      %s108 = sphi 0, %s106
      %s109 = sphi 0, %s108
      %s123 = sphi 0, %s109
      %s127 = sphi 0, %s127
      %s129 = sphi 0, %s127
      %s130 = sphi 0, %s129
      %s144 = sphi 0, %s130
      %s148 = sphi 0, %s148
      %s150 = sphi 0, %s148
      %s151 = sphi 0, %s150
      %s165 = sphi 0, %s151
      %s169 = sphi 0, %s169
      %s171 = sphi 0, %s169
      %s172 = sphi 0, %s171
      %s186 = sphi 0, %s172
      %s192 = sphi 0, %s194
      %s195 = sphi 0, %s192
      %s196 = sphi 0, %s195
      %s212 = sphi 0, %s196
    $region4: #{tpu_custom_call.1} parent=1 // loop_header_branch
      %28 = sbr.rel (%p26) target = $region8
    $region5: #{tpu_custom_call.1} parent=1 // loop_body
      %s30 = ssub.s32 %s25, 1
      %s31 = ssub.s32 %s25, 2
      %s32 = sadd.s32 %s25, 1
      %s34 = sadd.s32 %s33, 1
      %p37 = scmp.eq.s32.totalorder %s25, 1
      %p38 = scmp.ne.s32.totalorder %s33, %s35
      %p39 = scmp.eq.s32.totalorder %s25, 0
      %p40 = por %p38, %p39
      %p41 = scmp.ne.s32.totalorder %s33, %s35
      %p42 = scmp.eq.s32.totalorder %s30, 1
      %p43 = por %p41, %p42
      %p44 = scmp.ne.s32.totalorder %s35, %s36
      %p45 = scmp.eq.s32.totalorder %s30, 0
      %p46 = por %p44, %p45
      %p47 = scmp.ne.s32.totalorder %s35, %s36
      %p48 = scmp.eq.s32.totalorder %s31, 1
      %p49 = por %p47, %p48
      %p51 = scmp.ne.s32.totalorder %s36, %s50
      %p52 = scmp.eq.s32.totalorder %s31, 0
      %p53 = por %p51, %p52
      %s54 = ssub.s32 %s25, %s32
      %p55 = scmp.eq.s32.totalorder %s54, 0
      %s57 = sadd.s32 %s56, 1
      %s58 = scalar_select %p55, %s56, %s57
      %p61 = pneg %p55
      %p62 = scmp.eq.s32.totalorder %s25, 1
      %p63 = por %p61, %p62
      %p64 = scmp.ne.s32.totalorder %s56, %s59
      %p65 = scmp.eq.s32.totalorder %s25, 0
      %p66 = por %p64, %p65
      %p67 = scmp.ne.s32.totalorder %s56, %s59
      %p68 = scmp.eq.s32.totalorder %s30, 1
      %p69 = por %p67, %p68
      %p70 = scmp.ne.s32.totalorder %s59, %s60
      %p71 = scmp.eq.s32.totalorder %s30, 0
      %p72 = por %p70, %p71
      %p73 = scmp.ne.s32.totalorder %s59, %s60
      %p74 = scmp.eq.s32.totalorder %s31, 1
      %p75 = por %p73, %p74
      %p77 = scmp.ne.s32.totalorder %s60, %s76
      %p78 = scmp.eq.s32.totalorder %s31, 0
      %p79 = por %p77, %p78
      %s80 = ssub.s32 %s25, %s32
      %p81 = scmp.eq.s32.totalorder %s80, 0
      %s83 = sadd.s32 %s82, 1
      %s84 = scalar_select %p81, %s82, %s83
      %p87 = pneg %p81
      %p88 = scmp.eq.s32.totalorder %s25, 1
      %p89 = por %p87, %p88
      %p90 = scmp.ne.s32.totalorder %s82, %s85
      %p91 = scmp.eq.s32.totalorder %s25, 0
      %p92 = por %p90, %p91
      %p93 = scmp.ne.s32.totalorder %s82, %s85
      %p94 = scmp.eq.s32.totalorder %s30, 1
      %p95 = por %p93, %p94
      %p96 = scmp.ne.s32.totalorder %s85, %s86
      %p97 = scmp.eq.s32.totalorder %s30, 0
      %p98 = por %p96, %p97
      %p99 = scmp.ne.s32.totalorder %s85, %s86
      %p100 = scmp.eq.s32.totalorder %s31, 1
      %p101 = por %p99, %p100
      %p103 = scmp.ne.s32.totalorder %s86, %s102
      %p104 = scmp.eq.s32.totalorder %s31, 0
      %p105 = por %p103, %p104
      %s107 = sadd.s32 %s106, 1
      %p110 = scmp.eq.s32.totalorder %s25, 1
      %p111 = scmp.ne.s32.totalorder %s106, %s108
      %p112 = scmp.eq.s32.totalorder %s25, 0
      %p113 = por %p111, %p112
      %p114 = scmp.ne.s32.totalorder %s106, %s108
      %p115 = scmp.eq.s32.totalorder %s30, 1
      %p116 = por %p114, %p115
      %p117 = scmp.ne.s32.totalorder %s108, %s109
      %p118 = scmp.eq.s32.totalorder %s30, 0
      %p119 = por %p117, %p118
      %p120 = scmp.ne.s32.totalorder %s108, %s109
      %p121 = scmp.eq.s32.totalorder %s31, 1
      %p122 = por %p120, %p121
      %p124 = scmp.ne.s32.totalorder %s109, %s123
      %p125 = scmp.eq.s32.totalorder %s31, 0
      %p126 = por %p124, %p125
      %s128 = sadd.s32 %s127, 1
      %p131 = scmp.eq.s32.totalorder %s25, 1
      %p132 = scmp.ne.s32.totalorder %s127, %s129
      %p133 = scmp.eq.s32.totalorder %s25, 0
      %p134 = por %p132, %p133
      %p135 = scmp.ne.s32.totalorder %s127, %s129
      %p136 = scmp.eq.s32.totalorder %s30, 1
      %p137 = por %p135, %p136
      %p138 = scmp.ne.s32.totalorder %s129, %s130
      %p139 = scmp.eq.s32.totalorder %s30, 0
      %p140 = por %p138, %p139
      %p141 = scmp.ne.s32.totalorder %s129, %s130
      %p142 = scmp.eq.s32.totalorder %s31, 1
      %p143 = por %p141, %p142
      %p145 = scmp.ne.s32.totalorder %s130, %s144
      %p146 = scmp.eq.s32.totalorder %s31, 0
      %p147 = por %p145, %p146
      %s149 = sadd.s32 %s148, 1
      %p152 = scmp.eq.s32.totalorder %s25, 1
      %p153 = scmp.ne.s32.totalorder %s148, %s150
      %p154 = scmp.eq.s32.totalorder %s25, 0
      %p155 = por %p153, %p154
      %p156 = scmp.ne.s32.totalorder %s148, %s150
      %p157 = scmp.eq.s32.totalorder %s30, 1
      %p158 = por %p156, %p157
      %p159 = scmp.ne.s32.totalorder %s150, %s151
      %p160 = scmp.eq.s32.totalorder %s30, 0
      %p161 = por %p159, %p160
      %p162 = scmp.ne.s32.totalorder %s150, %s151
      %p163 = scmp.eq.s32.totalorder %s31, 1
      %p164 = por %p162, %p163
      %p166 = scmp.ne.s32.totalorder %s151, %s165
      %p167 = scmp.eq.s32.totalorder %s31, 0
      %p168 = por %p166, %p167
      %s170 = sadd.s32 %s169, 1
      %p173 = scmp.eq.s32.totalorder %s25, 1
      %p174 = scmp.ne.s32.totalorder %s169, %s171
      %p175 = scmp.eq.s32.totalorder %s25, 0
      %p176 = por %p174, %p175
      %p177 = scmp.ne.s32.totalorder %s169, %s171
      %p178 = scmp.eq.s32.totalorder %s30, 1
      %p179 = por %p177, %p178
      %p180 = scmp.ne.s32.totalorder %s171, %s172
      %p181 = scmp.eq.s32.totalorder %s30, 0
      %p182 = por %p180, %p181
      %p183 = scmp.ne.s32.totalorder %s171, %s172
      %p184 = scmp.eq.s32.totalorder %s31, 1
      %p185 = por %p183, %p184
      %p187 = scmp.ne.s32.totalorder %s172, %s186
      %p188 = scmp.eq.s32.totalorder %s31, 0
      %p189 = por %p187, %p188
      %s190 = ssub.s32 %s25, %s32
      %p191 = scmp.eq.s32.totalorder %s190, 0
      %s193 = sadd.s32 %s192, 1
      %s194 = scalar_select %p191, %s192, %s193
      %p197 = pneg %p191
      %p198 = scmp.eq.s32.totalorder %s25, 1
      %p199 = por %p197, %p198
      %p200 = scmp.ne.s32.totalorder %s192, %s195
      %p201 = scmp.eq.s32.totalorder %s25, 0
      %p202 = por %p200, %p201
      %p203 = scmp.ne.s32.totalorder %s192, %s195
      %p204 = scmp.eq.s32.totalorder %s30, 1
      %p205 = por %p203, %p204
      %p206 = scmp.ne.s32.totalorder %s195, %s196
      %p207 = scmp.eq.s32.totalorder %s30, 0
      %p208 = por %p206, %p207
      %p209 = scmp.ne.s32.totalorder %s195, %s196
      %p210 = scmp.eq.s32.totalorder %s31, 1
      %p211 = por %p209, %p210
      %p213 = scmp.ne.s32.totalorder %s196, %s212
      %p214 = scmp.eq.s32.totalorder %s31, 0
      %p215 = por %p213, %p214
      %p216 = scmp.le.s32.totalorder 1, %s25
      %p217 = scmp.lt.s32.totalorder %s25, 3
      %p218 = pnand %p216, %p217
      %p219 = pneg %p218
      // Predicated region
      $region9: #{tpu_custom_call.1} parent=5 // pred_check
        _
      $region10: #{tpu_custom_call.1} parent=5 // pred_check_branch
        %221 = sbr.rel (%p218) target = $region12
      $region11: #{tpu_custom_call.1} parent=5 // pred_region
        %s222 = ssub.s32 %s25, 1
        // Predicated region
        $region13: #{tpu_custom_call.1} parent=11 // pred_check
          %p223 = pneg %p46
        $region14: #{tpu_custom_call.1} parent=11 // pred_check_branch
          %225 = sbr.rel (%p223) target = $region16
        $region15: #{tpu_custom_call.1} parent=11 // pred_region
          _
        $region16: #{tpu_custom_call.1} parent=11 // pred_fallthru
          _
        // Predicated region
        $region17: #{tpu_custom_call.1} parent=11 // pred_check
          %p226 = pneg %p119
        $region18: #{tpu_custom_call.1} parent=11 // pred_check_branch
          %228 = sbr.rel (%p226) target = $region20
        $region19: #{tpu_custom_call.1} parent=11 // pred_region
          %s230 = ssub.s32 1024, 1024
          %231 = vsyncadd [#allocation7], %s230
          %s232 = sshll.u32 [#allocation8], 4
          %s233 = int_to_ptr.vmem [resolvable:$true] %s232
          %238 = dma.hbm_to_vmem [thread:$0]  %s3, 1024, %s233, [#allocation7], 64, 64, 4
        $region20: #{tpu_custom_call.1} parent=11 // pred_fallthru
          _
        // Predicated region
        $region21: #{tpu_custom_call.1} parent=11 // pred_check
          %p239 = pneg %p140
        $region22: #{tpu_custom_call.1} parent=11 // pred_check_branch
          %241 = sbr.rel (%p239) target = $region24
        $region23: #{tpu_custom_call.1} parent=11 // pred_region
          %s243 = ssub.s32 1024, 1024
          %244 = vsyncadd [#allocation10], %s243
          %s245 = sshll.u32 [#allocation9], 4
          %s246 = int_to_ptr.vmem [resolvable:$true] %s245
          %251 = dma.hbm_to_vmem [thread:$0]  %s4, 1024, %s246, [#allocation10], 64, 64, 4
        $region24: #{tpu_custom_call.1} parent=11 // pred_fallthru
          _
        // Predicated region
        $region25: #{tpu_custom_call.1} parent=11 // pred_check
          %p252 = pneg %p161
        $region26: #{tpu_custom_call.1} parent=11 // pred_check_branch
          %254 = sbr.rel (%p252) target = $region28
        $region27: #{tpu_custom_call.1} parent=11 // pred_region
          %s256 = ssub.s32 1024, 1024
          %257 = vsyncadd [#allocation10], %s256
          %s258 = sshll.u32 [#allocation11], 4
          %s259 = int_to_ptr.vmem [resolvable:$true] %s258
          %264 = dma.hbm_to_vmem [thread:$0]  %s5, 1024, %s259, [#allocation10], 64, 64, 4
        $region28: #{tpu_custom_call.1} parent=11 // pred_fallthru
          _
        // Predicated region
        $region29: #{tpu_custom_call.1} parent=11 // pred_check
          %p265 = pneg %p182
        $region30: #{tpu_custom_call.1} parent=11 // pred_check_branch
          %267 = sbr.rel (%p265) target = $region32
        $region31: #{tpu_custom_call.1} parent=11 // pred_region
          %s269 = ssub.s32 1024, 1024
          %270 = vsyncadd [#allocation13], %s269
          %s271 = sshll.u32 [#allocation12], 4
          %s272 = int_to_ptr.vmem [resolvable:$true] %s271
          %277 = dma.hbm_to_vmem [thread:$0]  %s6, 1024, %s272, [#allocation13], 64, 64, 4
        $region32: #{tpu_custom_call.1} parent=11 // pred_fallthru
          _
      $region12: #{tpu_custom_call.1} parent=5 // pred_fallthru
        _
      %p278 = scmp.lt.s32.totalorder %s25, 2
      // Predicated region
      $region33: #{tpu_custom_call.1} parent=5 // pred_check
        %p279 = pneg %p278
      $region34: #{tpu_custom_call.1} parent=5 // pred_check_branch
        %281 = sbr.rel (%p279) target = $region36
      $region35: #{tpu_custom_call.1} parent=5 // pred_region
        // Predicated region
        $region37: #{tpu_custom_call.1} parent=35 // pred_check
          %p282 = pneg %p66
        $region38: #{tpu_custom_call.1} parent=35 // pred_check_branch
          %284 = sbr.rel (%p282) target = $region40
        $region39: #{tpu_custom_call.1} parent=35 // pred_region
          %s285 = sand.u32 %s56, 1
          %s286 = scalar_lea.sflag [#allocation4], %s285
          %s287 = sand.u32 %s56, 1
          %s288 = smul.addr %s287, 128
          %s289 = scalar_lea.vmem [#allocation3], %s288
          %s290 = smul.u32 16, %s25
          %s292 = ssub.s32 2048, 2048
          %293 = vsyncadd %s286, %s292
          %s294 = smul.addr %s290, 128
          %s295 = scalar_lea.hbm %s1, %s294
          %s296 = sshll.u32 %s289, 4
          %s297 = int_to_ptr.vmem [resolvable:$true] %s296
          %302 = dma.hbm_to_vmem [thread:$0]  %s295, 2048, %s297, %s286, 128, 128, 8
        $region40: #{tpu_custom_call.1} parent=35 // pred_fallthru
          _
        // Predicated region
        $region41: #{tpu_custom_call.1} parent=35 // pred_check
          %p303 = pneg %p92
        $region42: #{tpu_custom_call.1} parent=35 // pred_check_branch
          %305 = sbr.rel (%p303) target = $region44
        $region43: #{tpu_custom_call.1} parent=35 // pred_region
          %s306 = sand.u32 %s25, 1
          %s307 = scalar_lea.sflag [#allocation7], %s306
          %s308 = sand.u32 %s82, 1
          %s309 = smul.addr %s308, 128
          %s310 = scalar_lea.vmem [#allocation6], %s309
          %s311 = smul.u32 16, %s25
          %s313 = ssub.s32 2048, 2048
          %314 = vsyncadd %s307, %s313
          %s315 = smul.addr %s311, 128
          %s316 = scalar_lea.hbm %s2, %s315
          %s317 = sshll.u32 %s310, 4
          %s318 = int_to_ptr.vmem [resolvable:$true] %s317
          %323 = dma.hbm_to_vmem [thread:$0]  %s316, 2048, %s318, %s307, 128, 128, 8
        $region44: #{tpu_custom_call.1} parent=35 // pred_fallthru
          _
      $region36: #{tpu_custom_call.1} parent=5 // pred_fallthru
        _
      %p324 = scmp.le.s32.totalorder 1, %s25
      %p325 = scmp.lt.s32.totalorder %s25, 3
      %p326 = pnand %p324, %p325
      %p327 = pneg %p326
      // Predicated region
      $region45: #{tpu_custom_call.1} parent=5 // pred_check
        _
      $region46: #{tpu_custom_call.1} parent=5 // pred_check_branch
        %329 = sbr.rel (%p326) target = $region48
      $region47: #{tpu_custom_call.1} parent=5 // pred_region
        %s330 = ssub.s32 %s25, 1
        %s331 = sand.u32 %s59, 1
        %s332 = scalar_lea.sflag [#allocation4], %s331
        %s333 = sand.u32 %s59, 1
        %s334 = smul.addr %s333, 128
        %s335 = scalar_lea.vmem [#allocation3], %s334
        // Predicated region
        $region49: #{tpu_custom_call.1} parent=47 // pred_check
          %p336 = pneg %p72
        $region50: #{tpu_custom_call.1} parent=47 // pred_check_branch
          %338 = sbr.rel (%p336) target = $region52
        $region51: #{tpu_custom_call.1} parent=47 // pred_region
          %339 = dma.done %s332, 2048
        $region52: #{tpu_custom_call.1} parent=47 // pred_fallthru
          _
        %s340 = sand.u32 %s30, 1
        %s341 = scalar_lea.sflag [#allocation7], %s340
        %s342 = sand.u32 %s85, 1
        %s343 = smul.addr %s342, 128
        %s344 = scalar_lea.vmem [#allocation6], %s343
        // Predicated region
        $region53: #{tpu_custom_call.1} parent=47 // pred_check
          %p345 = pneg %p98
        $region54: #{tpu_custom_call.1} parent=47 // pred_check_branch
          %347 = sbr.rel (%p345) target = $region56
        $region55: #{tpu_custom_call.1} parent=47 // pred_region
          %348 = dma.done %s341, 2048
        $region56: #{tpu_custom_call.1} parent=47 // pred_fallthru
          _
        // Predicated region
        $region57: #{tpu_custom_call.1} parent=47 // pred_check
          %p349 = pneg %p119
        $region58: #{tpu_custom_call.1} parent=47 // pred_check_branch
          %351 = sbr.rel (%p349) target = $region60
        $region59: #{tpu_custom_call.1} parent=47 // pred_region
          %352 = dma.done [#allocation7], 1024
        $region60: #{tpu_custom_call.1} parent=47 // pred_fallthru
          _
        // Predicated region
        $region61: #{tpu_custom_call.1} parent=47 // pred_check
          %p353 = pneg %p140
        $region62: #{tpu_custom_call.1} parent=47 // pred_check_branch
          %355 = sbr.rel (%p353) target = $region64
        $region63: #{tpu_custom_call.1} parent=47 // pred_region
          %356 = dma.done [#allocation10], 1024
        $region64: #{tpu_custom_call.1} parent=47 // pred_fallthru
          _
        // Predicated region
        $region65: #{tpu_custom_call.1} parent=47 // pred_check
          %p357 = pneg %p161
        $region66: #{tpu_custom_call.1} parent=47 // pred_check_branch
          %359 = sbr.rel (%p357) target = $region68
        $region67: #{tpu_custom_call.1} parent=47 // pred_region
          %360 = dma.done [#allocation10], 1024
        $region68: #{tpu_custom_call.1} parent=47 // pred_fallthru
          _
        // Predicated region
        $region69: #{tpu_custom_call.1} parent=47 // pred_check
          %p361 = pneg %p182
        $region70: #{tpu_custom_call.1} parent=47 // pred_check_branch
          %363 = sbr.rel (%p361) target = $region72
        $region71: #{tpu_custom_call.1} parent=47 // pred_region
          %364 = dma.done [#allocation13], 1024
        $region72: #{tpu_custom_call.1} parent=47 // pred_fallthru
          _
        %p365 = pneg %p46
        %p366 = pneg %p43
        %s367 = sand.u32 %s59, 1
        %s368 = scalar_lea.sflag [#allocation4], %s367
        %s369 = sand.u32 %s59, 1
        %s370 = smul.addr %s369, 128
        %s371 = scalar_lea.vmem [#allocation3], %s370
        %p372 = pneg %p72
        %p373 = pneg %p69
        %s374 = sand.u32 %s30, 1
        %s375 = scalar_lea.sflag [#allocation7], %s374
        %s376 = sand.u32 %s85, 1
        %s377 = smul.addr %s376, 128
        %s378 = scalar_lea.vmem [#allocation6], %s377
        %p379 = pneg %p98
        %p380 = pneg %p95
        %p381 = pneg %p119
        %p382 = pneg %p116
        %p383 = pneg %p140
        %p384 = pneg %p137
        %p385 = pneg %p161
        %p386 = pneg %p158
        %p387 = pneg %p182
        %p388 = pneg %p179
        %p389 = pneg %p208
        %p390 = pneg %p205
        %s391 = sand.u32 %s195, 1
        %s392 = scalar_lea.sflag [#allocation5], %s391
        %s393 = sand.u32 %s195, 1
        %s394 = smul.addr %s393, 128
        %s395 = scalar_lea.vmem [#allocation14], %s394
        %s396 = smul.u32 16, %s30
        %s397 = smul.u32 16, %s30
        %s398 = smul.u32 16, %s30
        %s400 = sld [smem:[#allocation2]]
        %v401 = vld [vmem:[%s344] sm:$0xff]
        %v402 = vld [vmem:[%s344 + $0x8] sm:$0xff]
        %v403 = vld [vmem:[%s344 + $0x10] sm:$0xff]
        %v404 = vld [vmem:[%s344 + $0x18] sm:$0xff]
        %v405 = vld [vmem:[%s344 + $0x20] sm:$0xff]
        %v406 = vld [vmem:[%s344 + $0x28] sm:$0xff]
        %v407 = vld [vmem:[%s344 + $0x30] sm:$0xff]
        %v408 = vld [vmem:[%s344 + $0x38] sm:$0xff]
        %v409 = vld [vmem:[%s344 + $0x40] sm:$0xff]
        %v410 = vld [vmem:[%s344 + $0x48] sm:$0xff]
        %v411 = vld [vmem:[%s344 + $0x50] sm:$0xff]
        %v412 = vld [vmem:[%s344 + $0x58] sm:$0xff]
        %v413 = vld [vmem:[%s344 + $0x60] sm:$0xff]
        %v414 = vld [vmem:[%s344 + $0x68] sm:$0xff]
        %v415 = vld [vmem:[%s344 + $0x70] sm:$0xff]
        %v416 = vld [vmem:[%s344 + $0x78] sm:$0xff]
        %v417 = vpack.c.bf16 %v402, %v401
        %v418 = vpack.c.bf16 %v404, %v403
        %v419 = vpack.c.bf16 %v406, %v405
        %v420 = vpack.c.bf16 %v408, %v407
        %v421 = vpack.c.bf16 %v410, %v409
        %v422 = vpack.c.bf16 %v412, %v411
        %v423 = vpack.c.bf16 %v414, %v413
        %v424 = vpack.c.bf16 %v416, %v415
        %v425 = vld [vmem:[#allocation9] sm:$0xf]
        %v426 = vld [vmem:[#allocation9 + $0x4] sm:$0xf]
        %v427 = vld [vmem:[#allocation9 + $0x8] sm:$0xf]
        %v428 = vld [vmem:[#allocation9 + $0xc] sm:$0xf]
        %v429 = vld [vmem:[#allocation9 + $0x10] sm:$0xf]
        %v430 = vld [vmem:[#allocation9 + $0x14] sm:$0xf]
        %v431 = vld [vmem:[#allocation9 + $0x18] sm:$0xf]
        %v432 = vld [vmem:[#allocation9 + $0x1c] sm:$0xf]
        %v433 = vld [vmem:[#allocation9 + $0x20] sm:$0xf]
        %v434 = vld [vmem:[#allocation9 + $0x24] sm:$0xf]
        %v435 = vld [vmem:[#allocation9 + $0x28] sm:$0xf]
        %v436 = vld [vmem:[#allocation9 + $0x2c] sm:$0xf]
        %v437 = vld [vmem:[#allocation9 + $0x30] sm:$0xf]
        %v438 = vld [vmem:[#allocation9 + $0x34] sm:$0xf]
        %v439 = vld [vmem:[#allocation9 + $0x38] sm:$0xf]
        %v440 = vld [vmem:[#allocation9 + $0x3c] sm:$0xf]
        %v457 = vunpack.c.l.b16 %v425
        %v458 = vunpack.c.l.b16 %v426
        %v459 = vunpack.c.l.b16 %v427
        %v460 = vunpack.c.l.b16 %v428
        %v461 = vunpack.c.l.b16 %v429
        %v462 = vunpack.c.l.b16 %v430
        %v463 = vunpack.c.l.b16 %v431
        %v464 = vunpack.c.l.b16 %v432
        %v465 = vunpack.c.l.b16 %v433
        %v466 = vunpack.c.l.b16 %v434
        %v467 = vunpack.c.l.b16 %v435
        %v468 = vunpack.c.l.b16 %v436
        %v469 = vunpack.c.l.b16 %v437
        %v470 = vunpack.c.l.b16 %v438
        %v471 = vunpack.c.l.b16 %v439
        %v472 = vunpack.c.l.b16 %v440
        %v473 = vpack.c.b16 %v458, %v457
        %v474 = vpack.c.b16 %v460, %v459
        %v475 = vpack.c.b16 %v462, %v461
        %v476 = vpack.c.b16 %v464, %v463
        %v477 = vpack.c.b16 %v466, %v465
        %v478 = vpack.c.b16 %v468, %v467
        %v479 = vpack.c.b16 %v470, %v469
        %v480 = vpack.c.b16 %v472, %v471
        %489 = vmatprep.subr.bf16.mxu0 0
        %490 = vmatpush1.bf16.msra.mxu0 %v473
        %491 = vmatprep.subr.bf16.mxu0 0
        %492 = vmatpush1.bf16.msra.mxu0 %v474
        %493 = vmatprep.subr.bf16.mxu0 0
        %494 = vmatpush1.bf16.msra.mxu0 %v475
        %495 = vmatprep.subr.bf16.mxu0 0
        %496 = vmatpush1.bf16.msra.mxu0 %v476
        %497 = vmatprep.subr.bf16.mxu0 0
        %498 = vmatpush1.bf16.msra.mxu0 %v477
        %499 = vmatprep.subr.bf16.mxu0 0
        %500 = vmatpush1.bf16.msra.mxu0 %v478
        %501 = vmatprep.subr.bf16.mxu0 0
        %502 = vmatpush1.bf16.msra.mxu0 %v479
        %503 = vmatprep.subr.bf16.mxu0 0
        %504 = vmatpush1.bf16.msra.mxu0 %v480
        %505 = vmatprep.subr.bf16.mxu0 0
        %506 = vmatpush1.bf16.msra.mxu0 0
        %507 = vmatprep.subr.bf16.mxu0 0
        %508 = vmatpush1.bf16.msra.mxu0 0
        %509 = vmatprep.subr.bf16.mxu0 0
        %510 = vmatpush1.bf16.msra.mxu0 0
        %511 = vmatprep.subr.bf16.mxu0 0
        %512 = vmatpush1.bf16.msra.mxu0 0
        %513 = vmatprep.subr.bf16.mxu0 0
        %514 = vmatpush1.bf16.msra.mxu0 0
        %515 = vmatprep.subr.bf16.mxu0 0
        %516 = vmatpush1.bf16.msra.mxu0 0
        %517 = vmatprep.subr.bf16.mxu0 0
        %518 = vmatpush1.bf16.msra.mxu0 0
        %519 = vmatprep.subr.bf16.mxu0 0
        %520 = vmatpush1.bf16.msra.mxu0 0
        %521 = vmatprep.mubr.bf16.mxu0 0
        %522 = vmatmul.mubr.bf16.gmra.mrb[0].mxu0 %v417
        %v523 = vpop.f32.mrb[0].mxu0
        %v524 = vadd.f32 0.0, %v523
        %v525 = vpop.f32.mrb[0].mxu0
        %v526 = vpop.f32.mrb[0].mxu0
        %v527 = vadd.f32 0.0, %v526
        %v528 = vpop.f32.mrb[0].mxu0
        %529 = vmatprep.mubr.bf16.mxu0 0
        %530 = vmatmul.mubr.bf16.gmra.mrb[0].mxu0 %v418
        %v531 = vpop.f32.mrb[0].mxu0
        %v532 = vadd.f32 0.0, %v531
        %v533 = vpop.f32.mrb[0].mxu0
        %v534 = vpop.f32.mrb[0].mxu0
        %v535 = vadd.f32 0.0, %v534
        %v536 = vpop.f32.mrb[0].mxu0
        %537 = vmatprep.mubr.bf16.mxu0 0
        %538 = vmatmul.mubr.bf16.gmra.mrb[0].mxu0 %v419
        %v539 = vpop.f32.mrb[0].mxu0
        %v540 = vadd.f32 0.0, %v539
        %v541 = vpop.f32.mrb[0].mxu0
        %v542 = vpop.f32.mrb[0].mxu0
        %v543 = vadd.f32 0.0, %v542
        %v544 = vpop.f32.mrb[0].mxu0
        %545 = vmatprep.mubr.bf16.mxu0 0
        %546 = vmatmul.mubr.bf16.gmra.mrb[0].mxu0 %v420
        %v547 = vpop.f32.mrb[0].mxu0
        %v548 = vadd.f32 0.0, %v547
        %v549 = vpop.f32.mrb[0].mxu0
        %v550 = vpop.f32.mrb[0].mxu0
        %v551 = vadd.f32 0.0, %v550
        %v552 = vpop.f32.mrb[0].mxu0
        %553 = vmatprep.mubr.bf16.mxu0 0
        %554 = vmatmul.mubr.bf16.gmra.mrb[0].mxu0 %v421
        %v555 = vpop.f32.mrb[0].mxu0
        %v556 = vadd.f32 0.0, %v555
        %v557 = vpop.f32.mrb[0].mxu0
        %v558 = vpop.f32.mrb[0].mxu0
        %v559 = vadd.f32 0.0, %v558
        %v560 = vpop.f32.mrb[0].mxu0
        %561 = vmatprep.mubr.bf16.mxu0 0
        %562 = vmatmul.mubr.bf16.gmra.mrb[0].mxu0 %v422
        %v563 = vpop.f32.mrb[0].mxu0
        %v564 = vadd.f32 0.0, %v563
        %v565 = vpop.f32.mrb[0].mxu0
        %v566 = vpop.f32.mrb[0].mxu0
        %v567 = vadd.f32 0.0, %v566
        %v568 = vpop.f32.mrb[0].mxu0
        %569 = vmatprep.mubr.bf16.mxu0 0
        %570 = vmatmul.mubr.bf16.gmra.mrb[0].mxu0 %v423
        %v571 = vpop.f32.mrb[0].mxu0
        %v572 = vadd.f32 0.0, %v571
        %v573 = vpop.f32.mrb[0].mxu0
        %v574 = vpop.f32.mrb[0].mxu0
        %v575 = vadd.f32 0.0, %v574
        %v576 = vpop.f32.mrb[0].mxu0
        %577 = vmatprep.mubr.bf16.mxu0 0
        %578 = vmatmul.mubr.bf16.gmra.mrb[0].mxu0 %v424
        %v579 = vpop.f32.mrb[0].mxu0
        %v580 = vadd.f32 0.0, %v579
        %v581 = vpop.f32.mrb[0].mxu0
        %v582 = vpop.f32.mrb[0].mxu0
        %v583 = vadd.f32 0.0, %v582
        %v584 = vpop.f32.mrb[0].mxu0
        %585 = vdwg.mxu0
        %v586 = vld [vmem:[%s335] sm:$0xff]
        %v587 = vld [vmem:[%s335 + $0x8] sm:$0xff]
        %v588 = vld [vmem:[%s335 + $0x10] sm:$0xff]
        %v589 = vld [vmem:[%s335 + $0x18] sm:$0xff]
        %v590 = vld [vmem:[%s335 + $0x20] sm:$0xff]
        %v591 = vld [vmem:[%s335 + $0x28] sm:$0xff]
        %v592 = vld [vmem:[%s335 + $0x30] sm:$0xff]
        %v593 = vld [vmem:[%s335 + $0x38] sm:$0xff]
        %v594 = vld [vmem:[%s335 + $0x40] sm:$0xff]
        %v595 = vld [vmem:[%s335 + $0x48] sm:$0xff]
        %v596 = vld [vmem:[%s335 + $0x50] sm:$0xff]
        %v597 = vld [vmem:[%s335 + $0x58] sm:$0xff]
        %v598 = vld [vmem:[%s335 + $0x60] sm:$0xff]
        %v599 = vld [vmem:[%s335 + $0x68] sm:$0xff]
        %v600 = vld [vmem:[%s335 + $0x70] sm:$0xff]
        %v601 = vld [vmem:[%s335 + $0x78] sm:$0xff]
        %v602 = vpack.c.bf16 %v587, %v586
        %v603 = vpack.c.bf16 %v589, %v588
        %v604 = vpack.c.bf16 %v591, %v590
        %v605 = vpack.c.bf16 %v593, %v592
        %v606 = vpack.c.bf16 %v595, %v594
        %v607 = vpack.c.bf16 %v597, %v596
        %v608 = vpack.c.bf16 %v599, %v598
        %v609 = vpack.c.bf16 %v601, %v600
        %v610 = vld [vmem:[#allocation8] sm:$0xf]
        %v611 = vld [vmem:[#allocation8 + $0x4] sm:$0xf]
        %v612 = vld [vmem:[#allocation8 + $0x8] sm:$0xf]
        %v613 = vld [vmem:[#allocation8 + $0xc] sm:$0xf]
        %v614 = vld [vmem:[#allocation8 + $0x10] sm:$0xf]
        %v615 = vld [vmem:[#allocation8 + $0x14] sm:$0xf]
        %v616 = vld [vmem:[#allocation8 + $0x18] sm:$0xf]
        %v617 = vld [vmem:[#allocation8 + $0x1c] sm:$0xf]
        %v618 = vld [vmem:[#allocation8 + $0x20] sm:$0xf]
        %v619 = vld [vmem:[#allocation8 + $0x24] sm:$0xf]
        %v620 = vld [vmem:[#allocation8 + $0x28] sm:$0xf]
        %v621 = vld [vmem:[#allocation8 + $0x2c] sm:$0xf]
        %v622 = vld [vmem:[#allocation8 + $0x30] sm:$0xf]
        %v623 = vld [vmem:[#allocation8 + $0x34] sm:$0xf]
        %v624 = vld [vmem:[#allocation8 + $0x38] sm:$0xf]
        %v625 = vld [vmem:[#allocation8 + $0x3c] sm:$0xf]
        %v642 = vunpack.c.l.b16 %v610
        %v643 = vunpack.c.l.b16 %v611
        %v644 = vunpack.c.l.b16 %v612
        %v645 = vunpack.c.l.b16 %v613
        %v646 = vunpack.c.l.b16 %v614
        %v647 = vunpack.c.l.b16 %v615
        %v648 = vunpack.c.l.b16 %v616
        %v649 = vunpack.c.l.b16 %v617
        %v650 = vunpack.c.l.b16 %v618
        %v651 = vunpack.c.l.b16 %v619
        %v652 = vunpack.c.l.b16 %v620
        %v653 = vunpack.c.l.b16 %v621
        %v654 = vunpack.c.l.b16 %v622
        %v655 = vunpack.c.l.b16 %v623
        %v656 = vunpack.c.l.b16 %v624
        %v657 = vunpack.c.l.b16 %v625
        %v658 = vpack.c.b16 %v643, %v642
        %v659 = vpack.c.b16 %v645, %v644
        %v660 = vpack.c.b16 %v647, %v646
        %v661 = vpack.c.b16 %v649, %v648
        %v662 = vpack.c.b16 %v651, %v650
        %v663 = vpack.c.b16 %v653, %v652
        %v664 = vpack.c.b16 %v655, %v654
        %v665 = vpack.c.b16 %v657, %v656
        %674 = vmatprep.subr.bf16.mxu0 0
        %675 = vmatpush1.bf16.msra.mxu0 %v658
        %676 = vmatprep.subr.bf16.mxu0 0
        %677 = vmatpush1.bf16.msra.mxu0 %v659
        %678 = vmatprep.subr.bf16.mxu0 0
        %679 = vmatpush1.bf16.msra.mxu0 %v660
        %680 = vmatprep.subr.bf16.mxu0 0
        %681 = vmatpush1.bf16.msra.mxu0 %v661
        %682 = vmatprep.subr.bf16.mxu0 0
        %683 = vmatpush1.bf16.msra.mxu0 %v662
        %684 = vmatprep.subr.bf16.mxu0 0
        %685 = vmatpush1.bf16.msra.mxu0 %v663
        %686 = vmatprep.subr.bf16.mxu0 0
        %687 = vmatpush1.bf16.msra.mxu0 %v664
        %688 = vmatprep.subr.bf16.mxu0 0
        %689 = vmatpush1.bf16.msra.mxu0 %v665
        %690 = vmatprep.subr.bf16.mxu0 0
        %691 = vmatpush1.bf16.msra.mxu0 0
        %692 = vmatprep.subr.bf16.mxu0 0
        %693 = vmatpush1.bf16.msra.mxu0 0
        %694 = vmatprep.subr.bf16.mxu0 0
        %695 = vmatpush1.bf16.msra.mxu0 0
        %696 = vmatprep.subr.bf16.mxu0 0
        %697 = vmatpush1.bf16.msra.mxu0 0
        %698 = vmatprep.subr.bf16.mxu0 0
        %699 = vmatpush1.bf16.msra.mxu0 0
        %700 = vmatprep.subr.bf16.mxu0 0
        %701 = vmatpush1.bf16.msra.mxu0 0
        %702 = vmatprep.subr.bf16.mxu0 0
        %703 = vmatpush1.bf16.msra.mxu0 0
        %704 = vmatprep.subr.bf16.mxu0 0
        %705 = vmatpush1.bf16.msra.mxu0 0
        %706 = vmatprep.mubr.bf16.mxu0 0
        %707 = vmatmul.mubr.bf16.gmra.mrb[0].mxu0 %v602
        %v708 = vpop.f32.mrb[0].mxu0
        %v709 = vadd.f32 %v524, %v708
        %v710 = vpop.f32.mrb[0].mxu0
        %v711 = vpop.f32.mrb[0].mxu0
        %v712 = vadd.f32 %v527, %v711
        %v713 = vpop.f32.mrb[0].mxu0
        %714 = vmatprep.mubr.bf16.mxu0 0
        %715 = vmatmul.mubr.bf16.gmra.mrb[0].mxu0 %v603
        %v716 = vpop.f32.mrb[0].mxu0
        %v717 = vadd.f32 %v532, %v716
        %v718 = vpop.f32.mrb[0].mxu0
        %v719 = vpop.f32.mrb[0].mxu0
        %v720 = vadd.f32 %v535, %v719
        %v721 = vpop.f32.mrb[0].mxu0
        %722 = vmatprep.mubr.bf16.mxu0 0
        %723 = vmatmul.mubr.bf16.gmra.mrb[0].mxu0 %v604
        %v724 = vpop.f32.mrb[0].mxu0
        %v725 = vadd.f32 %v540, %v724
        %v726 = vpop.f32.mrb[0].mxu0
        %v727 = vpop.f32.mrb[0].mxu0
        %v728 = vadd.f32 %v543, %v727
        %v729 = vpop.f32.mrb[0].mxu0
        %730 = vmatprep.mubr.bf16.mxu0 0
        %731 = vmatmul.mubr.bf16.gmra.mrb[0].mxu0 %v605
        %v732 = vpop.f32.mrb[0].mxu0
        %v733 = vadd.f32 %v548, %v732
        %v734 = vpop.f32.mrb[0].mxu0
        %v735 = vpop.f32.mrb[0].mxu0
        %v736 = vadd.f32 %v551, %v735
        %v737 = vpop.f32.mrb[0].mxu0
        %738 = vmatprep.mubr.bf16.mxu0 0
        %739 = vmatmul.mubr.bf16.gmra.mrb[0].mxu0 %v606
        %v740 = vpop.f32.mrb[0].mxu0
        %v741 = vadd.f32 %v556, %v740
        %v742 = vpop.f32.mrb[0].mxu0
        %v743 = vpop.f32.mrb[0].mxu0
        %v744 = vadd.f32 %v559, %v743
        %v745 = vpop.f32.mrb[0].mxu0
        %746 = vmatprep.mubr.bf16.mxu0 0
        %747 = vmatmul.mubr.bf16.gmra.mrb[0].mxu0 %v607
        %v748 = vpop.f32.mrb[0].mxu0
        %v749 = vadd.f32 %v564, %v748
        %v750 = vpop.f32.mrb[0].mxu0
        %v751 = vpop.f32.mrb[0].mxu0
        %v752 = vadd.f32 %v567, %v751
        %v753 = vpop.f32.mrb[0].mxu0
        %754 = vmatprep.mubr.bf16.mxu0 0
        %755 = vmatmul.mubr.bf16.gmra.mrb[0].mxu0 %v608
        %v756 = vpop.f32.mrb[0].mxu0
        %v757 = vadd.f32 %v572, %v756
        %v758 = vpop.f32.mrb[0].mxu0
        %v759 = vpop.f32.mrb[0].mxu0
        %v760 = vadd.f32 %v575, %v759
        %v761 = vpop.f32.mrb[0].mxu0
        %762 = vmatprep.mubr.bf16.mxu0 0
        %763 = vmatmul.mubr.bf16.gmra.mrb[0].mxu0 %v609
        %v764 = vpop.f32.mrb[0].mxu0
        %v765 = vadd.f32 %v580, %v764
        %v766 = vpop.f32.mrb[0].mxu0
        %v767 = vpop.f32.mrb[0].mxu0
        %v768 = vadd.f32 %v583, %v767
        %v769 = vpop.f32.mrb[0].mxu0
        %770 = vdwg.mxu0
        %v771 = vtanh.pop %v709
        %v772 = vtanh.pop %v712
        %v773 = vtanh.pop %v717
        %v774 = vtanh.pop %v720
        %v775 = vtanh.pop %v725
        %v776 = vtanh.pop %v728
        %v777 = vtanh.pop %v733
        %v778 = vtanh.pop %v736
        %v779 = vtanh.pop %v741
        %v780 = vtanh.pop %v744
        %v781 = vtanh.pop %v749
        %v782 = vtanh.pop %v752
        %v783 = vtanh.pop %v757
        %v784 = vtanh.pop %v760
        %v785 = vtanh.pop %v765
        %v786 = vtanh.pop %v768
        %v787 = vand.u32 2147483647, %v771
        %v788 = vand.u32 2147483647, %v772
        %v789 = vand.u32 2147483647, %v773
        %v790 = vand.u32 2147483647, %v774
        %v791 = vand.u32 2147483647, %v775
        %v792 = vand.u32 2147483647, %v776
        %v793 = vand.u32 2147483647, %v777
        %v794 = vand.u32 2147483647, %v778
        %v795 = vand.u32 2147483647, %v779
        %v796 = vand.u32 2147483647, %v780
        %v797 = vand.u32 2147483647, %v781
        %v798 = vand.u32 2147483647, %v782
        %v799 = vand.u32 2147483647, %v783
        %v800 = vand.u32 2147483647, %v784
        %v801 = vand.u32 2147483647, %v785
        %v802 = vand.u32 2147483647, %v786
        %v803 = vmax.f32 %v787, 1e-12
        %v804 = vmax.f32 %v788, 1e-12
        %v805 = vmax.f32 %v789, 1e-12
        %v806 = vmax.f32 %v790, 1e-12
        %v807 = vmax.f32 %v791, 1e-12
        %v808 = vmax.f32 %v792, 1e-12
        %v809 = vmax.f32 %v793, 1e-12
        %v810 = vmax.f32 %v794, 1e-12
        %v811 = vmax.f32 %v795, 1e-12
        %v812 = vmax.f32 %v796, 1e-12
        %v813 = vmax.f32 %v797, 1e-12
        %v814 = vmax.f32 %v798, 1e-12
        %v815 = vmax.f32 %v799, 1e-12
        %v816 = vmax.f32 %v800, 1e-12
        %v817 = vmax.f32 %v801, 1e-12
        %v818 = vmax.f32 %v802, 1e-12
        %v819 = vlog2.pop %v803
        %v820 = vmul.f32 %v819, 0.6931472
        %v821 = vlog2.pop %v804
        %v822 = vmul.f32 %v821, 0.6931472
        %v823 = vlog2.pop %v805
        %v824 = vmul.f32 %v823, 0.6931472
        %v825 = vlog2.pop %v806
        %v826 = vmul.f32 %v825, 0.6931472
        %v827 = vlog2.pop %v807
        %v828 = vmul.f32 %v827, 0.6931472
        %v829 = vlog2.pop %v808
        %v830 = vmul.f32 %v829, 0.6931472
        %v831 = vlog2.pop %v809
        %v832 = vmul.f32 %v831, 0.6931472
        %v833 = vlog2.pop %v810
        %v834 = vmul.f32 %v833, 0.6931472
        %v835 = vlog2.pop %v811
        %v836 = vmul.f32 %v835, 0.6931472
        %v837 = vlog2.pop %v812
        %v838 = vmul.f32 %v837, 0.6931472
        %v839 = vlog2.pop %v813
        %v840 = vmul.f32 %v839, 0.6931472
        %v841 = vlog2.pop %v814
        %v842 = vmul.f32 %v841, 0.6931472
        %v843 = vlog2.pop %v815
        %v844 = vmul.f32 %v843, 0.6931472
        %v845 = vlog2.pop %v816
        %v846 = vmul.f32 %v845, 0.6931472
        %v847 = vlog2.pop %v817
        %v848 = vmul.f32 %v847, 0.6931472
        %v849 = vlog2.pop %v818
        %v850 = vmul.f32 %v849, 0.6931472
        %vm851 = vcmp.lt.f32.partialorder %v771, 0.0
        %vm852 = vcmp.lt.f32.partialorder %v772, 0.0
        %vm853 = vcmp.lt.f32.partialorder %v773, 0.0
        %vm854 = vcmp.lt.f32.partialorder %v774, 0.0
        %vm855 = vcmp.lt.f32.partialorder %v775, 0.0
        %vm856 = vcmp.lt.f32.partialorder %v776, 0.0
        %vm857 = vcmp.lt.f32.partialorder %v777, 0.0
        %vm858 = vcmp.lt.f32.partialorder %v778, 0.0
        %vm859 = vcmp.lt.f32.partialorder %v779, 0.0
        %vm860 = vcmp.lt.f32.partialorder %v780, 0.0
        %vm861 = vcmp.lt.f32.partialorder %v781, 0.0
        %vm862 = vcmp.lt.f32.partialorder %v782, 0.0
        %vm863 = vcmp.lt.f32.partialorder %v783, 0.0
        %vm864 = vcmp.lt.f32.partialorder %v784, 0.0
        %vm865 = vcmp.lt.f32.partialorder %v785, 0.0
        %vm866 = vcmp.lt.f32.partialorder %v786, 0.0
        %v867 = vsel %vm851, 1, 0
        %v868 = vsel %vm852, 1, 0
        %v869 = vsel %vm853, 1, 0
        %v870 = vsel %vm854, 1, 0
        %v871 = vsel %vm855, 1, 0
        %v872 = vsel %vm856, 1, 0
        %v873 = vsel %vm857, 1, 0
        %v874 = vsel %vm858, 1, 0
        %v875 = vsel %vm859, 1, 0
        %v876 = vsel %vm860, 1, 0
        %v877 = vsel %vm861, 1, 0
        %v878 = vsel %vm862, 1, 0
        %v879 = vsel %vm863, 1, 0
        %v880 = vsel %vm864, 1, 0
        %v881 = vsel %vm865, 1, 0
        %v882 = vsel %vm866, 1, 0
        %v883 = vcvt.s32.f32 %v867
        %v884 = vcvt.s32.f32 %v868
        %v885 = vcvt.s32.f32 %v869
        %v886 = vcvt.s32.f32 %v870
        %v887 = vcvt.s32.f32 %v871
        %v888 = vcvt.s32.f32 %v872
        %v889 = vcvt.s32.f32 %v873
        %v890 = vcvt.s32.f32 %v874
        %v891 = vcvt.s32.f32 %v875
        %v892 = vcvt.s32.f32 %v876
        %v893 = vcvt.s32.f32 %v877
        %v894 = vcvt.s32.f32 %v878
        %v895 = vcvt.s32.f32 %v879
        %v896 = vcvt.s32.f32 %v880
        %v897 = vcvt.s32.f32 %v881
        %v898 = vcvt.s32.f32 %v882
        %v899 = vpack.c.bf16 %v884, %v883
        %v900 = vpack.c.bf16 %v886, %v885
        %v901 = vpack.c.bf16 %v888, %v887
        %v902 = vpack.c.bf16 %v890, %v889
        %v903 = vpack.c.bf16 %v892, %v891
        %v904 = vpack.c.bf16 %v894, %v893
        %v905 = vpack.c.bf16 %v896, %v895
        %v906 = vpack.c.bf16 %v898, %v897
        %v907 = vpack.c.bf16 %v822, %v820
        %v908 = vpack.c.bf16 %v826, %v824
        %v909 = vpack.c.bf16 %v830, %v828
        %v910 = vpack.c.bf16 %v834, %v832
        %v911 = vpack.c.bf16 %v838, %v836
        %v912 = vpack.c.bf16 %v842, %v840
        %v913 = vpack.c.bf16 %v846, %v844
        %v914 = vpack.c.bf16 %v850, %v848
        %v915 = vld [vmem:[#allocation11] sm:$0xf]
        %v916 = vld [vmem:[#allocation11 + $0x4] sm:$0xf]
        %v917 = vld [vmem:[#allocation11 + $0x8] sm:$0xf]
        %v918 = vld [vmem:[#allocation11 + $0xc] sm:$0xf]
        %v919 = vld [vmem:[#allocation11 + $0x10] sm:$0xf]
        %v920 = vld [vmem:[#allocation11 + $0x14] sm:$0xf]
        %v921 = vld [vmem:[#allocation11 + $0x18] sm:$0xf]
        %v922 = vld [vmem:[#allocation11 + $0x1c] sm:$0xf]
        %v923 = vld [vmem:[#allocation11 + $0x20] sm:$0xf]
        %v924 = vld [vmem:[#allocation11 + $0x24] sm:$0xf]
        %v925 = vld [vmem:[#allocation11 + $0x28] sm:$0xf]
        %v926 = vld [vmem:[#allocation11 + $0x2c] sm:$0xf]
        %v927 = vld [vmem:[#allocation11 + $0x30] sm:$0xf]
        %v928 = vld [vmem:[#allocation11 + $0x34] sm:$0xf]
        %v929 = vld [vmem:[#allocation11 + $0x38] sm:$0xf]
        %v930 = vld [vmem:[#allocation11 + $0x3c] sm:$0xf]
        %v947 = vunpack.c.l.b16 %v915
        %v948 = vunpack.c.l.b16 %v916
        %v949 = vunpack.c.l.b16 %v917
        %v950 = vunpack.c.l.b16 %v918
        %v951 = vunpack.c.l.b16 %v919
        %v952 = vunpack.c.l.b16 %v920
        %v953 = vunpack.c.l.b16 %v921
        %v954 = vunpack.c.l.b16 %v922
        %v955 = vunpack.c.l.b16 %v923
        %v956 = vunpack.c.l.b16 %v924
        %v957 = vunpack.c.l.b16 %v925
        %v958 = vunpack.c.l.b16 %v926
        %v959 = vunpack.c.l.b16 %v927
        %v960 = vunpack.c.l.b16 %v928
        %v961 = vunpack.c.l.b16 %v929
        %v962 = vunpack.c.l.b16 %v930
        %v963 = vpack.c.b16 %v948, %v947
        %v964 = vpack.c.b16 %v950, %v949
        %v965 = vpack.c.b16 %v952, %v951
        %v966 = vpack.c.b16 %v954, %v953
        %v967 = vpack.c.b16 %v956, %v955
        %v968 = vpack.c.b16 %v958, %v957
        %v969 = vpack.c.b16 %v960, %v959
        %v970 = vpack.c.b16 %v962, %v961
        %979 = vmatprep.subr.bf16.mxu0 0
        %980 = vmatpush1.bf16.msra.mxu0 %v963
        %981 = vmatprep.subr.bf16.mxu0 0
        %982 = vmatpush1.bf16.msra.mxu0 %v964
        %983 = vmatprep.subr.bf16.mxu0 0
        %984 = vmatpush1.bf16.msra.mxu0 %v965
        %985 = vmatprep.subr.bf16.mxu0 0
        %986 = vmatpush1.bf16.msra.mxu0 %v966
        %987 = vmatprep.subr.bf16.mxu0 0
        %988 = vmatpush1.bf16.msra.mxu0 %v967
        %989 = vmatprep.subr.bf16.mxu0 0
        %990 = vmatpush1.bf16.msra.mxu0 %v968
        %991 = vmatprep.subr.bf16.mxu0 0
        %992 = vmatpush1.bf16.msra.mxu0 %v969
        %993 = vmatprep.subr.bf16.mxu0 0
        %994 = vmatpush1.bf16.msra.mxu0 %v970
        %995 = vmatprep.subr.bf16.mxu0 0
        %996 = vmatpush1.bf16.msra.mxu0 0
        %997 = vmatprep.subr.bf16.mxu0 0
        %998 = vmatpush1.bf16.msra.mxu0 0
        %999 = vmatprep.subr.bf16.mxu0 0
        %1000 = vmatpush1.bf16.msra.mxu0 0
        %1001 = vmatprep.subr.bf16.mxu0 0
        %1002 = vmatpush1.bf16.msra.mxu0 0
        %1003 = vmatprep.subr.bf16.mxu0 0
        %1004 = vmatpush1.bf16.msra.mxu0 0
        %1005 = vmatprep.subr.bf16.mxu0 0
        %1006 = vmatpush1.bf16.msra.mxu0 0
        %1007 = vmatprep.subr.bf16.mxu0 0
        %1008 = vmatpush1.bf16.msra.mxu0 0
        %1009 = vmatprep.subr.bf16.mxu0 0
        %1010 = vmatpush1.bf16.msra.mxu0 0
        %1011 = vmatprep.mubr.bf16.mxu0 0
        %1012 = vmatmul.mubr.bf16.gmra.mrb[0].mxu0 %v907
        %v1013 = vpop.f32.mrb[0].mxu0
        %v1014 = vadd.f32 0.0, %v1013
        %v1015 = vpop.f32.mrb[0].mxu0
        %v1016 = vpop.f32.mrb[0].mxu0
        %v1017 = vadd.f32 0.0, %v1016
        %v1018 = vpop.f32.mrb[0].mxu0
        %1019 = vmatprep.mubr.bf16.mxu0 0
        %1020 = vmatmul.mubr.bf16.gmra.mrb[0].mxu0 %v908
        %v1021 = vpop.f32.mrb[0].mxu0
        %v1022 = vadd.f32 0.0, %v1021
        %v1023 = vpop.f32.mrb[0].mxu0
        %v1024 = vpop.f32.mrb[0].mxu0
        %v1025 = vadd.f32 0.0, %v1024
        %v1026 = vpop.f32.mrb[0].mxu0
        %1027 = vmatprep.mubr.bf16.mxu0 0
        %1028 = vmatmul.mubr.bf16.gmra.mrb[0].mxu0 %v909
        %v1029 = vpop.f32.mrb[0].mxu0
        %v1030 = vadd.f32 0.0, %v1029
        %v1031 = vpop.f32.mrb[0].mxu0
        %v1032 = vpop.f32.mrb[0].mxu0
        %v1033 = vadd.f32 0.0, %v1032
        %v1034 = vpop.f32.mrb[0].mxu0
        %1035 = vmatprep.mubr.bf16.mxu0 0
        %1036 = vmatmul.mubr.bf16.gmra.mrb[0].mxu0 %v910
        %v1037 = vpop.f32.mrb[0].mxu0
        %v1038 = vadd.f32 0.0, %v1037
        %v1039 = vpop.f32.mrb[0].mxu0
        %v1040 = vpop.f32.mrb[0].mxu0
        %v1041 = vadd.f32 0.0, %v1040
        %v1042 = vpop.f32.mrb[0].mxu0
        %1043 = vmatprep.mubr.bf16.mxu0 0
        %1044 = vmatmul.mubr.bf16.gmra.mrb[0].mxu0 %v911
        %v1045 = vpop.f32.mrb[0].mxu0
        %v1046 = vadd.f32 0.0, %v1045
        %v1047 = vpop.f32.mrb[0].mxu0
        %v1048 = vpop.f32.mrb[0].mxu0
        %v1049 = vadd.f32 0.0, %v1048
        %v1050 = vpop.f32.mrb[0].mxu0
        %1051 = vmatprep.mubr.bf16.mxu0 0
        %1052 = vmatmul.mubr.bf16.gmra.mrb[0].mxu0 %v912
        %v1053 = vpop.f32.mrb[0].mxu0
        %v1054 = vadd.f32 0.0, %v1053
        %v1055 = vpop.f32.mrb[0].mxu0
        %v1056 = vpop.f32.mrb[0].mxu0
        %v1057 = vadd.f32 0.0, %v1056
        %v1058 = vpop.f32.mrb[0].mxu0
        %1059 = vmatprep.mubr.bf16.mxu0 0
        %1060 = vmatmul.mubr.bf16.gmra.mrb[0].mxu0 %v913
        %v1061 = vpop.f32.mrb[0].mxu0
        %v1062 = vadd.f32 0.0, %v1061
        %v1063 = vpop.f32.mrb[0].mxu0
        %v1064 = vpop.f32.mrb[0].mxu0
        %v1065 = vadd.f32 0.0, %v1064
        %v1066 = vpop.f32.mrb[0].mxu0
        %1067 = vmatprep.mubr.bf16.mxu0 0
        %1068 = vmatmul.mubr.bf16.gmra.mrb[0].mxu0 %v914
        %v1069 = vpop.f32.mrb[0].mxu0
        %v1070 = vadd.f32 0.0, %v1069
        %v1071 = vpop.f32.mrb[0].mxu0
        %v1072 = vpop.f32.mrb[0].mxu0
        %v1073 = vadd.f32 0.0, %v1072
        %v1074 = vpop.f32.mrb[0].mxu0
        %1075 = vdwg.mxu0
        %1076 = vmatprep.subr.bf16.mxu0 0
        %1077 = vmatpush1.bf16.msra.mxu0 %v963
        %1078 = vmatprep.subr.bf16.mxu0 0
        %1079 = vmatpush1.bf16.msra.mxu0 %v964
        %1080 = vmatprep.subr.bf16.mxu0 0
        %1081 = vmatpush1.bf16.msra.mxu0 %v965
        %1082 = vmatprep.subr.bf16.mxu0 0
        %1083 = vmatpush1.bf16.msra.mxu0 %v966
        %1084 = vmatprep.subr.bf16.mxu0 0
        %1085 = vmatpush1.bf16.msra.mxu0 %v967
        %1086 = vmatprep.subr.bf16.mxu0 0
        %1087 = vmatpush1.bf16.msra.mxu0 %v968
        %1088 = vmatprep.subr.bf16.mxu0 0
        %1089 = vmatpush1.bf16.msra.mxu0 %v969
        %1090 = vmatprep.subr.bf16.mxu0 0
        %1091 = vmatpush1.bf16.msra.mxu0 %v970
        %1092 = vmatprep.subr.bf16.mxu0 0
        %1093 = vmatpush1.bf16.msra.mxu0 0
        %1094 = vmatprep.subr.bf16.mxu0 0
        %1095 = vmatpush1.bf16.msra.mxu0 0
        %1096 = vmatprep.subr.bf16.mxu0 0
        %1097 = vmatpush1.bf16.msra.mxu0 0
        %1098 = vmatprep.subr.bf16.mxu0 0
        %1099 = vmatpush1.bf16.msra.mxu0 0
        %1100 = vmatprep.subr.bf16.mxu0 0
        %1101 = vmatpush1.bf16.msra.mxu0 0
        %1102 = vmatprep.subr.bf16.mxu0 0
        %1103 = vmatpush1.bf16.msra.mxu0 0
        %1104 = vmatprep.subr.bf16.mxu0 0
        %1105 = vmatpush1.bf16.msra.mxu0 0
        %1106 = vmatprep.subr.bf16.mxu0 0
        %1107 = vmatpush1.bf16.msra.mxu0 0
        %1108 = vmatprep.mubr.bf16.mxu0 0
        %1109 = vmatmul.mubr.bf16.gmra.mrb[0].mxu0 %v899
        %v1110 = vpop.f32.mrb[0].mxu0
        %v1111 = vadd.f32 0.0, %v1110
        %v1112 = vpop.f32.mrb[0].mxu0
        %v1113 = vpop.f32.mrb[0].mxu0
        %v1114 = vadd.f32 0.0, %v1113
        %v1115 = vpop.f32.mrb[0].mxu0
        %1116 = vmatprep.mubr.bf16.mxu0 0
        %1117 = vmatmul.mubr.bf16.gmra.mrb[0].mxu0 %v900
        %v1118 = vpop.f32.mrb[0].mxu0
        %v1119 = vadd.f32 0.0, %v1118
        %v1120 = vpop.f32.mrb[0].mxu0
        %v1121 = vpop.f32.mrb[0].mxu0
        %v1122 = vadd.f32 0.0, %v1121
        %v1123 = vpop.f32.mrb[0].mxu0
        %1124 = vmatprep.mubr.bf16.mxu0 0
        %1125 = vmatmul.mubr.bf16.gmra.mrb[0].mxu0 %v901
        %v1126 = vpop.f32.mrb[0].mxu0
        %v1127 = vadd.f32 0.0, %v1126
        %v1128 = vpop.f32.mrb[0].mxu0
        %v1129 = vpop.f32.mrb[0].mxu0
        %v1130 = vadd.f32 0.0, %v1129
        %v1131 = vpop.f32.mrb[0].mxu0
        %1132 = vmatprep.mubr.bf16.mxu0 0
        %1133 = vmatmul.mubr.bf16.gmra.mrb[0].mxu0 %v902
        %v1134 = vpop.f32.mrb[0].mxu0
        %v1135 = vadd.f32 0.0, %v1134
        %v1136 = vpop.f32.mrb[0].mxu0
        %v1137 = vpop.f32.mrb[0].mxu0
        %v1138 = vadd.f32 0.0, %v1137
        %v1139 = vpop.f32.mrb[0].mxu0
        %1140 = vmatprep.mubr.bf16.mxu0 0
        %1141 = vmatmul.mubr.bf16.gmra.mrb[0].mxu0 %v903
        %v1142 = vpop.f32.mrb[0].mxu0
        %v1143 = vadd.f32 0.0, %v1142
        %v1144 = vpop.f32.mrb[0].mxu0
        %v1145 = vpop.f32.mrb[0].mxu0
        %v1146 = vadd.f32 0.0, %v1145
        %v1147 = vpop.f32.mrb[0].mxu0
        %1148 = vmatprep.mubr.bf16.mxu0 0
        %1149 = vmatmul.mubr.bf16.gmra.mrb[0].mxu0 %v904
        %v1150 = vpop.f32.mrb[0].mxu0
        %v1151 = vadd.f32 0.0, %v1150
        %v1152 = vpop.f32.mrb[0].mxu0
        %v1153 = vpop.f32.mrb[0].mxu0
        %v1154 = vadd.f32 0.0, %v1153
        %v1155 = vpop.f32.mrb[0].mxu0
        %1156 = vmatprep.mubr.bf16.mxu0 0
        %1157 = vmatmul.mubr.bf16.gmra.mrb[0].mxu0 %v905
        %v1158 = vpop.f32.mrb[0].mxu0
        %v1159 = vadd.f32 0.0, %v1158
        %v1160 = vpop.f32.mrb[0].mxu0
        %v1161 = vpop.f32.mrb[0].mxu0
        %v1162 = vadd.f32 0.0, %v1161
        %v1163 = vpop.f32.mrb[0].mxu0
        %1164 = vmatprep.mubr.bf16.mxu0 0
        %1165 = vmatmul.mubr.bf16.gmra.mrb[0].mxu0 %v906
        %v1166 = vpop.f32.mrb[0].mxu0
        %v1167 = vadd.f32 0.0, %v1166
        %v1168 = vpop.f32.mrb[0].mxu0
        %v1169 = vpop.f32.mrb[0].mxu0
        %v1170 = vadd.f32 0.0, %v1169
        %v1171 = vpop.f32.mrb[0].mxu0
        %1172 = vdwg.mxu0
        %v1173 = vmul.f32 %v1111, 0.5
        %v1174 = vmul.f32 %v1114, 0.5
        %v1175 = vmul.f32 %v1119, 0.5
        %v1176 = vmul.f32 %v1122, 0.5
        %v1177 = vmul.f32 %v1127, 0.5
        %v1178 = vmul.f32 %v1130, 0.5
        %v1179 = vmul.f32 %v1135, 0.5
        %v1180 = vmul.f32 %v1138, 0.5
        %v1181 = vmul.f32 %v1143, 0.5
        %v1182 = vmul.f32 %v1146, 0.5
        %v1183 = vmul.f32 %v1151, 0.5
        %v1184 = vmul.f32 %v1154, 0.5
        %v1185 = vmul.f32 %v1159, 0.5
        %v1186 = vmul.f32 %v1162, 0.5
        %v1187 = vmul.f32 %v1167, 0.5
        %v1188 = vmul.f32 %v1170, 0.5
        %v1189 = vfloor.f32 %v1173
        %v1190 = vfloor.f32 %v1174
        %v1191 = vfloor.f32 %v1175
        %v1192 = vfloor.f32 %v1176
        %v1193 = vfloor.f32 %v1177
        %v1194 = vfloor.f32 %v1178
        %v1195 = vfloor.f32 %v1179
        %v1196 = vfloor.f32 %v1180
        %v1197 = vfloor.f32 %v1181
        %v1198 = vfloor.f32 %v1182
        %v1199 = vfloor.f32 %v1183
        %v1200 = vfloor.f32 %v1184
        %v1201 = vfloor.f32 %v1185
        %v1202 = vfloor.f32 %v1186
        %v1203 = vfloor.f32 %v1187
        %v1204 = vfloor.f32 %v1188
        %v1205 = vmul.f32 %v1189, 2.0
        %v1206 = vmul.f32 %v1190, 2.0
        %v1207 = vmul.f32 %v1191, 2.0
        %v1208 = vmul.f32 %v1192, 2.0
        %v1209 = vmul.f32 %v1193, 2.0
        %v1210 = vmul.f32 %v1194, 2.0
        %v1211 = vmul.f32 %v1195, 2.0
        %v1212 = vmul.f32 %v1196, 2.0
        %v1213 = vmul.f32 %v1197, 2.0
        %v1214 = vmul.f32 %v1198, 2.0
        %v1215 = vmul.f32 %v1199, 2.0
        %v1216 = vmul.f32 %v1200, 2.0
        %v1217 = vmul.f32 %v1201, 2.0
        %v1218 = vmul.f32 %v1202, 2.0
        %v1219 = vmul.f32 %v1203, 2.0
        %v1220 = vmul.f32 %v1204, 2.0
        %v1221 = vsub.f32 %v1111, %v1205
        %v1222 = vsub.f32 %v1114, %v1206
        %v1223 = vsub.f32 %v1119, %v1207
        %v1224 = vsub.f32 %v1122, %v1208
        %v1225 = vsub.f32 %v1127, %v1209
        %v1226 = vsub.f32 %v1130, %v1210
        %v1227 = vsub.f32 %v1135, %v1211
        %v1228 = vsub.f32 %v1138, %v1212
        %v1229 = vsub.f32 %v1143, %v1213
        %v1230 = vsub.f32 %v1146, %v1214
        %v1231 = vsub.f32 %v1151, %v1215
        %v1232 = vsub.f32 %v1154, %v1216
        %v1233 = vsub.f32 %v1159, %v1217
        %v1234 = vsub.f32 %v1162, %v1218
        %v1235 = vsub.f32 %v1167, %v1219
        %v1236 = vsub.f32 %v1170, %v1220
        %v1237 = vmul.f32 %v1221, 2.0
        %v1238 = vmul.f32 %v1222, 2.0
        %v1239 = vmul.f32 %v1223, 2.0
        %v1240 = vmul.f32 %v1224, 2.0
        %v1241 = vmul.f32 %v1225, 2.0
        %v1242 = vmul.f32 %v1226, 2.0
        %v1243 = vmul.f32 %v1227, 2.0
        %v1244 = vmul.f32 %v1228, 2.0
        %v1245 = vmul.f32 %v1229, 2.0
        %v1246 = vmul.f32 %v1230, 2.0
        %v1247 = vmul.f32 %v1231, 2.0
        %v1248 = vmul.f32 %v1232, 2.0
        %v1249 = vmul.f32 %v1233, 2.0
        %v1250 = vmul.f32 %v1234, 2.0
        %v1251 = vmul.f32 %v1235, 2.0
        %v1252 = vmul.f32 %v1236, 2.0
        %v1253 = vsub.f32 1.0, %v1237
        %v1254 = vsub.f32 1.0, %v1238
        %v1255 = vsub.f32 1.0, %v1239
        %v1256 = vsub.f32 1.0, %v1240
        %v1257 = vsub.f32 1.0, %v1241
        %v1258 = vsub.f32 1.0, %v1242
        %v1259 = vsub.f32 1.0, %v1243
        %v1260 = vsub.f32 1.0, %v1244
        %v1261 = vsub.f32 1.0, %v1245
        %v1262 = vsub.f32 1.0, %v1246
        %v1263 = vsub.f32 1.0, %v1247
        %v1264 = vsub.f32 1.0, %v1248
        %v1265 = vsub.f32 1.0, %v1249
        %v1266 = vsub.f32 1.0, %v1250
        %v1267 = vsub.f32 1.0, %v1251
        %v1268 = vsub.f32 1.0, %v1252
        %v1269 = vmul.f32 %v1014, 1.442695
        %v1270 = vpow.pop %v1269
        %v1271 = vmul.f32 %v1017, 1.442695
        %v1272 = vpow.pop %v1271
        %v1273 = vmul.f32 %v1022, 1.442695
        %v1274 = vpow.pop %v1273
        %v1275 = vmul.f32 %v1025, 1.442695
        %v1276 = vpow.pop %v1275
        %v1277 = vmul.f32 %v1030, 1.442695
        %v1278 = vpow.pop %v1277
        %v1279 = vmul.f32 %v1033, 1.442695
        %v1280 = vpow.pop %v1279
        %v1281 = vmul.f32 %v1038, 1.442695
        %v1282 = vpow.pop %v1281
        %v1283 = vmul.f32 %v1041, 1.442695
        %v1284 = vpow.pop %v1283
        %v1285 = vmul.f32 %v1046, 1.442695
        %v1286 = vpow.pop %v1285
        %v1287 = vmul.f32 %v1049, 1.442695
        %v1288 = vpow.pop %v1287
        %v1289 = vmul.f32 %v1054, 1.442695
        %v1290 = vpow.pop %v1289
        %v1291 = vmul.f32 %v1057, 1.442695
        %v1292 = vpow.pop %v1291
        %v1293 = vmul.f32 %v1062, 1.442695
        %v1294 = vpow.pop %v1293
        %v1295 = vmul.f32 %v1065, 1.442695
        %v1296 = vpow.pop %v1295
        %v1297 = vmul.f32 %v1070, 1.442695
        %v1298 = vpow.pop %v1297
        %v1299 = vmul.f32 %v1073, 1.442695
        %v1300 = vpow.pop %v1299
        %v1301 = vmul.f32 %v1253, %v1270
        %v1302 = vmul.f32 %v1254, %v1272
        %v1303 = vmul.f32 %v1255, %v1274
        %v1304 = vmul.f32 %v1256, %v1276
        %v1305 = vmul.f32 %v1257, %v1278
        %v1306 = vmul.f32 %v1258, %v1280
        %v1307 = vmul.f32 %v1259, %v1282
        %v1308 = vmul.f32 %v1260, %v1284
        %v1309 = vmul.f32 %v1261, %v1286
        %v1310 = vmul.f32 %v1262, %v1288
        %v1311 = vmul.f32 %v1263, %v1290
        %v1312 = vmul.f32 %v1264, %v1292
        %v1313 = vmul.f32 %v1265, %v1294
        %v1314 = vmul.f32 %v1266, %v1296
        %v1315 = vmul.f32 %v1267, %v1298
        %v1316 = vmul.f32 %v1268, %v1300
        %v1317 = vmax.f32 %v1301, -0.999999
        %v1318 = vmax.f32 %v1302, -0.999999
        %v1319 = vmax.f32 %v1303, -0.999999
        %v1320 = vmax.f32 %v1304, -0.999999
        %v1321 = vmax.f32 %v1305, -0.999999
        %v1322 = vmax.f32 %v1306, -0.999999
        %v1323 = vmax.f32 %v1307, -0.999999
        %v1324 = vmax.f32 %v1308, -0.999999
        %v1325 = vmax.f32 %v1309, -0.999999
        %v1326 = vmax.f32 %v1310, -0.999999
        %v1327 = vmax.f32 %v1311, -0.999999
        %v1328 = vmax.f32 %v1312, -0.999999
        %v1329 = vmax.f32 %v1313, -0.999999
        %v1330 = vmax.f32 %v1314, -0.999999
        %v1331 = vmax.f32 %v1315, -0.999999
        %v1332 = vmax.f32 %v1316, -0.999999
        %v1333 = vmin.f32 %v1317, 0.999999
        %v1334 = vmin.f32 %v1318, 0.999999
        %v1335 = vmin.f32 %v1319, 0.999999
        %v1336 = vmin.f32 %v1320, 0.999999
        %v1337 = vmin.f32 %v1321, 0.999999
        %v1338 = vmin.f32 %v1322, 0.999999
        %v1339 = vmin.f32 %v1323, 0.999999
        %v1340 = vmin.f32 %v1324, 0.999999
        %v1341 = vmin.f32 %v1325, 0.999999
        %v1342 = vmin.f32 %v1326, 0.999999
        %v1343 = vmin.f32 %v1327, 0.999999
        %v1344 = vmin.f32 %v1328, 0.999999
        %v1345 = vmin.f32 %v1329, 0.999999
        %v1346 = vmin.f32 %v1330, 0.999999
        %v1347 = vmin.f32 %v1331, 0.999999
        %v1348 = vmin.f32 %v1332, 0.999999
        %v1349 = vadd.f32 %v1333, 1.0
        %v1350 = vadd.f32 %v1334, 1.0
        %v1351 = vadd.f32 %v1335, 1.0
        %v1352 = vadd.f32 %v1336, 1.0
        %v1353 = vadd.f32 %v1337, 1.0
        %v1354 = vadd.f32 %v1338, 1.0
        %v1355 = vadd.f32 %v1339, 1.0
        %v1356 = vadd.f32 %v1340, 1.0
        %v1357 = vadd.f32 %v1341, 1.0
        %v1358 = vadd.f32 %v1342, 1.0
        %v1359 = vadd.f32 %v1343, 1.0
        %v1360 = vadd.f32 %v1344, 1.0
        %v1361 = vadd.f32 %v1345, 1.0
        %v1362 = vadd.f32 %v1346, 1.0
        %v1363 = vadd.f32 %v1347, 1.0
        %v1364 = vadd.f32 %v1348, 1.0
        %v1365 = vsub.f32 1.0, %v1333
        %v1366 = vsub.f32 1.0, %v1334
        %v1367 = vsub.f32 1.0, %v1335
        %v1368 = vsub.f32 1.0, %v1336
        %v1369 = vsub.f32 1.0, %v1337
        %v1370 = vsub.f32 1.0, %v1338
        %v1371 = vsub.f32 1.0, %v1339
        %v1372 = vsub.f32 1.0, %v1340
        %v1373 = vsub.f32 1.0, %v1341
        %v1374 = vsub.f32 1.0, %v1342
        %v1375 = vsub.f32 1.0, %v1343
        %v1376 = vsub.f32 1.0, %v1344
        %v1377 = vsub.f32 1.0, %v1345
        %v1378 = vsub.f32 1.0, %v1346
        %v1379 = vsub.f32 1.0, %v1347
        %v1380 = vsub.f32 1.0, %v1348
        %v1381 = vrcp.pop %v1365
        %v1382 = vmul.f32 %v1349, %v1381
        %v1383 = vrcp.pop %v1366
        %v1384 = vmul.f32 %v1350, %v1383
        %v1385 = vrcp.pop %v1367
        %v1386 = vmul.f32 %v1351, %v1385
        %v1387 = vrcp.pop %v1368
        %v1388 = vmul.f32 %v1352, %v1387
        %v1389 = vrcp.pop %v1369
        %v1390 = vmul.f32 %v1353, %v1389
        %v1391 = vrcp.pop %v1370
        %v1392 = vmul.f32 %v1354, %v1391
        %v1393 = vrcp.pop %v1371
        %v1394 = vmul.f32 %v1355, %v1393
        %v1395 = vrcp.pop %v1372
        %v1396 = vmul.f32 %v1356, %v1395
        %v1397 = vrcp.pop %v1373
        %v1398 = vmul.f32 %v1357, %v1397
        %v1399 = vrcp.pop %v1374
        %v1400 = vmul.f32 %v1358, %v1399
        %v1401 = vrcp.pop %v1375
        %v1402 = vmul.f32 %v1359, %v1401
        %v1403 = vrcp.pop %v1376
        %v1404 = vmul.f32 %v1360, %v1403
        %v1405 = vrcp.pop %v1377
        %v1406 = vmul.f32 %v1361, %v1405
        %v1407 = vrcp.pop %v1378
        %v1408 = vmul.f32 %v1362, %v1407
        %v1409 = vrcp.pop %v1379
        %v1410 = vmul.f32 %v1363, %v1409
        %v1411 = vrcp.pop %v1380
        %v1412 = vmul.f32 %v1364, %v1411
        %v1413 = vlog2.pop %v1382
        %v1414 = vmul.f32 %v1413, 0.6931472
        %v1415 = vlog2.pop %v1384
        %v1416 = vmul.f32 %v1415, 0.6931472
        %v1417 = vlog2.pop %v1386
        %v1418 = vmul.f32 %v1417, 0.6931472
        %v1419 = vlog2.pop %v1388
        %v1420 = vmul.f32 %v1419, 0.6931472
        %v1421 = vlog2.pop %v1390
        %v1422 = vmul.f32 %v1421, 0.6931472
        %v1423 = vlog2.pop %v1392
        %v1424 = vmul.f32 %v1423, 0.6931472
        %v1425 = vlog2.pop %v1394
        %v1426 = vmul.f32 %v1425, 0.6931472
        %v1427 = vlog2.pop %v1396
        %v1428 = vmul.f32 %v1427, 0.6931472
        %v1429 = vlog2.pop %v1398
        %v1430 = vmul.f32 %v1429, 0.6931472
        %v1431 = vlog2.pop %v1400
        %v1432 = vmul.f32 %v1431, 0.6931472
        %v1433 = vlog2.pop %v1402
        %v1434 = vmul.f32 %v1433, 0.6931472
        %v1435 = vlog2.pop %v1404
        %v1436 = vmul.f32 %v1435, 0.6931472
        %v1437 = vlog2.pop %v1406
        %v1438 = vmul.f32 %v1437, 0.6931472
        %v1439 = vlog2.pop %v1408
        %v1440 = vmul.f32 %v1439, 0.6931472
        %v1441 = vlog2.pop %v1410
        %v1442 = vmul.f32 %v1441, 0.6931472
        %v1443 = vlog2.pop %v1412
        %v1444 = vmul.f32 %v1443, 0.6931472
        %s1445 = ssub.f32 0.0, %s400
        %v1446 = vstv %s1445
        %v1447 = vmax.f32 %v1446, %v1414
        %v1448 = vmax.f32 %v1446, %v1416
        %v1449 = vmax.f32 %v1446, %v1418
        %v1450 = vmax.f32 %v1446, %v1420
        %v1451 = vmax.f32 %v1446, %v1422
        %v1452 = vmax.f32 %v1446, %v1424
        %v1453 = vmax.f32 %v1446, %v1426
        %v1454 = vmax.f32 %v1446, %v1428
        %v1455 = vmax.f32 %v1446, %v1430
        %v1456 = vmax.f32 %v1446, %v1432
        %v1457 = vmax.f32 %v1446, %v1434
        %v1458 = vmax.f32 %v1446, %v1436
        %v1459 = vmax.f32 %v1446, %v1438
        %v1460 = vmax.f32 %v1446, %v1440
        %v1461 = vmax.f32 %v1446, %v1442
        %v1462 = vmax.f32 %v1446, %v1444
        %v1463 = vstv %s400
        %v1464 = vmin.f32 %v1463, %v1447
        %v1465 = vmin.f32 %v1463, %v1448
        %v1466 = vmin.f32 %v1463, %v1449
        %v1467 = vmin.f32 %v1463, %v1450
        %v1468 = vmin.f32 %v1463, %v1451
        %v1469 = vmin.f32 %v1463, %v1452
        %v1470 = vmin.f32 %v1463, %v1453
        %v1471 = vmin.f32 %v1463, %v1454
        %v1472 = vmin.f32 %v1463, %v1455
        %v1473 = vmin.f32 %v1463, %v1456
        %v1474 = vmin.f32 %v1463, %v1457
        %v1475 = vmin.f32 %v1463, %v1458
        %v1476 = vmin.f32 %v1463, %v1459
        %v1477 = vmin.f32 %v1463, %v1460
        %v1478 = vmin.f32 %v1463, %v1461
        %v1479 = vmin.f32 %v1463, %v1462
        %v1480 = vpack.c.bf16 %v1465, %v1464
        %v1481 = vpack.c.bf16 %v1467, %v1466
        %v1482 = vpack.c.bf16 %v1469, %v1468
        %v1483 = vpack.c.bf16 %v1471, %v1470
        %v1484 = vpack.c.bf16 %v1473, %v1472
        %v1485 = vpack.c.bf16 %v1475, %v1474
        %v1486 = vpack.c.bf16 %v1477, %v1476
        %v1487 = vpack.c.bf16 %v1479, %v1478
        %1488 = vmatprep.subr.bf16.mxu0 0
        %1489 = vmatpush1.bf16.msra.mxu0 %v658
        %1490 = vmatprep.subr.bf16.mxu0 0
        %1491 = vmatpush1.bf16.msra.mxu0 %v659
        %1492 = vmatprep.subr.bf16.mxu0 0
        %1493 = vmatpush1.bf16.msra.mxu0 %v660
        %1494 = vmatprep.subr.bf16.mxu0 0
        %1495 = vmatpush1.bf16.msra.mxu0 %v661
        %1496 = vmatprep.subr.bf16.mxu0 0
        %1497 = vmatpush1.bf16.msra.mxu0 %v662
        %1498 = vmatprep.subr.bf16.mxu0 0
        %1499 = vmatpush1.bf16.msra.mxu0 %v663
        %1500 = vmatprep.subr.bf16.mxu0 0
        %1501 = vmatpush1.bf16.msra.mxu0 %v664
        %1502 = vmatprep.subr.bf16.mxu0 0
        %1503 = vmatpush1.bf16.msra.mxu0 %v665
        %1504 = vmatprep.subr.bf16.mxu0 0
        %1505 = vmatpush1.bf16.msra.mxu0 0
        %1506 = vmatprep.subr.bf16.mxu0 0
        %1507 = vmatpush1.bf16.msra.mxu0 0
        %1508 = vmatprep.subr.bf16.mxu0 0
        %1509 = vmatpush1.bf16.msra.mxu0 0
        %1510 = vmatprep.subr.bf16.mxu0 0
        %1511 = vmatpush1.bf16.msra.mxu0 0
        %1512 = vmatprep.subr.bf16.mxu0 0
        %1513 = vmatpush1.bf16.msra.mxu0 0
        %1514 = vmatprep.subr.bf16.mxu0 0
        %1515 = vmatpush1.bf16.msra.mxu0 0
        %1516 = vmatprep.subr.bf16.mxu0 0
        %1517 = vmatpush1.bf16.msra.mxu0 0
        %1518 = vmatprep.subr.bf16.mxu0 0
        %1519 = vmatpush1.bf16.msra.mxu0 0
        %1520 = vmatprep.mubr.bf16.mxu0 0
        %1521 = vmatmul.mubr.bf16.gmra.mrb[0].mxu0 %v1480
        %v1522 = vpop.f32.mrb[0].mxu0
        %v1523 = vadd.f32 %v524, %v1522
        %v1524 = vpop.f32.mrb[0].mxu0
        %v1525 = vpop.f32.mrb[0].mxu0
        %v1526 = vadd.f32 %v527, %v1525
        %v1527 = vpop.f32.mrb[0].mxu0
        %1528 = vmatprep.mubr.bf16.mxu0 0
        %1529 = vmatmul.mubr.bf16.gmra.mrb[0].mxu0 %v1481
        %v1530 = vpop.f32.mrb[0].mxu0
        %v1531 = vadd.f32 %v532, %v1530
        %v1532 = vpop.f32.mrb[0].mxu0
        %v1533 = vpop.f32.mrb[0].mxu0
        %v1534 = vadd.f32 %v535, %v1533
        %v1535 = vpop.f32.mrb[0].mxu0
        %1536 = vmatprep.mubr.bf16.mxu0 0
        %1537 = vmatmul.mubr.bf16.gmra.mrb[0].mxu0 %v1482
        %v1538 = vpop.f32.mrb[0].mxu0
        %v1539 = vadd.f32 %v540, %v1538
        %v1540 = vpop.f32.mrb[0].mxu0
        %v1541 = vpop.f32.mrb[0].mxu0
        %v1542 = vadd.f32 %v543, %v1541
        %v1543 = vpop.f32.mrb[0].mxu0
        %1544 = vmatprep.mubr.bf16.mxu0 0
        %1545 = vmatmul.mubr.bf16.gmra.mrb[0].mxu0 %v1483
        %v1546 = vpop.f32.mrb[0].mxu0
        %v1547 = vadd.f32 %v548, %v1546
        %v1548 = vpop.f32.mrb[0].mxu0
        %v1549 = vpop.f32.mrb[0].mxu0
        %v1550 = vadd.f32 %v551, %v1549
        %v1551 = vpop.f32.mrb[0].mxu0
        %1552 = vmatprep.mubr.bf16.mxu0 0
        %1553 = vmatmul.mubr.bf16.gmra.mrb[0].mxu0 %v1484
        %v1554 = vpop.f32.mrb[0].mxu0
        %v1555 = vadd.f32 %v556, %v1554
        %v1556 = vpop.f32.mrb[0].mxu0
        %v1557 = vpop.f32.mrb[0].mxu0
        %v1558 = vadd.f32 %v559, %v1557
        %v1559 = vpop.f32.mrb[0].mxu0
        %1560 = vmatprep.mubr.bf16.mxu0 0
        %1561 = vmatmul.mubr.bf16.gmra.mrb[0].mxu0 %v1485
        %v1562 = vpop.f32.mrb[0].mxu0
        %v1563 = vadd.f32 %v564, %v1562
        %v1564 = vpop.f32.mrb[0].mxu0
        %v1565 = vpop.f32.mrb[0].mxu0
        %v1566 = vadd.f32 %v567, %v1565
        %v1567 = vpop.f32.mrb[0].mxu0
        %1568 = vmatprep.mubr.bf16.mxu0 0
        %1569 = vmatmul.mubr.bf16.gmra.mrb[0].mxu0 %v1486
        %v1570 = vpop.f32.mrb[0].mxu0
        %v1571 = vadd.f32 %v572, %v1570
        %v1572 = vpop.f32.mrb[0].mxu0
        %v1573 = vpop.f32.mrb[0].mxu0
        %v1574 = vadd.f32 %v575, %v1573
        %v1575 = vpop.f32.mrb[0].mxu0
        %1576 = vmatprep.mubr.bf16.mxu0 0
        %1577 = vmatmul.mubr.bf16.gmra.mrb[0].mxu0 %v1487
        %v1578 = vpop.f32.mrb[0].mxu0
        %v1579 = vadd.f32 %v580, %v1578
        %v1580 = vpop.f32.mrb[0].mxu0
        %v1581 = vpop.f32.mrb[0].mxu0
        %v1582 = vadd.f32 %v583, %v1581
        %v1583 = vpop.f32.mrb[0].mxu0
        %1584 = vdwg.mxu0
        %v1585 = vtanh.pop %v1523
        %v1586 = vtanh.pop %v1526
        %v1587 = vtanh.pop %v1531
        %v1588 = vtanh.pop %v1534
        %v1589 = vtanh.pop %v1539
        %v1590 = vtanh.pop %v1542
        %v1591 = vtanh.pop %v1547
        %v1592 = vtanh.pop %v1550
        %v1593 = vtanh.pop %v1555
        %v1594 = vtanh.pop %v1558
        %v1595 = vtanh.pop %v1563
        %v1596 = vtanh.pop %v1566
        %v1597 = vtanh.pop %v1571
        %v1598 = vtanh.pop %v1574
        %v1599 = vtanh.pop %v1579
        %v1600 = vtanh.pop %v1582
        %v1601 = vand.u32 2147483647, %v1585
        %v1602 = vand.u32 2147483647, %v1586
        %v1603 = vand.u32 2147483647, %v1587
        %v1604 = vand.u32 2147483647, %v1588
        %v1605 = vand.u32 2147483647, %v1589
        %v1606 = vand.u32 2147483647, %v1590
        %v1607 = vand.u32 2147483647, %v1591
        %v1608 = vand.u32 2147483647, %v1592
        %v1609 = vand.u32 2147483647, %v1593
        %v1610 = vand.u32 2147483647, %v1594
        %v1611 = vand.u32 2147483647, %v1595
        %v1612 = vand.u32 2147483647, %v1596
        %v1613 = vand.u32 2147483647, %v1597
        %v1614 = vand.u32 2147483647, %v1598
        %v1615 = vand.u32 2147483647, %v1599
        %v1616 = vand.u32 2147483647, %v1600
        %v1617 = vmax.f32 %v1601, 1e-12
        %v1618 = vmax.f32 %v1602, 1e-12
        %v1619 = vmax.f32 %v1603, 1e-12
        %v1620 = vmax.f32 %v1604, 1e-12
        %v1621 = vmax.f32 %v1605, 1e-12
        %v1622 = vmax.f32 %v1606, 1e-12
        %v1623 = vmax.f32 %v1607, 1e-12
        %v1624 = vmax.f32 %v1608, 1e-12
        %v1625 = vmax.f32 %v1609, 1e-12
        %v1626 = vmax.f32 %v1610, 1e-12
        %v1627 = vmax.f32 %v1611, 1e-12
        %v1628 = vmax.f32 %v1612, 1e-12
        %v1629 = vmax.f32 %v1613, 1e-12
        %v1630 = vmax.f32 %v1614, 1e-12
        %v1631 = vmax.f32 %v1615, 1e-12
        %v1632 = vmax.f32 %v1616, 1e-12
        %v1633 = vlog2.pop %v1617
        %v1634 = vmul.f32 %v1633, 0.6931472
        %v1635 = vlog2.pop %v1618
        %v1636 = vmul.f32 %v1635, 0.6931472
        %v1637 = vlog2.pop %v1619
        %v1638 = vmul.f32 %v1637, 0.6931472
        %v1639 = vlog2.pop %v1620
        %v1640 = vmul.f32 %v1639, 0.6931472
        %v1641 = vlog2.pop %v1621
        %v1642 = vmul.f32 %v1641, 0.6931472
        %v1643 = vlog2.pop %v1622
        %v1644 = vmul.f32 %v1643, 0.6931472
        %v1645 = vlog2.pop %v1623
        %v1646 = vmul.f32 %v1645, 0.6931472
        %v1647 = vlog2.pop %v1624
        %v1648 = vmul.f32 %v1647, 0.6931472
        %v1649 = vlog2.pop %v1625
        %v1650 = vmul.f32 %v1649, 0.6931472
        %v1651 = vlog2.pop %v1626
        %v1652 = vmul.f32 %v1651, 0.6931472
        %v1653 = vlog2.pop %v1627
        %v1654 = vmul.f32 %v1653, 0.6931472
        %v1655 = vlog2.pop %v1628
        %v1656 = vmul.f32 %v1655, 0.6931472
        %v1657 = vlog2.pop %v1629
        %v1658 = vmul.f32 %v1657, 0.6931472
        %v1659 = vlog2.pop %v1630
        %v1660 = vmul.f32 %v1659, 0.6931472
        %v1661 = vlog2.pop %v1631
        %v1662 = vmul.f32 %v1661, 0.6931472
        %v1663 = vlog2.pop %v1632
        %v1664 = vmul.f32 %v1663, 0.6931472
        %vm1665 = vcmp.lt.f32.partialorder %v1585, 0.0
        %vm1666 = vcmp.lt.f32.partialorder %v1586, 0.0
        %vm1667 = vcmp.lt.f32.partialorder %v1587, 0.0
        %vm1668 = vcmp.lt.f32.partialorder %v1588, 0.0
        %vm1669 = vcmp.lt.f32.partialorder %v1589, 0.0
        %vm1670 = vcmp.lt.f32.partialorder %v1590, 0.0
        %vm1671 = vcmp.lt.f32.partialorder %v1591, 0.0
        %vm1672 = vcmp.lt.f32.partialorder %v1592, 0.0
        %vm1673 = vcmp.lt.f32.partialorder %v1593, 0.0
        %vm1674 = vcmp.lt.f32.partialorder %v1594, 0.0
        %vm1675 = vcmp.lt.f32.partialorder %v1595, 0.0
        %vm1676 = vcmp.lt.f32.partialorder %v1596, 0.0
        %vm1677 = vcmp.lt.f32.partialorder %v1597, 0.0
        %vm1678 = vcmp.lt.f32.partialorder %v1598, 0.0
        %vm1679 = vcmp.lt.f32.partialorder %v1599, 0.0
        %vm1680 = vcmp.lt.f32.partialorder %v1600, 0.0
        %v1681 = vsel %vm1665, 1, 0
        %v1682 = vsel %vm1666, 1, 0
        %v1683 = vsel %vm1667, 1, 0
        %v1684 = vsel %vm1668, 1, 0
        %v1685 = vsel %vm1669, 1, 0
        %v1686 = vsel %vm1670, 1, 0
        %v1687 = vsel %vm1671, 1, 0
        %v1688 = vsel %vm1672, 1, 0
        %v1689 = vsel %vm1673, 1, 0
        %v1690 = vsel %vm1674, 1, 0
        %v1691 = vsel %vm1675, 1, 0
        %v1692 = vsel %vm1676, 1, 0
        %v1693 = vsel %vm1677, 1, 0
        %v1694 = vsel %vm1678, 1, 0
        %v1695 = vsel %vm1679, 1, 0
        %v1696 = vsel %vm1680, 1, 0
        %v1697 = vcvt.s32.f32 %v1681
        %v1698 = vcvt.s32.f32 %v1682
        %v1699 = vcvt.s32.f32 %v1683
        %v1700 = vcvt.s32.f32 %v1684
        %v1701 = vcvt.s32.f32 %v1685
        %v1702 = vcvt.s32.f32 %v1686
        %v1703 = vcvt.s32.f32 %v1687
        %v1704 = vcvt.s32.f32 %v1688
        %v1705 = vcvt.s32.f32 %v1689
        %v1706 = vcvt.s32.f32 %v1690
        %v1707 = vcvt.s32.f32 %v1691
        %v1708 = vcvt.s32.f32 %v1692
        %v1709 = vcvt.s32.f32 %v1693
        %v1710 = vcvt.s32.f32 %v1694
        %v1711 = vcvt.s32.f32 %v1695
        %v1712 = vcvt.s32.f32 %v1696
        %v1713 = vpack.c.bf16 %v1698, %v1697
        %v1714 = vpack.c.bf16 %v1700, %v1699
        %v1715 = vpack.c.bf16 %v1702, %v1701
        %v1716 = vpack.c.bf16 %v1704, %v1703
        %v1717 = vpack.c.bf16 %v1706, %v1705
        %v1718 = vpack.c.bf16 %v1708, %v1707
        %v1719 = vpack.c.bf16 %v1710, %v1709
        %v1720 = vpack.c.bf16 %v1712, %v1711
        %v1721 = vpack.c.bf16 %v1636, %v1634
        %v1722 = vpack.c.bf16 %v1640, %v1638
        %v1723 = vpack.c.bf16 %v1644, %v1642
        %v1724 = vpack.c.bf16 %v1648, %v1646
        %v1725 = vpack.c.bf16 %v1652, %v1650
        %v1726 = vpack.c.bf16 %v1656, %v1654
        %v1727 = vpack.c.bf16 %v1660, %v1658
        %v1728 = vpack.c.bf16 %v1664, %v1662
        %1729 = vmatprep.subr.bf16.mxu0 0
        %1730 = vmatpush1.bf16.msra.mxu0 %v963
        %1731 = vmatprep.subr.bf16.mxu0 0
        %1732 = vmatpush1.bf16.msra.mxu0 %v964
        %1733 = vmatprep.subr.bf16.mxu0 0
        %1734 = vmatpush1.bf16.msra.mxu0 %v965
        %1735 = vmatprep.subr.bf16.mxu0 0
        %1736 = vmatpush1.bf16.msra.mxu0 %v966
        %1737 = vmatprep.subr.bf16.mxu0 0
        %1738 = vmatpush1.bf16.msra.mxu0 %v967
        %1739 = vmatprep.subr.bf16.mxu0 0
        %1740 = vmatpush1.bf16.msra.mxu0 %v968
        %1741 = vmatprep.subr.bf16.mxu0 0
        %1742 = vmatpush1.bf16.msra.mxu0 %v969
        %1743 = vmatprep.subr.bf16.mxu0 0
        %1744 = vmatpush1.bf16.msra.mxu0 %v970
        %1745 = vmatprep.subr.bf16.mxu0 0
        %1746 = vmatpush1.bf16.msra.mxu0 0
        %1747 = vmatprep.subr.bf16.mxu0 0
        %1748 = vmatpush1.bf16.msra.mxu0 0
        %1749 = vmatprep.subr.bf16.mxu0 0
        %1750 = vmatpush1.bf16.msra.mxu0 0
        %1751 = vmatprep.subr.bf16.mxu0 0
        %1752 = vmatpush1.bf16.msra.mxu0 0
        %1753 = vmatprep.subr.bf16.mxu0 0
        %1754 = vmatpush1.bf16.msra.mxu0 0
        %1755 = vmatprep.subr.bf16.mxu0 0
        %1756 = vmatpush1.bf16.msra.mxu0 0
        %1757 = vmatprep.subr.bf16.mxu0 0
        %1758 = vmatpush1.bf16.msra.mxu0 0
        %1759 = vmatprep.subr.bf16.mxu0 0
        %1760 = vmatpush1.bf16.msra.mxu0 0
        %1761 = vmatprep.mubr.bf16.mxu0 0
        %1762 = vmatmul.mubr.bf16.gmra.mrb[0].mxu0 %v1721
        %v1763 = vpop.f32.mrb[0].mxu0
        %v1764 = vadd.f32 0.0, %v1763
        %v1765 = vpop.f32.mrb[0].mxu0
        %v1766 = vpop.f32.mrb[0].mxu0
        %v1767 = vadd.f32 0.0, %v1766
        %v1768 = vpop.f32.mrb[0].mxu0
        %1769 = vmatprep.mubr.bf16.mxu0 0
        %1770 = vmatmul.mubr.bf16.gmra.mrb[0].mxu0 %v1722
        %v1771 = vpop.f32.mrb[0].mxu0
        %v1772 = vadd.f32 0.0, %v1771
        %v1773 = vpop.f32.mrb[0].mxu0
        %v1774 = vpop.f32.mrb[0].mxu0
        %v1775 = vadd.f32 0.0, %v1774
        %v1776 = vpop.f32.mrb[0].mxu0
        %1777 = vmatprep.mubr.bf16.mxu0 0
        %1778 = vmatmul.mubr.bf16.gmra.mrb[0].mxu0 %v1723
        %v1779 = vpop.f32.mrb[0].mxu0
        %v1780 = vadd.f32 0.0, %v1779
        %v1781 = vpop.f32.mrb[0].mxu0
        %v1782 = vpop.f32.mrb[0].mxu0
        %v1783 = vadd.f32 0.0, %v1782
        %v1784 = vpop.f32.mrb[0].mxu0
        %1785 = vmatprep.mubr.bf16.mxu0 0
        %1786 = vmatmul.mubr.bf16.gmra.mrb[0].mxu0 %v1724
        %v1787 = vpop.f32.mrb[0].mxu0
        %v1788 = vadd.f32 0.0, %v1787
        %v1789 = vpop.f32.mrb[0].mxu0
        %v1790 = vpop.f32.mrb[0].mxu0
        %v1791 = vadd.f32 0.0, %v1790
        %v1792 = vpop.f32.mrb[0].mxu0
        %1793 = vmatprep.mubr.bf16.mxu0 0
        %1794 = vmatmul.mubr.bf16.gmra.mrb[0].mxu0 %v1725
        %v1795 = vpop.f32.mrb[0].mxu0
        %v1796 = vadd.f32 0.0, %v1795
        %v1797 = vpop.f32.mrb[0].mxu0
        %v1798 = vpop.f32.mrb[0].mxu0
        %v1799 = vadd.f32 0.0, %v1798
        %v1800 = vpop.f32.mrb[0].mxu0
        %1801 = vmatprep.mubr.bf16.mxu0 0
        %1802 = vmatmul.mubr.bf16.gmra.mrb[0].mxu0 %v1726
        %v1803 = vpop.f32.mrb[0].mxu0
        %v1804 = vadd.f32 0.0, %v1803
        %v1805 = vpop.f32.mrb[0].mxu0
        %v1806 = vpop.f32.mrb[0].mxu0
        %v1807 = vadd.f32 0.0, %v1806
        %v1808 = vpop.f32.mrb[0].mxu0
        %1809 = vmatprep.mubr.bf16.mxu0 0
        %1810 = vmatmul.mubr.bf16.gmra.mrb[0].mxu0 %v1727
        %v1811 = vpop.f32.mrb[0].mxu0
        %v1812 = vadd.f32 0.0, %v1811
        %v1813 = vpop.f32.mrb[0].mxu0
        %v1814 = vpop.f32.mrb[0].mxu0
        %v1815 = vadd.f32 0.0, %v1814
        %v1816 = vpop.f32.mrb[0].mxu0
        %1817 = vmatprep.mubr.bf16.mxu0 0
        %1818 = vmatmul.mubr.bf16.gmra.mrb[0].mxu0 %v1728
        %v1819 = vpop.f32.mrb[0].mxu0
        %v1820 = vadd.f32 0.0, %v1819
        %v1821 = vpop.f32.mrb[0].mxu0
        %v1822 = vpop.f32.mrb[0].mxu0
        %v1823 = vadd.f32 0.0, %v1822
        %v1824 = vpop.f32.mrb[0].mxu0
        %1825 = vdwg.mxu0
        %1826 = vmatprep.subr.bf16.mxu0 0
        %1827 = vmatpush1.bf16.msra.mxu0 %v963
        %1828 = vmatprep.subr.bf16.mxu0 0
        %1829 = vmatpush1.bf16.msra.mxu0 %v964
        %1830 = vmatprep.subr.bf16.mxu0 0
        %1831 = vmatpush1.bf16.msra.mxu0 %v965
        %1832 = vmatprep.subr.bf16.mxu0 0
        %1833 = vmatpush1.bf16.msra.mxu0 %v966
        %1834 = vmatprep.subr.bf16.mxu0 0
        %1835 = vmatpush1.bf16.msra.mxu0 %v967
        %1836 = vmatprep.subr.bf16.mxu0 0
        %1837 = vmatpush1.bf16.msra.mxu0 %v968
        %1838 = vmatprep.subr.bf16.mxu0 0
        %1839 = vmatpush1.bf16.msra.mxu0 %v969
        %1840 = vmatprep.subr.bf16.mxu0 0
        %1841 = vmatpush1.bf16.msra.mxu0 %v970
        %1842 = vmatprep.subr.bf16.mxu0 0
        %1843 = vmatpush1.bf16.msra.mxu0 0
        %1844 = vmatprep.subr.bf16.mxu0 0
        %1845 = vmatpush1.bf16.msra.mxu0 0
        %1846 = vmatprep.subr.bf16.mxu0 0
        %1847 = vmatpush1.bf16.msra.mxu0 0
        %1848 = vmatprep.subr.bf16.mxu0 0
        %1849 = vmatpush1.bf16.msra.mxu0 0
        %1850 = vmatprep.subr.bf16.mxu0 0
        %1851 = vmatpush1.bf16.msra.mxu0 0
        %1852 = vmatprep.subr.bf16.mxu0 0
        %1853 = vmatpush1.bf16.msra.mxu0 0
        %1854 = vmatprep.subr.bf16.mxu0 0
        %1855 = vmatpush1.bf16.msra.mxu0 0
        %1856 = vmatprep.subr.bf16.mxu0 0
        %1857 = vmatpush1.bf16.msra.mxu0 0
        %1858 = vmatprep.mubr.bf16.mxu0 0
        %1859 = vmatmul.mubr.bf16.gmra.mrb[0].mxu0 %v1713
        %v1860 = vpop.f32.mrb[0].mxu0
        %v1861 = vadd.f32 0.0, %v1860
        %v1862 = vpop.f32.mrb[0].mxu0
        %v1863 = vpop.f32.mrb[0].mxu0
        %v1864 = vadd.f32 0.0, %v1863
        %v1865 = vpop.f32.mrb[0].mxu0
        %1866 = vmatprep.mubr.bf16.mxu0 0
        %1867 = vmatmul.mubr.bf16.gmra.mrb[0].mxu0 %v1714
        %v1868 = vpop.f32.mrb[0].mxu0
        %v1869 = vadd.f32 0.0, %v1868
        %v1870 = vpop.f32.mrb[0].mxu0
        %v1871 = vpop.f32.mrb[0].mxu0
        %v1872 = vadd.f32 0.0, %v1871
        %v1873 = vpop.f32.mrb[0].mxu0
        %1874 = vmatprep.mubr.bf16.mxu0 0
        %1875 = vmatmul.mubr.bf16.gmra.mrb[0].mxu0 %v1715
        %v1876 = vpop.f32.mrb[0].mxu0
        %v1877 = vadd.f32 0.0, %v1876
        %v1878 = vpop.f32.mrb[0].mxu0
        %v1879 = vpop.f32.mrb[0].mxu0
        %v1880 = vadd.f32 0.0, %v1879
        %v1881 = vpop.f32.mrb[0].mxu0
        %1882 = vmatprep.mubr.bf16.mxu0 0
        %1883 = vmatmul.mubr.bf16.gmra.mrb[0].mxu0 %v1716
        %v1884 = vpop.f32.mrb[0].mxu0
        %v1885 = vadd.f32 0.0, %v1884
        %v1886 = vpop.f32.mrb[0].mxu0
        %v1887 = vpop.f32.mrb[0].mxu0
        %v1888 = vadd.f32 0.0, %v1887
        %v1889 = vpop.f32.mrb[0].mxu0
        %1890 = vmatprep.mubr.bf16.mxu0 0
        %1891 = vmatmul.mubr.bf16.gmra.mrb[0].mxu0 %v1717
        %v1892 = vpop.f32.mrb[0].mxu0
        %v1893 = vadd.f32 0.0, %v1892
        %v1894 = vpop.f32.mrb[0].mxu0
        %v1895 = vpop.f32.mrb[0].mxu0
        %v1896 = vadd.f32 0.0, %v1895
        %v1897 = vpop.f32.mrb[0].mxu0
        %1898 = vmatprep.mubr.bf16.mxu0 0
        %1899 = vmatmul.mubr.bf16.gmra.mrb[0].mxu0 %v1718
        %v1900 = vpop.f32.mrb[0].mxu0
        %v1901 = vadd.f32 0.0, %v1900
        %v1902 = vpop.f32.mrb[0].mxu0
        %v1903 = vpop.f32.mrb[0].mxu0
        %v1904 = vadd.f32 0.0, %v1903
        %v1905 = vpop.f32.mrb[0].mxu0
        %1906 = vmatprep.mubr.bf16.mxu0 0
        %1907 = vmatmul.mubr.bf16.gmra.mrb[0].mxu0 %v1719
        %v1908 = vpop.f32.mrb[0].mxu0
        %v1909 = vadd.f32 0.0, %v1908
        %v1910 = vpop.f32.mrb[0].mxu0
        %v1911 = vpop.f32.mrb[0].mxu0
        %v1912 = vadd.f32 0.0, %v1911
        %v1913 = vpop.f32.mrb[0].mxu0
        %1914 = vmatprep.mubr.bf16.mxu0 0
        %1915 = vmatmul.mubr.bf16.gmra.mrb[0].mxu0 %v1720
        %v1916 = vpop.f32.mrb[0].mxu0
        %v1917 = vadd.f32 0.0, %v1916
        %v1918 = vpop.f32.mrb[0].mxu0
        %v1919 = vpop.f32.mrb[0].mxu0
        %v1920 = vadd.f32 0.0, %v1919
        %v1921 = vpop.f32.mrb[0].mxu0
        %1922 = vdwg.mxu0
        %v1923 = vmul.f32 %v1861, 0.5
        %v1924 = vmul.f32 %v1864, 0.5
        %v1925 = vmul.f32 %v1869, 0.5
        %v1926 = vmul.f32 %v1872, 0.5
        %v1927 = vmul.f32 %v1877, 0.5
        %v1928 = vmul.f32 %v1880, 0.5
        %v1929 = vmul.f32 %v1885, 0.5
        %v1930 = vmul.f32 %v1888, 0.5
        %v1931 = vmul.f32 %v1893, 0.5
        %v1932 = vmul.f32 %v1896, 0.5
        %v1933 = vmul.f32 %v1901, 0.5
        %v1934 = vmul.f32 %v1904, 0.5
        %v1935 = vmul.f32 %v1909, 0.5
        %v1936 = vmul.f32 %v1912, 0.5
        %v1937 = vmul.f32 %v1917, 0.5
        %v1938 = vmul.f32 %v1920, 0.5
        %v1939 = vfloor.f32 %v1923
        %v1940 = vfloor.f32 %v1924
        %v1941 = vfloor.f32 %v1925
        %v1942 = vfloor.f32 %v1926
        %v1943 = vfloor.f32 %v1927
        %v1944 = vfloor.f32 %v1928
        %v1945 = vfloor.f32 %v1929
        %v1946 = vfloor.f32 %v1930
        %v1947 = vfloor.f32 %v1931
        %v1948 = vfloor.f32 %v1932
        %v1949 = vfloor.f32 %v1933
        %v1950 = vfloor.f32 %v1934
        %v1951 = vfloor.f32 %v1935
        %v1952 = vfloor.f32 %v1936
        %v1953 = vfloor.f32 %v1937
        %v1954 = vfloor.f32 %v1938
        %v1955 = vmul.f32 %v1939, 2.0
        %v1956 = vmul.f32 %v1940, 2.0
        %v1957 = vmul.f32 %v1941, 2.0
        %v1958 = vmul.f32 %v1942, 2.0
        %v1959 = vmul.f32 %v1943, 2.0
        %v1960 = vmul.f32 %v1944, 2.0
        %v1961 = vmul.f32 %v1945, 2.0
        %v1962 = vmul.f32 %v1946, 2.0
        %v1963 = vmul.f32 %v1947, 2.0
        %v1964 = vmul.f32 %v1948, 2.0
        %v1965 = vmul.f32 %v1949, 2.0
        %v1966 = vmul.f32 %v1950, 2.0
        %v1967 = vmul.f32 %v1951, 2.0
        %v1968 = vmul.f32 %v1952, 2.0
        %v1969 = vmul.f32 %v1953, 2.0
        %v1970 = vmul.f32 %v1954, 2.0
        %v1971 = vsub.f32 %v1861, %v1955
        %v1972 = vsub.f32 %v1864, %v1956
        %v1973 = vsub.f32 %v1869, %v1957
        %v1974 = vsub.f32 %v1872, %v1958
        %v1975 = vsub.f32 %v1877, %v1959
        %v1976 = vsub.f32 %v1880, %v1960
        %v1977 = vsub.f32 %v1885, %v1961
        %v1978 = vsub.f32 %v1888, %v1962
        %v1979 = vsub.f32 %v1893, %v1963
        %v1980 = vsub.f32 %v1896, %v1964
        %v1981 = vsub.f32 %v1901, %v1965
        %v1982 = vsub.f32 %v1904, %v1966
        %v1983 = vsub.f32 %v1909, %v1967
        %v1984 = vsub.f32 %v1912, %v1968
        %v1985 = vsub.f32 %v1917, %v1969
        %v1986 = vsub.f32 %v1920, %v1970
        %v1987 = vmul.f32 %v1971, 2.0
        %v1988 = vmul.f32 %v1972, 2.0
        %v1989 = vmul.f32 %v1973, 2.0
        %v1990 = vmul.f32 %v1974, 2.0
        %v1991 = vmul.f32 %v1975, 2.0
        %v1992 = vmul.f32 %v1976, 2.0
        %v1993 = vmul.f32 %v1977, 2.0
        %v1994 = vmul.f32 %v1978, 2.0
        %v1995 = vmul.f32 %v1979, 2.0
        %v1996 = vmul.f32 %v1980, 2.0
        %v1997 = vmul.f32 %v1981, 2.0
        %v1998 = vmul.f32 %v1982, 2.0
        %v1999 = vmul.f32 %v1983, 2.0
        %v2000 = vmul.f32 %v1984, 2.0
        %v2001 = vmul.f32 %v1985, 2.0
        %v2002 = vmul.f32 %v1986, 2.0
        %v2003 = vsub.f32 1.0, %v1987
        %v2004 = vsub.f32 1.0, %v1988
        %v2005 = vsub.f32 1.0, %v1989
        %v2006 = vsub.f32 1.0, %v1990
        %v2007 = vsub.f32 1.0, %v1991
        %v2008 = vsub.f32 1.0, %v1992
        %v2009 = vsub.f32 1.0, %v1993
        %v2010 = vsub.f32 1.0, %v1994
        %v2011 = vsub.f32 1.0, %v1995
        %v2012 = vsub.f32 1.0, %v1996
        %v2013 = vsub.f32 1.0, %v1997
        %v2014 = vsub.f32 1.0, %v1998
        %v2015 = vsub.f32 1.0, %v1999
        %v2016 = vsub.f32 1.0, %v2000
        %v2017 = vsub.f32 1.0, %v2001
        %v2018 = vsub.f32 1.0, %v2002
        %v2019 = vmul.f32 %v1764, 1.442695
        %v2020 = vpow.pop %v2019
        %v2021 = vmul.f32 %v1767, 1.442695
        %v2022 = vpow.pop %v2021
        %v2023 = vmul.f32 %v1772, 1.442695
        %v2024 = vpow.pop %v2023
        %v2025 = vmul.f32 %v1775, 1.442695
        %v2026 = vpow.pop %v2025
        %v2027 = vmul.f32 %v1780, 1.442695
        %v2028 = vpow.pop %v2027
        %v2029 = vmul.f32 %v1783, 1.442695
        %v2030 = vpow.pop %v2029
        %v2031 = vmul.f32 %v1788, 1.442695
        %v2032 = vpow.pop %v2031
        %v2033 = vmul.f32 %v1791, 1.442695
        %v2034 = vpow.pop %v2033
        %v2035 = vmul.f32 %v1796, 1.442695
        %v2036 = vpow.pop %v2035
        %v2037 = vmul.f32 %v1799, 1.442695
        %v2038 = vpow.pop %v2037
        %v2039 = vmul.f32 %v1804, 1.442695
        %v2040 = vpow.pop %v2039
        %v2041 = vmul.f32 %v1807, 1.442695
        %v2042 = vpow.pop %v2041
        %v2043 = vmul.f32 %v1812, 1.442695
        %v2044 = vpow.pop %v2043
        %v2045 = vmul.f32 %v1815, 1.442695
        %v2046 = vpow.pop %v2045
        %v2047 = vmul.f32 %v1820, 1.442695
        %v2048 = vpow.pop %v2047
        %v2049 = vmul.f32 %v1823, 1.442695
        %v2050 = vpow.pop %v2049
        %v2051 = vmul.f32 %v2003, %v2020
        %v2052 = vmul.f32 %v2004, %v2022
        %v2053 = vmul.f32 %v2005, %v2024
        %v2054 = vmul.f32 %v2006, %v2026
        %v2055 = vmul.f32 %v2007, %v2028
        %v2056 = vmul.f32 %v2008, %v2030
        %v2057 = vmul.f32 %v2009, %v2032
        %v2058 = vmul.f32 %v2010, %v2034
        %v2059 = vmul.f32 %v2011, %v2036
        %v2060 = vmul.f32 %v2012, %v2038
        %v2061 = vmul.f32 %v2013, %v2040
        %v2062 = vmul.f32 %v2014, %v2042
        %v2063 = vmul.f32 %v2015, %v2044
        %v2064 = vmul.f32 %v2016, %v2046
        %v2065 = vmul.f32 %v2017, %v2048
        %v2066 = vmul.f32 %v2018, %v2050
        %v2067 = vmax.f32 %v2051, -0.999999
        %v2068 = vmax.f32 %v2052, -0.999999
        %v2069 = vmax.f32 %v2053, -0.999999
        %v2070 = vmax.f32 %v2054, -0.999999
        %v2071 = vmax.f32 %v2055, -0.999999
        %v2072 = vmax.f32 %v2056, -0.999999
        %v2073 = vmax.f32 %v2057, -0.999999
        %v2074 = vmax.f32 %v2058, -0.999999
        %v2075 = vmax.f32 %v2059, -0.999999
        %v2076 = vmax.f32 %v2060, -0.999999
        %v2077 = vmax.f32 %v2061, -0.999999
        %v2078 = vmax.f32 %v2062, -0.999999
        %v2079 = vmax.f32 %v2063, -0.999999
        %v2080 = vmax.f32 %v2064, -0.999999
        %v2081 = vmax.f32 %v2065, -0.999999
        %v2082 = vmax.f32 %v2066, -0.999999
        %v2083 = vmin.f32 %v2067, 0.999999
        %v2084 = vmin.f32 %v2068, 0.999999
        %v2085 = vmin.f32 %v2069, 0.999999
        %v2086 = vmin.f32 %v2070, 0.999999
        %v2087 = vmin.f32 %v2071, 0.999999
        %v2088 = vmin.f32 %v2072, 0.999999
        %v2089 = vmin.f32 %v2073, 0.999999
        %v2090 = vmin.f32 %v2074, 0.999999
        %v2091 = vmin.f32 %v2075, 0.999999
        %v2092 = vmin.f32 %v2076, 0.999999
        %v2093 = vmin.f32 %v2077, 0.999999
        %v2094 = vmin.f32 %v2078, 0.999999
        %v2095 = vmin.f32 %v2079, 0.999999
        %v2096 = vmin.f32 %v2080, 0.999999
        %v2097 = vmin.f32 %v2081, 0.999999
        %v2098 = vmin.f32 %v2082, 0.999999
        %v2099 = vadd.f32 %v2083, 1.0
        %v2100 = vadd.f32 %v2084, 1.0
        %v2101 = vadd.f32 %v2085, 1.0
        %v2102 = vadd.f32 %v2086, 1.0
        %v2103 = vadd.f32 %v2087, 1.0
        %v2104 = vadd.f32 %v2088, 1.0
        %v2105 = vadd.f32 %v2089, 1.0
        %v2106 = vadd.f32 %v2090, 1.0
        %v2107 = vadd.f32 %v2091, 1.0
        %v2108 = vadd.f32 %v2092, 1.0
        %v2109 = vadd.f32 %v2093, 1.0
        %v2110 = vadd.f32 %v2094, 1.0
        %v2111 = vadd.f32 %v2095, 1.0
        %v2112 = vadd.f32 %v2096, 1.0
        %v2113 = vadd.f32 %v2097, 1.0
        %v2114 = vadd.f32 %v2098, 1.0
        %v2115 = vsub.f32 1.0, %v2083
        %v2116 = vsub.f32 1.0, %v2084
        %v2117 = vsub.f32 1.0, %v2085
        %v2118 = vsub.f32 1.0, %v2086
        %v2119 = vsub.f32 1.0, %v2087
        %v2120 = vsub.f32 1.0, %v2088
        %v2121 = vsub.f32 1.0, %v2089
        %v2122 = vsub.f32 1.0, %v2090
        %v2123 = vsub.f32 1.0, %v2091
        %v2124 = vsub.f32 1.0, %v2092
        %v2125 = vsub.f32 1.0, %v2093
        %v2126 = vsub.f32 1.0, %v2094
        %v2127 = vsub.f32 1.0, %v2095
        %v2128 = vsub.f32 1.0, %v2096
        %v2129 = vsub.f32 1.0, %v2097
        %v2130 = vsub.f32 1.0, %v2098
        %v2131 = vrcp.pop %v2115
        %v2132 = vmul.f32 %v2099, %v2131
        %v2133 = vrcp.pop %v2116
        %v2134 = vmul.f32 %v2100, %v2133
        %v2135 = vrcp.pop %v2117
        %v2136 = vmul.f32 %v2101, %v2135
        %v2137 = vrcp.pop %v2118
        %v2138 = vmul.f32 %v2102, %v2137
        %v2139 = vrcp.pop %v2119
        %v2140 = vmul.f32 %v2103, %v2139
        %v2141 = vrcp.pop %v2120
        %v2142 = vmul.f32 %v2104, %v2141
        %v2143 = vrcp.pop %v2121
        %v2144 = vmul.f32 %v2105, %v2143
        %v2145 = vrcp.pop %v2122
        %v2146 = vmul.f32 %v2106, %v2145
        %v2147 = vrcp.pop %v2123
        %v2148 = vmul.f32 %v2107, %v2147
        %v2149 = vrcp.pop %v2124
        %v2150 = vmul.f32 %v2108, %v2149
        %v2151 = vrcp.pop %v2125
        %v2152 = vmul.f32 %v2109, %v2151
        %v2153 = vrcp.pop %v2126
        %v2154 = vmul.f32 %v2110, %v2153
        %v2155 = vrcp.pop %v2127
        %v2156 = vmul.f32 %v2111, %v2155
        %v2157 = vrcp.pop %v2128
        %v2158 = vmul.f32 %v2112, %v2157
        %v2159 = vrcp.pop %v2129
        %v2160 = vmul.f32 %v2113, %v2159
        %v2161 = vrcp.pop %v2130
        %v2162 = vmul.f32 %v2114, %v2161
        %v2163 = vlog2.pop %v2132
        %v2164 = vmul.f32 %v2163, 0.6931472
        %v2165 = vlog2.pop %v2134
        %v2166 = vmul.f32 %v2165, 0.6931472
        %v2167 = vlog2.pop %v2136
        %v2168 = vmul.f32 %v2167, 0.6931472
        %v2169 = vlog2.pop %v2138
        %v2170 = vmul.f32 %v2169, 0.6931472
        %v2171 = vlog2.pop %v2140
        %v2172 = vmul.f32 %v2171, 0.6931472
        %v2173 = vlog2.pop %v2142
        %v2174 = vmul.f32 %v2173, 0.6931472
        %v2175 = vlog2.pop %v2144
        %v2176 = vmul.f32 %v2175, 0.6931472
        %v2177 = vlog2.pop %v2146
        %v2178 = vmul.f32 %v2177, 0.6931472
        %v2179 = vlog2.pop %v2148
        %v2180 = vmul.f32 %v2179, 0.6931472
        %v2181 = vlog2.pop %v2150
        %v2182 = vmul.f32 %v2181, 0.6931472
        %v2183 = vlog2.pop %v2152
        %v2184 = vmul.f32 %v2183, 0.6931472
        %v2185 = vlog2.pop %v2154
        %v2186 = vmul.f32 %v2185, 0.6931472
        %v2187 = vlog2.pop %v2156
        %v2188 = vmul.f32 %v2187, 0.6931472
        %v2189 = vlog2.pop %v2158
        %v2190 = vmul.f32 %v2189, 0.6931472
        %v2191 = vlog2.pop %v2160
        %v2192 = vmul.f32 %v2191, 0.6931472
        %v2193 = vlog2.pop %v2162
        %v2194 = vmul.f32 %v2193, 0.6931472
        %v2195 = vmax.f32 %v1446, %v2164
        %v2196 = vmax.f32 %v1446, %v2166
        %v2197 = vmax.f32 %v1446, %v2168
        %v2198 = vmax.f32 %v1446, %v2170
        %v2199 = vmax.f32 %v1446, %v2172
        %v2200 = vmax.f32 %v1446, %v2174
        %v2201 = vmax.f32 %v1446, %v2176
        %v2202 = vmax.f32 %v1446, %v2178
        %v2203 = vmax.f32 %v1446, %v2180
        %v2204 = vmax.f32 %v1446, %v2182
        %v2205 = vmax.f32 %v1446, %v2184
        %v2206 = vmax.f32 %v1446, %v2186
        %v2207 = vmax.f32 %v1446, %v2188
        %v2208 = vmax.f32 %v1446, %v2190
        %v2209 = vmax.f32 %v1446, %v2192
        %v2210 = vmax.f32 %v1446, %v2194
        %v2211 = vmin.f32 %v1463, %v2195
        %v2212 = vmin.f32 %v1463, %v2196
        %v2213 = vmin.f32 %v1463, %v2197
        %v2214 = vmin.f32 %v1463, %v2198
        %v2215 = vmin.f32 %v1463, %v2199
        %v2216 = vmin.f32 %v1463, %v2200
        %v2217 = vmin.f32 %v1463, %v2201
        %v2218 = vmin.f32 %v1463, %v2202
        %v2219 = vmin.f32 %v1463, %v2203
        %v2220 = vmin.f32 %v1463, %v2204
        %v2221 = vmin.f32 %v1463, %v2205
        %v2222 = vmin.f32 %v1463, %v2206
        %v2223 = vmin.f32 %v1463, %v2207
        %v2224 = vmin.f32 %v1463, %v2208
        %v2225 = vmin.f32 %v1463, %v2209
        %v2226 = vmin.f32 %v1463, %v2210
        %v2227 = vpack.c.bf16 %v2212, %v2211
        %v2228 = vpack.c.bf16 %v2214, %v2213
        %v2229 = vpack.c.bf16 %v2216, %v2215
        %v2230 = vpack.c.bf16 %v2218, %v2217
        %v2231 = vpack.c.bf16 %v2220, %v2219
        %v2232 = vpack.c.bf16 %v2222, %v2221
        %v2233 = vpack.c.bf16 %v2224, %v2223
        %v2234 = vpack.c.bf16 %v2226, %v2225
        %2235 = vmatprep.subr.bf16.mxu0 0
        %2236 = vmatpush1.bf16.msra.mxu0 %v658
        %2237 = vmatprep.subr.bf16.mxu0 0
        %2238 = vmatpush1.bf16.msra.mxu0 %v659
        %2239 = vmatprep.subr.bf16.mxu0 0
        %2240 = vmatpush1.bf16.msra.mxu0 %v660
        %2241 = vmatprep.subr.bf16.mxu0 0
        %2242 = vmatpush1.bf16.msra.mxu0 %v661
        %2243 = vmatprep.subr.bf16.mxu0 0
        %2244 = vmatpush1.bf16.msra.mxu0 %v662
        %2245 = vmatprep.subr.bf16.mxu0 0
        %2246 = vmatpush1.bf16.msra.mxu0 %v663
        %2247 = vmatprep.subr.bf16.mxu0 0
        %2248 = vmatpush1.bf16.msra.mxu0 %v664
        %2249 = vmatprep.subr.bf16.mxu0 0
        %2250 = vmatpush1.bf16.msra.mxu0 %v665
        %2251 = vmatprep.subr.bf16.mxu0 0
        %2252 = vmatpush1.bf16.msra.mxu0 0
        %2253 = vmatprep.subr.bf16.mxu0 0
        %2254 = vmatpush1.bf16.msra.mxu0 0
        %2255 = vmatprep.subr.bf16.mxu0 0
        %2256 = vmatpush1.bf16.msra.mxu0 0
        %2257 = vmatprep.subr.bf16.mxu0 0
        %2258 = vmatpush1.bf16.msra.mxu0 0
        %2259 = vmatprep.subr.bf16.mxu0 0
        %2260 = vmatpush1.bf16.msra.mxu0 0
        %2261 = vmatprep.subr.bf16.mxu0 0
        %2262 = vmatpush1.bf16.msra.mxu0 0
        %2263 = vmatprep.subr.bf16.mxu0 0
        %2264 = vmatpush1.bf16.msra.mxu0 0
        %2265 = vmatprep.subr.bf16.mxu0 0
        %2266 = vmatpush1.bf16.msra.mxu0 0
        %2267 = vmatprep.mubr.bf16.mxu0 0
        %2268 = vmatmul.mubr.bf16.gmra.mrb[0].mxu0 %v2227
        %v2269 = vpop.f32.mrb[0].mxu0
        %v2270 = vadd.f32 %v524, %v2269
        %v2271 = vpop.f32.mrb[0].mxu0
        %v2272 = vpop.f32.mrb[0].mxu0
        %v2273 = vadd.f32 %v527, %v2272
        %v2274 = vpop.f32.mrb[0].mxu0
        %2275 = vmatprep.mubr.bf16.mxu0 0
        %2276 = vmatmul.mubr.bf16.gmra.mrb[0].mxu0 %v2228
        %v2277 = vpop.f32.mrb[0].mxu0
        %v2278 = vadd.f32 %v532, %v2277
        %v2279 = vpop.f32.mrb[0].mxu0
        %v2280 = vpop.f32.mrb[0].mxu0
        %v2281 = vadd.f32 %v535, %v2280
        %v2282 = vpop.f32.mrb[0].mxu0
        %2283 = vmatprep.mubr.bf16.mxu0 0
        %2284 = vmatmul.mubr.bf16.gmra.mrb[0].mxu0 %v2229
        %v2285 = vpop.f32.mrb[0].mxu0
        %v2286 = vadd.f32 %v540, %v2285
        %v2287 = vpop.f32.mrb[0].mxu0
        %v2288 = vpop.f32.mrb[0].mxu0
        %v2289 = vadd.f32 %v543, %v2288
        %v2290 = vpop.f32.mrb[0].mxu0
        %2291 = vmatprep.mubr.bf16.mxu0 0
        %2292 = vmatmul.mubr.bf16.gmra.mrb[0].mxu0 %v2230
        %v2293 = vpop.f32.mrb[0].mxu0
        %v2294 = vadd.f32 %v548, %v2293
        %v2295 = vpop.f32.mrb[0].mxu0
        %v2296 = vpop.f32.mrb[0].mxu0
        %v2297 = vadd.f32 %v551, %v2296
        %v2298 = vpop.f32.mrb[0].mxu0
        %2299 = vmatprep.mubr.bf16.mxu0 0
        %2300 = vmatmul.mubr.bf16.gmra.mrb[0].mxu0 %v2231
        %v2301 = vpop.f32.mrb[0].mxu0
        %v2302 = vadd.f32 %v556, %v2301
        %v2303 = vpop.f32.mrb[0].mxu0
        %v2304 = vpop.f32.mrb[0].mxu0
        %v2305 = vadd.f32 %v559, %v2304
        %v2306 = vpop.f32.mrb[0].mxu0
        %2307 = vmatprep.mubr.bf16.mxu0 0
        %2308 = vmatmul.mubr.bf16.gmra.mrb[0].mxu0 %v2232
        %v2309 = vpop.f32.mrb[0].mxu0
        %v2310 = vadd.f32 %v564, %v2309
        %v2311 = vpop.f32.mrb[0].mxu0
        %v2312 = vpop.f32.mrb[0].mxu0
        %v2313 = vadd.f32 %v567, %v2312
        %v2314 = vpop.f32.mrb[0].mxu0
        %2315 = vmatprep.mubr.bf16.mxu0 0
        %2316 = vmatmul.mubr.bf16.gmra.mrb[0].mxu0 %v2233
        %v2317 = vpop.f32.mrb[0].mxu0
        %v2318 = vadd.f32 %v572, %v2317
        %v2319 = vpop.f32.mrb[0].mxu0
        %v2320 = vpop.f32.mrb[0].mxu0
        %v2321 = vadd.f32 %v575, %v2320
        %v2322 = vpop.f32.mrb[0].mxu0
        %2323 = vmatprep.mubr.bf16.mxu0 0
        %2324 = vmatmul.mubr.bf16.gmra.mrb[0].mxu0 %v2234
        %v2325 = vpop.f32.mrb[0].mxu0
        %v2326 = vadd.f32 %v580, %v2325
        %v2327 = vpop.f32.mrb[0].mxu0
        %v2328 = vpop.f32.mrb[0].mxu0
        %v2329 = vadd.f32 %v583, %v2328
        %v2330 = vpop.f32.mrb[0].mxu0
        %2331 = vdwg.mxu0
        %v2332 = vtanh.pop %v2270
        %v2333 = vtanh.pop %v2273
        %v2334 = vtanh.pop %v2278
        %v2335 = vtanh.pop %v2281
        %v2336 = vtanh.pop %v2286
        %v2337 = vtanh.pop %v2289
        %v2338 = vtanh.pop %v2294
        %v2339 = vtanh.pop %v2297
        %v2340 = vtanh.pop %v2302
        %v2341 = vtanh.pop %v2305
        %v2342 = vtanh.pop %v2310
        %v2343 = vtanh.pop %v2313
        %v2344 = vtanh.pop %v2318
        %v2345 = vtanh.pop %v2321
        %v2346 = vtanh.pop %v2326
        %v2347 = vtanh.pop %v2329
        %v2348 = vand.u32 2147483647, %v2332
        %v2349 = vand.u32 2147483647, %v2333
        %v2350 = vand.u32 2147483647, %v2334
        %v2351 = vand.u32 2147483647, %v2335
        %v2352 = vand.u32 2147483647, %v2336
        %v2353 = vand.u32 2147483647, %v2337
        %v2354 = vand.u32 2147483647, %v2338
        %v2355 = vand.u32 2147483647, %v2339
        %v2356 = vand.u32 2147483647, %v2340
        %v2357 = vand.u32 2147483647, %v2341
        %v2358 = vand.u32 2147483647, %v2342
        %v2359 = vand.u32 2147483647, %v2343
        %v2360 = vand.u32 2147483647, %v2344
        %v2361 = vand.u32 2147483647, %v2345
        %v2362 = vand.u32 2147483647, %v2346
        %v2363 = vand.u32 2147483647, %v2347
        %v2364 = vmax.f32 %v2348, 1e-12
        %v2365 = vmax.f32 %v2349, 1e-12
        %v2366 = vmax.f32 %v2350, 1e-12
        %v2367 = vmax.f32 %v2351, 1e-12
        %v2368 = vmax.f32 %v2352, 1e-12
        %v2369 = vmax.f32 %v2353, 1e-12
        %v2370 = vmax.f32 %v2354, 1e-12
        %v2371 = vmax.f32 %v2355, 1e-12
        %v2372 = vmax.f32 %v2356, 1e-12
        %v2373 = vmax.f32 %v2357, 1e-12
        %v2374 = vmax.f32 %v2358, 1e-12
        %v2375 = vmax.f32 %v2359, 1e-12
        %v2376 = vmax.f32 %v2360, 1e-12
        %v2377 = vmax.f32 %v2361, 1e-12
        %v2378 = vmax.f32 %v2362, 1e-12
        %v2379 = vmax.f32 %v2363, 1e-12
        %v2380 = vlog2.pop %v2364
        %v2381 = vmul.f32 %v2380, 0.6931472
        %v2382 = vlog2.pop %v2365
        %v2383 = vmul.f32 %v2382, 0.6931472
        %v2384 = vlog2.pop %v2366
        %v2385 = vmul.f32 %v2384, 0.6931472
        %v2386 = vlog2.pop %v2367
        %v2387 = vmul.f32 %v2386, 0.6931472
        %v2388 = vlog2.pop %v2368
        %v2389 = vmul.f32 %v2388, 0.6931472
        %v2390 = vlog2.pop %v2369
        %v2391 = vmul.f32 %v2390, 0.6931472
        %v2392 = vlog2.pop %v2370
        %v2393 = vmul.f32 %v2392, 0.6931472
        %v2394 = vlog2.pop %v2371
        %v2395 = vmul.f32 %v2394, 0.6931472
        %v2396 = vlog2.pop %v2372
        %v2397 = vmul.f32 %v2396, 0.6931472
        %v2398 = vlog2.pop %v2373
        %v2399 = vmul.f32 %v2398, 0.6931472
        %v2400 = vlog2.pop %v2374
        %v2401 = vmul.f32 %v2400, 0.6931472
        %v2402 = vlog2.pop %v2375
        %v2403 = vmul.f32 %v2402, 0.6931472
        %v2404 = vlog2.pop %v2376
        %v2405 = vmul.f32 %v2404, 0.6931472
        %v2406 = vlog2.pop %v2377
        %v2407 = vmul.f32 %v2406, 0.6931472
        %v2408 = vlog2.pop %v2378
        %v2409 = vmul.f32 %v2408, 0.6931472
        %v2410 = vlog2.pop %v2379
        %v2411 = vmul.f32 %v2410, 0.6931472
        %vm2412 = vcmp.lt.f32.partialorder %v2332, 0.0
        %vm2413 = vcmp.lt.f32.partialorder %v2333, 0.0
        %vm2414 = vcmp.lt.f32.partialorder %v2334, 0.0
        %vm2415 = vcmp.lt.f32.partialorder %v2335, 0.0
        %vm2416 = vcmp.lt.f32.partialorder %v2336, 0.0
        %vm2417 = vcmp.lt.f32.partialorder %v2337, 0.0
        %vm2418 = vcmp.lt.f32.partialorder %v2338, 0.0
        %vm2419 = vcmp.lt.f32.partialorder %v2339, 0.0
        %vm2420 = vcmp.lt.f32.partialorder %v2340, 0.0
        %vm2421 = vcmp.lt.f32.partialorder %v2341, 0.0
        %vm2422 = vcmp.lt.f32.partialorder %v2342, 0.0
        %vm2423 = vcmp.lt.f32.partialorder %v2343, 0.0
        %vm2424 = vcmp.lt.f32.partialorder %v2344, 0.0
        %vm2425 = vcmp.lt.f32.partialorder %v2345, 0.0
        %vm2426 = vcmp.lt.f32.partialorder %v2346, 0.0
        %vm2427 = vcmp.lt.f32.partialorder %v2347, 0.0
        %v2428 = vsel %vm2412, 1, 0
        %v2429 = vsel %vm2413, 1, 0
        %v2430 = vsel %vm2414, 1, 0
        %v2431 = vsel %vm2415, 1, 0
        %v2432 = vsel %vm2416, 1, 0
        %v2433 = vsel %vm2417, 1, 0
        %v2434 = vsel %vm2418, 1, 0
        %v2435 = vsel %vm2419, 1, 0
        %v2436 = vsel %vm2420, 1, 0
        %v2437 = vsel %vm2421, 1, 0
        %v2438 = vsel %vm2422, 1, 0
        %v2439 = vsel %vm2423, 1, 0
        %v2440 = vsel %vm2424, 1, 0
        %v2441 = vsel %vm2425, 1, 0
        %v2442 = vsel %vm2426, 1, 0
        %v2443 = vsel %vm2427, 1, 0
        %v2444 = vcvt.s32.f32 %v2428
        %v2445 = vcvt.s32.f32 %v2429
        %v2446 = vcvt.s32.f32 %v2430
        %v2447 = vcvt.s32.f32 %v2431
        %v2448 = vcvt.s32.f32 %v2432
        %v2449 = vcvt.s32.f32 %v2433
        %v2450 = vcvt.s32.f32 %v2434
        %v2451 = vcvt.s32.f32 %v2435
        %v2452 = vcvt.s32.f32 %v2436
        %v2453 = vcvt.s32.f32 %v2437
        %v2454 = vcvt.s32.f32 %v2438
        %v2455 = vcvt.s32.f32 %v2439
        %v2456 = vcvt.s32.f32 %v2440
        %v2457 = vcvt.s32.f32 %v2441
        %v2458 = vcvt.s32.f32 %v2442
        %v2459 = vcvt.s32.f32 %v2443
        %v2460 = vpack.c.bf16 %v2445, %v2444
        %v2461 = vpack.c.bf16 %v2447, %v2446
        %v2462 = vpack.c.bf16 %v2449, %v2448
        %v2463 = vpack.c.bf16 %v2451, %v2450
        %v2464 = vpack.c.bf16 %v2453, %v2452
        %v2465 = vpack.c.bf16 %v2455, %v2454
        %v2466 = vpack.c.bf16 %v2457, %v2456
        %v2467 = vpack.c.bf16 %v2459, %v2458
        %v2468 = vpack.c.bf16 %v2383, %v2381
        %v2469 = vpack.c.bf16 %v2387, %v2385
        %v2470 = vpack.c.bf16 %v2391, %v2389
        %v2471 = vpack.c.bf16 %v2395, %v2393
        %v2472 = vpack.c.bf16 %v2399, %v2397
        %v2473 = vpack.c.bf16 %v2403, %v2401
        %v2474 = vpack.c.bf16 %v2407, %v2405
        %v2475 = vpack.c.bf16 %v2411, %v2409
        %2476 = vmatprep.subr.bf16.mxu0 0
        %2477 = vmatpush1.bf16.msra.mxu0 %v963
        %2478 = vmatprep.subr.bf16.mxu0 0
        %2479 = vmatpush1.bf16.msra.mxu0 %v964
        %2480 = vmatprep.subr.bf16.mxu0 0
        %2481 = vmatpush1.bf16.msra.mxu0 %v965
        %2482 = vmatprep.subr.bf16.mxu0 0
        %2483 = vmatpush1.bf16.msra.mxu0 %v966
        %2484 = vmatprep.subr.bf16.mxu0 0
        %2485 = vmatpush1.bf16.msra.mxu0 %v967
        %2486 = vmatprep.subr.bf16.mxu0 0
        %2487 = vmatpush1.bf16.msra.mxu0 %v968
        %2488 = vmatprep.subr.bf16.mxu0 0
        %2489 = vmatpush1.bf16.msra.mxu0 %v969
        %2490 = vmatprep.subr.bf16.mxu0 0
        %2491 = vmatpush1.bf16.msra.mxu0 %v970
        %2492 = vmatprep.subr.bf16.mxu0 0
        %2493 = vmatpush1.bf16.msra.mxu0 0
        %2494 = vmatprep.subr.bf16.mxu0 0
        %2495 = vmatpush1.bf16.msra.mxu0 0
        %2496 = vmatprep.subr.bf16.mxu0 0
        %2497 = vmatpush1.bf16.msra.mxu0 0
        %2498 = vmatprep.subr.bf16.mxu0 0
        %2499 = vmatpush1.bf16.msra.mxu0 0
        %2500 = vmatprep.subr.bf16.mxu0 0
        %2501 = vmatpush1.bf16.msra.mxu0 0
        %2502 = vmatprep.subr.bf16.mxu0 0
        %2503 = vmatpush1.bf16.msra.mxu0 0
        %2504 = vmatprep.subr.bf16.mxu0 0
        %2505 = vmatpush1.bf16.msra.mxu0 0
        %2506 = vmatprep.subr.bf16.mxu0 0
        %2507 = vmatpush1.bf16.msra.mxu0 0
        %2508 = vmatprep.mubr.bf16.mxu0 0
        %2509 = vmatmul.mubr.bf16.gmra.mrb[0].mxu0 %v2468
        %v2510 = vpop.f32.mrb[0].mxu0
        %v2511 = vadd.f32 0.0, %v2510
        %v2512 = vpop.f32.mrb[0].mxu0
        %v2513 = vpop.f32.mrb[0].mxu0
        %v2514 = vadd.f32 0.0, %v2513
        %v2515 = vpop.f32.mrb[0].mxu0
        %2516 = vmatprep.mubr.bf16.mxu0 0
        %2517 = vmatmul.mubr.bf16.gmra.mrb[0].mxu0 %v2469
        %v2518 = vpop.f32.mrb[0].mxu0
        %v2519 = vadd.f32 0.0, %v2518
        %v2520 = vpop.f32.mrb[0].mxu0
        %v2521 = vpop.f32.mrb[0].mxu0
        %v2522 = vadd.f32 0.0, %v2521
        %v2523 = vpop.f32.mrb[0].mxu0
        %2524 = vmatprep.mubr.bf16.mxu0 0
        %2525 = vmatmul.mubr.bf16.gmra.mrb[0].mxu0 %v2470
        %v2526 = vpop.f32.mrb[0].mxu0
        %v2527 = vadd.f32 0.0, %v2526
        %v2528 = vpop.f32.mrb[0].mxu0
        %v2529 = vpop.f32.mrb[0].mxu0
        %v2530 = vadd.f32 0.0, %v2529
        %v2531 = vpop.f32.mrb[0].mxu0
        %2532 = vmatprep.mubr.bf16.mxu0 0
        %2533 = vmatmul.mubr.bf16.gmra.mrb[0].mxu0 %v2471
        %v2534 = vpop.f32.mrb[0].mxu0
        %v2535 = vadd.f32 0.0, %v2534
        %v2536 = vpop.f32.mrb[0].mxu0
        %v2537 = vpop.f32.mrb[0].mxu0
        %v2538 = vadd.f32 0.0, %v2537
        %v2539 = vpop.f32.mrb[0].mxu0
        %2540 = vmatprep.mubr.bf16.mxu0 0
        %2541 = vmatmul.mubr.bf16.gmra.mrb[0].mxu0 %v2472
        %v2542 = vpop.f32.mrb[0].mxu0
        %v2543 = vadd.f32 0.0, %v2542
        %v2544 = vpop.f32.mrb[0].mxu0
        %v2545 = vpop.f32.mrb[0].mxu0
        %v2546 = vadd.f32 0.0, %v2545
        %v2547 = vpop.f32.mrb[0].mxu0
        %2548 = vmatprep.mubr.bf16.mxu0 0
        %2549 = vmatmul.mubr.bf16.gmra.mrb[0].mxu0 %v2473
        %v2550 = vpop.f32.mrb[0].mxu0
        %v2551 = vadd.f32 0.0, %v2550
        %v2552 = vpop.f32.mrb[0].mxu0
        %v2553 = vpop.f32.mrb[0].mxu0
        %v2554 = vadd.f32 0.0, %v2553
        %v2555 = vpop.f32.mrb[0].mxu0
        %2556 = vmatprep.mubr.bf16.mxu0 0
        %2557 = vmatmul.mubr.bf16.gmra.mrb[0].mxu0 %v2474
        %v2558 = vpop.f32.mrb[0].mxu0
        %v2559 = vadd.f32 0.0, %v2558
        %v2560 = vpop.f32.mrb[0].mxu0
        %v2561 = vpop.f32.mrb[0].mxu0
        %v2562 = vadd.f32 0.0, %v2561
        %v2563 = vpop.f32.mrb[0].mxu0
        %2564 = vmatprep.mubr.bf16.mxu0 0
        %2565 = vmatmul.mubr.bf16.gmra.mrb[0].mxu0 %v2475
        %v2566 = vpop.f32.mrb[0].mxu0
        %v2567 = vadd.f32 0.0, %v2566
        %v2568 = vpop.f32.mrb[0].mxu0
        %v2569 = vpop.f32.mrb[0].mxu0
        %v2570 = vadd.f32 0.0, %v2569
        %v2571 = vpop.f32.mrb[0].mxu0
        %2572 = vdwg.mxu0
        %2573 = vmatprep.subr.bf16.mxu0 0
        %2574 = vmatpush1.bf16.msra.mxu0 %v963
        %2575 = vmatprep.subr.bf16.mxu0 0
        %2576 = vmatpush1.bf16.msra.mxu0 %v964
        %2577 = vmatprep.subr.bf16.mxu0 0
        %2578 = vmatpush1.bf16.msra.mxu0 %v965
        %2579 = vmatprep.subr.bf16.mxu0 0
        %2580 = vmatpush1.bf16.msra.mxu0 %v966
        %2581 = vmatprep.subr.bf16.mxu0 0
        %2582 = vmatpush1.bf16.msra.mxu0 %v967
        %2583 = vmatprep.subr.bf16.mxu0 0
        %2584 = vmatpush1.bf16.msra.mxu0 %v968
        %2585 = vmatprep.subr.bf16.mxu0 0
        %2586 = vmatpush1.bf16.msra.mxu0 %v969
        %2587 = vmatprep.subr.bf16.mxu0 0
        %2588 = vmatpush1.bf16.msra.mxu0 %v970
        %2589 = vmatprep.subr.bf16.mxu0 0
        %2590 = vmatpush1.bf16.msra.mxu0 0
        %2591 = vmatprep.subr.bf16.mxu0 0
        %2592 = vmatpush1.bf16.msra.mxu0 0
        %2593 = vmatprep.subr.bf16.mxu0 0
        %2594 = vmatpush1.bf16.msra.mxu0 0
        %2595 = vmatprep.subr.bf16.mxu0 0
        %2596 = vmatpush1.bf16.msra.mxu0 0
        %2597 = vmatprep.subr.bf16.mxu0 0
        %2598 = vmatpush1.bf16.msra.mxu0 0
        %2599 = vmatprep.subr.bf16.mxu0 0
        %2600 = vmatpush1.bf16.msra.mxu0 0
        %2601 = vmatprep.subr.bf16.mxu0 0
        %2602 = vmatpush1.bf16.msra.mxu0 0
        %2603 = vmatprep.subr.bf16.mxu0 0
        %2604 = vmatpush1.bf16.msra.mxu0 0
        %2605 = vmatprep.mubr.bf16.mxu0 0
        %2606 = vmatmul.mubr.bf16.gmra.mrb[0].mxu0 %v2460
        %v2607 = vpop.f32.mrb[0].mxu0
        %v2608 = vadd.f32 0.0, %v2607
        %v2609 = vpop.f32.mrb[0].mxu0
        %v2610 = vpop.f32.mrb[0].mxu0
        %v2611 = vadd.f32 0.0, %v2610
        %v2612 = vpop.f32.mrb[0].mxu0
        %2613 = vmatprep.mubr.bf16.mxu0 0
        %2614 = vmatmul.mubr.bf16.gmra.mrb[0].mxu0 %v2461
        %v2615 = vpop.f32.mrb[0].mxu0
        %v2616 = vadd.f32 0.0, %v2615
        %v2617 = vpop.f32.mrb[0].mxu0
        %v2618 = vpop.f32.mrb[0].mxu0
        %v2619 = vadd.f32 0.0, %v2618
        %v2620 = vpop.f32.mrb[0].mxu0
        %2621 = vmatprep.mubr.bf16.mxu0 0
        %2622 = vmatmul.mubr.bf16.gmra.mrb[0].mxu0 %v2462
        %v2623 = vpop.f32.mrb[0].mxu0
        %v2624 = vadd.f32 0.0, %v2623
        %v2625 = vpop.f32.mrb[0].mxu0
        %v2626 = vpop.f32.mrb[0].mxu0
        %v2627 = vadd.f32 0.0, %v2626
        %v2628 = vpop.f32.mrb[0].mxu0
        %2629 = vmatprep.mubr.bf16.mxu0 0
        %2630 = vmatmul.mubr.bf16.gmra.mrb[0].mxu0 %v2463
        %v2631 = vpop.f32.mrb[0].mxu0
        %v2632 = vadd.f32 0.0, %v2631
        %v2633 = vpop.f32.mrb[0].mxu0
        %v2634 = vpop.f32.mrb[0].mxu0
        %v2635 = vadd.f32 0.0, %v2634
        %v2636 = vpop.f32.mrb[0].mxu0
        %2637 = vmatprep.mubr.bf16.mxu0 0
        %2638 = vmatmul.mubr.bf16.gmra.mrb[0].mxu0 %v2464
        %v2639 = vpop.f32.mrb[0].mxu0
        %v2640 = vadd.f32 0.0, %v2639
        %v2641 = vpop.f32.mrb[0].mxu0
        %v2642 = vpop.f32.mrb[0].mxu0
        %v2643 = vadd.f32 0.0, %v2642
        %v2644 = vpop.f32.mrb[0].mxu0
        %2645 = vmatprep.mubr.bf16.mxu0 0
        %2646 = vmatmul.mubr.bf16.gmra.mrb[0].mxu0 %v2465
        %v2647 = vpop.f32.mrb[0].mxu0
        %v2648 = vadd.f32 0.0, %v2647
        %v2649 = vpop.f32.mrb[0].mxu0
        %v2650 = vpop.f32.mrb[0].mxu0
        %v2651 = vadd.f32 0.0, %v2650
        %v2652 = vpop.f32.mrb[0].mxu0
        %2653 = vmatprep.mubr.bf16.mxu0 0
        %2654 = vmatmul.mubr.bf16.gmra.mrb[0].mxu0 %v2466
        %v2655 = vpop.f32.mrb[0].mxu0
        %v2656 = vadd.f32 0.0, %v2655
        %v2657 = vpop.f32.mrb[0].mxu0
        %v2658 = vpop.f32.mrb[0].mxu0
        %v2659 = vadd.f32 0.0, %v2658
        %v2660 = vpop.f32.mrb[0].mxu0
        %2661 = vmatprep.mubr.bf16.mxu0 0
        %2662 = vmatmul.mubr.bf16.gmra.mrb[0].mxu0 %v2467
        %v2663 = vpop.f32.mrb[0].mxu0
        %v2664 = vadd.f32 0.0, %v2663
        %v2665 = vpop.f32.mrb[0].mxu0
        %v2666 = vpop.f32.mrb[0].mxu0
        %v2667 = vadd.f32 0.0, %v2666
        %v2668 = vpop.f32.mrb[0].mxu0
        %2669 = vdwg.mxu0
        %v2670 = vmul.f32 %v2608, 0.5
        %v2671 = vmul.f32 %v2611, 0.5
        %v2672 = vmul.f32 %v2616, 0.5
        %v2673 = vmul.f32 %v2619, 0.5
        %v2674 = vmul.f32 %v2624, 0.5
        %v2675 = vmul.f32 %v2627, 0.5
        %v2676 = vmul.f32 %v2632, 0.5
        %v2677 = vmul.f32 %v2635, 0.5
        %v2678 = vmul.f32 %v2640, 0.5
        %v2679 = vmul.f32 %v2643, 0.5
        %v2680 = vmul.f32 %v2648, 0.5
        %v2681 = vmul.f32 %v2651, 0.5
        %v2682 = vmul.f32 %v2656, 0.5
        %v2683 = vmul.f32 %v2659, 0.5
        %v2684 = vmul.f32 %v2664, 0.5
        %v2685 = vmul.f32 %v2667, 0.5
        %v2686 = vfloor.f32 %v2670
        %v2687 = vfloor.f32 %v2671
        %v2688 = vfloor.f32 %v2672
        %v2689 = vfloor.f32 %v2673
        %v2690 = vfloor.f32 %v2674
        %v2691 = vfloor.f32 %v2675
        %v2692 = vfloor.f32 %v2676
        %v2693 = vfloor.f32 %v2677
        %v2694 = vfloor.f32 %v2678
        %v2695 = vfloor.f32 %v2679
        %v2696 = vfloor.f32 %v2680
        %v2697 = vfloor.f32 %v2681
        %v2698 = vfloor.f32 %v2682
        %v2699 = vfloor.f32 %v2683
        %v2700 = vfloor.f32 %v2684
        %v2701 = vfloor.f32 %v2685
        %v2702 = vmul.f32 %v2686, 2.0
        %v2703 = vmul.f32 %v2687, 2.0
        %v2704 = vmul.f32 %v2688, 2.0
        %v2705 = vmul.f32 %v2689, 2.0
        %v2706 = vmul.f32 %v2690, 2.0
        %v2707 = vmul.f32 %v2691, 2.0
        %v2708 = vmul.f32 %v2692, 2.0
        %v2709 = vmul.f32 %v2693, 2.0
        %v2710 = vmul.f32 %v2694, 2.0
        %v2711 = vmul.f32 %v2695, 2.0
        %v2712 = vmul.f32 %v2696, 2.0
        %v2713 = vmul.f32 %v2697, 2.0
        %v2714 = vmul.f32 %v2698, 2.0
        %v2715 = vmul.f32 %v2699, 2.0
        %v2716 = vmul.f32 %v2700, 2.0
        %v2717 = vmul.f32 %v2701, 2.0
        %v2718 = vsub.f32 %v2608, %v2702
        %v2719 = vsub.f32 %v2611, %v2703
        %v2720 = vsub.f32 %v2616, %v2704
        %v2721 = vsub.f32 %v2619, %v2705
        %v2722 = vsub.f32 %v2624, %v2706
        %v2723 = vsub.f32 %v2627, %v2707
        %v2724 = vsub.f32 %v2632, %v2708
        %v2725 = vsub.f32 %v2635, %v2709
        %v2726 = vsub.f32 %v2640, %v2710
        %v2727 = vsub.f32 %v2643, %v2711
        %v2728 = vsub.f32 %v2648, %v2712
        %v2729 = vsub.f32 %v2651, %v2713
        %v2730 = vsub.f32 %v2656, %v2714
        %v2731 = vsub.f32 %v2659, %v2715
        %v2732 = vsub.f32 %v2664, %v2716
        %v2733 = vsub.f32 %v2667, %v2717
        %v2734 = vmul.f32 %v2718, 2.0
        %v2735 = vmul.f32 %v2719, 2.0
        %v2736 = vmul.f32 %v2720, 2.0
        %v2737 = vmul.f32 %v2721, 2.0
        %v2738 = vmul.f32 %v2722, 2.0
        %v2739 = vmul.f32 %v2723, 2.0
        %v2740 = vmul.f32 %v2724, 2.0
        %v2741 = vmul.f32 %v2725, 2.0
        %v2742 = vmul.f32 %v2726, 2.0
        %v2743 = vmul.f32 %v2727, 2.0
        %v2744 = vmul.f32 %v2728, 2.0
        %v2745 = vmul.f32 %v2729, 2.0
        %v2746 = vmul.f32 %v2730, 2.0
        %v2747 = vmul.f32 %v2731, 2.0
        %v2748 = vmul.f32 %v2732, 2.0
        %v2749 = vmul.f32 %v2733, 2.0
        %v2750 = vsub.f32 1.0, %v2734
        %v2751 = vsub.f32 1.0, %v2735
        %v2752 = vsub.f32 1.0, %v2736
        %v2753 = vsub.f32 1.0, %v2737
        %v2754 = vsub.f32 1.0, %v2738
        %v2755 = vsub.f32 1.0, %v2739
        %v2756 = vsub.f32 1.0, %v2740
        %v2757 = vsub.f32 1.0, %v2741
        %v2758 = vsub.f32 1.0, %v2742
        %v2759 = vsub.f32 1.0, %v2743
        %v2760 = vsub.f32 1.0, %v2744
        %v2761 = vsub.f32 1.0, %v2745
        %v2762 = vsub.f32 1.0, %v2746
        %v2763 = vsub.f32 1.0, %v2747
        %v2764 = vsub.f32 1.0, %v2748
        %v2765 = vsub.f32 1.0, %v2749
        %v2766 = vmul.f32 %v2511, 1.442695
        %v2767 = vpow.pop %v2766
        %v2768 = vmul.f32 %v2514, 1.442695
        %v2769 = vpow.pop %v2768
        %v2770 = vmul.f32 %v2519, 1.442695
        %v2771 = vpow.pop %v2770
        %v2772 = vmul.f32 %v2522, 1.442695
        %v2773 = vpow.pop %v2772
        %v2774 = vmul.f32 %v2527, 1.442695
        %v2775 = vpow.pop %v2774
        %v2776 = vmul.f32 %v2530, 1.442695
        %v2777 = vpow.pop %v2776
        %v2778 = vmul.f32 %v2535, 1.442695
        %v2779 = vpow.pop %v2778
        %v2780 = vmul.f32 %v2538, 1.442695
        %v2781 = vpow.pop %v2780
        %v2782 = vmul.f32 %v2543, 1.442695
        %v2783 = vpow.pop %v2782
        %v2784 = vmul.f32 %v2546, 1.442695
        %v2785 = vpow.pop %v2784
        %v2786 = vmul.f32 %v2551, 1.442695
        %v2787 = vpow.pop %v2786
        %v2788 = vmul.f32 %v2554, 1.442695
        %v2789 = vpow.pop %v2788
        %v2790 = vmul.f32 %v2559, 1.442695
        %v2791 = vpow.pop %v2790
        %v2792 = vmul.f32 %v2562, 1.442695
        %v2793 = vpow.pop %v2792
        %v2794 = vmul.f32 %v2567, 1.442695
        %v2795 = vpow.pop %v2794
        %v2796 = vmul.f32 %v2570, 1.442695
        %v2797 = vpow.pop %v2796
        %v2798 = vmul.f32 %v2750, %v2767
        %v2799 = vmul.f32 %v2751, %v2769
        %v2800 = vmul.f32 %v2752, %v2771
        %v2801 = vmul.f32 %v2753, %v2773
        %v2802 = vmul.f32 %v2754, %v2775
        %v2803 = vmul.f32 %v2755, %v2777
        %v2804 = vmul.f32 %v2756, %v2779
        %v2805 = vmul.f32 %v2757, %v2781
        %v2806 = vmul.f32 %v2758, %v2783
        %v2807 = vmul.f32 %v2759, %v2785
        %v2808 = vmul.f32 %v2760, %v2787
        %v2809 = vmul.f32 %v2761, %v2789
        %v2810 = vmul.f32 %v2762, %v2791
        %v2811 = vmul.f32 %v2763, %v2793
        %v2812 = vmul.f32 %v2764, %v2795
        %v2813 = vmul.f32 %v2765, %v2797
        %v2814 = vmax.f32 %v2798, -0.999999
        %v2815 = vmax.f32 %v2799, -0.999999
        %v2816 = vmax.f32 %v2800, -0.999999
        %v2817 = vmax.f32 %v2801, -0.999999
        %v2818 = vmax.f32 %v2802, -0.999999
        %v2819 = vmax.f32 %v2803, -0.999999
        %v2820 = vmax.f32 %v2804, -0.999999
        %v2821 = vmax.f32 %v2805, -0.999999
        %v2822 = vmax.f32 %v2806, -0.999999
        %v2823 = vmax.f32 %v2807, -0.999999
        %v2824 = vmax.f32 %v2808, -0.999999
        %v2825 = vmax.f32 %v2809, -0.999999
        %v2826 = vmax.f32 %v2810, -0.999999
        %v2827 = vmax.f32 %v2811, -0.999999
        %v2828 = vmax.f32 %v2812, -0.999999
        %v2829 = vmax.f32 %v2813, -0.999999
        %v2830 = vmin.f32 %v2814, 0.999999
        %v2831 = vmin.f32 %v2815, 0.999999
        %v2832 = vmin.f32 %v2816, 0.999999
        %v2833 = vmin.f32 %v2817, 0.999999
        %v2834 = vmin.f32 %v2818, 0.999999
        %v2835 = vmin.f32 %v2819, 0.999999
        %v2836 = vmin.f32 %v2820, 0.999999
        %v2837 = vmin.f32 %v2821, 0.999999
        %v2838 = vmin.f32 %v2822, 0.999999
        %v2839 = vmin.f32 %v2823, 0.999999
        %v2840 = vmin.f32 %v2824, 0.999999
        %v2841 = vmin.f32 %v2825, 0.999999
        %v2842 = vmin.f32 %v2826, 0.999999
        %v2843 = vmin.f32 %v2827, 0.999999
        %v2844 = vmin.f32 %v2828, 0.999999
        %v2845 = vmin.f32 %v2829, 0.999999
        %v2846 = vadd.f32 %v2830, 1.0
        %v2847 = vadd.f32 %v2831, 1.0
        %v2848 = vadd.f32 %v2832, 1.0
        %v2849 = vadd.f32 %v2833, 1.0
        %v2850 = vadd.f32 %v2834, 1.0
        %v2851 = vadd.f32 %v2835, 1.0
        %v2852 = vadd.f32 %v2836, 1.0
        %v2853 = vadd.f32 %v2837, 1.0
        %v2854 = vadd.f32 %v2838, 1.0
        %v2855 = vadd.f32 %v2839, 1.0
        %v2856 = vadd.f32 %v2840, 1.0
        %v2857 = vadd.f32 %v2841, 1.0
        %v2858 = vadd.f32 %v2842, 1.0
        %v2859 = vadd.f32 %v2843, 1.0
        %v2860 = vadd.f32 %v2844, 1.0
        %v2861 = vadd.f32 %v2845, 1.0
        %v2862 = vsub.f32 1.0, %v2830
        %v2863 = vsub.f32 1.0, %v2831
        %v2864 = vsub.f32 1.0, %v2832
        %v2865 = vsub.f32 1.0, %v2833
        %v2866 = vsub.f32 1.0, %v2834
        %v2867 = vsub.f32 1.0, %v2835
        %v2868 = vsub.f32 1.0, %v2836
        %v2869 = vsub.f32 1.0, %v2837
        %v2870 = vsub.f32 1.0, %v2838
        %v2871 = vsub.f32 1.0, %v2839
        %v2872 = vsub.f32 1.0, %v2840
        %v2873 = vsub.f32 1.0, %v2841
        %v2874 = vsub.f32 1.0, %v2842
        %v2875 = vsub.f32 1.0, %v2843
        %v2876 = vsub.f32 1.0, %v2844
        %v2877 = vsub.f32 1.0, %v2845
        %v2878 = vrcp.pop %v2862
        %v2879 = vmul.f32 %v2846, %v2878
        %v2880 = vrcp.pop %v2863
        %v2881 = vmul.f32 %v2847, %v2880
        %v2882 = vrcp.pop %v2864
        %v2883 = vmul.f32 %v2848, %v2882
        %v2884 = vrcp.pop %v2865
        %v2885 = vmul.f32 %v2849, %v2884
        %v2886 = vrcp.pop %v2866
        %v2887 = vmul.f32 %v2850, %v2886
        %v2888 = vrcp.pop %v2867
        %v2889 = vmul.f32 %v2851, %v2888
        %v2890 = vrcp.pop %v2868
        %v2891 = vmul.f32 %v2852, %v2890
        %v2892 = vrcp.pop %v2869
        %v2893 = vmul.f32 %v2853, %v2892
        %v2894 = vrcp.pop %v2870
        %v2895 = vmul.f32 %v2854, %v2894
        %v2896 = vrcp.pop %v2871
        %v2897 = vmul.f32 %v2855, %v2896
        %v2898 = vrcp.pop %v2872
        %v2899 = vmul.f32 %v2856, %v2898
        %v2900 = vrcp.pop %v2873
        %v2901 = vmul.f32 %v2857, %v2900
        %v2902 = vrcp.pop %v2874
        %v2903 = vmul.f32 %v2858, %v2902
        %v2904 = vrcp.pop %v2875
        %v2905 = vmul.f32 %v2859, %v2904
        %v2906 = vrcp.pop %v2876
        %v2907 = vmul.f32 %v2860, %v2906
        %v2908 = vrcp.pop %v2877
        %v2909 = vmul.f32 %v2861, %v2908
        %v2910 = vlog2.pop %v2879
        %v2911 = vmul.f32 %v2910, 0.6931472
        %v2912 = vlog2.pop %v2881
        %v2913 = vmul.f32 %v2912, 0.6931472
        %v2914 = vlog2.pop %v2883
        %v2915 = vmul.f32 %v2914, 0.6931472
        %v2916 = vlog2.pop %v2885
        %v2917 = vmul.f32 %v2916, 0.6931472
        %v2918 = vlog2.pop %v2887
        %v2919 = vmul.f32 %v2918, 0.6931472
        %v2920 = vlog2.pop %v2889
        %v2921 = vmul.f32 %v2920, 0.6931472
        %v2922 = vlog2.pop %v2891
        %v2923 = vmul.f32 %v2922, 0.6931472
        %v2924 = vlog2.pop %v2893
        %v2925 = vmul.f32 %v2924, 0.6931472
        %v2926 = vlog2.pop %v2895
        %v2927 = vmul.f32 %v2926, 0.6931472
        %v2928 = vlog2.pop %v2897
        %v2929 = vmul.f32 %v2928, 0.6931472
        %v2930 = vlog2.pop %v2899
        %v2931 = vmul.f32 %v2930, 0.6931472
        %v2932 = vlog2.pop %v2901
        %v2933 = vmul.f32 %v2932, 0.6931472
        %v2934 = vlog2.pop %v2903
        %v2935 = vmul.f32 %v2934, 0.6931472
        %v2936 = vlog2.pop %v2905
        %v2937 = vmul.f32 %v2936, 0.6931472
        %v2938 = vlog2.pop %v2907
        %v2939 = vmul.f32 %v2938, 0.6931472
        %v2940 = vlog2.pop %v2909
        %v2941 = vmul.f32 %v2940, 0.6931472
        %v2942 = vmax.f32 %v1446, %v2911
        %v2943 = vmax.f32 %v1446, %v2913
        %v2944 = vmax.f32 %v1446, %v2915
        %v2945 = vmax.f32 %v1446, %v2917
        %v2946 = vmax.f32 %v1446, %v2919
        %v2947 = vmax.f32 %v1446, %v2921
        %v2948 = vmax.f32 %v1446, %v2923
        %v2949 = vmax.f32 %v1446, %v2925
        %v2950 = vmax.f32 %v1446, %v2927
        %v2951 = vmax.f32 %v1446, %v2929
        %v2952 = vmax.f32 %v1446, %v2931
        %v2953 = vmax.f32 %v1446, %v2933
        %v2954 = vmax.f32 %v1446, %v2935
        %v2955 = vmax.f32 %v1446, %v2937
        %v2956 = vmax.f32 %v1446, %v2939
        %v2957 = vmax.f32 %v1446, %v2941
        %v2958 = vmin.f32 %v1463, %v2942
        %v2959 = vmin.f32 %v1463, %v2943
        %v2960 = vmin.f32 %v1463, %v2944
        %v2961 = vmin.f32 %v1463, %v2945
        %v2962 = vmin.f32 %v1463, %v2946
        %v2963 = vmin.f32 %v1463, %v2947
        %v2964 = vmin.f32 %v1463, %v2948
        %v2965 = vmin.f32 %v1463, %v2949
        %v2966 = vmin.f32 %v1463, %v2950
        %v2967 = vmin.f32 %v1463, %v2951
        %v2968 = vmin.f32 %v1463, %v2952
        %v2969 = vmin.f32 %v1463, %v2953
        %v2970 = vmin.f32 %v1463, %v2954
        %v2971 = vmin.f32 %v1463, %v2955
        %v2972 = vmin.f32 %v1463, %v2956
        %v2973 = vmin.f32 %v1463, %v2957
        %v2974 = vpack.c.bf16 %v2959, %v2958
        %v2975 = vpack.c.bf16 %v2961, %v2960
        %v2976 = vpack.c.bf16 %v2963, %v2962
        %v2977 = vpack.c.bf16 %v2965, %v2964
        %v2978 = vpack.c.bf16 %v2967, %v2966
        %v2979 = vpack.c.bf16 %v2969, %v2968
        %v2980 = vpack.c.bf16 %v2971, %v2970
        %v2981 = vpack.c.bf16 %v2973, %v2972
        %2982 = vmatprep.subr.bf16.mxu0 0
        %2983 = vmatpush1.bf16.msra.mxu0 %v658
        %2984 = vmatprep.subr.bf16.mxu0 0
        %2985 = vmatpush1.bf16.msra.mxu0 %v659
        %2986 = vmatprep.subr.bf16.mxu0 0
        %2987 = vmatpush1.bf16.msra.mxu0 %v660
        %2988 = vmatprep.subr.bf16.mxu0 0
        %2989 = vmatpush1.bf16.msra.mxu0 %v661
        %2990 = vmatprep.subr.bf16.mxu0 0
        %2991 = vmatpush1.bf16.msra.mxu0 %v662
        %2992 = vmatprep.subr.bf16.mxu0 0
        %2993 = vmatpush1.bf16.msra.mxu0 %v663
        %2994 = vmatprep.subr.bf16.mxu0 0
        %2995 = vmatpush1.bf16.msra.mxu0 %v664
        %2996 = vmatprep.subr.bf16.mxu0 0
        %2997 = vmatpush1.bf16.msra.mxu0 %v665
        %2998 = vmatprep.subr.bf16.mxu0 0
        %2999 = vmatpush1.bf16.msra.mxu0 0
        %3000 = vmatprep.subr.bf16.mxu0 0
        %3001 = vmatpush1.bf16.msra.mxu0 0
        %3002 = vmatprep.subr.bf16.mxu0 0
        %3003 = vmatpush1.bf16.msra.mxu0 0
        %3004 = vmatprep.subr.bf16.mxu0 0
        %3005 = vmatpush1.bf16.msra.mxu0 0
        %3006 = vmatprep.subr.bf16.mxu0 0
        %3007 = vmatpush1.bf16.msra.mxu0 0
        %3008 = vmatprep.subr.bf16.mxu0 0
        %3009 = vmatpush1.bf16.msra.mxu0 0
        %3010 = vmatprep.subr.bf16.mxu0 0
        %3011 = vmatpush1.bf16.msra.mxu0 0
        %3012 = vmatprep.subr.bf16.mxu0 0
        %3013 = vmatpush1.bf16.msra.mxu0 0
        %3014 = vmatprep.mubr.bf16.mxu0 0
        %3015 = vmatmul.mubr.bf16.gmra.mrb[0].mxu0 %v2974
        %v3016 = vpop.f32.mrb[0].mxu0
        %v3017 = vadd.f32 %v524, %v3016
        %v3018 = vpop.f32.mrb[0].mxu0
        %v3019 = vpop.f32.mrb[0].mxu0
        %v3020 = vadd.f32 %v527, %v3019
        %v3021 = vpop.f32.mrb[0].mxu0
        %3022 = vmatprep.mubr.bf16.mxu0 0
        %3023 = vmatmul.mubr.bf16.gmra.mrb[0].mxu0 %v2975
        %v3024 = vpop.f32.mrb[0].mxu0
        %v3025 = vadd.f32 %v532, %v3024
        %v3026 = vpop.f32.mrb[0].mxu0
        %v3027 = vpop.f32.mrb[0].mxu0
        %v3028 = vadd.f32 %v535, %v3027
        %v3029 = vpop.f32.mrb[0].mxu0
        %3030 = vmatprep.mubr.bf16.mxu0 0
        %3031 = vmatmul.mubr.bf16.gmra.mrb[0].mxu0 %v2976
        %v3032 = vpop.f32.mrb[0].mxu0
        %v3033 = vadd.f32 %v540, %v3032
        %v3034 = vpop.f32.mrb[0].mxu0
        %v3035 = vpop.f32.mrb[0].mxu0
        %v3036 = vadd.f32 %v543, %v3035
        %v3037 = vpop.f32.mrb[0].mxu0
        %3038 = vmatprep.mubr.bf16.mxu0 0
        %3039 = vmatmul.mubr.bf16.gmra.mrb[0].mxu0 %v2977
        %v3040 = vpop.f32.mrb[0].mxu0
        %v3041 = vadd.f32 %v548, %v3040
        %v3042 = vpop.f32.mrb[0].mxu0
        %v3043 = vpop.f32.mrb[0].mxu0
        %v3044 = vadd.f32 %v551, %v3043
        %v3045 = vpop.f32.mrb[0].mxu0
        %3046 = vmatprep.mubr.bf16.mxu0 0
        %3047 = vmatmul.mubr.bf16.gmra.mrb[0].mxu0 %v2978
        %v3048 = vpop.f32.mrb[0].mxu0
        %v3049 = vadd.f32 %v556, %v3048
        %v3050 = vpop.f32.mrb[0].mxu0
        %v3051 = vpop.f32.mrb[0].mxu0
        %v3052 = vadd.f32 %v559, %v3051
        %v3053 = vpop.f32.mrb[0].mxu0
        %3054 = vmatprep.mubr.bf16.mxu0 0
        %3055 = vmatmul.mubr.bf16.gmra.mrb[0].mxu0 %v2979
        %v3056 = vpop.f32.mrb[0].mxu0
        %v3057 = vadd.f32 %v564, %v3056
        %v3058 = vpop.f32.mrb[0].mxu0
        %v3059 = vpop.f32.mrb[0].mxu0
        %v3060 = vadd.f32 %v567, %v3059
        %v3061 = vpop.f32.mrb[0].mxu0
        %3062 = vmatprep.mubr.bf16.mxu0 0
        %3063 = vmatmul.mubr.bf16.gmra.mrb[0].mxu0 %v2980
        %v3064 = vpop.f32.mrb[0].mxu0
        %v3065 = vadd.f32 %v572, %v3064
        %v3066 = vpop.f32.mrb[0].mxu0
        %v3067 = vpop.f32.mrb[0].mxu0
        %v3068 = vadd.f32 %v575, %v3067
        %v3069 = vpop.f32.mrb[0].mxu0
        %3070 = vmatprep.mubr.bf16.mxu0 0
        %3071 = vmatmul.mubr.bf16.gmra.mrb[0].mxu0 %v2981
        %v3072 = vpop.f32.mrb[0].mxu0
        %v3073 = vadd.f32 %v580, %v3072
        %v3074 = vpop.f32.mrb[0].mxu0
        %v3075 = vpop.f32.mrb[0].mxu0
        %v3076 = vadd.f32 %v583, %v3075
        %v3077 = vpop.f32.mrb[0].mxu0
        %3078 = vdwg.mxu0
        %v3079 = vtanh.pop %v3017
        %v3080 = vtanh.pop %v3020
        %v3081 = vtanh.pop %v3025
        %v3082 = vtanh.pop %v3028
        %v3083 = vtanh.pop %v3033
        %v3084 = vtanh.pop %v3036
        %v3085 = vtanh.pop %v3041
        %v3086 = vtanh.pop %v3044
        %v3087 = vtanh.pop %v3049
        %v3088 = vtanh.pop %v3052
        %v3089 = vtanh.pop %v3057
        %v3090 = vtanh.pop %v3060
        %v3091 = vtanh.pop %v3065
        %v3092 = vtanh.pop %v3068
        %v3093 = vtanh.pop %v3073
        %v3094 = vtanh.pop %v3076
        %v3095 = vand.u32 2147483647, %v3079
        %v3096 = vand.u32 2147483647, %v3080
        %v3097 = vand.u32 2147483647, %v3081
        %v3098 = vand.u32 2147483647, %v3082
        %v3099 = vand.u32 2147483647, %v3083
        %v3100 = vand.u32 2147483647, %v3084
        %v3101 = vand.u32 2147483647, %v3085
        %v3102 = vand.u32 2147483647, %v3086
        %v3103 = vand.u32 2147483647, %v3087
        %v3104 = vand.u32 2147483647, %v3088
        %v3105 = vand.u32 2147483647, %v3089
        %v3106 = vand.u32 2147483647, %v3090
        %v3107 = vand.u32 2147483647, %v3091
        %v3108 = vand.u32 2147483647, %v3092
        %v3109 = vand.u32 2147483647, %v3093
        %v3110 = vand.u32 2147483647, %v3094
        %v3111 = vmax.f32 %v3095, 1e-12
        %v3112 = vmax.f32 %v3096, 1e-12
        %v3113 = vmax.f32 %v3097, 1e-12
        %v3114 = vmax.f32 %v3098, 1e-12
        %v3115 = vmax.f32 %v3099, 1e-12
        %v3116 = vmax.f32 %v3100, 1e-12
        %v3117 = vmax.f32 %v3101, 1e-12
        %v3118 = vmax.f32 %v3102, 1e-12
        %v3119 = vmax.f32 %v3103, 1e-12
        %v3120 = vmax.f32 %v3104, 1e-12
        %v3121 = vmax.f32 %v3105, 1e-12
        %v3122 = vmax.f32 %v3106, 1e-12
        %v3123 = vmax.f32 %v3107, 1e-12
        %v3124 = vmax.f32 %v3108, 1e-12
        %v3125 = vmax.f32 %v3109, 1e-12
        %v3126 = vmax.f32 %v3110, 1e-12
        %v3127 = vlog2.pop %v3111
        %v3128 = vmul.f32 %v3127, 0.6931472
        %v3129 = vlog2.pop %v3112
        %v3130 = vmul.f32 %v3129, 0.6931472
        %v3131 = vlog2.pop %v3113
        %v3132 = vmul.f32 %v3131, 0.6931472
        %v3133 = vlog2.pop %v3114
        %v3134 = vmul.f32 %v3133, 0.6931472
        %v3135 = vlog2.pop %v3115
        %v3136 = vmul.f32 %v3135, 0.6931472
        %v3137 = vlog2.pop %v3116
        %v3138 = vmul.f32 %v3137, 0.6931472
        %v3139 = vlog2.pop %v3117
        %v3140 = vmul.f32 %v3139, 0.6931472
        %v3141 = vlog2.pop %v3118
        %v3142 = vmul.f32 %v3141, 0.6931472
        %v3143 = vlog2.pop %v3119
        %v3144 = vmul.f32 %v3143, 0.6931472
        %v3145 = vlog2.pop %v3120
        %v3146 = vmul.f32 %v3145, 0.6931472
        %v3147 = vlog2.pop %v3121
        %v3148 = vmul.f32 %v3147, 0.6931472
        %v3149 = vlog2.pop %v3122
        %v3150 = vmul.f32 %v3149, 0.6931472
        %v3151 = vlog2.pop %v3123
        %v3152 = vmul.f32 %v3151, 0.6931472
        %v3153 = vlog2.pop %v3124
        %v3154 = vmul.f32 %v3153, 0.6931472
        %v3155 = vlog2.pop %v3125
        %v3156 = vmul.f32 %v3155, 0.6931472
        %v3157 = vlog2.pop %v3126
        %v3158 = vmul.f32 %v3157, 0.6931472
        %vm3159 = vcmp.lt.f32.partialorder %v3079, 0.0
        %vm3160 = vcmp.lt.f32.partialorder %v3080, 0.0
        %vm3161 = vcmp.lt.f32.partialorder %v3081, 0.0
        %vm3162 = vcmp.lt.f32.partialorder %v3082, 0.0
        %vm3163 = vcmp.lt.f32.partialorder %v3083, 0.0
        %vm3164 = vcmp.lt.f32.partialorder %v3084, 0.0
        %vm3165 = vcmp.lt.f32.partialorder %v3085, 0.0
        %vm3166 = vcmp.lt.f32.partialorder %v3086, 0.0
        %vm3167 = vcmp.lt.f32.partialorder %v3087, 0.0
        %vm3168 = vcmp.lt.f32.partialorder %v3088, 0.0
        %vm3169 = vcmp.lt.f32.partialorder %v3089, 0.0
        %vm3170 = vcmp.lt.f32.partialorder %v3090, 0.0
        %vm3171 = vcmp.lt.f32.partialorder %v3091, 0.0
        %vm3172 = vcmp.lt.f32.partialorder %v3092, 0.0
        %vm3173 = vcmp.lt.f32.partialorder %v3093, 0.0
        %vm3174 = vcmp.lt.f32.partialorder %v3094, 0.0
        %v3175 = vsel %vm3159, 1, 0
        %v3176 = vsel %vm3160, 1, 0
        %v3177 = vsel %vm3161, 1, 0
        %v3178 = vsel %vm3162, 1, 0
        %v3179 = vsel %vm3163, 1, 0
        %v3180 = vsel %vm3164, 1, 0
        %v3181 = vsel %vm3165, 1, 0
        %v3182 = vsel %vm3166, 1, 0
        %v3183 = vsel %vm3167, 1, 0
        %v3184 = vsel %vm3168, 1, 0
        %v3185 = vsel %vm3169, 1, 0
        %v3186 = vsel %vm3170, 1, 0
        %v3187 = vsel %vm3171, 1, 0
        %v3188 = vsel %vm3172, 1, 0
        %v3189 = vsel %vm3173, 1, 0
        %v3190 = vsel %vm3174, 1, 0
        %v3191 = vcvt.s32.f32 %v3175
        %v3192 = vcvt.s32.f32 %v3176
        %v3193 = vcvt.s32.f32 %v3177
        %v3194 = vcvt.s32.f32 %v3178
        %v3195 = vcvt.s32.f32 %v3179
        %v3196 = vcvt.s32.f32 %v3180
        %v3197 = vcvt.s32.f32 %v3181
        %v3198 = vcvt.s32.f32 %v3182
        %v3199 = vcvt.s32.f32 %v3183
        %v3200 = vcvt.s32.f32 %v3184
        %v3201 = vcvt.s32.f32 %v3185
        %v3202 = vcvt.s32.f32 %v3186
        %v3203 = vcvt.s32.f32 %v3187
        %v3204 = vcvt.s32.f32 %v3188
        %v3205 = vcvt.s32.f32 %v3189
        %v3206 = vcvt.s32.f32 %v3190
        %v3207 = vpack.c.bf16 %v3192, %v3191
        %v3208 = vpack.c.bf16 %v3194, %v3193
        %v3209 = vpack.c.bf16 %v3196, %v3195
        %v3210 = vpack.c.bf16 %v3198, %v3197
        %v3211 = vpack.c.bf16 %v3200, %v3199
        %v3212 = vpack.c.bf16 %v3202, %v3201
        %v3213 = vpack.c.bf16 %v3204, %v3203
        %v3214 = vpack.c.bf16 %v3206, %v3205
        %v3215 = vpack.c.bf16 %v3130, %v3128
        %v3216 = vpack.c.bf16 %v3134, %v3132
        %v3217 = vpack.c.bf16 %v3138, %v3136
        %v3218 = vpack.c.bf16 %v3142, %v3140
        %v3219 = vpack.c.bf16 %v3146, %v3144
        %v3220 = vpack.c.bf16 %v3150, %v3148
        %v3221 = vpack.c.bf16 %v3154, %v3152
        %v3222 = vpack.c.bf16 %v3158, %v3156
        %3223 = vmatprep.subr.bf16.mxu0 0
        %3224 = vmatpush1.bf16.msra.mxu0 %v963
        %3225 = vmatprep.subr.bf16.mxu0 0
        %3226 = vmatpush1.bf16.msra.mxu0 %v964
        %3227 = vmatprep.subr.bf16.mxu0 0
        %3228 = vmatpush1.bf16.msra.mxu0 %v965
        %3229 = vmatprep.subr.bf16.mxu0 0
        %3230 = vmatpush1.bf16.msra.mxu0 %v966
        %3231 = vmatprep.subr.bf16.mxu0 0
        %3232 = vmatpush1.bf16.msra.mxu0 %v967
        %3233 = vmatprep.subr.bf16.mxu0 0
        %3234 = vmatpush1.bf16.msra.mxu0 %v968
        %3235 = vmatprep.subr.bf16.mxu0 0
        %3236 = vmatpush1.bf16.msra.mxu0 %v969
        %3237 = vmatprep.subr.bf16.mxu0 0
        %3238 = vmatpush1.bf16.msra.mxu0 %v970
        %3239 = vmatprep.subr.bf16.mxu0 0
        %3240 = vmatpush1.bf16.msra.mxu0 0
        %3241 = vmatprep.subr.bf16.mxu0 0
        %3242 = vmatpush1.bf16.msra.mxu0 0
        %3243 = vmatprep.subr.bf16.mxu0 0
        %3244 = vmatpush1.bf16.msra.mxu0 0
        %3245 = vmatprep.subr.bf16.mxu0 0
        %3246 = vmatpush1.bf16.msra.mxu0 0
        %3247 = vmatprep.subr.bf16.mxu0 0
        %3248 = vmatpush1.bf16.msra.mxu0 0
        %3249 = vmatprep.subr.bf16.mxu0 0
        %3250 = vmatpush1.bf16.msra.mxu0 0
        %3251 = vmatprep.subr.bf16.mxu0 0
        %3252 = vmatpush1.bf16.msra.mxu0 0
        %3253 = vmatprep.subr.bf16.mxu0 0
        %3254 = vmatpush1.bf16.msra.mxu0 0
        %3255 = vmatprep.mubr.bf16.mxu0 0
        %3256 = vmatmul.mubr.bf16.gmra.mrb[0].mxu0 %v3215
        %v3257 = vpop.f32.mrb[0].mxu0
        %v3258 = vadd.f32 0.0, %v3257
        %v3259 = vpop.f32.mrb[0].mxu0
        %v3260 = vpop.f32.mrb[0].mxu0
        %v3261 = vadd.f32 0.0, %v3260
        %v3262 = vpop.f32.mrb[0].mxu0
        %3263 = vmatprep.mubr.bf16.mxu0 0
        %3264 = vmatmul.mubr.bf16.gmra.mrb[0].mxu0 %v3216
        %v3265 = vpop.f32.mrb[0].mxu0
        %v3266 = vadd.f32 0.0, %v3265
        %v3267 = vpop.f32.mrb[0].mxu0
        %v3268 = vpop.f32.mrb[0].mxu0
        %v3269 = vadd.f32 0.0, %v3268
        %v3270 = vpop.f32.mrb[0].mxu0
        %3271 = vmatprep.mubr.bf16.mxu0 0
        %3272 = vmatmul.mubr.bf16.gmra.mrb[0].mxu0 %v3217
        %v3273 = vpop.f32.mrb[0].mxu0
        %v3274 = vadd.f32 0.0, %v3273
        %v3275 = vpop.f32.mrb[0].mxu0
        %v3276 = vpop.f32.mrb[0].mxu0
        %v3277 = vadd.f32 0.0, %v3276
        %v3278 = vpop.f32.mrb[0].mxu0
        %3279 = vmatprep.mubr.bf16.mxu0 0
        %3280 = vmatmul.mubr.bf16.gmra.mrb[0].mxu0 %v3218
        %v3281 = vpop.f32.mrb[0].mxu0
        %v3282 = vadd.f32 0.0, %v3281
        %v3283 = vpop.f32.mrb[0].mxu0
        %v3284 = vpop.f32.mrb[0].mxu0
        %v3285 = vadd.f32 0.0, %v3284
        %v3286 = vpop.f32.mrb[0].mxu0
        %3287 = vmatprep.mubr.bf16.mxu0 0
        %3288 = vmatmul.mubr.bf16.gmra.mrb[0].mxu0 %v3219
        %v3289 = vpop.f32.mrb[0].mxu0
        %v3290 = vadd.f32 0.0, %v3289
        %v3291 = vpop.f32.mrb[0].mxu0
        %v3292 = vpop.f32.mrb[0].mxu0
        %v3293 = vadd.f32 0.0, %v3292
        %v3294 = vpop.f32.mrb[0].mxu0
        %3295 = vmatprep.mubr.bf16.mxu0 0
        %3296 = vmatmul.mubr.bf16.gmra.mrb[0].mxu0 %v3220
        %v3297 = vpop.f32.mrb[0].mxu0
        %v3298 = vadd.f32 0.0, %v3297
        %v3299 = vpop.f32.mrb[0].mxu0
        %v3300 = vpop.f32.mrb[0].mxu0
        %v3301 = vadd.f32 0.0, %v3300
        %v3302 = vpop.f32.mrb[0].mxu0
        %3303 = vmatprep.mubr.bf16.mxu0 0
        %3304 = vmatmul.mubr.bf16.gmra.mrb[0].mxu0 %v3221
        %v3305 = vpop.f32.mrb[0].mxu0
        %v3306 = vadd.f32 0.0, %v3305
        %v3307 = vpop.f32.mrb[0].mxu0
        %v3308 = vpop.f32.mrb[0].mxu0
        %v3309 = vadd.f32 0.0, %v3308
        %v3310 = vpop.f32.mrb[0].mxu0
        %3311 = vmatprep.mubr.bf16.mxu0 0
        %3312 = vmatmul.mubr.bf16.gmra.mrb[0].mxu0 %v3222
        %v3313 = vpop.f32.mrb[0].mxu0
        %v3314 = vadd.f32 0.0, %v3313
        %v3315 = vpop.f32.mrb[0].mxu0
        %v3316 = vpop.f32.mrb[0].mxu0
        %v3317 = vadd.f32 0.0, %v3316
        %v3318 = vpop.f32.mrb[0].mxu0
        %3319 = vdwg.mxu0
        %3320 = vmatprep.subr.bf16.mxu0 0
        %3321 = vmatpush1.bf16.msra.mxu0 %v963
        %3322 = vmatprep.subr.bf16.mxu0 0
        %3323 = vmatpush1.bf16.msra.mxu0 %v964
        %3324 = vmatprep.subr.bf16.mxu0 0
        %3325 = vmatpush1.bf16.msra.mxu0 %v965
        %3326 = vmatprep.subr.bf16.mxu0 0
        %3327 = vmatpush1.bf16.msra.mxu0 %v966
        %3328 = vmatprep.subr.bf16.mxu0 0
        %3329 = vmatpush1.bf16.msra.mxu0 %v967
        %3330 = vmatprep.subr.bf16.mxu0 0
        %3331 = vmatpush1.bf16.msra.mxu0 %v968
        %3332 = vmatprep.subr.bf16.mxu0 0
        %3333 = vmatpush1.bf16.msra.mxu0 %v969
        %3334 = vmatprep.subr.bf16.mxu0 0
        %3335 = vmatpush1.bf16.msra.mxu0 %v970
        %3336 = vmatprep.subr.bf16.mxu0 0
        %3337 = vmatpush1.bf16.msra.mxu0 0
        %3338 = vmatprep.subr.bf16.mxu0 0
        %3339 = vmatpush1.bf16.msra.mxu0 0
        %3340 = vmatprep.subr.bf16.mxu0 0
        %3341 = vmatpush1.bf16.msra.mxu0 0
        %3342 = vmatprep.subr.bf16.mxu0 0
        %3343 = vmatpush1.bf16.msra.mxu0 0
        %3344 = vmatprep.subr.bf16.mxu0 0
        %3345 = vmatpush1.bf16.msra.mxu0 0
        %3346 = vmatprep.subr.bf16.mxu0 0
        %3347 = vmatpush1.bf16.msra.mxu0 0
        %3348 = vmatprep.subr.bf16.mxu0 0
        %3349 = vmatpush1.bf16.msra.mxu0 0
        %3350 = vmatprep.subr.bf16.mxu0 0
        %3351 = vmatpush1.bf16.msra.mxu0 0
        %3352 = vmatprep.mubr.bf16.mxu0 0
        %3353 = vmatmul.mubr.bf16.gmra.mrb[0].mxu0 %v3207
        %v3354 = vpop.f32.mrb[0].mxu0
        %v3355 = vadd.f32 0.0, %v3354
        %v3356 = vpop.f32.mrb[0].mxu0
        %v3357 = vpop.f32.mrb[0].mxu0
        %v3358 = vadd.f32 0.0, %v3357
        %v3359 = vpop.f32.mrb[0].mxu0
        %3360 = vmatprep.mubr.bf16.mxu0 0
        %3361 = vmatmul.mubr.bf16.gmra.mrb[0].mxu0 %v3208
        %v3362 = vpop.f32.mrb[0].mxu0
        %v3363 = vadd.f32 0.0, %v3362
        %v3364 = vpop.f32.mrb[0].mxu0
        %v3365 = vpop.f32.mrb[0].mxu0
        %v3366 = vadd.f32 0.0, %v3365
        %v3367 = vpop.f32.mrb[0].mxu0
        %3368 = vmatprep.mubr.bf16.mxu0 0
        %3369 = vmatmul.mubr.bf16.gmra.mrb[0].mxu0 %v3209
        %v3370 = vpop.f32.mrb[0].mxu0
        %v3371 = vadd.f32 0.0, %v3370
        %v3372 = vpop.f32.mrb[0].mxu0
        %v3373 = vpop.f32.mrb[0].mxu0
        %v3374 = vadd.f32 0.0, %v3373
        %v3375 = vpop.f32.mrb[0].mxu0
        %3376 = vmatprep.mubr.bf16.mxu0 0
        %3377 = vmatmul.mubr.bf16.gmra.mrb[0].mxu0 %v3210
        %v3378 = vpop.f32.mrb[0].mxu0
        %v3379 = vadd.f32 0.0, %v3378
        %v3380 = vpop.f32.mrb[0].mxu0
        %v3381 = vpop.f32.mrb[0].mxu0
        %v3382 = vadd.f32 0.0, %v3381
        %v3383 = vpop.f32.mrb[0].mxu0
        %3384 = vmatprep.mubr.bf16.mxu0 0
        %3385 = vmatmul.mubr.bf16.gmra.mrb[0].mxu0 %v3211
        %v3386 = vpop.f32.mrb[0].mxu0
        %v3387 = vadd.f32 0.0, %v3386
        %v3388 = vpop.f32.mrb[0].mxu0
        %v3389 = vpop.f32.mrb[0].mxu0
        %v3390 = vadd.f32 0.0, %v3389
        %v3391 = vpop.f32.mrb[0].mxu0
        %3392 = vmatprep.mubr.bf16.mxu0 0
        %3393 = vmatmul.mubr.bf16.gmra.mrb[0].mxu0 %v3212
        %v3394 = vpop.f32.mrb[0].mxu0
        %v3395 = vadd.f32 0.0, %v3394
        %v3396 = vpop.f32.mrb[0].mxu0
        %v3397 = vpop.f32.mrb[0].mxu0
        %v3398 = vadd.f32 0.0, %v3397
        %v3399 = vpop.f32.mrb[0].mxu0
        %3400 = vmatprep.mubr.bf16.mxu0 0
        %3401 = vmatmul.mubr.bf16.gmra.mrb[0].mxu0 %v3213
        %v3402 = vpop.f32.mrb[0].mxu0
        %v3403 = vadd.f32 0.0, %v3402
        %v3404 = vpop.f32.mrb[0].mxu0
        %v3405 = vpop.f32.mrb[0].mxu0
        %v3406 = vadd.f32 0.0, %v3405
        %v3407 = vpop.f32.mrb[0].mxu0
        %3408 = vmatprep.mubr.bf16.mxu0 0
        %3409 = vmatmul.mubr.bf16.gmra.mrb[0].mxu0 %v3214
        %v3410 = vpop.f32.mrb[0].mxu0
        %v3411 = vadd.f32 0.0, %v3410
        %v3412 = vpop.f32.mrb[0].mxu0
        %v3413 = vpop.f32.mrb[0].mxu0
        %v3414 = vadd.f32 0.0, %v3413
        %v3415 = vpop.f32.mrb[0].mxu0
        %3416 = vdwg.mxu0
        %v3417 = vmul.f32 %v3355, 0.5
        %v3418 = vmul.f32 %v3358, 0.5
        %v3419 = vmul.f32 %v3363, 0.5
        %v3420 = vmul.f32 %v3366, 0.5
        %v3421 = vmul.f32 %v3371, 0.5
        %v3422 = vmul.f32 %v3374, 0.5
        %v3423 = vmul.f32 %v3379, 0.5
        %v3424 = vmul.f32 %v3382, 0.5
        %v3425 = vmul.f32 %v3387, 0.5
        %v3426 = vmul.f32 %v3390, 0.5
        %v3427 = vmul.f32 %v3395, 0.5
        %v3428 = vmul.f32 %v3398, 0.5
        %v3429 = vmul.f32 %v3403, 0.5
        %v3430 = vmul.f32 %v3406, 0.5
        %v3431 = vmul.f32 %v3411, 0.5
        %v3432 = vmul.f32 %v3414, 0.5
        %v3433 = vfloor.f32 %v3417
        %v3434 = vfloor.f32 %v3418
        %v3435 = vfloor.f32 %v3419
        %v3436 = vfloor.f32 %v3420
        %v3437 = vfloor.f32 %v3421
        %v3438 = vfloor.f32 %v3422
        %v3439 = vfloor.f32 %v3423
        %v3440 = vfloor.f32 %v3424
        %v3441 = vfloor.f32 %v3425
        %v3442 = vfloor.f32 %v3426
        %v3443 = vfloor.f32 %v3427
        %v3444 = vfloor.f32 %v3428
        %v3445 = vfloor.f32 %v3429
        %v3446 = vfloor.f32 %v3430
        %v3447 = vfloor.f32 %v3431
        %v3448 = vfloor.f32 %v3432
        %v3449 = vmul.f32 %v3433, 2.0
        %v3450 = vmul.f32 %v3434, 2.0
        %v3451 = vmul.f32 %v3435, 2.0
        %v3452 = vmul.f32 %v3436, 2.0
        %v3453 = vmul.f32 %v3437, 2.0
        %v3454 = vmul.f32 %v3438, 2.0
        %v3455 = vmul.f32 %v3439, 2.0
        %v3456 = vmul.f32 %v3440, 2.0
        %v3457 = vmul.f32 %v3441, 2.0
        %v3458 = vmul.f32 %v3442, 2.0
        %v3459 = vmul.f32 %v3443, 2.0
        %v3460 = vmul.f32 %v3444, 2.0
        %v3461 = vmul.f32 %v3445, 2.0
        %v3462 = vmul.f32 %v3446, 2.0
        %v3463 = vmul.f32 %v3447, 2.0
        %v3464 = vmul.f32 %v3448, 2.0
        %v3465 = vsub.f32 %v3355, %v3449
        %v3466 = vsub.f32 %v3358, %v3450
        %v3467 = vsub.f32 %v3363, %v3451
        %v3468 = vsub.f32 %v3366, %v3452
        %v3469 = vsub.f32 %v3371, %v3453
        %v3470 = vsub.f32 %v3374, %v3454
        %v3471 = vsub.f32 %v3379, %v3455
        %v3472 = vsub.f32 %v3382, %v3456
        %v3473 = vsub.f32 %v3387, %v3457
        %v3474 = vsub.f32 %v3390, %v3458
        %v3475 = vsub.f32 %v3395, %v3459
        %v3476 = vsub.f32 %v3398, %v3460
        %v3477 = vsub.f32 %v3403, %v3461
        %v3478 = vsub.f32 %v3406, %v3462
        %v3479 = vsub.f32 %v3411, %v3463
        %v3480 = vsub.f32 %v3414, %v3464
        %v3481 = vmul.f32 %v3465, 2.0
        %v3482 = vmul.f32 %v3466, 2.0
        %v3483 = vmul.f32 %v3467, 2.0
        %v3484 = vmul.f32 %v3468, 2.0
        %v3485 = vmul.f32 %v3469, 2.0
        %v3486 = vmul.f32 %v3470, 2.0
        %v3487 = vmul.f32 %v3471, 2.0
        %v3488 = vmul.f32 %v3472, 2.0
        %v3489 = vmul.f32 %v3473, 2.0
        %v3490 = vmul.f32 %v3474, 2.0
        %v3491 = vmul.f32 %v3475, 2.0
        %v3492 = vmul.f32 %v3476, 2.0
        %v3493 = vmul.f32 %v3477, 2.0
        %v3494 = vmul.f32 %v3478, 2.0
        %v3495 = vmul.f32 %v3479, 2.0
        %v3496 = vmul.f32 %v3480, 2.0
        %v3497 = vsub.f32 1.0, %v3481
        %v3498 = vsub.f32 1.0, %v3482
        %v3499 = vsub.f32 1.0, %v3483
        %v3500 = vsub.f32 1.0, %v3484
        %v3501 = vsub.f32 1.0, %v3485
        %v3502 = vsub.f32 1.0, %v3486
        %v3503 = vsub.f32 1.0, %v3487
        %v3504 = vsub.f32 1.0, %v3488
        %v3505 = vsub.f32 1.0, %v3489
        %v3506 = vsub.f32 1.0, %v3490
        %v3507 = vsub.f32 1.0, %v3491
        %v3508 = vsub.f32 1.0, %v3492
        %v3509 = vsub.f32 1.0, %v3493
        %v3510 = vsub.f32 1.0, %v3494
        %v3511 = vsub.f32 1.0, %v3495
        %v3512 = vsub.f32 1.0, %v3496
        %v3513 = vmul.f32 %v3258, 1.442695
        %v3514 = vpow.pop %v3513
        %v3515 = vmul.f32 %v3261, 1.442695
        %v3516 = vpow.pop %v3515
        %v3517 = vmul.f32 %v3266, 1.442695
        %v3518 = vpow.pop %v3517
        %v3519 = vmul.f32 %v3269, 1.442695
        %v3520 = vpow.pop %v3519
        %v3521 = vmul.f32 %v3274, 1.442695
        %v3522 = vpow.pop %v3521
        %v3523 = vmul.f32 %v3277, 1.442695
        %v3524 = vpow.pop %v3523
        %v3525 = vmul.f32 %v3282, 1.442695
        %v3526 = vpow.pop %v3525
        %v3527 = vmul.f32 %v3285, 1.442695
        %v3528 = vpow.pop %v3527
        %v3529 = vmul.f32 %v3290, 1.442695
        %v3530 = vpow.pop %v3529
        %v3531 = vmul.f32 %v3293, 1.442695
        %v3532 = vpow.pop %v3531
        %v3533 = vmul.f32 %v3298, 1.442695
        %v3534 = vpow.pop %v3533
        %v3535 = vmul.f32 %v3301, 1.442695
        %v3536 = vpow.pop %v3535
        %v3537 = vmul.f32 %v3306, 1.442695
        %v3538 = vpow.pop %v3537
        %v3539 = vmul.f32 %v3309, 1.442695
        %v3540 = vpow.pop %v3539
        %v3541 = vmul.f32 %v3314, 1.442695
        %v3542 = vpow.pop %v3541
        %v3543 = vmul.f32 %v3317, 1.442695
        %v3544 = vpow.pop %v3543
        %v3545 = vmul.f32 %v3497, %v3514
        %v3546 = vmul.f32 %v3498, %v3516
        %v3547 = vmul.f32 %v3499, %v3518
        %v3548 = vmul.f32 %v3500, %v3520
        %v3549 = vmul.f32 %v3501, %v3522
        %v3550 = vmul.f32 %v3502, %v3524
        %v3551 = vmul.f32 %v3503, %v3526
        %v3552 = vmul.f32 %v3504, %v3528
        %v3553 = vmul.f32 %v3505, %v3530
        %v3554 = vmul.f32 %v3506, %v3532
        %v3555 = vmul.f32 %v3507, %v3534
        %v3556 = vmul.f32 %v3508, %v3536
        %v3557 = vmul.f32 %v3509, %v3538
        %v3558 = vmul.f32 %v3510, %v3540
        %v3559 = vmul.f32 %v3511, %v3542
        %v3560 = vmul.f32 %v3512, %v3544
        %v3561 = vmax.f32 %v3545, -0.999999
        %v3562 = vmax.f32 %v3546, -0.999999
        %v3563 = vmax.f32 %v3547, -0.999999
        %v3564 = vmax.f32 %v3548, -0.999999
        %v3565 = vmax.f32 %v3549, -0.999999
        %v3566 = vmax.f32 %v3550, -0.999999
        %v3567 = vmax.f32 %v3551, -0.999999
        %v3568 = vmax.f32 %v3552, -0.999999
        %v3569 = vmax.f32 %v3553, -0.999999
        %v3570 = vmax.f32 %v3554, -0.999999
        %v3571 = vmax.f32 %v3555, -0.999999
        %v3572 = vmax.f32 %v3556, -0.999999
        %v3573 = vmax.f32 %v3557, -0.999999
        %v3574 = vmax.f32 %v3558, -0.999999
        %v3575 = vmax.f32 %v3559, -0.999999
        %v3576 = vmax.f32 %v3560, -0.999999
        %v3577 = vmin.f32 %v3561, 0.999999
        %v3578 = vmin.f32 %v3562, 0.999999
        %v3579 = vmin.f32 %v3563, 0.999999
        %v3580 = vmin.f32 %v3564, 0.999999
        %v3581 = vmin.f32 %v3565, 0.999999
        %v3582 = vmin.f32 %v3566, 0.999999
        %v3583 = vmin.f32 %v3567, 0.999999
        %v3584 = vmin.f32 %v3568, 0.999999
        %v3585 = vmin.f32 %v3569, 0.999999
        %v3586 = vmin.f32 %v3570, 0.999999
        %v3587 = vmin.f32 %v3571, 0.999999
        %v3588 = vmin.f32 %v3572, 0.999999
        %v3589 = vmin.f32 %v3573, 0.999999
        %v3590 = vmin.f32 %v3574, 0.999999
        %v3591 = vmin.f32 %v3575, 0.999999
        %v3592 = vmin.f32 %v3576, 0.999999
        %v3593 = vadd.f32 %v3577, 1.0
        %v3594 = vadd.f32 %v3578, 1.0
        %v3595 = vadd.f32 %v3579, 1.0
        %v3596 = vadd.f32 %v3580, 1.0
        %v3597 = vadd.f32 %v3581, 1.0
        %v3598 = vadd.f32 %v3582, 1.0
        %v3599 = vadd.f32 %v3583, 1.0
        %v3600 = vadd.f32 %v3584, 1.0
        %v3601 = vadd.f32 %v3585, 1.0
        %v3602 = vadd.f32 %v3586, 1.0
        %v3603 = vadd.f32 %v3587, 1.0
        %v3604 = vadd.f32 %v3588, 1.0
        %v3605 = vadd.f32 %v3589, 1.0
        %v3606 = vadd.f32 %v3590, 1.0
        %v3607 = vadd.f32 %v3591, 1.0
        %v3608 = vadd.f32 %v3592, 1.0
        %v3609 = vsub.f32 1.0, %v3577
        %v3610 = vsub.f32 1.0, %v3578
        %v3611 = vsub.f32 1.0, %v3579
        %v3612 = vsub.f32 1.0, %v3580
        %v3613 = vsub.f32 1.0, %v3581
        %v3614 = vsub.f32 1.0, %v3582
        %v3615 = vsub.f32 1.0, %v3583
        %v3616 = vsub.f32 1.0, %v3584
        %v3617 = vsub.f32 1.0, %v3585
        %v3618 = vsub.f32 1.0, %v3586
        %v3619 = vsub.f32 1.0, %v3587
        %v3620 = vsub.f32 1.0, %v3588
        %v3621 = vsub.f32 1.0, %v3589
        %v3622 = vsub.f32 1.0, %v3590
        %v3623 = vsub.f32 1.0, %v3591
        %v3624 = vsub.f32 1.0, %v3592
        %v3625 = vrcp.pop %v3609
        %v3626 = vmul.f32 %v3593, %v3625
        %v3627 = vrcp.pop %v3610
        %v3628 = vmul.f32 %v3594, %v3627
        %v3629 = vrcp.pop %v3611
        %v3630 = vmul.f32 %v3595, %v3629
        %v3631 = vrcp.pop %v3612
        %v3632 = vmul.f32 %v3596, %v3631
        %v3633 = vrcp.pop %v3613
        %v3634 = vmul.f32 %v3597, %v3633
        %v3635 = vrcp.pop %v3614
        %v3636 = vmul.f32 %v3598, %v3635
        %v3637 = vrcp.pop %v3615
        %v3638 = vmul.f32 %v3599, %v3637
        %v3639 = vrcp.pop %v3616
        %v3640 = vmul.f32 %v3600, %v3639
        %v3641 = vrcp.pop %v3617
        %v3642 = vmul.f32 %v3601, %v3641
        %v3643 = vrcp.pop %v3618
        %v3644 = vmul.f32 %v3602, %v3643
        %v3645 = vrcp.pop %v3619
        %v3646 = vmul.f32 %v3603, %v3645
        %v3647 = vrcp.pop %v3620
        %v3648 = vmul.f32 %v3604, %v3647
        %v3649 = vrcp.pop %v3621
        %v3650 = vmul.f32 %v3605, %v3649
        %v3651 = vrcp.pop %v3622
        %v3652 = vmul.f32 %v3606, %v3651
        %v3653 = vrcp.pop %v3623
        %v3654 = vmul.f32 %v3607, %v3653
        %v3655 = vrcp.pop %v3624
        %v3656 = vmul.f32 %v3608, %v3655
        %v3657 = vlog2.pop %v3626
        %v3658 = vmul.f32 %v3657, 0.6931472
        %v3659 = vlog2.pop %v3628
        %v3660 = vmul.f32 %v3659, 0.6931472
        %v3661 = vlog2.pop %v3630
        %v3662 = vmul.f32 %v3661, 0.6931472
        %v3663 = vlog2.pop %v3632
        %v3664 = vmul.f32 %v3663, 0.6931472
        %v3665 = vlog2.pop %v3634
        %v3666 = vmul.f32 %v3665, 0.6931472
        %v3667 = vlog2.pop %v3636
        %v3668 = vmul.f32 %v3667, 0.6931472
        %v3669 = vlog2.pop %v3638
        %v3670 = vmul.f32 %v3669, 0.6931472
        %v3671 = vlog2.pop %v3640
        %v3672 = vmul.f32 %v3671, 0.6931472
        %v3673 = vlog2.pop %v3642
        %v3674 = vmul.f32 %v3673, 0.6931472
        %v3675 = vlog2.pop %v3644
        %v3676 = vmul.f32 %v3675, 0.6931472
        %v3677 = vlog2.pop %v3646
        %v3678 = vmul.f32 %v3677, 0.6931472
        %v3679 = vlog2.pop %v3648
        %v3680 = vmul.f32 %v3679, 0.6931472
        %v3681 = vlog2.pop %v3650
        %v3682 = vmul.f32 %v3681, 0.6931472
        %v3683 = vlog2.pop %v3652
        %v3684 = vmul.f32 %v3683, 0.6931472
        %v3685 = vlog2.pop %v3654
        %v3686 = vmul.f32 %v3685, 0.6931472
        %v3687 = vlog2.pop %v3656
        %v3688 = vmul.f32 %v3687, 0.6931472
        %v3689 = vmax.f32 %v1446, %v3658
        %v3690 = vmax.f32 %v1446, %v3660
        %v3691 = vmax.f32 %v1446, %v3662
        %v3692 = vmax.f32 %v1446, %v3664
        %v3693 = vmax.f32 %v1446, %v3666
        %v3694 = vmax.f32 %v1446, %v3668
        %v3695 = vmax.f32 %v1446, %v3670
        %v3696 = vmax.f32 %v1446, %v3672
        %v3697 = vmax.f32 %v1446, %v3674
        %v3698 = vmax.f32 %v1446, %v3676
        %v3699 = vmax.f32 %v1446, %v3678
        %v3700 = vmax.f32 %v1446, %v3680
        %v3701 = vmax.f32 %v1446, %v3682
        %v3702 = vmax.f32 %v1446, %v3684
        %v3703 = vmax.f32 %v1446, %v3686
        %v3704 = vmax.f32 %v1446, %v3688
        %v3705 = vmin.f32 %v1463, %v3689
        %v3706 = vmin.f32 %v1463, %v3690
        %v3707 = vmin.f32 %v1463, %v3691
        %v3708 = vmin.f32 %v1463, %v3692
        %v3709 = vmin.f32 %v1463, %v3693
        %v3710 = vmin.f32 %v1463, %v3694
        %v3711 = vmin.f32 %v1463, %v3695
        %v3712 = vmin.f32 %v1463, %v3696
        %v3713 = vmin.f32 %v1463, %v3697
        %v3714 = vmin.f32 %v1463, %v3698
        %v3715 = vmin.f32 %v1463, %v3699
        %v3716 = vmin.f32 %v1463, %v3700
        %v3717 = vmin.f32 %v1463, %v3701
        %v3718 = vmin.f32 %v1463, %v3702
        %v3719 = vmin.f32 %v1463, %v3703
        %v3720 = vmin.f32 %v1463, %v3704
        %v3721 = vpack.c.bf16 %v3706, %v3705
        %v3722 = vpack.c.bf16 %v3708, %v3707
        %v3723 = vpack.c.bf16 %v3710, %v3709
        %v3724 = vpack.c.bf16 %v3712, %v3711
        %v3725 = vpack.c.bf16 %v3714, %v3713
        %v3726 = vpack.c.bf16 %v3716, %v3715
        %v3727 = vpack.c.bf16 %v3718, %v3717
        %v3728 = vpack.c.bf16 %v3720, %v3719
        %3729 = vmatprep.subr.bf16.mxu0 0
        %3730 = vmatpush1.bf16.msra.mxu0 %v658
        %3731 = vmatprep.subr.bf16.mxu0 0
        %3732 = vmatpush1.bf16.msra.mxu0 %v659
        %3733 = vmatprep.subr.bf16.mxu0 0
        %3734 = vmatpush1.bf16.msra.mxu0 %v660
        %3735 = vmatprep.subr.bf16.mxu0 0
        %3736 = vmatpush1.bf16.msra.mxu0 %v661
        %3737 = vmatprep.subr.bf16.mxu0 0
        %3738 = vmatpush1.bf16.msra.mxu0 %v662
        %3739 = vmatprep.subr.bf16.mxu0 0
        %3740 = vmatpush1.bf16.msra.mxu0 %v663
        %3741 = vmatprep.subr.bf16.mxu0 0
        %3742 = vmatpush1.bf16.msra.mxu0 %v664
        %3743 = vmatprep.subr.bf16.mxu0 0
        %3744 = vmatpush1.bf16.msra.mxu0 %v665
        %3745 = vmatprep.subr.bf16.mxu0 0
        %3746 = vmatpush1.bf16.msra.mxu0 0
        %3747 = vmatprep.subr.bf16.mxu0 0
        %3748 = vmatpush1.bf16.msra.mxu0 0
        %3749 = vmatprep.subr.bf16.mxu0 0
        %3750 = vmatpush1.bf16.msra.mxu0 0
        %3751 = vmatprep.subr.bf16.mxu0 0
        %3752 = vmatpush1.bf16.msra.mxu0 0
        %3753 = vmatprep.subr.bf16.mxu0 0
        %3754 = vmatpush1.bf16.msra.mxu0 0
        %3755 = vmatprep.subr.bf16.mxu0 0
        %3756 = vmatpush1.bf16.msra.mxu0 0
        %3757 = vmatprep.subr.bf16.mxu0 0
        %3758 = vmatpush1.bf16.msra.mxu0 0
        %3759 = vmatprep.subr.bf16.mxu0 0
        %3760 = vmatpush1.bf16.msra.mxu0 0
        %3761 = vmatprep.mubr.bf16.mxu0 0
        %3762 = vmatmul.mubr.bf16.gmra.mrb[0].mxu0 %v3721
        %v3763 = vpop.f32.mrb[0].mxu0
        %v3764 = vadd.f32 %v524, %v3763
        %v3765 = vpop.f32.mrb[0].mxu0
        %v3766 = vpop.f32.mrb[0].mxu0
        %v3767 = vadd.f32 %v527, %v3766
        %v3768 = vpop.f32.mrb[0].mxu0
        %3769 = vmatprep.mubr.bf16.mxu0 0
        %3770 = vmatmul.mubr.bf16.gmra.mrb[0].mxu0 %v3722
        %v3771 = vpop.f32.mrb[0].mxu0
        %v3772 = vadd.f32 %v532, %v3771
        %v3773 = vpop.f32.mrb[0].mxu0
        %v3774 = vpop.f32.mrb[0].mxu0
        %v3775 = vadd.f32 %v535, %v3774
        %v3776 = vpop.f32.mrb[0].mxu0
        %3777 = vmatprep.mubr.bf16.mxu0 0
        %3778 = vmatmul.mubr.bf16.gmra.mrb[0].mxu0 %v3723
        %v3779 = vpop.f32.mrb[0].mxu0
        %v3780 = vadd.f32 %v540, %v3779
        %v3781 = vpop.f32.mrb[0].mxu0
        %v3782 = vpop.f32.mrb[0].mxu0
        %v3783 = vadd.f32 %v543, %v3782
        %v3784 = vpop.f32.mrb[0].mxu0
        %3785 = vmatprep.mubr.bf16.mxu0 0
        %3786 = vmatmul.mubr.bf16.gmra.mrb[0].mxu0 %v3724
        %v3787 = vpop.f32.mrb[0].mxu0
        %v3788 = vadd.f32 %v548, %v3787
        %v3789 = vpop.f32.mrb[0].mxu0
        %v3790 = vpop.f32.mrb[0].mxu0
        %v3791 = vadd.f32 %v551, %v3790
        %v3792 = vpop.f32.mrb[0].mxu0
        %3793 = vmatprep.mubr.bf16.mxu0 0
        %3794 = vmatmul.mubr.bf16.gmra.mrb[0].mxu0 %v3725
        %v3795 = vpop.f32.mrb[0].mxu0
        %v3796 = vadd.f32 %v556, %v3795
        %v3797 = vpop.f32.mrb[0].mxu0
        %v3798 = vpop.f32.mrb[0].mxu0
        %v3799 = vadd.f32 %v559, %v3798
        %v3800 = vpop.f32.mrb[0].mxu0
        %3801 = vmatprep.mubr.bf16.mxu0 0
        %3802 = vmatmul.mubr.bf16.gmra.mrb[0].mxu0 %v3726
        %v3803 = vpop.f32.mrb[0].mxu0
        %v3804 = vadd.f32 %v564, %v3803
        %v3805 = vpop.f32.mrb[0].mxu0
        %v3806 = vpop.f32.mrb[0].mxu0
        %v3807 = vadd.f32 %v567, %v3806
        %v3808 = vpop.f32.mrb[0].mxu0
        %3809 = vmatprep.mubr.bf16.mxu0 0
        %3810 = vmatmul.mubr.bf16.gmra.mrb[0].mxu0 %v3727
        %v3811 = vpop.f32.mrb[0].mxu0
        %v3812 = vadd.f32 %v572, %v3811
        %v3813 = vpop.f32.mrb[0].mxu0
        %v3814 = vpop.f32.mrb[0].mxu0
        %v3815 = vadd.f32 %v575, %v3814
        %v3816 = vpop.f32.mrb[0].mxu0
        %3817 = vmatprep.mubr.bf16.mxu0 0
        %3818 = vmatmul.mubr.bf16.gmra.mrb[0].mxu0 %v3728
        %v3819 = vpop.f32.mrb[0].mxu0
        %v3820 = vadd.f32 %v580, %v3819
        %v3821 = vpop.f32.mrb[0].mxu0
        %v3822 = vpop.f32.mrb[0].mxu0
        %v3823 = vadd.f32 %v583, %v3822
        %v3824 = vpop.f32.mrb[0].mxu0
        %3825 = vdwg.mxu0
        %v3826 = vtanh.pop %v3764
        %v3827 = vtanh.pop %v3767
        %v3828 = vtanh.pop %v3772
        %v3829 = vtanh.pop %v3775
        %v3830 = vtanh.pop %v3780
        %v3831 = vtanh.pop %v3783
        %v3832 = vtanh.pop %v3788
        %v3833 = vtanh.pop %v3791
        %v3834 = vtanh.pop %v3796
        %v3835 = vtanh.pop %v3799
        %v3836 = vtanh.pop %v3804
        %v3837 = vtanh.pop %v3807
        %v3838 = vtanh.pop %v3812
        %v3839 = vtanh.pop %v3815
        %v3840 = vtanh.pop %v3820
        %v3841 = vtanh.pop %v3823
        %v3842 = vand.u32 2147483647, %v3826
        %v3843 = vand.u32 2147483647, %v3827
        %v3844 = vand.u32 2147483647, %v3828
        %v3845 = vand.u32 2147483647, %v3829
        %v3846 = vand.u32 2147483647, %v3830
        %v3847 = vand.u32 2147483647, %v3831
        %v3848 = vand.u32 2147483647, %v3832
        %v3849 = vand.u32 2147483647, %v3833
        %v3850 = vand.u32 2147483647, %v3834
        %v3851 = vand.u32 2147483647, %v3835
        %v3852 = vand.u32 2147483647, %v3836
        %v3853 = vand.u32 2147483647, %v3837
        %v3854 = vand.u32 2147483647, %v3838
        %v3855 = vand.u32 2147483647, %v3839
        %v3856 = vand.u32 2147483647, %v3840
        %v3857 = vand.u32 2147483647, %v3841
        %v3858 = vmax.f32 %v3842, 1e-12
        %v3859 = vmax.f32 %v3843, 1e-12
        %v3860 = vmax.f32 %v3844, 1e-12
        %v3861 = vmax.f32 %v3845, 1e-12
        %v3862 = vmax.f32 %v3846, 1e-12
        %v3863 = vmax.f32 %v3847, 1e-12
        %v3864 = vmax.f32 %v3848, 1e-12
        %v3865 = vmax.f32 %v3849, 1e-12
        %v3866 = vmax.f32 %v3850, 1e-12
        %v3867 = vmax.f32 %v3851, 1e-12
        %v3868 = vmax.f32 %v3852, 1e-12
        %v3869 = vmax.f32 %v3853, 1e-12
        %v3870 = vmax.f32 %v3854, 1e-12
        %v3871 = vmax.f32 %v3855, 1e-12
        %v3872 = vmax.f32 %v3856, 1e-12
        %v3873 = vmax.f32 %v3857, 1e-12
        %v3874 = vlog2.pop %v3858
        %v3875 = vmul.f32 %v3874, 0.6931472
        %v3876 = vlog2.pop %v3859
        %v3877 = vmul.f32 %v3876, 0.6931472
        %v3878 = vlog2.pop %v3860
        %v3879 = vmul.f32 %v3878, 0.6931472
        %v3880 = vlog2.pop %v3861
        %v3881 = vmul.f32 %v3880, 0.6931472
        %v3882 = vlog2.pop %v3862
        %v3883 = vmul.f32 %v3882, 0.6931472
        %v3884 = vlog2.pop %v3863
        %v3885 = vmul.f32 %v3884, 0.6931472
        %v3886 = vlog2.pop %v3864
        %v3887 = vmul.f32 %v3886, 0.6931472
        %v3888 = vlog2.pop %v3865
        %v3889 = vmul.f32 %v3888, 0.6931472
        %v3890 = vlog2.pop %v3866
        %v3891 = vmul.f32 %v3890, 0.6931472
        %v3892 = vlog2.pop %v3867
        %v3893 = vmul.f32 %v3892, 0.6931472
        %v3894 = vlog2.pop %v3868
        %v3895 = vmul.f32 %v3894, 0.6931472
        %v3896 = vlog2.pop %v3869
        %v3897 = vmul.f32 %v3896, 0.6931472
        %v3898 = vlog2.pop %v3870
        %v3899 = vmul.f32 %v3898, 0.6931472
        %v3900 = vlog2.pop %v3871
        %v3901 = vmul.f32 %v3900, 0.6931472
        %v3902 = vlog2.pop %v3872
        %v3903 = vmul.f32 %v3902, 0.6931472
        %v3904 = vlog2.pop %v3873
        %v3905 = vmul.f32 %v3904, 0.6931472
        %vm3906 = vcmp.lt.f32.partialorder %v3826, 0.0
        %vm3907 = vcmp.lt.f32.partialorder %v3827, 0.0
        %vm3908 = vcmp.lt.f32.partialorder %v3828, 0.0
        %vm3909 = vcmp.lt.f32.partialorder %v3829, 0.0
        %vm3910 = vcmp.lt.f32.partialorder %v3830, 0.0
        %vm3911 = vcmp.lt.f32.partialorder %v3831, 0.0
        %vm3912 = vcmp.lt.f32.partialorder %v3832, 0.0
        %vm3913 = vcmp.lt.f32.partialorder %v3833, 0.0
        %vm3914 = vcmp.lt.f32.partialorder %v3834, 0.0
        %vm3915 = vcmp.lt.f32.partialorder %v3835, 0.0
        %vm3916 = vcmp.lt.f32.partialorder %v3836, 0.0
        %vm3917 = vcmp.lt.f32.partialorder %v3837, 0.0
        %vm3918 = vcmp.lt.f32.partialorder %v3838, 0.0
        %vm3919 = vcmp.lt.f32.partialorder %v3839, 0.0
        %vm3920 = vcmp.lt.f32.partialorder %v3840, 0.0
        %vm3921 = vcmp.lt.f32.partialorder %v3841, 0.0
        %v3922 = vsel %vm3906, 1, 0
        %v3923 = vsel %vm3907, 1, 0
        %v3924 = vsel %vm3908, 1, 0
        %v3925 = vsel %vm3909, 1, 0
        %v3926 = vsel %vm3910, 1, 0
        %v3927 = vsel %vm3911, 1, 0
        %v3928 = vsel %vm3912, 1, 0
        %v3929 = vsel %vm3913, 1, 0
        %v3930 = vsel %vm3914, 1, 0
        %v3931 = vsel %vm3915, 1, 0
        %v3932 = vsel %vm3916, 1, 0
        %v3933 = vsel %vm3917, 1, 0
        %v3934 = vsel %vm3918, 1, 0
        %v3935 = vsel %vm3919, 1, 0
        %v3936 = vsel %vm3920, 1, 0
        %v3937 = vsel %vm3921, 1, 0
        %v3938 = vcvt.s32.f32 %v3922
        %v3939 = vcvt.s32.f32 %v3923
        %v3940 = vcvt.s32.f32 %v3924
        %v3941 = vcvt.s32.f32 %v3925
        %v3942 = vcvt.s32.f32 %v3926
        %v3943 = vcvt.s32.f32 %v3927
        %v3944 = vcvt.s32.f32 %v3928
        %v3945 = vcvt.s32.f32 %v3929
        %v3946 = vcvt.s32.f32 %v3930
        %v3947 = vcvt.s32.f32 %v3931
        %v3948 = vcvt.s32.f32 %v3932
        %v3949 = vcvt.s32.f32 %v3933
        %v3950 = vcvt.s32.f32 %v3934
        %v3951 = vcvt.s32.f32 %v3935
        %v3952 = vcvt.s32.f32 %v3936
        %v3953 = vcvt.s32.f32 %v3937
        %v3954 = vpack.c.bf16 %v3939, %v3938
        %v3955 = vpack.c.bf16 %v3941, %v3940
        %v3956 = vpack.c.bf16 %v3943, %v3942
        %v3957 = vpack.c.bf16 %v3945, %v3944
        %v3958 = vpack.c.bf16 %v3947, %v3946
        %v3959 = vpack.c.bf16 %v3949, %v3948
        %v3960 = vpack.c.bf16 %v3951, %v3950
        %v3961 = vpack.c.bf16 %v3953, %v3952
        %v3962 = vpack.c.bf16 %v3877, %v3875
        %v3963 = vpack.c.bf16 %v3881, %v3879
        %v3964 = vpack.c.bf16 %v3885, %v3883
        %v3965 = vpack.c.bf16 %v3889, %v3887
        %v3966 = vpack.c.bf16 %v3893, %v3891
        %v3967 = vpack.c.bf16 %v3897, %v3895
        %v3968 = vpack.c.bf16 %v3901, %v3899
        %v3969 = vpack.c.bf16 %v3905, %v3903
        %3970 = vmatprep.subr.bf16.mxu0 0
        %3971 = vmatpush1.bf16.msra.mxu0 %v963
        %3972 = vmatprep.subr.bf16.mxu0 0
        %3973 = vmatpush1.bf16.msra.mxu0 %v964
        %3974 = vmatprep.subr.bf16.mxu0 0
        %3975 = vmatpush1.bf16.msra.mxu0 %v965
        %3976 = vmatprep.subr.bf16.mxu0 0
        %3977 = vmatpush1.bf16.msra.mxu0 %v966
        %3978 = vmatprep.subr.bf16.mxu0 0
        %3979 = vmatpush1.bf16.msra.mxu0 %v967
        %3980 = vmatprep.subr.bf16.mxu0 0
        %3981 = vmatpush1.bf16.msra.mxu0 %v968
        %3982 = vmatprep.subr.bf16.mxu0 0
        %3983 = vmatpush1.bf16.msra.mxu0 %v969
        %3984 = vmatprep.subr.bf16.mxu0 0
        %3985 = vmatpush1.bf16.msra.mxu0 %v970
        %3986 = vmatprep.subr.bf16.mxu0 0
        %3987 = vmatpush1.bf16.msra.mxu0 0
        %3988 = vmatprep.subr.bf16.mxu0 0
        %3989 = vmatpush1.bf16.msra.mxu0 0
        %3990 = vmatprep.subr.bf16.mxu0 0
        %3991 = vmatpush1.bf16.msra.mxu0 0
        %3992 = vmatprep.subr.bf16.mxu0 0
        %3993 = vmatpush1.bf16.msra.mxu0 0
        %3994 = vmatprep.subr.bf16.mxu0 0
        %3995 = vmatpush1.bf16.msra.mxu0 0
        %3996 = vmatprep.subr.bf16.mxu0 0
        %3997 = vmatpush1.bf16.msra.mxu0 0
        %3998 = vmatprep.subr.bf16.mxu0 0
        %3999 = vmatpush1.bf16.msra.mxu0 0
        %4000 = vmatprep.subr.bf16.mxu0 0
        %4001 = vmatpush1.bf16.msra.mxu0 0
        %4002 = vmatprep.mubr.bf16.mxu0 0
        %4003 = vmatmul.mubr.bf16.gmra.mrb[0].mxu0 %v3962
        %v4004 = vpop.f32.mrb[0].mxu0
        %v4005 = vadd.f32 0.0, %v4004
        %v4006 = vpop.f32.mrb[0].mxu0
        %v4007 = vpop.f32.mrb[0].mxu0
        %v4008 = vadd.f32 0.0, %v4007
        %v4009 = vpop.f32.mrb[0].mxu0
        %4010 = vmatprep.mubr.bf16.mxu0 0
        %4011 = vmatmul.mubr.bf16.gmra.mrb[0].mxu0 %v3963
        %v4012 = vpop.f32.mrb[0].mxu0
        %v4013 = vadd.f32 0.0, %v4012
        %v4014 = vpop.f32.mrb[0].mxu0
        %v4015 = vpop.f32.mrb[0].mxu0
        %v4016 = vadd.f32 0.0, %v4015
        %v4017 = vpop.f32.mrb[0].mxu0
        %4018 = vmatprep.mubr.bf16.mxu0 0
        %4019 = vmatmul.mubr.bf16.gmra.mrb[0].mxu0 %v3964
        %v4020 = vpop.f32.mrb[0].mxu0
        %v4021 = vadd.f32 0.0, %v4020
        %v4022 = vpop.f32.mrb[0].mxu0
        %v4023 = vpop.f32.mrb[0].mxu0
        %v4024 = vadd.f32 0.0, %v4023
        %v4025 = vpop.f32.mrb[0].mxu0
        %4026 = vmatprep.mubr.bf16.mxu0 0
        %4027 = vmatmul.mubr.bf16.gmra.mrb[0].mxu0 %v3965
        %v4028 = vpop.f32.mrb[0].mxu0
        %v4029 = vadd.f32 0.0, %v4028
        %v4030 = vpop.f32.mrb[0].mxu0
        %v4031 = vpop.f32.mrb[0].mxu0
        %v4032 = vadd.f32 0.0, %v4031
        %v4033 = vpop.f32.mrb[0].mxu0
        %4034 = vmatprep.mubr.bf16.mxu0 0
        %4035 = vmatmul.mubr.bf16.gmra.mrb[0].mxu0 %v3966
        %v4036 = vpop.f32.mrb[0].mxu0
        %v4037 = vadd.f32 0.0, %v4036
        %v4038 = vpop.f32.mrb[0].mxu0
        %v4039 = vpop.f32.mrb[0].mxu0
        %v4040 = vadd.f32 0.0, %v4039
        %v4041 = vpop.f32.mrb[0].mxu0
        %4042 = vmatprep.mubr.bf16.mxu0 0
        %4043 = vmatmul.mubr.bf16.gmra.mrb[0].mxu0 %v3967
        %v4044 = vpop.f32.mrb[0].mxu0
        %v4045 = vadd.f32 0.0, %v4044
        %v4046 = vpop.f32.mrb[0].mxu0
        %v4047 = vpop.f32.mrb[0].mxu0
        %v4048 = vadd.f32 0.0, %v4047
        %v4049 = vpop.f32.mrb[0].mxu0
        %4050 = vmatprep.mubr.bf16.mxu0 0
        %4051 = vmatmul.mubr.bf16.gmra.mrb[0].mxu0 %v3968
        %v4052 = vpop.f32.mrb[0].mxu0
        %v4053 = vadd.f32 0.0, %v4052
        %v4054 = vpop.f32.mrb[0].mxu0
        %v4055 = vpop.f32.mrb[0].mxu0
        %v4056 = vadd.f32 0.0, %v4055
        %v4057 = vpop.f32.mrb[0].mxu0
        %4058 = vmatprep.mubr.bf16.mxu0 0
        %4059 = vmatmul.mubr.bf16.gmra.mrb[0].mxu0 %v3969
        %v4060 = vpop.f32.mrb[0].mxu0
        %v4061 = vadd.f32 0.0, %v4060
        %v4062 = vpop.f32.mrb[0].mxu0
        %v4063 = vpop.f32.mrb[0].mxu0
        %v4064 = vadd.f32 0.0, %v4063
        %v4065 = vpop.f32.mrb[0].mxu0
        %4066 = vdwg.mxu0
        %4067 = vmatprep.subr.bf16.mxu0 0
        %4068 = vmatpush1.bf16.msra.mxu0 %v963
        %4069 = vmatprep.subr.bf16.mxu0 0
        %4070 = vmatpush1.bf16.msra.mxu0 %v964
        %4071 = vmatprep.subr.bf16.mxu0 0
        %4072 = vmatpush1.bf16.msra.mxu0 %v965
        %4073 = vmatprep.subr.bf16.mxu0 0
        %4074 = vmatpush1.bf16.msra.mxu0 %v966
        %4075 = vmatprep.subr.bf16.mxu0 0
        %4076 = vmatpush1.bf16.msra.mxu0 %v967
        %4077 = vmatprep.subr.bf16.mxu0 0
        %4078 = vmatpush1.bf16.msra.mxu0 %v968
        %4079 = vmatprep.subr.bf16.mxu0 0
        %4080 = vmatpush1.bf16.msra.mxu0 %v969
        %4081 = vmatprep.subr.bf16.mxu0 0
        %4082 = vmatpush1.bf16.msra.mxu0 %v970
        %4083 = vmatprep.subr.bf16.mxu0 0
        %4084 = vmatpush1.bf16.msra.mxu0 0
        %4085 = vmatprep.subr.bf16.mxu0 0
        %4086 = vmatpush1.bf16.msra.mxu0 0
        %4087 = vmatprep.subr.bf16.mxu0 0
        %4088 = vmatpush1.bf16.msra.mxu0 0
        %4089 = vmatprep.subr.bf16.mxu0 0
        %4090 = vmatpush1.bf16.msra.mxu0 0
        %4091 = vmatprep.subr.bf16.mxu0 0
        %4092 = vmatpush1.bf16.msra.mxu0 0
        %4093 = vmatprep.subr.bf16.mxu0 0
        %4094 = vmatpush1.bf16.msra.mxu0 0
        %4095 = vmatprep.subr.bf16.mxu0 0
        %4096 = vmatpush1.bf16.msra.mxu0 0
        %4097 = vmatprep.subr.bf16.mxu0 0
        %4098 = vmatpush1.bf16.msra.mxu0 0
        %4099 = vmatprep.mubr.bf16.mxu0 0
        %4100 = vmatmul.mubr.bf16.gmra.mrb[0].mxu0 %v3954
        %v4101 = vpop.f32.mrb[0].mxu0
        %v4102 = vadd.f32 0.0, %v4101
        %v4103 = vpop.f32.mrb[0].mxu0
        %v4104 = vpop.f32.mrb[0].mxu0
        %v4105 = vadd.f32 0.0, %v4104
        %v4106 = vpop.f32.mrb[0].mxu0
        %4107 = vmatprep.mubr.bf16.mxu0 0
        %4108 = vmatmul.mubr.bf16.gmra.mrb[0].mxu0 %v3955
        %v4109 = vpop.f32.mrb[0].mxu0
        %v4110 = vadd.f32 0.0, %v4109
        %v4111 = vpop.f32.mrb[0].mxu0
        %v4112 = vpop.f32.mrb[0].mxu0
        %v4113 = vadd.f32 0.0, %v4112
        %v4114 = vpop.f32.mrb[0].mxu0
        %4115 = vmatprep.mubr.bf16.mxu0 0
        %4116 = vmatmul.mubr.bf16.gmra.mrb[0].mxu0 %v3956
        %v4117 = vpop.f32.mrb[0].mxu0
        %v4118 = vadd.f32 0.0, %v4117
        %v4119 = vpop.f32.mrb[0].mxu0
        %v4120 = vpop.f32.mrb[0].mxu0
        %v4121 = vadd.f32 0.0, %v4120
        %v4122 = vpop.f32.mrb[0].mxu0
        %4123 = vmatprep.mubr.bf16.mxu0 0
        %4124 = vmatmul.mubr.bf16.gmra.mrb[0].mxu0 %v3957
        %v4125 = vpop.f32.mrb[0].mxu0
        %v4126 = vadd.f32 0.0, %v4125
        %v4127 = vpop.f32.mrb[0].mxu0
        %v4128 = vpop.f32.mrb[0].mxu0
        %v4129 = vadd.f32 0.0, %v4128
        %v4130 = vpop.f32.mrb[0].mxu0
        %4131 = vmatprep.mubr.bf16.mxu0 0
        %4132 = vmatmul.mubr.bf16.gmra.mrb[0].mxu0 %v3958
        %v4133 = vpop.f32.mrb[0].mxu0
        %v4134 = vadd.f32 0.0, %v4133
        %v4135 = vpop.f32.mrb[0].mxu0
        %v4136 = vpop.f32.mrb[0].mxu0
        %v4137 = vadd.f32 0.0, %v4136
        %v4138 = vpop.f32.mrb[0].mxu0
        %4139 = vmatprep.mubr.bf16.mxu0 0
        %4140 = vmatmul.mubr.bf16.gmra.mrb[0].mxu0 %v3959
        %v4141 = vpop.f32.mrb[0].mxu0
        %v4142 = vadd.f32 0.0, %v4141
        %v4143 = vpop.f32.mrb[0].mxu0
        %v4144 = vpop.f32.mrb[0].mxu0
        %v4145 = vadd.f32 0.0, %v4144
        %v4146 = vpop.f32.mrb[0].mxu0
        %4147 = vmatprep.mubr.bf16.mxu0 0
        %4148 = vmatmul.mubr.bf16.gmra.mrb[0].mxu0 %v3960
        %v4149 = vpop.f32.mrb[0].mxu0
        %v4150 = vadd.f32 0.0, %v4149
        %v4151 = vpop.f32.mrb[0].mxu0
        %v4152 = vpop.f32.mrb[0].mxu0
        %v4153 = vadd.f32 0.0, %v4152
        %v4154 = vpop.f32.mrb[0].mxu0
        %4155 = vmatprep.mubr.bf16.mxu0 0
        %4156 = vmatmul.mubr.bf16.gmra.mrb[0].mxu0 %v3961
        %v4157 = vpop.f32.mrb[0].mxu0
        %v4158 = vadd.f32 0.0, %v4157
        %v4159 = vpop.f32.mrb[0].mxu0
        %v4160 = vpop.f32.mrb[0].mxu0
        %v4161 = vadd.f32 0.0, %v4160
        %v4162 = vpop.f32.mrb[0].mxu0
        %4163 = vdwg.mxu0
        %v4164 = vmul.f32 %v4102, 0.5
        %v4165 = vmul.f32 %v4105, 0.5
        %v4166 = vmul.f32 %v4110, 0.5
        %v4167 = vmul.f32 %v4113, 0.5
        %v4168 = vmul.f32 %v4118, 0.5
        %v4169 = vmul.f32 %v4121, 0.5
        %v4170 = vmul.f32 %v4126, 0.5
        %v4171 = vmul.f32 %v4129, 0.5
        %v4172 = vmul.f32 %v4134, 0.5
        %v4173 = vmul.f32 %v4137, 0.5
        %v4174 = vmul.f32 %v4142, 0.5
        %v4175 = vmul.f32 %v4145, 0.5
        %v4176 = vmul.f32 %v4150, 0.5
        %v4177 = vmul.f32 %v4153, 0.5
        %v4178 = vmul.f32 %v4158, 0.5
        %v4179 = vmul.f32 %v4161, 0.5
        %v4180 = vfloor.f32 %v4164
        %v4181 = vfloor.f32 %v4165
        %v4182 = vfloor.f32 %v4166
        %v4183 = vfloor.f32 %v4167
        %v4184 = vfloor.f32 %v4168
        %v4185 = vfloor.f32 %v4169
        %v4186 = vfloor.f32 %v4170
        %v4187 = vfloor.f32 %v4171
        %v4188 = vfloor.f32 %v4172
        %v4189 = vfloor.f32 %v4173
        %v4190 = vfloor.f32 %v4174
        %v4191 = vfloor.f32 %v4175
        %v4192 = vfloor.f32 %v4176
        %v4193 = vfloor.f32 %v4177
        %v4194 = vfloor.f32 %v4178
        %v4195 = vfloor.f32 %v4179
        %v4196 = vmul.f32 %v4180, 2.0
        %v4197 = vmul.f32 %v4181, 2.0
        %v4198 = vmul.f32 %v4182, 2.0
        %v4199 = vmul.f32 %v4183, 2.0
        %v4200 = vmul.f32 %v4184, 2.0
        %v4201 = vmul.f32 %v4185, 2.0
        %v4202 = vmul.f32 %v4186, 2.0
        %v4203 = vmul.f32 %v4187, 2.0
        %v4204 = vmul.f32 %v4188, 2.0
        %v4205 = vmul.f32 %v4189, 2.0
        %v4206 = vmul.f32 %v4190, 2.0
        %v4207 = vmul.f32 %v4191, 2.0
        %v4208 = vmul.f32 %v4192, 2.0
        %v4209 = vmul.f32 %v4193, 2.0
        %v4210 = vmul.f32 %v4194, 2.0
        %v4211 = vmul.f32 %v4195, 2.0
        %v4212 = vsub.f32 %v4102, %v4196
        %v4213 = vsub.f32 %v4105, %v4197
        %v4214 = vsub.f32 %v4110, %v4198
        %v4215 = vsub.f32 %v4113, %v4199
        %v4216 = vsub.f32 %v4118, %v4200
        %v4217 = vsub.f32 %v4121, %v4201
        %v4218 = vsub.f32 %v4126, %v4202
        %v4219 = vsub.f32 %v4129, %v4203
        %v4220 = vsub.f32 %v4134, %v4204
        %v4221 = vsub.f32 %v4137, %v4205
        %v4222 = vsub.f32 %v4142, %v4206
        %v4223 = vsub.f32 %v4145, %v4207
        %v4224 = vsub.f32 %v4150, %v4208
        %v4225 = vsub.f32 %v4153, %v4209
        %v4226 = vsub.f32 %v4158, %v4210
        %v4227 = vsub.f32 %v4161, %v4211
        %v4228 = vmul.f32 %v4212, 2.0
        %v4229 = vmul.f32 %v4213, 2.0
        %v4230 = vmul.f32 %v4214, 2.0
        %v4231 = vmul.f32 %v4215, 2.0
        %v4232 = vmul.f32 %v4216, 2.0
        %v4233 = vmul.f32 %v4217, 2.0
        %v4234 = vmul.f32 %v4218, 2.0
        %v4235 = vmul.f32 %v4219, 2.0
        %v4236 = vmul.f32 %v4220, 2.0
        %v4237 = vmul.f32 %v4221, 2.0
        %v4238 = vmul.f32 %v4222, 2.0
        %v4239 = vmul.f32 %v4223, 2.0
        %v4240 = vmul.f32 %v4224, 2.0
        %v4241 = vmul.f32 %v4225, 2.0
        %v4242 = vmul.f32 %v4226, 2.0
        %v4243 = vmul.f32 %v4227, 2.0
        %v4244 = vsub.f32 1.0, %v4228
        %v4245 = vsub.f32 1.0, %v4229
        %v4246 = vsub.f32 1.0, %v4230
        %v4247 = vsub.f32 1.0, %v4231
        %v4248 = vsub.f32 1.0, %v4232
        %v4249 = vsub.f32 1.0, %v4233
        %v4250 = vsub.f32 1.0, %v4234
        %v4251 = vsub.f32 1.0, %v4235
        %v4252 = vsub.f32 1.0, %v4236
        %v4253 = vsub.f32 1.0, %v4237
        %v4254 = vsub.f32 1.0, %v4238
        %v4255 = vsub.f32 1.0, %v4239
        %v4256 = vsub.f32 1.0, %v4240
        %v4257 = vsub.f32 1.0, %v4241
        %v4258 = vsub.f32 1.0, %v4242
        %v4259 = vsub.f32 1.0, %v4243
        %v4260 = vmul.f32 %v4005, 1.442695
        %v4261 = vpow.pop %v4260
        %v4262 = vmul.f32 %v4008, 1.442695
        %v4263 = vpow.pop %v4262
        %v4264 = vmul.f32 %v4013, 1.442695
        %v4265 = vpow.pop %v4264
        %v4266 = vmul.f32 %v4016, 1.442695
        %v4267 = vpow.pop %v4266
        %v4268 = vmul.f32 %v4021, 1.442695
        %v4269 = vpow.pop %v4268
        %v4270 = vmul.f32 %v4024, 1.442695
        %v4271 = vpow.pop %v4270
        %v4272 = vmul.f32 %v4029, 1.442695
        %v4273 = vpow.pop %v4272
        %v4274 = vmul.f32 %v4032, 1.442695
        %v4275 = vpow.pop %v4274
        %v4276 = vmul.f32 %v4037, 1.442695
        %v4277 = vpow.pop %v4276
        %v4278 = vmul.f32 %v4040, 1.442695
        %v4279 = vpow.pop %v4278
        %v4280 = vmul.f32 %v4045, 1.442695
        %v4281 = vpow.pop %v4280
        %v4282 = vmul.f32 %v4048, 1.442695
        %v4283 = vpow.pop %v4282
        %v4284 = vmul.f32 %v4053, 1.442695
        %v4285 = vpow.pop %v4284
        %v4286 = vmul.f32 %v4056, 1.442695
        %v4287 = vpow.pop %v4286
        %v4288 = vmul.f32 %v4061, 1.442695
        %v4289 = vpow.pop %v4288
        %v4290 = vmul.f32 %v4064, 1.442695
        %v4291 = vpow.pop %v4290
        %v4292 = vmul.f32 %v4244, %v4261
        %v4293 = vmul.f32 %v4245, %v4263
        %v4294 = vmul.f32 %v4246, %v4265
        %v4295 = vmul.f32 %v4247, %v4267
        %v4296 = vmul.f32 %v4248, %v4269
        %v4297 = vmul.f32 %v4249, %v4271
        %v4298 = vmul.f32 %v4250, %v4273
        %v4299 = vmul.f32 %v4251, %v4275
        %v4300 = vmul.f32 %v4252, %v4277
        %v4301 = vmul.f32 %v4253, %v4279
        %v4302 = vmul.f32 %v4254, %v4281
        %v4303 = vmul.f32 %v4255, %v4283
        %v4304 = vmul.f32 %v4256, %v4285
        %v4305 = vmul.f32 %v4257, %v4287
        %v4306 = vmul.f32 %v4258, %v4289
        %v4307 = vmul.f32 %v4259, %v4291
        %v4308 = vmax.f32 %v4292, -0.999999
        %v4309 = vmax.f32 %v4293, -0.999999
        %v4310 = vmax.f32 %v4294, -0.999999
        %v4311 = vmax.f32 %v4295, -0.999999
        %v4312 = vmax.f32 %v4296, -0.999999
        %v4313 = vmax.f32 %v4297, -0.999999
        %v4314 = vmax.f32 %v4298, -0.999999
        %v4315 = vmax.f32 %v4299, -0.999999
        %v4316 = vmax.f32 %v4300, -0.999999
        %v4317 = vmax.f32 %v4301, -0.999999
        %v4318 = vmax.f32 %v4302, -0.999999
        %v4319 = vmax.f32 %v4303, -0.999999
        %v4320 = vmax.f32 %v4304, -0.999999
        %v4321 = vmax.f32 %v4305, -0.999999
        %v4322 = vmax.f32 %v4306, -0.999999
        %v4323 = vmax.f32 %v4307, -0.999999
        %v4324 = vmin.f32 %v4308, 0.999999
        %v4325 = vmin.f32 %v4309, 0.999999
        %v4326 = vmin.f32 %v4310, 0.999999
        %v4327 = vmin.f32 %v4311, 0.999999
        %v4328 = vmin.f32 %v4312, 0.999999
        %v4329 = vmin.f32 %v4313, 0.999999
        %v4330 = vmin.f32 %v4314, 0.999999
        %v4331 = vmin.f32 %v4315, 0.999999
        %v4332 = vmin.f32 %v4316, 0.999999
        %v4333 = vmin.f32 %v4317, 0.999999
        %v4334 = vmin.f32 %v4318, 0.999999
        %v4335 = vmin.f32 %v4319, 0.999999
        %v4336 = vmin.f32 %v4320, 0.999999
        %v4337 = vmin.f32 %v4321, 0.999999
        %v4338 = vmin.f32 %v4322, 0.999999
        %v4339 = vmin.f32 %v4323, 0.999999
        %v4340 = vadd.f32 %v4324, 1.0
        %v4341 = vadd.f32 %v4325, 1.0
        %v4342 = vadd.f32 %v4326, 1.0
        %v4343 = vadd.f32 %v4327, 1.0
        %v4344 = vadd.f32 %v4328, 1.0
        %v4345 = vadd.f32 %v4329, 1.0
        %v4346 = vadd.f32 %v4330, 1.0
        %v4347 = vadd.f32 %v4331, 1.0
        %v4348 = vadd.f32 %v4332, 1.0
        %v4349 = vadd.f32 %v4333, 1.0
        %v4350 = vadd.f32 %v4334, 1.0
        %v4351 = vadd.f32 %v4335, 1.0
        %v4352 = vadd.f32 %v4336, 1.0
        %v4353 = vadd.f32 %v4337, 1.0
        %v4354 = vadd.f32 %v4338, 1.0
        %v4355 = vadd.f32 %v4339, 1.0
        %v4356 = vsub.f32 1.0, %v4324
        %v4357 = vsub.f32 1.0, %v4325
        %v4358 = vsub.f32 1.0, %v4326
        %v4359 = vsub.f32 1.0, %v4327
        %v4360 = vsub.f32 1.0, %v4328
        %v4361 = vsub.f32 1.0, %v4329
        %v4362 = vsub.f32 1.0, %v4330
        %v4363 = vsub.f32 1.0, %v4331
        %v4364 = vsub.f32 1.0, %v4332
        %v4365 = vsub.f32 1.0, %v4333
        %v4366 = vsub.f32 1.0, %v4334
        %v4367 = vsub.f32 1.0, %v4335
        %v4368 = vsub.f32 1.0, %v4336
        %v4369 = vsub.f32 1.0, %v4337
        %v4370 = vsub.f32 1.0, %v4338
        %v4371 = vsub.f32 1.0, %v4339
        %v4372 = vrcp.pop %v4356
        %v4373 = vmul.f32 %v4340, %v4372
        %v4374 = vrcp.pop %v4357
        %v4375 = vmul.f32 %v4341, %v4374
        %v4376 = vrcp.pop %v4358
        %v4377 = vmul.f32 %v4342, %v4376
        %v4378 = vrcp.pop %v4359
        %v4379 = vmul.f32 %v4343, %v4378
        %v4380 = vrcp.pop %v4360
        %v4381 = vmul.f32 %v4344, %v4380
        %v4382 = vrcp.pop %v4361
        %v4383 = vmul.f32 %v4345, %v4382
        %v4384 = vrcp.pop %v4362
        %v4385 = vmul.f32 %v4346, %v4384
        %v4386 = vrcp.pop %v4363
        %v4387 = vmul.f32 %v4347, %v4386
        %v4388 = vrcp.pop %v4364
        %v4389 = vmul.f32 %v4348, %v4388
        %v4390 = vrcp.pop %v4365
        %v4391 = vmul.f32 %v4349, %v4390
        %v4392 = vrcp.pop %v4366
        %v4393 = vmul.f32 %v4350, %v4392
        %v4394 = vrcp.pop %v4367
        %v4395 = vmul.f32 %v4351, %v4394
        %v4396 = vrcp.pop %v4368
        %v4397 = vmul.f32 %v4352, %v4396
        %v4398 = vrcp.pop %v4369
        %v4399 = vmul.f32 %v4353, %v4398
        %v4400 = vrcp.pop %v4370
        %v4401 = vmul.f32 %v4354, %v4400
        %v4402 = vrcp.pop %v4371
        %v4403 = vmul.f32 %v4355, %v4402
        %v4404 = vlog2.pop %v4373
        %v4405 = vmul.f32 %v4404, 0.6931472
        %v4406 = vlog2.pop %v4375
        %v4407 = vmul.f32 %v4406, 0.6931472
        %v4408 = vlog2.pop %v4377
        %v4409 = vmul.f32 %v4408, 0.6931472
        %v4410 = vlog2.pop %v4379
        %v4411 = vmul.f32 %v4410, 0.6931472
        %v4412 = vlog2.pop %v4381
        %v4413 = vmul.f32 %v4412, 0.6931472
        %v4414 = vlog2.pop %v4383
        %v4415 = vmul.f32 %v4414, 0.6931472
        %v4416 = vlog2.pop %v4385
        %v4417 = vmul.f32 %v4416, 0.6931472
        %v4418 = vlog2.pop %v4387
        %v4419 = vmul.f32 %v4418, 0.6931472
        %v4420 = vlog2.pop %v4389
        %v4421 = vmul.f32 %v4420, 0.6931472
        %v4422 = vlog2.pop %v4391
        %v4423 = vmul.f32 %v4422, 0.6931472
        %v4424 = vlog2.pop %v4393
        %v4425 = vmul.f32 %v4424, 0.6931472
        %v4426 = vlog2.pop %v4395
        %v4427 = vmul.f32 %v4426, 0.6931472
        %v4428 = vlog2.pop %v4397
        %v4429 = vmul.f32 %v4428, 0.6931472
        %v4430 = vlog2.pop %v4399
        %v4431 = vmul.f32 %v4430, 0.6931472
        %v4432 = vlog2.pop %v4401
        %v4433 = vmul.f32 %v4432, 0.6931472
        %v4434 = vlog2.pop %v4403
        %v4435 = vmul.f32 %v4434, 0.6931472
        %v4436 = vmax.f32 %v1446, %v4405
        %v4437 = vmax.f32 %v1446, %v4407
        %v4438 = vmax.f32 %v1446, %v4409
        %v4439 = vmax.f32 %v1446, %v4411
        %v4440 = vmax.f32 %v1446, %v4413
        %v4441 = vmax.f32 %v1446, %v4415
        %v4442 = vmax.f32 %v1446, %v4417
        %v4443 = vmax.f32 %v1446, %v4419
        %v4444 = vmax.f32 %v1446, %v4421
        %v4445 = vmax.f32 %v1446, %v4423
        %v4446 = vmax.f32 %v1446, %v4425
        %v4447 = vmax.f32 %v1446, %v4427
        %v4448 = vmax.f32 %v1446, %v4429
        %v4449 = vmax.f32 %v1446, %v4431
        %v4450 = vmax.f32 %v1446, %v4433
        %v4451 = vmax.f32 %v1446, %v4435
        %v4452 = vmin.f32 %v1463, %v4436
        %v4453 = vmin.f32 %v1463, %v4437
        %v4454 = vmin.f32 %v1463, %v4438
        %v4455 = vmin.f32 %v1463, %v4439
        %v4456 = vmin.f32 %v1463, %v4440
        %v4457 = vmin.f32 %v1463, %v4441
        %v4458 = vmin.f32 %v1463, %v4442
        %v4459 = vmin.f32 %v1463, %v4443
        %v4460 = vmin.f32 %v1463, %v4444
        %v4461 = vmin.f32 %v1463, %v4445
        %v4462 = vmin.f32 %v1463, %v4446
        %v4463 = vmin.f32 %v1463, %v4447
        %v4464 = vmin.f32 %v1463, %v4448
        %v4465 = vmin.f32 %v1463, %v4449
        %v4466 = vmin.f32 %v1463, %v4450
        %v4467 = vmin.f32 %v1463, %v4451
        %v4468 = vpack.c.bf16 %v4453, %v4452
        %v4469 = vpack.c.bf16 %v4455, %v4454
        %v4470 = vpack.c.bf16 %v4457, %v4456
        %v4471 = vpack.c.bf16 %v4459, %v4458
        %v4472 = vpack.c.bf16 %v4461, %v4460
        %v4473 = vpack.c.bf16 %v4463, %v4462
        %v4474 = vpack.c.bf16 %v4465, %v4464
        %v4475 = vpack.c.bf16 %v4467, %v4466
        %v4476 = vld [vmem:[#allocation12] sm:$0xf]
        %v4477 = vld [vmem:[#allocation12 + $0x4] sm:$0xf]
        %v4478 = vld [vmem:[#allocation12 + $0x8] sm:$0xf]
        %v4479 = vld [vmem:[#allocation12 + $0xc] sm:$0xf]
        %v4480 = vld [vmem:[#allocation12 + $0x10] sm:$0xf]
        %v4481 = vld [vmem:[#allocation12 + $0x14] sm:$0xf]
        %v4482 = vld [vmem:[#allocation12 + $0x18] sm:$0xf]
        %v4483 = vld [vmem:[#allocation12 + $0x1c] sm:$0xf]
        %v4484 = vld [vmem:[#allocation12 + $0x20] sm:$0xf]
        %v4485 = vld [vmem:[#allocation12 + $0x24] sm:$0xf]
        %v4486 = vld [vmem:[#allocation12 + $0x28] sm:$0xf]
        %v4487 = vld [vmem:[#allocation12 + $0x2c] sm:$0xf]
        %v4488 = vld [vmem:[#allocation12 + $0x30] sm:$0xf]
        %v4489 = vld [vmem:[#allocation12 + $0x34] sm:$0xf]
        %v4490 = vld [vmem:[#allocation12 + $0x38] sm:$0xf]
        %v4491 = vld [vmem:[#allocation12 + $0x3c] sm:$0xf]
        %v4508 = vunpack.c.l.b16 %v4476
        %v4509 = vunpack.c.l.b16 %v4477
        %v4510 = vunpack.c.l.b16 %v4478
        %v4511 = vunpack.c.l.b16 %v4479
        %v4512 = vunpack.c.l.b16 %v4480
        %v4513 = vunpack.c.l.b16 %v4481
        %v4514 = vunpack.c.l.b16 %v4482
        %v4515 = vunpack.c.l.b16 %v4483
        %v4516 = vunpack.c.l.b16 %v4484
        %v4517 = vunpack.c.l.b16 %v4485
        %v4518 = vunpack.c.l.b16 %v4486
        %v4519 = vunpack.c.l.b16 %v4487
        %v4520 = vunpack.c.l.b16 %v4488
        %v4521 = vunpack.c.l.b16 %v4489
        %v4522 = vunpack.c.l.b16 %v4490
        %v4523 = vunpack.c.l.b16 %v4491
        %v4524 = vpack.c.b16 %v4509, %v4508
        %v4525 = vpack.c.b16 %v4511, %v4510
        %v4526 = vpack.c.b16 %v4513, %v4512
        %v4527 = vpack.c.b16 %v4515, %v4514
        %v4528 = vpack.c.b16 %v4517, %v4516
        %v4529 = vpack.c.b16 %v4519, %v4518
        %v4530 = vpack.c.b16 %v4521, %v4520
        %v4531 = vpack.c.b16 %v4523, %v4522
        %4540 = vmatprep.subr.bf16.mxu0 0
        %4541 = vmatpush1.bf16.msra.mxu0 %v4524
        %4542 = vmatprep.subr.bf16.mxu0 0
        %4543 = vmatpush1.bf16.msra.mxu0 %v4525
        %4544 = vmatprep.subr.bf16.mxu0 0
        %4545 = vmatpush1.bf16.msra.mxu0 %v4526
        %4546 = vmatprep.subr.bf16.mxu0 0
        %4547 = vmatpush1.bf16.msra.mxu0 %v4527
        %4548 = vmatprep.subr.bf16.mxu0 0
        %4549 = vmatpush1.bf16.msra.mxu0 %v4528
        %4550 = vmatprep.subr.bf16.mxu0 0
        %4551 = vmatpush1.bf16.msra.mxu0 %v4529
        %4552 = vmatprep.subr.bf16.mxu0 0
        %4553 = vmatpush1.bf16.msra.mxu0 %v4530
        %4554 = vmatprep.subr.bf16.mxu0 0
        %4555 = vmatpush1.bf16.msra.mxu0 %v4531
        %4556 = vmatprep.subr.bf16.mxu0 0
        %4557 = vmatpush1.bf16.msra.mxu0 0
        %4558 = vmatprep.subr.bf16.mxu0 0
        %4559 = vmatpush1.bf16.msra.mxu0 0
        %4560 = vmatprep.subr.bf16.mxu0 0
        %4561 = vmatpush1.bf16.msra.mxu0 0
        %4562 = vmatprep.subr.bf16.mxu0 0
        %4563 = vmatpush1.bf16.msra.mxu0 0
        %4564 = vmatprep.subr.bf16.mxu0 0
        %4565 = vmatpush1.bf16.msra.mxu0 0
        %4566 = vmatprep.subr.bf16.mxu0 0
        %4567 = vmatpush1.bf16.msra.mxu0 0
        %4568 = vmatprep.subr.bf16.mxu0 0
        %4569 = vmatpush1.bf16.msra.mxu0 0
        %4570 = vmatprep.subr.bf16.mxu0 0
        %4571 = vmatpush1.bf16.msra.mxu0 0
        %4572 = vmatprep.mubr.bf16.mxu0 0
        %4573 = vmatmul.mubr.bf16.gmra.mrb[0].mxu0 %v4468
        %v4574 = vpop.f32.mrb[0].mxu0
        %v4575 = vadd.f32 %v401, %v4574
        %v4576 = vpop.f32.mrb[0].mxu0
        %v4577 = vpop.f32.mrb[0].mxu0
        %v4578 = vadd.f32 %v402, %v4577
        %v4579 = vpop.f32.mrb[0].mxu0
        %4580 = vmatprep.mubr.bf16.mxu0 0
        %4581 = vmatmul.mubr.bf16.gmra.mrb[0].mxu0 %v4469
        %v4582 = vpop.f32.mrb[0].mxu0
        %v4583 = vadd.f32 %v403, %v4582
        %v4584 = vpop.f32.mrb[0].mxu0
        %v4585 = vpop.f32.mrb[0].mxu0
        %v4586 = vadd.f32 %v404, %v4585
        %v4587 = vpop.f32.mrb[0].mxu0
        %4588 = vmatprep.mubr.bf16.mxu0 0
        %4589 = vmatmul.mubr.bf16.gmra.mrb[0].mxu0 %v4470
        %v4590 = vpop.f32.mrb[0].mxu0
        %v4591 = vadd.f32 %v405, %v4590
        %v4592 = vpop.f32.mrb[0].mxu0
        %v4593 = vpop.f32.mrb[0].mxu0
        %v4594 = vadd.f32 %v406, %v4593
        %v4595 = vpop.f32.mrb[0].mxu0
        %4596 = vmatprep.mubr.bf16.mxu0 0
        %4597 = vmatmul.mubr.bf16.gmra.mrb[0].mxu0 %v4471
        %v4598 = vpop.f32.mrb[0].mxu0
        %v4599 = vadd.f32 %v407, %v4598
        %v4600 = vpop.f32.mrb[0].mxu0
        %v4601 = vpop.f32.mrb[0].mxu0
        %v4602 = vadd.f32 %v408, %v4601
        %v4603 = vpop.f32.mrb[0].mxu0
        %4604 = vmatprep.mubr.bf16.mxu0 0
        %4605 = vmatmul.mubr.bf16.gmra.mrb[0].mxu0 %v4472
        %v4606 = vpop.f32.mrb[0].mxu0
        %v4607 = vadd.f32 %v409, %v4606
        %v4608 = vpop.f32.mrb[0].mxu0
        %v4609 = vpop.f32.mrb[0].mxu0
        %v4610 = vadd.f32 %v410, %v4609
        %v4611 = vpop.f32.mrb[0].mxu0
        %4612 = vmatprep.mubr.bf16.mxu0 0
        %4613 = vmatmul.mubr.bf16.gmra.mrb[0].mxu0 %v4473
        %v4614 = vpop.f32.mrb[0].mxu0
        %v4615 = vadd.f32 %v411, %v4614
        %v4616 = vpop.f32.mrb[0].mxu0
        %v4617 = vpop.f32.mrb[0].mxu0
        %v4618 = vadd.f32 %v412, %v4617
        %v4619 = vpop.f32.mrb[0].mxu0
        %4620 = vmatprep.mubr.bf16.mxu0 0
        %4621 = vmatmul.mubr.bf16.gmra.mrb[0].mxu0 %v4474
        %v4622 = vpop.f32.mrb[0].mxu0
        %v4623 = vadd.f32 %v413, %v4622
        %v4624 = vpop.f32.mrb[0].mxu0
        %v4625 = vpop.f32.mrb[0].mxu0
        %v4626 = vadd.f32 %v414, %v4625
        %v4627 = vpop.f32.mrb[0].mxu0
        %4628 = vmatprep.mubr.bf16.mxu0 0
        %4629 = vmatmul.mubr.bf16.gmra.mrb[0].mxu0 %v4475
        %v4630 = vpop.f32.mrb[0].mxu0
        %v4631 = vadd.f32 %v415, %v4630
        %v4632 = vpop.f32.mrb[0].mxu0
        %v4633 = vpop.f32.mrb[0].mxu0
        %v4634 = vadd.f32 %v416, %v4633
        %v4635 = vpop.f32.mrb[0].mxu0
        %4636 = vdwg.mxu0
        %v4637 = vmul.f32 %v4575, 1.442695
        %v4638 = vpow.pop %v4637
        %v4639 = vmul.f32 %v4578, 1.442695
        %v4640 = vpow.pop %v4639
        %v4641 = vmul.f32 %v4583, 1.442695
        %v4642 = vpow.pop %v4641
        %v4643 = vmul.f32 %v4586, 1.442695
        %v4644 = vpow.pop %v4643
        %v4645 = vmul.f32 %v4591, 1.442695
        %v4646 = vpow.pop %v4645
        %v4647 = vmul.f32 %v4594, 1.442695
        %v4648 = vpow.pop %v4647
        %v4649 = vmul.f32 %v4599, 1.442695
        %v4650 = vpow.pop %v4649
        %v4651 = vmul.f32 %v4602, 1.442695
        %v4652 = vpow.pop %v4651
        %v4653 = vmul.f32 %v4607, 1.442695
        %v4654 = vpow.pop %v4653
        %v4655 = vmul.f32 %v4610, 1.442695
        %v4656 = vpow.pop %v4655
        %v4657 = vmul.f32 %v4615, 1.442695
        %v4658 = vpow.pop %v4657
        %v4659 = vmul.f32 %v4618, 1.442695
        %v4660 = vpow.pop %v4659
        %v4661 = vmul.f32 %v4623, 1.442695
        %v4662 = vpow.pop %v4661
        %v4663 = vmul.f32 %v4626, 1.442695
        %v4664 = vpow.pop %v4663
        %v4665 = vmul.f32 %v4631, 1.442695
        %v4666 = vpow.pop %v4665
        %v4667 = vmul.f32 %v4634, 1.442695
        %v4668 = vpow.pop %v4667
        %v4669 = vadd.f32 %v4638, 1.0
        %v4670 = vadd.f32 %v4640, 1.0
        %v4671 = vadd.f32 %v4642, 1.0
        %v4672 = vadd.f32 %v4644, 1.0
        %v4673 = vadd.f32 %v4646, 1.0
        %v4674 = vadd.f32 %v4648, 1.0
        %v4675 = vadd.f32 %v4650, 1.0
        %v4676 = vadd.f32 %v4652, 1.0
        %v4677 = vadd.f32 %v4654, 1.0
        %v4678 = vadd.f32 %v4656, 1.0
        %v4679 = vadd.f32 %v4658, 1.0
        %v4680 = vadd.f32 %v4660, 1.0
        %v4681 = vadd.f32 %v4662, 1.0
        %v4682 = vadd.f32 %v4664, 1.0
        %v4683 = vadd.f32 %v4666, 1.0
        %v4684 = vadd.f32 %v4668, 1.0
        %v4685 = vrcp.pop %v4669
        %v4686 = vmul.f32 1.0, %v4685
        %v4687 = vrcp.pop %v4670
        %v4688 = vmul.f32 1.0, %v4687
        %v4689 = vrcp.pop %v4671
        %v4690 = vmul.f32 1.0, %v4689
        %v4691 = vrcp.pop %v4672
        %v4692 = vmul.f32 1.0, %v4691
        %v4693 = vrcp.pop %v4673
        %v4694 = vmul.f32 1.0, %v4693
        %v4695 = vrcp.pop %v4674
        %v4696 = vmul.f32 1.0, %v4695
        %v4697 = vrcp.pop %v4675
        %v4698 = vmul.f32 1.0, %v4697
        %v4699 = vrcp.pop %v4676
        %v4700 = vmul.f32 1.0, %v4699
        %v4701 = vrcp.pop %v4677
        %v4702 = vmul.f32 1.0, %v4701
        %v4703 = vrcp.pop %v4678
        %v4704 = vmul.f32 1.0, %v4703
        %v4705 = vrcp.pop %v4679
        %v4706 = vmul.f32 1.0, %v4705
        %v4707 = vrcp.pop %v4680
        %v4708 = vmul.f32 1.0, %v4707
        %v4709 = vrcp.pop %v4681
        %v4710 = vmul.f32 1.0, %v4709
        %v4711 = vrcp.pop %v4682
        %v4712 = vmul.f32 1.0, %v4711
        %v4713 = vrcp.pop %v4683
        %v4714 = vmul.f32 1.0, %v4713
        %v4715 = vrcp.pop %v4684
        %v4716 = vmul.f32 1.0, %v4715
        %4717 = vst [vmem:[%s395] sm:$0xff] %v4686
        %4718 = vst [vmem:[%s395 + $0x8] sm:$0xff] %v4688
        %4719 = vst [vmem:[%s395 + $0x10] sm:$0xff] %v4690
        %4720 = vst [vmem:[%s395 + $0x18] sm:$0xff] %v4692
        %4721 = vst [vmem:[%s395 + $0x20] sm:$0xff] %v4694
        %4722 = vst [vmem:[%s395 + $0x28] sm:$0xff] %v4696
        %4723 = vst [vmem:[%s395 + $0x30] sm:$0xff] %v4698
        %4724 = vst [vmem:[%s395 + $0x38] sm:$0xff] %v4700
        %4725 = vst [vmem:[%s395 + $0x40] sm:$0xff] %v4702
        %4726 = vst [vmem:[%s395 + $0x48] sm:$0xff] %v4704
        %4727 = vst [vmem:[%s395 + $0x50] sm:$0xff] %v4706
        %4728 = vst [vmem:[%s395 + $0x58] sm:$0xff] %v4708
        %4729 = vst [vmem:[%s395 + $0x60] sm:$0xff] %v4710
        %4730 = vst [vmem:[%s395 + $0x68] sm:$0xff] %v4712
        %4731 = vst [vmem:[%s395 + $0x70] sm:$0xff] %v4714
        %4732 = vst [vmem:[%s395 + $0x78] sm:$0xff] %v4716
        %s4733 = sand.u32 %s195, 1
        %s4734 = scalar_lea.sflag [#allocation5], %s4733
        %s4735 = sand.u32 %s195, 1
        %s4736 = smul.addr %s4735, 128
        %s4737 = scalar_lea.vmem [#allocation14], %s4736
        // Predicated region
        $region73: #{tpu_custom_call.1} parent=47 // pred_check
          %p4738 = pneg %p205
        $region74: #{tpu_custom_call.1} parent=47 // pred_check_branch
          %4740 = sbr.rel (%p4738) target = $region76
        $region75: #{tpu_custom_call.1} parent=47 // pred_region
          %s4741 = smul.u32 16, %s30
          %s4743 = ssub.s32 2048, 2048
          %4744 = vsyncadd %s4734, %s4743
          %s4745 = smul.addr %s4741, 128
          %s4746 = scalar_lea.hbm %s7, %s4745
          %s4747 = sshll.u32 %s4737, 4
          %s4748 = int_to_ptr.vmem [resolvable:$true] %s4747
          %4753 = dma.vmem_to_hbm [thread:$0]  %s4748, 2048, %s4746, %s4734, 128, 128, 8
        $region76: #{tpu_custom_call.1} parent=47 // pred_fallthru
          _
      $region48: #{tpu_custom_call.1} parent=5 // pred_fallthru
        _
      %p4754 = scmp.le.s32.totalorder 2, %s25
      // Predicated region
      $region77: #{tpu_custom_call.1} parent=5 // pred_check
        %p4755 = pneg %p4754
      $region78: #{tpu_custom_call.1} parent=5 // pred_check_branch
        %4757 = sbr.rel (%p4755) target = $region80
      $region79: #{tpu_custom_call.1} parent=5 // pred_region
        %s4758 = ssub.s32 %s25, 2
        // Predicated region
        $region81: #{tpu_custom_call.1} parent=79 // pred_check
          %p4759 = pneg %p211
        $region82: #{tpu_custom_call.1} parent=79 // pred_check_branch
          %4761 = sbr.rel (%p4759) target = $region84
        $region83: #{tpu_custom_call.1} parent=79 // pred_region
          %s4762 = sand.u32 %s196, 1
          %s4763 = scalar_lea.sflag [#allocation5], %s4762
          %s4764 = sand.u32 %s196, 1
          %s4765 = smul.addr %s4764, 128
          %s4766 = scalar_lea.vmem [#allocation14], %s4765
          %4767 = dma.done %s4763, 2048
        $region84: #{tpu_custom_call.1} parent=79 // pred_fallthru
          _
      $region80: #{tpu_custom_call.1} parent=5 // pred_fallthru
        _
    $region6: #{tpu_custom_call.1} parent=1 // loop_footer
      %s29 = sadd.s32 1, %s25
    $region7: #{tpu_custom_call.1} parent=1 // loop_footer_branch
      %24 = sbr.rel target = $region3
    $region8: #{tpu_custom_call.1} parent=1 // loop_exit
      _
    %4768 = vsyncpa [#allocation4], 1
    %s4769 = scalar_lea.sflag [#allocation4], 1
    %4770 = vsyncpa %s4769, 1
    %4771 = vsyncpa [#allocation7], 1
    %s4772 = scalar_lea.sflag [#allocation7], 1
    %4773 = vsyncpa %s4772, 1
    %4774 = vsyncpa [#allocation10], 1
    %4775 = vsyncpa [#allocation13], 1
    %4776 = vsyncpa [#allocation5], 1
    %s4777 = scalar_lea.sflag [#allocation5], 1
    %4778 = vsyncpa %s4777, 1

// kernel: tpu_custom_call.1
$region0: #{tpu_custom_call.1}
  #allocation0 [shape = 'u32[]', space=smem, size = 0x4, offset = 0x4, fixed_abs, tag = 'smem constant byte address 0x4 - core index']
  #allocation1 [shape = 'u32[144,128]{1,0:T(1,128)}', space=vmem, size = 0x12000, scoped, tag = 'internal scratch']
  #allocation2 [shape = 'f32[1,1]{1,0:T(1,128)S(6)}', space=smem, size = 0x200, scoped, tag = 'scoped memory for tpu_custom_call.1']
  %s0 = inlined_call_operand.<no memory space> [shape: f32[1,1], index: 0, kind: input, shape index: {}]
  %s1 = inlined_call_operand.hbm [shape: f32[256,128], index: 1, kind: input, shape index: {}]
  %s2 = inlined_call_operand.hbm [shape: f32[256,128], index: 2, kind: input, shape index: {}]
  %s3 = inlined_call_operand.hbm [shape: bf16[128,128], index: 3, kind: input, shape index: {}]
  %s4 = inlined_call_operand.hbm [shape: bf16[128,128], index: 4, kind: input, shape index: {}]
  %s5 = inlined_call_operand.hbm [shape: bf16[128,128], index: 5, kind: input, shape index: {}]
  %s6 = inlined_call_operand.hbm [shape: bf16[128,128], index: 6, kind: input, shape index: {}]
  %s7 = inlined_call_operand.hbm [shape: f32[256,128], index: 7, kind: output, shape index: {}]
  %s8 = sld [smem:[#allocation0]]
  $region85: #{tpu_custom_call.1} parent=0
    _
  %s10 = ssub.s32 1, %s8
  %s11 = scalar_select 0, %s10, %s8
  %12 = sst [smem:[#allocation2]] %s0
  $region1: #{tpu_custom_call.1} parent=0
    #allocation3 [shape = 'u8[131072]{0}', space=vmem, size = 0x20000, scoped, tag = 'input window, operand 1']
    #allocation4 [shape = 's32[2]{0}', space=sflag, size = 0x8, scoped, tag = 'scoped memory for tpu_custom_call.1']
    #allocation5 [shape = 's32[2]{0}', space=sflag, size = 0x8, scoped, tag = 'scoped memory for tpu_custom_call.1']
    #allocation6 [shape = 'u8[131072]{0}', space=vmem, size = 0x20000, scoped, tag = 'input window, operand 2']
    #allocation7 [shape = 's32[2]{0}', space=sflag, size = 0x8, scoped, tag = 'scoped memory for tpu_custom_call.1']
    #allocation8 [shape = 'u8[32768]{0}', space=vmem, size = 0x8000, scoped, tag = 'input window, operand 3, single buffered']
    #allocation9 [shape = 'u8[32768]{0}', space=vmem, size = 0x8000, scoped, tag = 'input window, operand 4, single buffered']
    #allocation10 [shape = 's32[1]{0}', space=sflag, size = 0x4, scoped, tag = 'scoped memory for tpu_custom_call.1']
    #allocation11 [shape = 'u8[32768]{0}', space=vmem, size = 0x8000, scoped, tag = 'input window, operand 5, single buffered']
    #allocation12 [shape = 'u8[32768]{0}', space=vmem, size = 0x8000, scoped, tag = 'input window, operand 6, single buffered']
    #allocation13 [shape = 's32[1]{0}', space=sflag, size = 0x4, scoped, tag = 'scoped memory for tpu_custom_call.1']
    #allocation14 [shape = 'u8[131072]{0}', space=vmem, size = 0x20000, scoped, tag = 'output window, operand 0']
    %13 = vsyncpa [#allocation4], 0
    %s14 = scalar_lea.sflag [#allocation4], 1
    %15 = vsyncpa %s14, 0
    %16 = vsyncpa [#allocation7], 0
    %s17 = scalar_lea.sflag [#allocation7], 1
    %18 = vsyncpa %s17, 0
    %19 = vsyncpa [#allocation10], 0
    %20 = vsyncpa [#allocation13], 0
    %21 = vsyncpa [#allocation5], 0
    %s22 = scalar_lea.sflag [#allocation5], 1
    %23 = vsyncpa %s22, 0
    loop: start=0, step=1, limit=4
    $region2: #{tpu_custom_call.1} parent=1 // loop_pre_header
      _
    $region3: #{tpu_custom_call.1} parent=1 // loop_header
      %s25 = sphi 0, %s29
      %p26 = scmp.ge.s32.totalorder %s25, 4
      %s33 = sphi 0, %s33
      %s35 = sphi 0, %s33
      %s36 = sphi 0, %s35
      %s50 = sphi 0, %s36
      %s56 = sphi 0, %s58
      %s59 = sphi 0, %s56
      %s60 = sphi 0, %s59
      %s76 = sphi 0, %s60
      %s82 = sphi 0, %s84
      %s85 = sphi 0, %s82
      %s86 = sphi 0, %s85
      %s102 = sphi 0, %s86
      %s106 = sphi 0, %s106
      %s108 = sphi 0, %s106
      %s109 = sphi 0, %s108
      %s123 = sphi 0, %s109
      %s127 = sphi 0, %s127
      %s129 = sphi 0, %s127
      %s130 = sphi 0, %s129
      %s144 = sphi 0, %s130
      %s148 = sphi 0, %s148
      %s150 = sphi 0, %s148
      %s151 = sphi 0, %s150
      %s165 = sphi 0, %s151
      %s169 = sphi 0, %s169
      %s171 = sphi 0, %s169
      %s172 = sphi 0, %s171
      %s186 = sphi 0, %s172
      %s192 = sphi 0, %s194
      %s195 = sphi 0, %s192
      %s196 = sphi 0, %s195
      %s212 = sphi 0, %s196
    $region4: #{tpu_custom_call.1} parent=1 // loop_header_branch
      %28 = sbr.rel (%p26) target = $region8
    $region5: #{tpu_custom_call.1} parent=1 // loop_body
      %s30 = ssub.s32 %s25, 1
      %s31 = ssub.s32 %s25, 2
      %s32 = sadd.s32 %s25, 1
      %s34 = sadd.s32 %s33, 1
      %p37 = scmp.eq.s32.totalorder %s25, 1
      %p38 = scmp.ne.s32.totalorder %s33, %s35
      %p39 = scmp.eq.s32.totalorder %s25, 0
      %p40 = por %p38, %p39
      %p41 = scmp.ne.s32.totalorder %s33, %s35
      %p42 = scmp.eq.s32.totalorder %s30, 1
      %p43 = por %p41, %p42
      %p44 = scmp.ne.s32.totalorder %s35, %s36
      %p45 = scmp.eq.s32.totalorder %s30, 0
      %p46 = por %p44, %p45
      %p47 = scmp.ne.s32.totalorder %s35, %s36
      %p48 = scmp.eq.s32.totalorder %s31, 1
      %p49 = por %p47, %p48
      %p51 = scmp.ne.s32.totalorder %s36, %s50
      %p52 = scmp.eq.s32.totalorder %s31, 0
      %p53 = por %p51, %p52
      %s54 = ssub.s32 %s25, %s32
      %p55 = scmp.eq.s32.totalorder %s54, 0
      %s57 = sadd.s32 %s56, 1
      %s58 = scalar_select %p55, %s56, %s57
      %p61 = pneg %p55
      %p62 = scmp.eq.s32.totalorder %s25, 1
      %p63 = por %p61, %p62
      %p64 = scmp.ne.s32.totalorder %s56, %s59
      %p65 = scmp.eq.s32.totalorder %s25, 0
      %p66 = por %p64, %p65
      %p67 = scmp.ne.s32.totalorder %s56, %s59
      %p68 = scmp.eq.s32.totalorder %s30, 1
      %p69 = por %p67, %p68
      %p70 = scmp.ne.s32.totalorder %s59, %s60
      %p71 = scmp.eq.s32.totalorder %s30, 0
      %p72 = por %p70, %p71
      %p73 = scmp.ne.s32.totalorder %s59, %s60
      %p74 = scmp.eq.s32.totalorder %s31, 1
      %p75 = por %p73, %p74
      %p77 = scmp.ne.s32.totalorder %s60, %s76
      %p78 = scmp.eq.s32.totalorder %s31, 0
      %p79 = por %p77, %p78
      %s80 = ssub.s32 %s25, %s32
      %p81 = scmp.eq.s32.totalorder %s80, 0
      %s83 = sadd.s32 %s82, 1
      %s84 = scalar_select %p81, %s82, %s83
      %p87 = pneg %p81
      %p88 = scmp.eq.s32.totalorder %s25, 1
      %p89 = por %p87, %p88
      %p90 = scmp.ne.s32.totalorder %s82, %s85
      %p91 = scmp.eq.s32.totalorder %s25, 0
      %p92 = por %p90, %p91
      %p93 = scmp.ne.s32.totalorder %s82, %s85
      %p94 = scmp.eq.s32.totalorder %s30, 1
      %p95 = por %p93, %p94
      %p96 = scmp.ne.s32.totalorder %s85, %s86
      %p97 = scmp.eq.s32.totalorder %s30, 0
      %p98 = por %p96, %p97
      %p99 = scmp.ne.s32.totalorder %s85, %s86
      %p100 = scmp.eq.s32.totalorder %s31, 1
      %p101 = por %p99, %p100
      %p103 = scmp.ne.s32.totalorder %s86, %s102
      %p104 = scmp.eq.s32.totalorder %s31, 0
      %p105 = por %p103, %p104
      %s107 = sadd.s32 %s106, 1
      %p110 = scmp.eq.s32.totalorder %s25, 1
      %p111 = scmp.ne.s32.totalorder %s106, %s108
      %p112 = scmp.eq.s32.totalorder %s25, 0
      %p113 = por %p111, %p112
      %p114 = scmp.ne.s32.totalorder %s106, %s108
      %p115 = scmp.eq.s32.totalorder %s30, 1
      %p116 = por %p114, %p115
      %p117 = scmp.ne.s32.totalorder %s108, %s109
      %p118 = scmp.eq.s32.totalorder %s30, 0
      %p119 = por %p117, %p118
      %p120 = scmp.ne.s32.totalorder %s108, %s109
      %p121 = scmp.eq.s32.totalorder %s31, 1
      %p122 = por %p120, %p121
      %p124 = scmp.ne.s32.totalorder %s109, %s123
      %p125 = scmp.eq.s32.totalorder %s31, 0
      %p126 = por %p124, %p125
      %s128 = sadd.s32 %s127, 1
      %p131 = scmp.eq.s32.totalorder %s25, 1
      %p132 = scmp.ne.s32.totalorder %s127, %s129
      %p133 = scmp.eq.s32.totalorder %s25, 0
      %p134 = por %p132, %p133
      %p135 = scmp.ne.s32.totalorder %s127, %s129
      %p136 = scmp.eq.s32.totalorder %s30, 1
      %p137 = por %p135, %p136
      %p138 = scmp.ne.s32.totalorder %s129, %s130
      %p139 = scmp.eq.s32.totalorder %s30, 0
      %p140 = por %p138, %p139
      %p141 = scmp.ne.s32.totalorder %s129, %s130
      %p142 = scmp.eq.s32.totalorder %s31, 1
      %p143 = por %p141, %p142
      %p145 = scmp.ne.s32.totalorder %s130, %s144
      %p146 = scmp.eq.s32.totalorder %s31, 0
      %p147 = por %p145, %p146
      %s149 = sadd.s32 %s148, 1
      %p152 = scmp.eq.s32.totalorder %s25, 1
      %p153 = scmp.ne.s32.totalorder %s148, %s150
      %p154 = scmp.eq.s32.totalorder %s25, 0
      %p155 = por %p153, %p154
      %p156 = scmp.ne.s32.totalorder %s148, %s150
      %p157 = scmp.eq.s32.totalorder %s30, 1
      %p158 = por %p156, %p157
      %p159 = scmp.ne.s32.totalorder %s150, %s151
      %p160 = scmp.eq.s32.totalorder %s30, 0
      %p161 = por %p159, %p160
      %p162 = scmp.ne.s32.totalorder %s150, %s151
      %p163 = scmp.eq.s32.totalorder %s31, 1
      %p164 = por %p162, %p163
      %p166 = scmp.ne.s32.totalorder %s151, %s165
      %p167 = scmp.eq.s32.totalorder %s31, 0
      %p168 = por %p166, %p167
      %s170 = sadd.s32 %s169, 1
      %p173 = scmp.eq.s32.totalorder %s25, 1
      %p174 = scmp.ne.s32.totalorder %s169, %s171
      %p175 = scmp.eq.s32.totalorder %s25, 0
      %p176 = por %p174, %p175
      %p177 = scmp.ne.s32.totalorder %s169, %s171
      %p178 = scmp.eq.s32.totalorder %s30, 1
      %p179 = por %p177, %p178
      %p180 = scmp.ne.s32.totalorder %s171, %s172
      %p181 = scmp.eq.s32.totalorder %s30, 0
      %p182 = por %p180, %p181
      %p183 = scmp.ne.s32.totalorder %s171, %s172
      %p184 = scmp.eq.s32.totalorder %s31, 1
      %p185 = por %p183, %p184
      %p187 = scmp.ne.s32.totalorder %s172, %s186
      %p188 = scmp.eq.s32.totalorder %s31, 0
      %p189 = por %p187, %p188
      %s190 = ssub.s32 %s25, %s32
      %p191 = scmp.eq.s32.totalorder %s190, 0
      %s193 = sadd.s32 %s192, 1
      %s194 = scalar_select %p191, %s192, %s193
      %p197 = pneg %p191
      %p198 = scmp.eq.s32.totalorder %s25, 1
      %p199 = por %p197, %p198
      %p200 = scmp.ne.s32.totalorder %s192, %s195
      %p201 = scmp.eq.s32.totalorder %s25, 0
      %p202 = por %p200, %p201
      %p203 = scmp.ne.s32.totalorder %s192, %s195
      %p204 = scmp.eq.s32.totalorder %s30, 1
      %p205 = por %p203, %p204
      %p206 = scmp.ne.s32.totalorder %s195, %s196
      %p207 = scmp.eq.s32.totalorder %s30, 0
      %p208 = por %p206, %p207
      %p209 = scmp.ne.s32.totalorder %s195, %s196
      %p210 = scmp.eq.s32.totalorder %s31, 1
      %p211 = por %p209, %p210
      %p213 = scmp.ne.s32.totalorder %s196, %s212
      %p214 = scmp.eq.s32.totalorder %s31, 0
      %p215 = por %p213, %p214
      %p216 = scmp.le.s32.totalorder 1, %s25
      %p217 = scmp.lt.s32.totalorder %s25, 3
      %p218 = pnand %p216, %p217
      %p219 = pneg %p218
      // Predicated region
      $region9: #{tpu_custom_call.1} parent=5 // pred_check
        _
      $region10: #{tpu_custom_call.1} parent=5 // pred_check_branch
        %221 = sbr.rel (%p218) target = $region12
      $region11: #{tpu_custom_call.1} parent=5 // pred_region
        %s222 = ssub.s32 %s25, 1
        // Predicated region
        $region13: #{tpu_custom_call.1} parent=11 // pred_check
          %p223 = pneg %p46
        $region14: #{tpu_custom_call.1} parent=11 // pred_check_branch
          %225 = sbr.rel (%p223) target = $region16
        $region15: #{tpu_custom_call.1} parent=11 // pred_region
          _
        $region16: #{tpu_custom_call.1} parent=11 // pred_fallthru
          _
        // Predicated region
        $region17: #{tpu_custom_call.1} parent=11 // pred_check
          %p226 = pneg %p119
        $region18: #{tpu_custom_call.1} parent=11 // pred_check_branch
          %228 = sbr.rel (%p226) target = $region20
        $region19: #{tpu_custom_call.1} parent=11 // pred_region
          %s230 = ssub.s32 1024, 1024
          %231 = vsyncadd [#allocation7], %s230
          %s232 = sshll.u32 [#allocation8], 4
          %s233 = int_to_ptr.vmem [resolvable:$true] %s232
          %238 = dma.hbm_to_vmem [thread:$0]  %s3, 1024, %s233, [#allocation7], 64, 64, 4
        $region20: #{tpu_custom_call.1} parent=11 // pred_fallthru
          _
        // Predicated region
        $region21: #{tpu_custom_call.1} parent=11 // pred_check
          %p239 = pneg %p140
        $region22: #{tpu_custom_call.1} parent=11 // pred_check_branch
          %241 = sbr.rel (%p239) target = $region24
        $region23: #{tpu_custom_call.1} parent=11 // pred_region
          %s243 = ssub.s32 1024, 1024
          %244 = vsyncadd [#allocation10], %s243
          %s245 = sshll.u32 [#allocation9], 4
          %s246 = int_to_ptr.vmem [resolvable:$true] %s245
          %251 = dma.hbm_to_vmem [thread:$0]  %s4, 1024, %s246, [#allocation10], 64, 64, 4
        $region24: #{tpu_custom_call.1} parent=11 // pred_fallthru
          _
        // Predicated region
        $region25: #{tpu_custom_call.1} parent=11 // pred_check
          %p252 = pneg %p161
        $region26: #{tpu_custom_call.1} parent=11 // pred_check_branch
          %254 = sbr.rel (%p252) target = $region28
        $region27: #{tpu_custom_call.1} parent=11 // pred_region
          %s256 = ssub.s32 1024, 1024
          %257 = vsyncadd [#allocation10], %s256
          %s258 = sshll.u32 [#allocation11], 4
          %s259 = int_to_ptr.vmem [resolvable:$true] %s258
          %264 = dma.hbm_to_vmem [thread:$0]  %s5, 1024, %s259, [#allocation10], 64, 64, 4
        $region28: #{tpu_custom_call.1} parent=11 // pred_fallthru
          _
        // Predicated region
        $region29: #{tpu_custom_call.1} parent=11 // pred_check
          %p265 = pneg %p182
        $region30: #{tpu_custom_call.1} parent=11 // pred_check_branch
          %267 = sbr.rel (%p265) target = $region32
        $region31: #{tpu_custom_call.1} parent=11 // pred_region
          %s269 = ssub.s32 1024, 1024
          %270 = vsyncadd [#allocation13], %s269
          %s271 = sshll.u32 [#allocation12], 4
          %s272 = int_to_ptr.vmem [resolvable:$true] %s271
          %277 = dma.hbm_to_vmem [thread:$0]  %s6, 1024, %s272, [#allocation13], 64, 64, 4
        $region32: #{tpu_custom_call.1} parent=11 // pred_fallthru
          _
      $region12: #{tpu_custom_call.1} parent=5 // pred_fallthru
        _
      %p278 = scmp.lt.s32.totalorder %s25, 2
      // Predicated region
      $region33: #{tpu_custom_call.1} parent=5 // pred_check
        %p279 = pneg %p278
      $region34: #{tpu_custom_call.1} parent=5 // pred_check_branch
        %281 = sbr.rel (%p279) target = $region36
      $region35: #{tpu_custom_call.1} parent=5 // pred_region
        // Predicated region
        $region37: #{tpu_custom_call.1} parent=35 // pred_check
          %p282 = pneg %p66
        $region38: #{tpu_custom_call.1} parent=35 // pred_check_branch
          %284 = sbr.rel (%p282) target = $region40
        $region39: #{tpu_custom_call.1} parent=35 // pred_region
          %s285 = sand.u32 %s56, 1
          %s286 = scalar_lea.sflag [#allocation4], %s285
          %s287 = sand.u32 %s56, 1
          %s288 = smul.addr %s287, 128
          %s289 = scalar_lea.vmem [#allocation3], %s288
          %s290 = smul.u32 16, %s25
          %s292 = ssub.s32 2048, 2048
          %293 = vsyncadd %s286, %s292
          %s294 = smul.addr %s290, 128
          %s295 = scalar_lea.hbm %s1, %s294
          %s296 = sshll.u32 %s289, 4
          %s297 = int_to_ptr.vmem [resolvable:$true] %s296
          %302 = dma.hbm_to_vmem [thread:$0]  %s295, 2048, %s297, %s286, 128, 128, 8
        $region40: #{tpu_custom_call.1} parent=35 // pred_fallthru
          _
        // Predicated region
        $region41: #{tpu_custom_call.1} parent=35 // pred_check
          %p303 = pneg %p92
        $region42: #{tpu_custom_call.1} parent=35 // pred_check_branch
          %305 = sbr.rel (%p303) target = $region44
        $region43: #{tpu_custom_call.1} parent=35 // pred_region
          %s306 = sand.u32 %s25, 1
          %s307 = scalar_lea.sflag [#allocation7], %s306
          %s308 = sand.u32 %s82, 1
          %s309 = smul.addr %s308, 128
          %s310 = scalar_lea.vmem [#allocation6], %s309
          %s311 = smul.u32 16, %s25
          %s313 = ssub.s32 2048, 2048
          %314 = vsyncadd %s307, %s313
          %s315 = smul.addr %s311, 128
          %s316 = scalar_lea.hbm %s2, %s315
          %s317 = sshll.u32 %s310, 4
          %s318 = int_to_ptr.vmem [resolvable:$true] %s317
          %323 = dma.hbm_to_vmem [thread:$0]  %s316, 2048, %s318, %s307, 128, 128, 8
        $region44: #{tpu_custom_call.1} parent=35 // pred_fallthru
          _
      $region36: #{tpu_custom_call.1} parent=5 // pred_fallthru
        _
      %p324 = scmp.le.s32.totalorder 1, %s25
      %p325 = scmp.lt.s32.totalorder %s25, 3
      %p326 = pnand %p324, %p325
      %p327 = pneg %p326
      // Predicated region
      $region45: #{tpu_custom_call.1} parent=5 // pred_check
        _
      $region46: #{tpu_custom_call.1} parent=5 // pred_check_branch
        %329 = sbr.rel (%p326) target = $region48
      $region47: #{tpu_custom_call.1} parent=5 // pred_region
        %s330 = ssub.s32 %s25, 1
        %s331 = sand.u32 %s59, 1
        %s332 = scalar_lea.sflag [#allocation4], %s331
        %s333 = sand.u32 %s59, 1
        %s334 = smul.addr %s333, 128
        %s335 = scalar_lea.vmem [#allocation3], %s334
        // Predicated region
        $region49: #{tpu_custom_call.1} parent=47 // pred_check
          %p336 = pneg %p72
        $region50: #{tpu_custom_call.1} parent=47 // pred_check_branch
          %338 = sbr.rel (%p336) target = $region52
        $region51: #{tpu_custom_call.1} parent=47 // pred_region
          %339 = dma.done %s332, 2048
        $region52: #{tpu_custom_call.1} parent=47 // pred_fallthru
          _
        %s340 = sand.u32 %s30, 1
        %s341 = scalar_lea.sflag [#allocation7], %s340
        %s342 = sand.u32 %s85, 1
        %s343 = smul.addr %s342, 128
        %s344 = scalar_lea.vmem [#allocation6], %s343
        // Predicated region
        $region53: #{tpu_custom_call.1} parent=47 // pred_check
          %p345 = pneg %p98
        $region54: #{tpu_custom_call.1} parent=47 // pred_check_branch
          %347 = sbr.rel (%p345) target = $region56
        $region55: #{tpu_custom_call.1} parent=47 // pred_region
          %348 = dma.done %s341, 2048
        $region56: #{tpu_custom_call.1} parent=47 // pred_fallthru
          _
        // Predicated region
        $region57: #{tpu_custom_call.1} parent=47 // pred_check
          %p349 = pneg %p119
        $region58: #{tpu_custom_call.1} parent=47 // pred_check_branch
          %351 = sbr.rel (%p349) target = $region60
        $region59: #{tpu_custom_call.1} parent=47 // pred_region
          %352 = dma.done [#allocation7], 1024
        $region60: #{tpu_custom_call.1} parent=47 // pred_fallthru
          _
        // Predicated region
        $region61: #{tpu_custom_call.1} parent=47 // pred_check
          %p353 = pneg %p140
        $region62: #{tpu_custom_call.1} parent=47 // pred_check_branch
          %355 = sbr.rel (%p353) target = $region64
        $region63: #{tpu_custom_call.1} parent=47 // pred_region
          %356 = dma.done [#allocation10], 1024
        $region64: #{tpu_custom_call.1} parent=47 // pred_fallthru
          _
        // Predicated region
        $region65: #{tpu_custom_call.1} parent=47 // pred_check
          %p357 = pneg %p161
        $region66: #{tpu_custom_call.1} parent=47 // pred_check_branch
          %359 = sbr.rel (%p357) target = $region68
        $region67: #{tpu_custom_call.1} parent=47 // pred_region
          %360 = dma.done [#allocation10], 1024
        $region68: #{tpu_custom_call.1} parent=47 // pred_fallthru
          _
        // Predicated region
        $region69: #{tpu_custom_call.1} parent=47 // pred_check
          %p361 = pneg %p182
        $region70: #{tpu_custom_call.1} parent=47 // pred_check_branch
          %363 = sbr.rel (%p361) target = $region72
        $region71: #{tpu_custom_call.1} parent=47 // pred_region
          %364 = dma.done [#allocation13], 1024
        $region72: #{tpu_custom_call.1} parent=47 // pred_fallthru
          _
        %p365 = pneg %p46
        %p366 = pneg %p43
        %s367 = sand.u32 %s59, 1
        %s368 = scalar_lea.sflag [#allocation4], %s367
        %s369 = sand.u32 %s59, 1
        %s370 = smul.addr %s369, 128
        %s371 = scalar_lea.vmem [#allocation3], %s370
        %p372 = pneg %p72
        %p373 = pneg %p69
        %s374 = sand.u32 %s30, 1
        %s375 = scalar_lea.sflag [#allocation7], %s374
        %s376 = sand.u32 %s85, 1
        %s377 = smul.addr %s376, 128
        %s378 = scalar_lea.vmem [#allocation6], %s377
        %p379 = pneg %p98
        %p380 = pneg %p95
        %p381 = pneg %p119
        %p382 = pneg %p116
        %p383 = pneg %p140
        %p384 = pneg %p137
        %p385 = pneg %p161
        %p386 = pneg %p158
        %p387 = pneg %p182
        %p388 = pneg %p179
        %p389 = pneg %p208
        %p390 = pneg %p205
        %s391 = sand.u32 %s195, 1
        %s392 = scalar_lea.sflag [#allocation5], %s391
        %s393 = sand.u32 %s195, 1
        %s394 = smul.addr %s393, 128
        %s395 = scalar_lea.vmem [#allocation14], %s394
        %s396 = smul.u32 16, %s30
        %s397 = smul.u32 16, %s30
        %s398 = smul.u32 16, %s30
        %s400 = sld [smem:[#allocation2]]
        %v401 = vld [vmem:[%s344] sm:$0xff]
        %v402 = vld [vmem:[%s344 + $0x8] sm:$0xff]
        %v403 = vld [vmem:[%s344 + $0x10] sm:$0xff]
        %v404 = vld [vmem:[%s344 + $0x18] sm:$0xff]
        %v405 = vld [vmem:[%s344 + $0x20] sm:$0xff]
        %v406 = vld [vmem:[%s344 + $0x28] sm:$0xff]
        %v407 = vld [vmem:[%s344 + $0x30] sm:$0xff]
        %v408 = vld [vmem:[%s344 + $0x38] sm:$0xff]
        %v409 = vld [vmem:[%s344 + $0x40] sm:$0xff]
        %v410 = vld [vmem:[%s344 + $0x48] sm:$0xff]
        %v411 = vld [vmem:[%s344 + $0x50] sm:$0xff]
        %v412 = vld [vmem:[%s344 + $0x58] sm:$0xff]
        %v413 = vld [vmem:[%s344 + $0x60] sm:$0xff]
        %v414 = vld [vmem:[%s344 + $0x68] sm:$0xff]
        %v415 = vld [vmem:[%s344 + $0x70] sm:$0xff]
        %v416 = vld [vmem:[%s344 + $0x78] sm:$0xff]
        %v417 = vpack.c.bf16 %v402, %v401
        %v418 = vpack.c.bf16 %v404, %v403
        %v419 = vpack.c.bf16 %v406, %v405
        %v420 = vpack.c.bf16 %v408, %v407
        %v421 = vpack.c.bf16 %v410, %v409
        %v422 = vpack.c.bf16 %v412, %v411
        %v423 = vpack.c.bf16 %v414, %v413
        %v424 = vpack.c.bf16 %v416, %v415
        %v425 = vld [vmem:[#allocation9] sm:$0xf]
        %v426 = vld [vmem:[#allocation9 + $0x4] sm:$0xf]
        %v427 = vld [vmem:[#allocation9 + $0x8] sm:$0xf]
        %v428 = vld [vmem:[#allocation9 + $0xc] sm:$0xf]
        %v429 = vld [vmem:[#allocation9 + $0x10] sm:$0xf]
        %v430 = vld [vmem:[#allocation9 + $0x14] sm:$0xf]
        %v431 = vld [vmem:[#allocation9 + $0x18] sm:$0xf]
        %v432 = vld [vmem:[#allocation9 + $0x1c] sm:$0xf]
        %v433 = vld [vmem:[#allocation9 + $0x20] sm:$0xf]
        %v434 = vld [vmem:[#allocation9 + $0x24] sm:$0xf]
        %v435 = vld [vmem:[#allocation9 + $0x28] sm:$0xf]
        %v436 = vld [vmem:[#allocation9 + $0x2c] sm:$0xf]
        %v437 = vld [vmem:[#allocation9 + $0x30] sm:$0xf]
        %v438 = vld [vmem:[#allocation9 + $0x34] sm:$0xf]
        %v439 = vld [vmem:[#allocation9 + $0x38] sm:$0xf]
        %v440 = vld [vmem:[#allocation9 + $0x3c] sm:$0xf]
        %v457 = vunpack.c.l.b16 %v425
        %v458 = vunpack.c.l.b16 %v426
        %v459 = vunpack.c.l.b16 %v427
        %v460 = vunpack.c.l.b16 %v428
        %v461 = vunpack.c.l.b16 %v429
        %v462 = vunpack.c.l.b16 %v430
        %v463 = vunpack.c.l.b16 %v431
        %v464 = vunpack.c.l.b16 %v432
        %v465 = vunpack.c.l.b16 %v433
        %v466 = vunpack.c.l.b16 %v434
        %v467 = vunpack.c.l.b16 %v435
        %v468 = vunpack.c.l.b16 %v436
        %v469 = vunpack.c.l.b16 %v437
        %v470 = vunpack.c.l.b16 %v438
        %v471 = vunpack.c.l.b16 %v439
        %v472 = vunpack.c.l.b16 %v440
        %v473 = vpack.c.b16 %v458, %v457
        %v474 = vpack.c.b16 %v460, %v459
        %v475 = vpack.c.b16 %v462, %v461
        %v476 = vpack.c.b16 %v464, %v463
        %v477 = vpack.c.b16 %v466, %v465
        %v478 = vpack.c.b16 %v468, %v467
        %v479 = vpack.c.b16 %v470, %v469
        %v480 = vpack.c.b16 %v472, %v471
        %489 = vmatprep.subr.bf16.mxu0 0
        %490 = vmatpush1.bf16.msra.mxu0 %v473
        %491 = vmatprep.subr.bf16.mxu0 0
        %492 = vmatpush1.bf16.msra.mxu0 %v474
        %493 = vmatprep.subr.bf16.mxu0 0
        %494 = vmatpush1.bf16.msra.mxu0 %v475
        %495 = vmatprep.subr.bf16.mxu0 0
        %496 = vmatpush1.bf16.msra.mxu0 %v476
        %497 = vmatprep.subr.bf16.mxu0 0
        %498 = vmatpush1.bf16.msra.mxu0 %v477
        %499 = vmatprep.subr.bf16.mxu0 0
        %500 = vmatpush1.bf16.msra.mxu0 %v478
        %501 = vmatprep.subr.bf16.mxu0 0
        %502 = vmatpush1.bf16.msra.mxu0 %v479
        %503 = vmatprep.subr.bf16.mxu0 0
        %504 = vmatpush1.bf16.msra.mxu0 %v480
        %505 = vmatprep.subr.bf16.mxu0 0
        %506 = vmatpush1.bf16.msra.mxu0 0
        %507 = vmatprep.subr.bf16.mxu0 0
        %508 = vmatpush1.bf16.msra.mxu0 0
        %509 = vmatprep.subr.bf16.mxu0 0
        %510 = vmatpush1.bf16.msra.mxu0 0
        %511 = vmatprep.subr.bf16.mxu0 0
        %512 = vmatpush1.bf16.msra.mxu0 0
        %513 = vmatprep.subr.bf16.mxu0 0
        %514 = vmatpush1.bf16.msra.mxu0 0
        %515 = vmatprep.subr.bf16.mxu0 0
        %516 = vmatpush1.bf16.msra.mxu0 0
        %517 = vmatprep.subr.bf16.mxu0 0
        %518 = vmatpush1.bf16.msra.mxu0 0
        %519 = vmatprep.subr.bf16.mxu0 0
        %520 = vmatpush1.bf16.msra.mxu0 0
        %521 = vmatprep.mubr.bf16.mxu0 0
        %522 = vmatmul.mubr.bf16.gmra.mrb[0].mxu0 %v417
        %v523 = vpop.f32.mrb[0].mxu0
        %v524 = vadd.f32 0.0, %v523
        %v525 = vpop.f32.mrb[0].mxu0
        %v526 = vpop.f32.mrb[0].mxu0
        %v527 = vadd.f32 0.0, %v526
        %v528 = vpop.f32.mrb[0].mxu0
        %529 = vmatprep.mubr.bf16.mxu0 0
        %530 = vmatmul.mubr.bf16.gmra.mrb[0].mxu0 %v418
        %v531 = vpop.f32.mrb[0].mxu0
        %v532 = vadd.f32 0.0, %v531
        %v533 = vpop.f32.mrb[0].mxu0
        %v534 = vpop.f32.mrb[0].mxu0
        %v535 = vadd.f32 0.0, %v534
        %v536 = vpop.f32.mrb[0].mxu0
        %537 = vmatprep.mubr.bf16.mxu0 0
        %538 = vmatmul.mubr.bf16.gmra.mrb[0].mxu0 %v419
        %v539 = vpop.f32.mrb[0].mxu0
        %v540 = vadd.f32 0.0, %v539
        %v541 = vpop.f32.mrb[0].mxu0
        %v542 = vpop.f32.mrb[0].mxu0
        %v543 = vadd.f32 0.0, %v542
        %v544 = vpop.f32.mrb[0].mxu0
        %545 = vmatprep.mubr.bf16.mxu0 0
        %546 = vmatmul.mubr.bf16.gmra.mrb[0].mxu0 %v420
        %v547 = vpop.f32.mrb[0].mxu0
        %v548 = vadd.f32 0.0, %v547
        %v549 = vpop.f32.mrb[0].mxu0
        %v550 = vpop.f32.mrb[0].mxu0
        %v551 = vadd.f32 0.0, %v550
        %v552 = vpop.f32.mrb[0].mxu0
        %553 = vmatprep.mubr.bf16.mxu0 0
        %554 = vmatmul.mubr.bf16.gmra.mrb[0].mxu0 %v421
        %v555 = vpop.f32.mrb[0].mxu0
        %v556 = vadd.f32 0.0, %v555
        %v557 = vpop.f32.mrb[0].mxu0
        %v558 = vpop.f32.mrb[0].mxu0
        %v559 = vadd.f32 0.0, %v558
        %v560 = vpop.f32.mrb[0].mxu0
        %561 = vmatprep.mubr.bf16.mxu0 0
        %562 = vmatmul.mubr.bf16.gmra.mrb[0].mxu0 %v422
        %v563 = vpop.f32.mrb[0].mxu0
        %v564 = vadd.f32 0.0, %v563
        %v565 = vpop.f32.mrb[0].mxu0
        %v566 = vpop.f32.mrb[0].mxu0
        %v567 = vadd.f32 0.0, %v566
        %v568 = vpop.f32.mrb[0].mxu0
        %569 = vmatprep.mubr.bf16.mxu0 0
        %570 = vmatmul.mubr.bf16.gmra.mrb[0].mxu0 %v423
        %v571 = vpop.f32.mrb[0].mxu0
        %v572 = vadd.f32 0.0, %v571
        %v573 = vpop.f32.mrb[0].mxu0
        %v574 = vpop.f32.mrb[0].mxu0
        %v575 = vadd.f32 0.0, %v574
        %v576 = vpop.f32.mrb[0].mxu0
        %577 = vmatprep.mubr.bf16.mxu0 0
        %578 = vmatmul.mubr.bf16.gmra.mrb[0].mxu0 %v424
        %v579 = vpop.f32.mrb[0].mxu0
        %v580 = vadd.f32 0.0, %v579
        %v581 = vpop.f32.mrb[0].mxu0
        %v582 = vpop.f32.mrb[0].mxu0
        %v583 = vadd.f32 0.0, %v582
        %v584 = vpop.f32.mrb[0].mxu0
        %585 = vdwg.mxu0
        %v586 = vld [vmem:[%s335] sm:$0xff]
        %v587 = vld [vmem:[%s335 + $0x8] sm:$0xff]
        %v588 = vld [vmem:[%s335 + $0x10] sm:$0xff]
        %v589 = vld [vmem:[%s335 + $0x18] sm:$0xff]
        %v590 = vld [vmem:[%s335 + $0x20] sm:$0xff]
        %v591 = vld [vmem:[%s335 + $0x28] sm:$0xff]
        %v592 = vld [vmem:[%s335 + $0x30] sm:$0xff]
        %v593 = vld [vmem:[%s335 + $0x38] sm:$0xff]
        %v594 = vld [vmem:[%s335 + $0x40] sm:$0xff]
        %v595 = vld [vmem:[%s335 + $0x48] sm:$0xff]
        %v596 = vld [vmem:[%s335 + $0x50] sm:$0xff]
        %v597 = vld [vmem:[%s335 + $0x58] sm:$0xff]
        %v598 = vld [vmem:[%s335 + $0x60] sm:$0xff]
        %v599 = vld [vmem:[%s335 + $0x68] sm:$0xff]
        %v600 = vld [vmem:[%s335 + $0x70] sm:$0xff]
        %v601 = vld [vmem:[%s335 + $0x78] sm:$0xff]
        %v602 = vpack.c.bf16 %v587, %v586
        %v603 = vpack.c.bf16 %v589, %v588
        %v604 = vpack.c.bf16 %v591, %v590
        %v605 = vpack.c.bf16 %v593, %v592
        %v606 = vpack.c.bf16 %v595, %v594
        %v607 = vpack.c.bf16 %v597, %v596
        %v608 = vpack.c.bf16 %v599, %v598
        %v609 = vpack.c.bf16 %v601, %v600
        %v610 = vld [vmem:[#allocation8] sm:$0xf]
        %v611 = vld [vmem:[#allocation8 + $0x4] sm:$0xf]
        %v612 = vld [vmem:[#allocation8 + $0x8] sm:$0xf]
        %v613 = vld [vmem:[#allocation8 + $0xc] sm:$0xf]
        %v614 = vld [vmem:[#allocation8 + $0x10] sm:$0xf]
        %v615 = vld [vmem:[#allocation8 + $0x14] sm:$0xf]
        %v616 = vld [vmem:[#allocation8 + $0x18] sm:$0xf]
        %v617 = vld [vmem:[#allocation8 + $0x1c] sm:$0xf]
        %v618 = vld [vmem:[#allocation8 + $0x20] sm:$0xf]
        %v619 = vld [vmem:[#allocation8 + $0x24] sm:$0xf]
        %v620 = vld [vmem:[#allocation8 + $0x28] sm:$0xf]
        %v621 = vld [vmem:[#allocation8 + $0x2c] sm:$0xf]
        %v622 = vld [vmem:[#allocation8 + $0x30] sm:$0xf]
        %v623 = vld [vmem:[#allocation8 + $0x34] sm:$0xf]
        %v624 = vld [vmem:[#allocation8 + $0x38] sm:$0xf]
        %v625 = vld [vmem:[#allocation8 + $0x3c] sm:$0xf]
        %v642 = vunpack.c.l.b16 %v610
        %v643 = vunpack.c.l.b16 %v611
        %v644 = vunpack.c.l.b16 %v612
        %v645 = vunpack.c.l.b16 %v613
        %v646 = vunpack.c.l.b16 %v614
        %v647 = vunpack.c.l.b16 %v615
        %v648 = vunpack.c.l.b16 %v616
        %v649 = vunpack.c.l.b16 %v617
        %v650 = vunpack.c.l.b16 %v618
        %v651 = vunpack.c.l.b16 %v619
        %v652 = vunpack.c.l.b16 %v620
        %v653 = vunpack.c.l.b16 %v621
        %v654 = vunpack.c.l.b16 %v622
        %v655 = vunpack.c.l.b16 %v623
        %v656 = vunpack.c.l.b16 %v624
        %v657 = vunpack.c.l.b16 %v625
        %v658 = vpack.c.b16 %v643, %v642
        %v659 = vpack.c.b16 %v645, %v644
        %v660 = vpack.c.b16 %v647, %v646
        %v661 = vpack.c.b16 %v649, %v648
        %v662 = vpack.c.b16 %v651, %v650
        %v663 = vpack.c.b16 %v653, %v652
        %v664 = vpack.c.b16 %v655, %v654
        %v665 = vpack.c.b16 %v657, %v656
        %674 = vmatprep.subr.bf16.mxu0 0
        %675 = vmatpush1.bf16.msra.mxu0 %v658
        %676 = vmatprep.subr.bf16.mxu0 0
        %677 = vmatpush1.bf16.msra.mxu0 %v659
        %678 = vmatprep.subr.bf16.mxu0 0
        %679 = vmatpush1.bf16.msra.mxu0 %v660
        %680 = vmatprep.subr.bf16.mxu0 0
        %681 = vmatpush1.bf16.msra.mxu0 %v661
        %682 = vmatprep.subr.bf16.mxu0 0
        %683 = vmatpush1.bf16.msra.mxu0 %v662
        %684 = vmatprep.subr.bf16.mxu0 0
        %685 = vmatpush1.bf16.msra.mxu0 %v663
        %686 = vmatprep.subr.bf16.mxu0 0
        %687 = vmatpush1.bf16.msra.mxu0 %v664
        %688 = vmatprep.subr.bf16.mxu0 0
        %689 = vmatpush1.bf16.msra.mxu0 %v665
        %690 = vmatprep.subr.bf16.mxu0 0
        %691 = vmatpush1.bf16.msra.mxu0 0
        %692 = vmatprep.subr.bf16.mxu0 0
        %693 = vmatpush1.bf16.msra.mxu0 0
        %694 = vmatprep.subr.bf16.mxu0 0
        %695 = vmatpush1.bf16.msra.mxu0 0
        %696 = vmatprep.subr.bf16.mxu0 0
        %697 = vmatpush1.bf16.msra.mxu0 0
        %698 = vmatprep.subr.bf16.mxu0 0
        %699 = vmatpush1.bf16.msra.mxu0 0
        %700 = vmatprep.subr.bf16.mxu0 0
        %701 = vmatpush1.bf16.msra.mxu0 0
        %702 = vmatprep.subr.bf16.mxu0 0
        %703 = vmatpush1.bf16.msra.mxu0 0
        %704 = vmatprep.subr.bf16.mxu0 0
        %705 = vmatpush1.bf16.msra.mxu0 0
        %706 = vmatprep.mubr.bf16.mxu0 0
        %707 = vmatmul.mubr.bf16.gmra.mrb[0].mxu0 %v602
        %v708 = vpop.f32.mrb[0].mxu0
        %v709 = vadd.f32 %v524, %v708
        %v710 = vpop.f32.mrb[0].mxu0
        %v711 = vpop.f32.mrb[0].mxu0
        %v712 = vadd.f32 %v527, %v711
        %v713 = vpop.f32.mrb[0].mxu0
        %714 = vmatprep.mubr.bf16.mxu0 0
        %715 = vmatmul.mubr.bf16.gmra.mrb[0].mxu0 %v603
        %v716 = vpop.f32.mrb[0].mxu0
        %v717 = vadd.f32 %v532, %v716
        %v718 = vpop.f32.mrb[0].mxu0
        %v719 = vpop.f32.mrb[0].mxu0
        %v720 = vadd.f32 %v535, %v719
        %v721 = vpop.f32.mrb[0].mxu0
        %722 = vmatprep.mubr.bf16.mxu0 0
        %723 = vmatmul.mubr.bf16.gmra.mrb[0].mxu0 %v604
        %v724 = vpop.f32.mrb[0].mxu0
        %v725 = vadd.f32 %v540, %v724
        %v726 = vpop.f32.mrb[0].mxu0
        %v727 = vpop.f32.mrb[0].mxu0
        %v728 = vadd.f32 %v543, %v727
        %v729 = vpop.f32.mrb[0].mxu0
        %730 = vmatprep.mubr.bf16.mxu0 0
        %731 = vmatmul.mubr.bf16.gmra.mrb[0].mxu0 %v605
        %v732 = vpop.f32.mrb[0].mxu0
        %v733 = vadd.f32 %v548, %v732
        %v734 = vpop.f32.mrb[0].mxu0
        %v735 = vpop.f32.mrb[0].mxu0
        %v736 = vadd.f32 %v551, %v735
        %v737 = vpop.f32.mrb[0].mxu0
        %738 = vmatprep.mubr.bf16.mxu0 0
        %739 = vmatmul.mubr.bf16.gmra.mrb[0].mxu0 %v606
        %v740 = vpop.f32.mrb[0].mxu0
        %v741 = vadd.f32 %v556, %v740
        %v742 = vpop.f32.mrb[0].mxu0
        %v743 = vpop.f32.mrb[0].mxu0
        %v744 = vadd.f32 %v559, %v743
        %v745 = vpop.f32.mrb[0].mxu0
        %746 = vmatprep.mubr.bf16.mxu0 0
        %747 = vmatmul.mubr.bf16.gmra.mrb[0].mxu0 %v607
        %v748 = vpop.f32.mrb[0].mxu0
        %v749 = vadd.f32 %v564, %v748
        %v750 = vpop.f32.mrb[0].mxu0
        %v751 = vpop.f32.mrb[0].mxu0
        %v752 = vadd.f32 %v567, %v751
        %v753 = vpop.f32.mrb[0].mxu0
        %754 = vmatprep.mubr.bf16.mxu0 0
        %755 = vmatmul.mubr.bf16.gmra.mrb[0].mxu0 %v608
        %v756 = vpop.f32.mrb[0].mxu0
        %v757 = vadd.f32 %v572, %v756
        %v758 = vpop.f32.mrb[0].mxu0
        %v759 = vpop.f32.mrb[0].mxu0
        %v760 = vadd.f32 %v575, %v759
        %v761 = vpop.f32.mrb[0].mxu0
        %762 = vmatprep.mubr.bf16.mxu0 0
        %763 = vmatmul.mubr.bf16.gmra.mrb[0].mxu0 %v609
        %v764 = vpop.f32.mrb[0].mxu0
        %v765 = vadd.f32 %v580, %v764
        %v766 = vpop.f32.mrb[0].mxu0
        %v767 = vpop.f32.mrb[0].mxu0
        %v768 = vadd.f32 %v583, %v767
        %v769 = vpop.f32.mrb[0].mxu0
        %770 = vdwg.mxu0
        %v771 = vtanh.pop %v709
        %v772 = vtanh.pop %v712
        %v773 = vtanh.pop %v717
        %v774 = vtanh.pop %v720
        %v775 = vtanh.pop %v725
        %v776 = vtanh.pop %v728
        %v777 = vtanh.pop %v733
        %v778 = vtanh.pop %v736
        %v779 = vtanh.pop %v741
        %v780 = vtanh.pop %v744
        %v781 = vtanh.pop %v749
        %v782 = vtanh.pop %v752
        %v783 = vtanh.pop %v757
        %v784 = vtanh.pop %v760
        %v785 = vtanh.pop %v765
        %v786 = vtanh.pop %v768
        %v787 = vand.u32 2147483647, %v771
        %v788 = vand.u32 2147483647, %v772
        %v789 = vand.u32 2147483647, %v773
        %v790 = vand.u32 2147483647, %v774
        %v791 = vand.u32 2147483647, %v775
        %v792 = vand.u32 2147483647, %v776
        %v793 = vand.u32 2147483647, %v777
        %v794 = vand.u32 2147483647, %v778
        %v795 = vand.u32 2147483647, %v779
        %v796 = vand.u32 2147483647, %v780
        %v797 = vand.u32 2147483647, %v781
        %v798 = vand.u32 2147483647, %v782
        %v799 = vand.u32 2147483647, %v783
        %v800 = vand.u32 2147483647, %v784
        %v801 = vand.u32 2147483647, %v785
        %v802 = vand.u32 2147483647, %v786
        %v803 = vmax.f32 %v787, 1e-12
        %v804 = vmax.f32 %v788, 1e-12
        %v805 = vmax.f32 %v789, 1e-12
        %v806 = vmax.f32 %v790, 1e-12
        %v807 = vmax.f32 %v791, 1e-12
        %v808 = vmax.f32 %v792, 1e-12
        %v809 = vmax.f32 %v793, 1e-12
        %v810 = vmax.f32 %v794, 1e-12
        %v811 = vmax.f32 %v795, 1e-12
        %v812 = vmax.f32 %v796, 1e-12
        %v813 = vmax.f32 %v797, 1e-12
        %v814 = vmax.f32 %v798, 1e-12
        %v815 = vmax.f32 %v799, 1e-12
        %v816 = vmax.f32 %v800, 1e-12
        %v817 = vmax.f32 %v801, 1e-12
        %v818 = vmax.f32 %v802, 1e-12
        %v819 = vlog2.pop %v803
        %v820 = vmul.f32 %v819, 0.6931472
        %v821 = vlog2.pop %v804
        %v822 = vmul.f32 %v821, 0.6931472
        %v823 = vlog2.pop %v805
        %v824 = vmul.f32 %v823, 0.6931472
        %v825 = vlog2.pop %v806
        %v826 = vmul.f32 %v825, 0.6931472
        %v827 = vlog2.pop %v807
        %v828 = vmul.f32 %v827, 0.6931472
        %v829 = vlog2.pop %v808
        %v830 = vmul.f32 %v829, 0.6931472
        %v831 = vlog2.pop %v809
        %v832 = vmul.f32 %v831, 0.6931472
        %v833 = vlog2.pop %v810
        %v834 = vmul.f32 %v833, 0.6931472
        %v835 = vlog2.pop %v811
        %v836 = vmul.f32 %v835, 0.6931472
        %v837 = vlog2.pop %v812
        %v838 = vmul.f32 %v837, 0.6931472
        %v839 = vlog2.pop %v813
        %v840 = vmul.f32 %v839, 0.6931472
        %v841 = vlog2.pop %v814
        %v842 = vmul.f32 %v841, 0.6931472
        %v843 = vlog2.pop %v815
        %v844 = vmul.f32 %v843, 0.6931472
        %v845 = vlog2.pop %v816
        %v846 = vmul.f32 %v845, 0.6931472
        %v847 = vlog2.pop %v817
        %v848 = vmul.f32 %v847, 0.6931472
        %v849 = vlog2.pop %v818
        %v850 = vmul.f32 %v849, 0.6931472
        %vm851 = vcmp.lt.f32.partialorder %v771, 0.0
        %vm852 = vcmp.lt.f32.partialorder %v772, 0.0
        %vm853 = vcmp.lt.f32.partialorder %v773, 0.0
        %vm854 = vcmp.lt.f32.partialorder %v774, 0.0
        %vm855 = vcmp.lt.f32.partialorder %v775, 0.0
        %vm856 = vcmp.lt.f32.partialorder %v776, 0.0
        %vm857 = vcmp.lt.f32.partialorder %v777, 0.0
        %vm858 = vcmp.lt.f32.partialorder %v778, 0.0
        %vm859 = vcmp.lt.f32.partialorder %v779, 0.0
        %vm860 = vcmp.lt.f32.partialorder %v780, 0.0
        %vm861 = vcmp.lt.f32.partialorder %v781, 0.0
        %vm862 = vcmp.lt.f32.partialorder %v782, 0.0
        %vm863 = vcmp.lt.f32.partialorder %v783, 0.0
        %vm864 = vcmp.lt.f32.partialorder %v784, 0.0
        %vm865 = vcmp.lt.f32.partialorder %v785, 0.0
        %vm866 = vcmp.lt.f32.partialorder %v786, 0.0
        %v867 = vsel %vm851, 1, 0
        %v868 = vsel %vm852, 1, 0
        %v869 = vsel %vm853, 1, 0
        %v870 = vsel %vm854, 1, 0
        %v871 = vsel %vm855, 1, 0
        %v872 = vsel %vm856, 1, 0
        %v873 = vsel %vm857, 1, 0
        %v874 = vsel %vm858, 1, 0
        %v875 = vsel %vm859, 1, 0
        %v876 = vsel %vm860, 1, 0
        %v877 = vsel %vm861, 1, 0
        %v878 = vsel %vm862, 1, 0
        %v879 = vsel %vm863, 1, 0
        %v880 = vsel %vm864, 1, 0
        %v881 = vsel %vm865, 1, 0
        %v882 = vsel %vm866, 1, 0
        %v883 = vcvt.s32.f32 %v867
        %v884 = vcvt.s32.f32 %v868
        %v885 = vcvt.s32.f32 %v869
        %v886 = vcvt.s32.f32 %v870
        %v887 = vcvt.s32.f32 %v871
        %v888 = vcvt.s32.f32 %v872
        %v889 = vcvt.s32.f32 %v873
        %v890 = vcvt.s32.f32 %v874
        %v891 = vcvt.s32.f32 %v875
        %v892 = vcvt.s32.f32 %v876
        %v893 = vcvt.s32.f32 %v877
        %v894 = vcvt.s32.f32 %v878
        %v895 = vcvt.s32.f32 %v879
        %v896 = vcvt.s32.f32 %v880
        %v897 = vcvt.s32.f32 %v881
        %v898 = vcvt.s32.f32 %v882
        %v899 = vpack.c.bf16 %v884, %v883
        %v900 = vpack.c.bf16 %v886, %v885
        %v901 = vpack.c.bf16 %v888, %v887
        %v902 = vpack.c.bf16 %v890, %v889
        %v903 = vpack.c.bf16 %v892, %v891
        %v904 = vpack.c.bf16 %v894, %v893
        %v905 = vpack.c.bf16 %v896, %v895
        %v906 = vpack.c.bf16 %v898, %v897
        %v907 = vpack.c.bf16 %v822, %v820
        %v908 = vpack.c.bf16 %v826, %v824
        %v909 = vpack.c.bf16 %v830, %v828
        %v910 = vpack.c.bf16 %v834, %v832
        %v911 = vpack.c.bf16 %v838, %v836
        %v912 = vpack.c.bf16 %v842, %v840
        %v913 = vpack.c.bf16 %v846, %v844
        %v914 = vpack.c.bf16 %v850, %v848
        %v915 = vld [vmem:[#allocation11] sm:$0xf]
        %v916 = vld [vmem:[#allocation11 + $0x4] sm:$0xf]
        %v917 = vld [vmem:[#allocation11 + $0x8] sm:$0xf]
        %v918 = vld [vmem:[#allocation11 + $0xc] sm:$0xf]
        %v919 = vld [vmem:[#allocation11 + $0x10] sm:$0xf]
        %v920 = vld [vmem:[#allocation11 + $0x14] sm:$0xf]
        %v921 = vld [vmem:[#allocation11 + $0x18] sm:$0xf]
        %v922 = vld [vmem:[#allocation11 + $0x1c] sm:$0xf]
        %v923 = vld [vmem:[#allocation11 + $0x20] sm:$0xf]
        %v924 = vld [vmem:[#allocation11 + $0x24] sm:$0xf]
        %v925 = vld [vmem:[#allocation11 + $0x28] sm:$0xf]
        %v926 = vld [vmem:[#allocation11 + $0x2c] sm:$0xf]
        %v927 = vld [vmem:[#allocation11 + $0x30] sm:$0xf]
        %v928 = vld [vmem:[#allocation11 + $0x34] sm:$0xf]
        %v929 = vld [vmem:[#allocation11 + $0x38] sm:$0xf]
        %v930 = vld [vmem:[#allocation11 + $0x3c] sm:$0xf]
        %v947 = vunpack.c.l.b16 %v915
        %v948 = vunpack.c.l.b16 %v916
        %v949 = vunpack.c.l.b16 %v917
        %v950 = vunpack.c.l.b16 %v918
        %v951 = vunpack.c.l.b16 %v919
        %v952 = vunpack.c.l.b16 %v920
        %v953 = vunpack.c.l.b16 %v921
        %v954 = vunpack.c.l.b16 %v922
        %v955 = vunpack.c.l.b16 %v923
        %v956 = vunpack.c.l.b16 %v924
        %v957 = vunpack.c.l.b16 %v925
        %v958 = vunpack.c.l.b16 %v926
        %v959 = vunpack.c.l.b16 %v927
        %v960 = vunpack.c.l.b16 %v928
        %v961 = vunpack.c.l.b16 %v929
        %v962 = vunpack.c.l.b16 %v930
        %v963 = vpack.c.b16 %v948, %v947
        %v964 = vpack.c.b16 %v950, %v949
        %v965 = vpack.c.b16 %v952, %v951
        %v966 = vpack.c.b16 %v954, %v953
        %v967 = vpack.c.b16 %v956, %v955
        %v968 = vpack.c.b16 %v958, %v957
        %v969 = vpack.c.b16 %v960, %v959
        %v970 = vpack.c.b16 %v962, %v961
        %979 = vmatprep.subr.bf16.mxu0 0
        %980 = vmatpush1.bf16.msra.mxu0 %v963
        %981 = vmatprep.subr.bf16.mxu0 0
        %982 = vmatpush1.bf16.msra.mxu0 %v964
        %983 = vmatprep.subr.bf16.mxu0 0
        %984 = vmatpush1.bf16.msra.mxu0 %v965
        %985 = vmatprep.subr.bf16.mxu0 0
        %986 = vmatpush1.bf16.msra.mxu0 %v966
        %987 = vmatprep.subr.bf16.mxu0 0
        %988 = vmatpush1.bf16.msra.mxu0 %v967
        %989 = vmatprep.subr.bf16.mxu0 0
        %990 = vmatpush1.bf16.msra.mxu0 %v968
        %991 = vmatprep.subr.bf16.mxu0 0
        %992 = vmatpush1.bf16.msra.mxu0 %v969
        %993 = vmatprep.subr.bf16.mxu0 0
        %994 = vmatpush1.bf16.msra.mxu0 %v970
        %995 = vmatprep.subr.bf16.mxu0 0
        %996 = vmatpush1.bf16.msra.mxu0 0
        %997 = vmatprep.subr.bf16.mxu0 0
        %998 = vmatpush1.bf16.msra.mxu0 0
        %999 = vmatprep.subr.bf16.mxu0 0
        %1000 = vmatpush1.bf16.msra.mxu0 0
        %1001 = vmatprep.subr.bf16.mxu0 0
        %1002 = vmatpush1.bf16.msra.mxu0 0
        %1003 = vmatprep.subr.bf16.mxu0 0
        %1004 = vmatpush1.bf16.msra.mxu0 0
        %1005 = vmatprep.subr.bf16.mxu0 0
        %1006 = vmatpush1.bf16.msra.mxu0 0
        %1007 = vmatprep.subr.bf16.mxu0 0
        %1008 = vmatpush1.bf16.msra.mxu0 0
        %1009 = vmatprep.subr.bf16.mxu0 0
        %1010 = vmatpush1.bf16.msra.mxu0 0
        %1011 = vmatprep.mubr.bf16.mxu0 0
        %1012 = vmatmul.mubr.bf16.gmra.mrb[0].mxu0 %v907
        %v1013 = vpop.f32.mrb[0].mxu0
        %v1014 = vadd.f32 0.0, %v1013
        %v1015 = vpop.f32.mrb[0].mxu0
        %v1016 = vpop.f32.mrb[0].mxu0
        %v1017 = vadd.f32 0.0, %v1016
        %v1018 = vpop.f32.mrb[0].mxu0
        %1019 = vmatprep.mubr.bf16.mxu0 0
        %1020 = vmatmul.mubr.bf16.gmra.mrb[0].mxu0 %v908
        %v1021 = vpop.f32.mrb[0].mxu0
        %v1022 = vadd.f32 0.0, %v1021
        %v1023 = vpop.f32.mrb[0].mxu0
        %v1024 = vpop.f32.mrb[0].mxu0
        %v1025 = vadd.f32 0.0, %v1024
        %v1026 = vpop.f32.mrb[0].mxu0
        %1027 = vmatprep.mubr.bf16.mxu0 0
        %1028 = vmatmul.mubr.bf16.gmra.mrb[0].mxu0 %v909
        %v1029 = vpop.f32.mrb[0].mxu0
        %v1030 = vadd.f32 0.0, %v1029
        %v1031 = vpop.f32.mrb[0].mxu0
        %v1032 = vpop.f32.mrb[0].mxu0
        %v1033 = vadd.f32 0.0, %v1032
        %v1034 = vpop.f32.mrb[0].mxu0
        %1035 = vmatprep.mubr.bf16.mxu0 0
        %1036 = vmatmul.mubr.bf16.gmra.mrb[0].mxu0 %v910
        %v1037 = vpop.f32.mrb[0].mxu0
        %v1038 = vadd.f32 0.0, %v1037
        %v1039 = vpop.f32.mrb[0].mxu0
        %v1040 = vpop.f32.mrb[0].mxu0
        %v1041 = vadd.f32 0.0, %v1040
        %v1042 = vpop.f32.mrb[0].mxu0
        %1043 = vmatprep.mubr.bf16.mxu0 0
        %1044 = vmatmul.mubr.bf16.gmra.mrb[0].mxu0 %v911
        %v1045 = vpop.f32.mrb[0].mxu0
        %v1046 = vadd.f32 0.0, %v1045
        %v1047 = vpop.f32.mrb[0].mxu0
        %v1048 = vpop.f32.mrb[0].mxu0
        %v1049 = vadd.f32 0.0, %v1048
        %v1050 = vpop.f32.mrb[0].mxu0
        %1051 = vmatprep.mubr.bf16.mxu0 0
        %1052 = vmatmul.mubr.bf16.gmra.mrb[0].mxu0 %v912
        %v1053 = vpop.f32.mrb[0].mxu0
        %v1054 = vadd.f32 0.0, %v1053
        %v1055 = vpop.f32.mrb[0].mxu0
        %v1056 = vpop.f32.mrb[0].mxu0
        %v1057 = vadd.f32 0.0, %v1056
        %v1058 = vpop.f32.mrb[0].mxu0
        %1059 = vmatprep.mubr.bf16.mxu0 0
        %1060 = vmatmul.mubr.bf16.gmra.mrb[0].mxu0 %v913
        %v1061 = vpop.f32.mrb[0].mxu0
        %v1062 = vadd.f32 0.0, %v1061
        %v1063 = vpop.f32.mrb[0].mxu0
        %v1064 = vpop.f32.mrb[0].mxu0
        %v1065 = vadd.f32 0.0, %v1064
        %v1066 = vpop.f32.mrb[0].mxu0
        %1067 = vmatprep.mubr.bf16.mxu0 0
        %1068 = vmatmul.mubr.bf16.gmra.mrb[0].mxu0 %v914
        %v1069 = vpop.f32.mrb[0].mxu0
        %v1070 = vadd.f32 0.0, %v1069
        %v1071 = vpop.f32.mrb[0].mxu0
        %v1072 = vpop.f32.mrb[0].mxu0
        %v1073 = vadd.f32 0.0, %v1072
        %v1074 = vpop.f32.mrb[0].mxu0
        %1075 = vdwg.mxu0
        %1076 = vmatprep.subr.bf16.mxu0 0
        %1077 = vmatpush1.bf16.msra.mxu0 %v963
        %1078 = vmatprep.subr.bf16.mxu0 0
        %1079 = vmatpush1.bf16.msra.mxu0 %v964
        %1080 = vmatprep.subr.bf16.mxu0 0
        %1081 = vmatpush1.bf16.msra.mxu0 %v965
        %1082 = vmatprep.subr.bf16.mxu0 0
        %1083 = vmatpush1.bf16.msra.mxu0 %v966
        %1084 = vmatprep.subr.bf16.mxu0 0
        %1085 = vmatpush1.bf16.msra.mxu0 %v967
        %1086 = vmatprep.subr.bf16.mxu0 0
        %1087 = vmatpush1.bf16.msra.mxu0 %v968
        %1088 = vmatprep.subr.bf16.mxu0 0
        %1089 = vmatpush1.bf16.msra.mxu0 %v969
        %1090 = vmatprep.subr.bf16.mxu0 0
        %1091 = vmatpush1.bf16.msra.mxu0 %v970
        %1092 = vmatprep.subr.bf16.mxu0 0
        %1093 = vmatpush1.bf16.msra.mxu0 0
        %1094 = vmatprep.subr.bf16.mxu0 0
        %1095 = vmatpush1.bf16.msra.mxu0 0
        %1096 = vmatprep.subr.bf16.mxu0 0
        %1097 = vmatpush1.bf16.msra.mxu0 0
        %1098 = vmatprep.subr.bf16.mxu0 0
        %1099 = vmatpush1.bf16.msra.mxu0 0
        %1100 = vmatprep.subr.bf16.mxu0 0
        %1101 = vmatpush1.bf16.msra.mxu0 0
        %1102 = vmatprep.subr.bf16.mxu0 0
        %1103 = vmatpush1.bf16.msra.mxu0 0
        %1104 = vmatprep.subr.bf16.mxu0 0
        %1105 = vmatpush1.bf16.msra.mxu0 0
        %1106 = vmatprep.subr.bf16.mxu0 0
        %1107 = vmatpush1.bf16.msra.mxu0 0
        %1108 = vmatprep.mubr.bf16.mxu0 0
        %1109 = vmatmul.mubr.bf16.gmra.mrb[0].mxu0 %v899
        %v1110 = vpop.f32.mrb[0].mxu0
        %v1111 = vadd.f32 0.0, %v1110
        %v1112 = vpop.f32.mrb[0].mxu0
        %v1113 = vpop.f32.mrb[0].mxu0
        %v1114 = vadd.f32 0.0, %v1113
        %v1115 = vpop.f32.mrb[0].mxu0
        %1116 = vmatprep.mubr.bf16.mxu0 0
        %1117 = vmatmul.mubr.bf16.gmra.mrb[0].mxu0 %v900
        %v1118 = vpop.f32.mrb[0].mxu0
        %v1119 = vadd.f32 0.0, %v1118
        %v1120 = vpop.f32.mrb[0].mxu0
        %v1121 = vpop.f32.mrb[0].mxu0
        %v1122 = vadd.f32 0.0, %v1121
        %v1123 = vpop.f32.mrb[0].mxu0
        %1124 = vmatprep.mubr.bf16.mxu0 0
        %1125 = vmatmul.mubr.bf16.gmra.mrb[0].mxu0 %v901
        %v1126 = vpop.f32.mrb[0].mxu0
        %v1127 = vadd.f32 0.0, %v1126
        %v1128 = vpop.f32.mrb[0].mxu0
        %v1129 = vpop.f32.mrb[0].mxu0
        %v1130 = vadd.f32 0.0, %v1129
        %v1131 = vpop.f32.mrb[0].mxu0
        %1132 = vmatprep.mubr.bf16.mxu0 0
        %1133 = vmatmul.mubr.bf16.gmra.mrb[0].mxu0 %v902
        %v1134 = vpop.f32.mrb[0].mxu0
        %v1135 = vadd.f32 0.0, %v1134
        %v1136 = vpop.f32.mrb[0].mxu0
        %v1137 = vpop.f32.mrb[0].mxu0
        %v1138 = vadd.f32 0.0, %v1137
        %v1139 = vpop.f32.mrb[0].mxu0
        %1140 = vmatprep.mubr.bf16.mxu0 0
        %1141 = vmatmul.mubr.bf16.gmra.mrb[0].mxu0 %v903
        %v1142 = vpop.f32.mrb[0].mxu0
        %v1143 = vadd.f32 0.0, %v1142
        %v1144 = vpop.f32.mrb[0].mxu0
        %v1145 = vpop.f32.mrb[0].mxu0
        %v1146 = vadd.f32 0.0, %v1145
        %v1147 = vpop.f32.mrb[0].mxu0
        %1148 = vmatprep.mubr.bf16.mxu0 0
        %1149 = vmatmul.mubr.bf16.gmra.mrb[0].mxu0 %v904
        %v1150 = vpop.f32.mrb[0].mxu0
        %v1151 = vadd.f32 0.0, %v1150
        %v1152 = vpop.f32.mrb[0].mxu0
        %v1153 = vpop.f32.mrb[0].mxu0
        %v1154 = vadd.f32 0.0, %v1153
        %v1155 = vpop.f32.mrb[0].mxu0
        %1156 = vmatprep.mubr.bf16.mxu0 0
        %1157 = vmatmul.mubr.bf16.gmra.mrb[0].mxu0 %v905
        %v1158 = vpop.f32.mrb[0].mxu0
        %v1159 = vadd.f32 0.0, %v1158
        %v1160 = vpop.f32.mrb[0].mxu0
        %v1161 = vpop.f32.mrb[0].mxu0
        %v1162 = vadd.f32 0.0, %v1161
        %v1163 = vpop.f32.mrb[0].mxu0
        %1164 = vmatprep.mubr.bf16.mxu0 0
        %1165 = vmatmul.mubr.bf16.gmra.mrb[0].mxu0 %v906
        %v1166 = vpop.f32.mrb[0].mxu0
        %v1167 = vadd.f32 0.0, %v1166
        %v1168 = vpop.f32.mrb[0].mxu0
        %v1169 = vpop.f32.mrb[0].mxu0
        %v1170 = vadd.f32 0.0, %v1169
        %v1171 = vpop.f32.mrb[0].mxu0
        %1172 = vdwg.mxu0
        %v1173 = vmul.f32 %v1111, 0.5
        %v1174 = vmul.f32 %v1114, 0.5
        %v1175 = vmul.f32 %v1119, 0.5
        %v1176 = vmul.f32 %v1122, 0.5
        %v1177 = vmul.f32 %v1127, 0.5
        %v1178 = vmul.f32 %v1130, 0.5
        %v1179 = vmul.f32 %v1135, 0.5
        %v1180 = vmul.f32 %v1138, 0.5
        %v1181 = vmul.f32 %v1143, 0.5
        %v1182 = vmul.f32 %v1146, 0.5
        %v1183 = vmul.f32 %v1151, 0.5
        %v1184 = vmul.f32 %v1154, 0.5
        %v1185 = vmul.f32 %v1159, 0.5
        %v1186 = vmul.f32 %v1162, 0.5
        %v1187 = vmul.f32 %v1167, 0.5
        %v1188 = vmul.f32 %v1170, 0.5
        %v1189 = vfloor.f32 %v1173
        %v1190 = vfloor.f32 %v1174
        %v1191 = vfloor.f32 %v1175
        %v1192 = vfloor.f32 %v1176
        %v1193 = vfloor.f32 %v1177
        %v1194 = vfloor.f32 %v1178
        %v1195 = vfloor.f32 %v1179
        %v1196 = vfloor.f32 %v1180
        %v1197 = vfloor.f32 %v1181
        %v1198 = vfloor.f32 %v1182
        %v1199 = vfloor.f32 %v1183
        %v1200 = vfloor.f32 %v1184
        %v1201 = vfloor.f32 %v1185
        %v1202 = vfloor.f32 %v1186
        %v1203 = vfloor.f32 %v1187
        %v1204 = vfloor.f32 %v1188
        %v1205 = vmul.f32 %v1189, 2.0
        %v1206 = vmul.f32 %v1190, 2.0
        %v1207 = vmul.f32 %v1191, 2.0
        %v1208 = vmul.f32 %v1192, 2.0
        %v1209 = vmul.f32 %v1193, 2.0
        %v1210 = vmul.f32 %v1194, 2.0
        %v1211 = vmul.f32 %v1195, 2.0
        %v1212 = vmul.f32 %v1196, 2.0
        %v1213 = vmul.f32 %v1197, 2.0
        %v1214 = vmul.f32 %v1198, 2.0
        %v1215 = vmul.f32 %v1199, 2.0
        %v1216 = vmul.f32 %v1200, 2.0
        %v1217 = vmul.f32 %v1201, 2.0
        %v1218 = vmul.f32 %v1202, 2.0
        %v1219 = vmul.f32 %v1203, 2.0
        %v1220 = vmul.f32 %v1204, 2.0
        %v1221 = vsub.f32 %v1111, %v1205
        %v1222 = vsub.f32 %v1114, %v1206
        %v1223 = vsub.f32 %v1119, %v1207
        %v1224 = vsub.f32 %v1122, %v1208
        %v1225 = vsub.f32 %v1127, %v1209
        %v1226 = vsub.f32 %v1130, %v1210
        %v1227 = vsub.f32 %v1135, %v1211
        %v1228 = vsub.f32 %v1138, %v1212
        %v1229 = vsub.f32 %v1143, %v1213
        %v1230 = vsub.f32 %v1146, %v1214
        %v1231 = vsub.f32 %v1151, %v1215
        %v1232 = vsub.f32 %v1154, %v1216
        %v1233 = vsub.f32 %v1159, %v1217
        %v1234 = vsub.f32 %v1162, %v1218
        %v1235 = vsub.f32 %v1167, %v1219
        %v1236 = vsub.f32 %v1170, %v1220
        %v1237 = vmul.f32 %v1221, 2.0
        %v1238 = vmul.f32 %v1222, 2.0
        %v1239 = vmul.f32 %v1223, 2.0
        %v1240 = vmul.f32 %v1224, 2.0
        %v1241 = vmul.f32 %v1225, 2.0
        %v1242 = vmul.f32 %v1226, 2.0
        %v1243 = vmul.f32 %v1227, 2.0
        %v1244 = vmul.f32 %v1228, 2.0
        %v1245 = vmul.f32 %v1229, 2.0
        %v1246 = vmul.f32 %v1230, 2.0
        %v1247 = vmul.f32 %v1231, 2.0
        %v1248 = vmul.f32 %v1232, 2.0
        %v1249 = vmul.f32 %v1233, 2.0
        %v1250 = vmul.f32 %v1234, 2.0
        %v1251 = vmul.f32 %v1235, 2.0
        %v1252 = vmul.f32 %v1236, 2.0
        %v1253 = vsub.f32 1.0, %v1237
        %v1254 = vsub.f32 1.0, %v1238
        %v1255 = vsub.f32 1.0, %v1239
        %v1256 = vsub.f32 1.0, %v1240
        %v1257 = vsub.f32 1.0, %v1241
        %v1258 = vsub.f32 1.0, %v1242
        %v1259 = vsub.f32 1.0, %v1243
        %v1260 = vsub.f32 1.0, %v1244
        %v1261 = vsub.f32 1.0, %v1245
        %v1262 = vsub.f32 1.0, %v1246
        %v1263 = vsub.f32 1.0, %v1247
        %v1264 = vsub.f32 1.0, %v1248
        %v1265 = vsub.f32 1.0, %v1249
        %v1266 = vsub.f32 1.0, %v1250
        %v1267 = vsub.f32 1.0, %v1251
        %v1268 = vsub.f32 1.0, %v1252
        %v1269 = vmul.f32 %v1014, 1.442695
        %v1270 = vpow.pop %v1269
        %v1271 = vmul.f32 %v1017, 1.442695
        %v1272 = vpow.pop %v1271
        %v1273 = vmul.f32 %v1022, 1.442695
        %v1274 = vpow.pop %v1273
        %v1275 = vmul.f32 %v1025, 1.442695
        %v1276 = vpow.pop %v1275
        %v1277 = vmul.f32 %v1030, 1.442695
        %v1278 = vpow.pop %v1277
        %v1279 = vmul.f32 %v1033, 1.442695
        %v1280 = vpow.pop %v1279
        %v1281 = vmul.f32 %v1038, 1.442695
        %v1282 = vpow.pop %v1281
        %v1283 = vmul.f32 %v1041, 1.442695
        %v1284 = vpow.pop %v1283
        %v1285 = vmul.f32 %v1046, 1.442695
        %v1286 = vpow.pop %v1285
        %v1287 = vmul.f32 %v1049, 1.442695
        %v1288 = vpow.pop %v1287
        %v1289 = vmul.f32 %v1054, 1.442695
        %v1290 = vpow.pop %v1289
        %v1291 = vmul.f32 %v1057, 1.442695
        %v1292 = vpow.pop %v1291
        %v1293 = vmul.f32 %v1062, 1.442695
        %v1294 = vpow.pop %v1293
        %v1295 = vmul.f32 %v1065, 1.442695
        %v1296 = vpow.pop %v1295
        %v1297 = vmul.f32 %v1070, 1.442695
        %v1298 = vpow.pop %v1297
        %v1299 = vmul.f32 %v1073, 1.442695
        %v1300 = vpow.pop %v1299
        %v1301 = vmul.f32 %v1253, %v1270
        %v1302 = vmul.f32 %v1254, %v1272
        %v1303 = vmul.f32 %v1255, %v1274
        %v1304 = vmul.f32 %v1256, %v1276
        %v1305 = vmul.f32 %v1257, %v1278
        %v1306 = vmul.f32 %v1258, %v1280
        %v1307 = vmul.f32 %v1259, %v1282
        %v1308 = vmul.f32 %v1260, %v1284
        %v1309 = vmul.f32 %v1261, %v1286
        %v1310 = vmul.f32 %v1262, %v1288
        %v1311 = vmul.f32 %v1263, %v1290
        %v1312 = vmul.f32 %v1264, %v1292
        %v1313 = vmul.f32 %v1265, %v1294
        %v1314 = vmul.f32 %v1266, %v1296
        %v1315 = vmul.f32 %v1267, %v1298
        %v1316 = vmul.f32 %v1268, %v1300
        %v1317 = vmax.f32 %v1301, -0.999999
        %v1318 = vmax.f32 %v1302, -0.999999
        %v1319 = vmax.f32 %v1303, -0.999999
        %v1320 = vmax.f32 %v1304, -0.999999
        %v1321 = vmax.f32 %v1305, -0.999999
        %v1322 = vmax.f32 %v1306, -0.999999
        %v1323 = vmax.f32 %v1307, -0.999999
        %v1324 = vmax.f32 %v1308, -0.999999
        %v1325 = vmax.f32 %v1309, -0.999999
        %v1326 = vmax.f32 %v1310, -0.999999
        %v1327 = vmax.f32 %v1311, -0.999999
        %v1328 = vmax.f32 %v1312, -0.999999
        %v1329 = vmax.f32 %v1313, -0.999999
        %v1330 = vmax.f32 %v1314, -0.999999
        %v1331 = vmax.f32 %v1315, -0.999999
        %v1332 = vmax.f32 %v1316, -0.999999
        %v1333 = vmin.f32 %v1317, 0.999999
        %v1334 = vmin.f32 %v1318, 0.999999
        %v1335 = vmin.f32 %v1319, 0.999999
        %v1336 = vmin.f32 %v1320, 0.999999
        %v1337 = vmin.f32 %v1321, 0.999999
        %v1338 = vmin.f32 %v1322, 0.999999
        %v1339 = vmin.f32 %v1323, 0.999999
        %v1340 = vmin.f32 %v1324, 0.999999
        %v1341 = vmin.f32 %v1325, 0.999999
        %v1342 = vmin.f32 %v1326, 0.999999
        %v1343 = vmin.f32 %v1327, 0.999999
        %v1344 = vmin.f32 %v1328, 0.999999
        %v1345 = vmin.f32 %v1329, 0.999999
        %v1346 = vmin.f32 %v1330, 0.999999
        %v1347 = vmin.f32 %v1331, 0.999999
        %v1348 = vmin.f32 %v1332, 0.999999
        %v1349 = vadd.f32 %v1333, 1.0
        %v1350 = vadd.f32 %v1334, 1.0
        %v1351 = vadd.f32 %v1335, 1.0
        %v1352 = vadd.f32 %v1336, 1.0
        %v1353 = vadd.f32 %v1337, 1.0
        %v1354 = vadd.f32 %v1338, 1.0
        %v1355 = vadd.f32 %v1339, 1.0
        %v1356 = vadd.f32 %v1340, 1.0
        %v1357 = vadd.f32 %v1341, 1.0
        %v1358 = vadd.f32 %v1342, 1.0
        %v1359 = vadd.f32 %v1343, 1.0
        %v1360 = vadd.f32 %v1344, 1.0
        %v1361 = vadd.f32 %v1345, 1.0
        %v1362 = vadd.f32 %v1346, 1.0
        %v1363 = vadd.f32 %v1347, 1.0
        %v1364 = vadd.f32 %v1348, 1.0
        %v1365 = vsub.f32 1.0, %v1333
        %v1366 = vsub.f32 1.0, %v1334
        %v1367 = vsub.f32 1.0, %v1335
        %v1368 = vsub.f32 1.0, %v1336
        %v1369 = vsub.f32 1.0, %v1337
        %v1370 = vsub.f32 1.0, %v1338
        %v1371 = vsub.f32 1.0, %v1339
        %v1372 = vsub.f32 1.0, %v1340
        %v1373 = vsub.f32 1.0, %v1341
        %v1374 = vsub.f32 1.0, %v1342
        %v1375 = vsub.f32 1.0, %v1343
        %v1376 = vsub.f32 1.0, %v1344
        %v1377 = vsub.f32 1.0, %v1345
        %v1378 = vsub.f32 1.0, %v1346
        %v1379 = vsub.f32 1.0, %v1347
        %v1380 = vsub.f32 1.0, %v1348
        %v1381 = vrcp.pop %v1365
        %v1382 = vmul.f32 %v1349, %v1381
        %v1383 = vrcp.pop %v1366
        %v1384 = vmul.f32 %v1350, %v1383
        %v1385 = vrcp.pop %v1367
        %v1386 = vmul.f32 %v1351, %v1385
        %v1387 = vrcp.pop %v1368
        %v1388 = vmul.f32 %v1352, %v1387
        %v1389 = vrcp.pop %v1369
        %v1390 = vmul.f32 %v1353, %v1389
        %v1391 = vrcp.pop %v1370
        %v1392 = vmul.f32 %v1354, %v1391
        %v1393 = vrcp.pop %v1371
        %v1394 = vmul.f32 %v1355, %v1393
        %v1395 = vrcp.pop %v1372
        %v1396 = vmul.f32 %v1356, %v1395
        %v1397 = vrcp.pop %v1373
        %v1398 = vmul.f32 %v1357, %v1397
        %v1399 = vrcp.pop %v1374
        %v1400 = vmul.f32 %v1358, %v1399
        %v1401 = vrcp.pop %v1375
        %v1402 = vmul.f32 %v1359, %v1401
        %v1403 = vrcp.pop %v1376
        %v1404 = vmul.f32 %v1360, %v1403
        %v1405 = vrcp.pop %v1377
        %v1406 = vmul.f32 %v1361, %v1405
        %v1407 = vrcp.pop %v1378
        %v1408 = vmul.f32 %v1362, %v1407
        %v1409 = vrcp.pop %v1379
        %v1410 = vmul.f32 %v1363, %v1409
        %v1411 = vrcp.pop %v1380
        %v1412 = vmul.f32 %v1364, %v1411
        %v1413 = vlog2.pop %v1382
        %v1414 = vmul.f32 %v1413, 0.6931472
        %v1415 = vlog2.pop %v1384
        %v1416 = vmul.f32 %v1415, 0.6931472
        %v1417 = vlog2.pop %v1386
        %v1418 = vmul.f32 %v1417, 0.6931472
        %v1419 = vlog2.pop %v1388
        %v1420 = vmul.f32 %v1419, 0.6931472
        %v1421 = vlog2.pop %v1390
        %v1422 = vmul.f32 %v1421, 0.6931472
        %v1423 = vlog2.pop %v1392
        %v1424 = vmul.f32 %v1423, 0.6931472
        %v1425 = vlog2.pop %v1394
        %v1426 = vmul.f32 %v1425, 0.6931472
        %v1427 = vlog2.pop %v1396
        %v1428 = vmul.f32 %v1427, 0.6931472
        %v1429 = vlog2.pop %v1398
        %v1430 = vmul.f32 %v1429, 0.6931472
        %v1431 = vlog2.pop %v1400
        %v1432 = vmul.f32 %v1431, 0.6931472
        %v1433 = vlog2.pop %v1402
        %v1434 = vmul.f32 %v1433, 0.6931472
        %v1435 = vlog2.pop %v1404
        %v1436 = vmul.f32 %v1435, 0.6931472
        %v1437 = vlog2.pop %v1406
        %v1438 = vmul.f32 %v1437, 0.6931472
        %v1439 = vlog2.pop %v1408
        %v1440 = vmul.f32 %v1439, 0.6931472
        %v1441 = vlog2.pop %v1410
        %v1442 = vmul.f32 %v1441, 0.6931472
        %v1443 = vlog2.pop %v1412
        %v1444 = vmul.f32 %v1443, 0.6931472
        %s1445 = ssub.f32 0.0, %s400
        %v1446 = vstv %s1445
        %v1447 = vmax.f32 %v1446, %v1414
        %v1448 = vmax.f32 %v1446, %v1416
        %v1449 = vmax.f32 %v1446, %v1418
        %v1450 = vmax.f32 %v1446, %v1420
        %v1451 = vmax.f32 %v1446, %v1422
        %v1452 = vmax.f32 %v1446, %v1424
        %v1453 = vmax.f32 %v1446, %v1426
        %v1454 = vmax.f32 %v1446, %v1428
        %v1455 = vmax.f32 %v1446, %v1430
        %v1456 = vmax.f32 %v1446, %v1432
        %v1457 = vmax.f32 %v1446, %v1434
        %v1458 = vmax.f32 %v1446, %v1436
        %v1459 = vmax.f32 %v1446, %v1438
        %v1460 = vmax.f32 %v1446, %v1440
        %v1461 = vmax.f32 %v1446, %v1442
        %v1462 = vmax.f32 %v1446, %v1444
        %v1463 = vstv %s400
        %v1464 = vmin.f32 %v1463, %v1447
        %v1465 = vmin.f32 %v1463, %v1448
        %v1466 = vmin.f32 %v1463, %v1449
        %v1467 = vmin.f32 %v1463, %v1450
        %v1468 = vmin.f32 %v1463, %v1451
        %v1469 = vmin.f32 %v1463, %v1452
        %v1470 = vmin.f32 %v1463, %v1453
        %v1471 = vmin.f32 %v1463, %v1454
        %v1472 = vmin.f32 %v1463, %v1455
        %v1473 = vmin.f32 %v1463, %v1456
        %v1474 = vmin.f32 %v1463, %v1457
        %v1475 = vmin.f32 %v1463, %v1458
        %v1476 = vmin.f32 %v1463, %v1459
        %v1477 = vmin.f32 %v1463, %v1460
        %v1478 = vmin.f32 %v1463, %v1461
        %v1479 = vmin.f32 %v1463, %v1462
        %v1480 = vpack.c.bf16 %v1465, %v1464
        %v1481 = vpack.c.bf16 %v1467, %v1466
        %v1482 = vpack.c.bf16 %v1469, %v1468
        %v1483 = vpack.c.bf16 %v1471, %v1470
        %v1484 = vpack.c.bf16 %v1473, %v1472
        %v1485 = vpack.c.bf16 %v1475, %v1474
        %v1486 = vpack.c.bf16 %v1477, %v1476
        %v1487 = vpack.c.bf16 %v1479, %v1478
        %1488 = vmatprep.subr.bf16.mxu0 0
        %1489 = vmatpush1.bf16.msra.mxu0 %v658
        %1490 = vmatprep.subr.bf16.mxu0 0
        %1491 = vmatpush1.bf16.msra.mxu0 %v659
        %1492 = vmatprep.subr.bf16.mxu0 0
        %1493 = vmatpush1.bf16.msra.mxu0 %v660
        %1494 = vmatprep.subr.bf16.mxu0 0
        %1495 = vmatpush1.bf16.msra.mxu0 %v661
        %1496 = vmatprep.subr.bf16.mxu0 0
        %1497 = vmatpush1.bf16.msra.mxu0 %v662
        %1498 = vmatprep.subr.bf16.mxu0 0
        %1499 = vmatpush1.bf16.msra.mxu0 %v663
        %1500 = vmatprep.subr.bf16.mxu0 0
        %1501 = vmatpush1.bf16.msra.mxu0 %v664
        %1502 = vmatprep.subr.bf16.mxu0 0
        %1503 = vmatpush1.bf16.msra.mxu0 %v665
        %1504 = vmatprep.subr.bf16.mxu0 0
        %1505 = vmatpush1.bf16.msra.mxu0 0
        %1506 = vmatprep.subr.bf16.mxu0 0
        %1507 = vmatpush1.bf16.msra.mxu0 0
        %1508 = vmatprep.subr.bf16.mxu0 0
        %1509 = vmatpush1.bf16.msra.mxu0 0
        %1510 = vmatprep.subr.bf16.mxu0 0
        %1511 = vmatpush1.bf16.msra.mxu0 0
        %1512 = vmatprep.subr.bf16.mxu0 0
        %1513 = vmatpush1.bf16.msra.mxu0 0
        %1514 = vmatprep.subr.bf16.mxu0 0
        %1515 = vmatpush1.bf16.msra.mxu0 0
        %1516 = vmatprep.subr.bf16.mxu0 0
        %1517 = vmatpush1.bf16.msra.mxu0 0
        %1518 = vmatprep.subr.bf16.mxu0 0
        %1519 = vmatpush1.bf16.msra.mxu0 0
        %1520 = vmatprep.mubr.bf16.mxu0 0
        %1521 = vmatmul.mubr.bf16.gmra.mrb[0].mxu0 %v1480
        %v1522 = vpop.f32.mrb[0].mxu0
        %v1523 = vadd.f32 %v524, %v1522
        %v1524 = vpop.f32.mrb[0].mxu0
        %v1525 = vpop.f32.mrb[0].mxu0
        %v1526 = vadd.f32 %v527, %v1525
        %v1527 = vpop.f32.mrb[0].mxu0
        %1528 = vmatprep.mubr.bf16.mxu0 0
        %1529 = vmatmul.mubr.bf16.gmra.mrb[0].mxu0 %v1481
        %v1530 = vpop.f32.mrb[0].mxu0
        %v1531 = vadd.f32 %v532, %v1530
        %v1532 = vpop.f32.mrb[0].mxu0
        %v1533 = vpop.f32.mrb[0].mxu0
        %v1534 = vadd.f32 %v535, %v1533
        %v1535 = vpop.f32.mrb[0].mxu0
        %1536 = vmatprep.mubr.bf16.mxu0 0
        %1537 = vmatmul.mubr.bf16.gmra.mrb[0].mxu0 %v1482
        %v1538 = vpop.f32.mrb[0].mxu0
        %v1539 = vadd.f32 %v540, %v1538
        %v1540 = vpop.f32.mrb[0].mxu0
        %v1541 = vpop.f32.mrb[0].mxu0
        %v1542 = vadd.f32 %v543, %v1541
        %v1543 = vpop.f32.mrb[0].mxu0
        %1544 = vmatprep.mubr.bf16.mxu0 0
        %1545 = vmatmul.mubr.bf16.gmra.mrb[0].mxu0 %v1483
        %v1546 = vpop.f32.mrb[0].mxu0
        %v1547 = vadd.f32 %v548, %v1546
        %v1548 = vpop.f32.mrb[0].mxu0
        %v1549 = vpop.f32.mrb[0].mxu0
        %v1550 = vadd.f32 %v551, %v1549
        %v1551 = vpop.f32.mrb[0].mxu0
        %1552 = vmatprep.mubr.bf16.mxu0 0
        %1553 = vmatmul.mubr.bf16.gmra.mrb[0].mxu0 %v1484
        %v1554 = vpop.f32.mrb[0].mxu0
        %v1555 = vadd.f32 %v556, %v1554
        %v1556 = vpop.f32.mrb[0].mxu0
        %v1557 = vpop.f32.mrb[0].mxu0
        %v1558 = vadd.f32 %v559, %v1557
        %v1559 = vpop.f32.mrb[0].mxu0
        %1560 = vmatprep.mubr.bf16.mxu0 0
        %1561 = vmatmul.mubr.bf16.gmra.mrb[0].mxu0 %v1485
        %v1562 = vpop.f32.mrb[0].mxu0
        %v1563 = vadd.f32 %v564, %v1562
        %v1564 = vpop.f32.mrb[0].mxu0
        %v1565 = vpop.f32.mrb[0].mxu0
        %v1566 = vadd.f32 %v567, %v1565
        %v1567 = vpop.f32.mrb[0].mxu0
        %1568 = vmatprep.mubr.bf16.mxu0 0
        %1569 = vmatmul.mubr.bf16.gmra.mrb[0].mxu0 %v1486
        %v1570 = vpop.f32.mrb[0].mxu0
        %v1571 = vadd.f32 %v572, %v1570
        %v1572 = vpop.f32.mrb[0].mxu0
        %v1573 = vpop.f32.mrb[0].mxu0
        %v1574 = vadd.f32 %v575, %v1573
        %v1575 = vpop.f32.mrb[0].mxu0
        %1576 = vmatprep.mubr.bf16.mxu0 0
        %1577 = vmatmul.mubr.bf16.gmra.mrb[0].mxu0 %v1487
        %v1578 = vpop.f32.mrb[0].mxu0
        %v1579 = vadd.f32 %v580, %v1578
        %v1580 = vpop.f32.mrb[0].mxu0
        %v1581 = vpop.f32.mrb[0].mxu0
        %v1582 = vadd.f32 %v583, %v1581
        %v1583 = vpop.f32.mrb[0].mxu0
        %1584 = vdwg.mxu0
        %v1585 = vtanh.pop %v1523
        %v1586 = vtanh.pop %v1526
        %v1587 = vtanh.pop %v1531
        %v1588 = vtanh.pop %v1534
        %v1589 = vtanh.pop %v1539
        %v1590 = vtanh.pop %v1542
        %v1591 = vtanh.pop %v1547
        %v1592 = vtanh.pop %v1550
        %v1593 = vtanh.pop %v1555
        %v1594 = vtanh.pop %v1558
        %v1595 = vtanh.pop %v1563
        %v1596 = vtanh.pop %v1566
        %v1597 = vtanh.pop %v1571
        %v1598 = vtanh.pop %v1574
        %v1599 = vtanh.pop %v1579
        %v1600 = vtanh.pop %v1582
        %v1601 = vand.u32 2147483647, %v1585
        %v1602 = vand.u32 2147483647, %v1586
        %v1603 = vand.u32 2147483647, %v1587
        %v1604 = vand.u32 2147483647, %v1588
        %v1605 = vand.u32 2147483647, %v1589
        %v1606 = vand.u32 2147483647, %v1590
        %v1607 = vand.u32 2147483647, %v1591
        %v1608 = vand.u32 2147483647, %v1592
        %v1609 = vand.u32 2147483647, %v1593
        %v1610 = vand.u32 2147483647, %v1594
        %v1611 = vand.u32 2147483647, %v1595
        %v1612 = vand.u32 2147483647, %v1596
        %v1613 = vand.u32 2147483647, %v1597
        %v1614 = vand.u32 2147483647, %v1598
        %v1615 = vand.u32 2147483647, %v1599
        %v1616 = vand.u32 2147483647, %v1600
        %v1617 = vmax.f32 %v1601, 1e-12
        %v1618 = vmax.f32 %v1602, 1e-12
        %v1619 = vmax.f32 %v1603, 1e-12
        %v1620 = vmax.f32 %v1604, 1e-12
        %v1621 = vmax.f32 %v1605, 1e-12
        %v1622 = vmax.f32 %v1606, 1e-12
        %v1623 = vmax.f32 %v1607, 1e-12
        %v1624 = vmax.f32 %v1608, 1e-12
        %v1625 = vmax.f32 %v1609, 1e-12
        %v1626 = vmax.f32 %v1610, 1e-12
        %v1627 = vmax.f32 %v1611, 1e-12
        %v1628 = vmax.f32 %v1612, 1e-12
        %v1629 = vmax.f32 %v1613, 1e-12
        %v1630 = vmax.f32 %v1614, 1e-12
        %v1631 = vmax.f32 %v1615, 1e-12
        %v1632 = vmax.f32 %v1616, 1e-12
        %v1633 = vlog2.pop %v1617
        %v1634 = vmul.f32 %v1633, 0.6931472
        %v1635 = vlog2.pop %v1618
        %v1636 = vmul.f32 %v1635, 0.6931472
        %v1637 = vlog2.pop %v1619
        %v1638 = vmul.f32 %v1637, 0.6931472
        %v1639 = vlog2.pop %v1620
        %v1640 = vmul.f32 %v1639, 0.6931472
        %v1641 = vlog2.pop %v1621
        %v1642 = vmul.f32 %v1641, 0.6931472
        %v1643 = vlog2.pop %v1622
        %v1644 = vmul.f32 %v1643, 0.6931472
        %v1645 = vlog2.pop %v1623
        %v1646 = vmul.f32 %v1645, 0.6931472
        %v1647 = vlog2.pop %v1624
        %v1648 = vmul.f32 %v1647, 0.6931472
        %v1649 = vlog2.pop %v1625
        %v1650 = vmul.f32 %v1649, 0.6931472
        %v1651 = vlog2.pop %v1626
        %v1652 = vmul.f32 %v1651, 0.6931472
        %v1653 = vlog2.pop %v1627
        %v1654 = vmul.f32 %v1653, 0.6931472
        %v1655 = vlog2.pop %v1628
        %v1656 = vmul.f32 %v1655, 0.6931472
        %v1657 = vlog2.pop %v1629
        %v1658 = vmul.f32 %v1657, 0.6931472
        %v1659 = vlog2.pop %v1630
        %v1660 = vmul.f32 %v1659, 0.6931472
        %v1661 = vlog2.pop %v1631
        %v1662 = vmul.f32 %v1661, 0.6931472
        %v1663 = vlog2.pop %v1632
        %v1664 = vmul.f32 %v1663, 0.6931472
        %vm1665 = vcmp.lt.f32.partialorder %v1585, 0.0
        %vm1666 = vcmp.lt.f32.partialorder %v1586, 0.0
        %vm1667 = vcmp.lt.f32.partialorder %v1587, 0.0
        %vm1668 = vcmp.lt.f32.partialorder %v1588, 0.0
        %vm1669 = vcmp.lt.f32.partialorder %v1589, 0.0
        %vm1670 = vcmp.lt.f32.partialorder %v1590, 0.0
        %vm1671 = vcmp.lt.f32.partialorder %v1591, 0.0
        %vm1672 = vcmp.lt.f32.partialorder %v1592, 0.0
        %vm1673 = vcmp.lt.f32.partialorder %v1593, 0.0
        %vm1674 = vcmp.lt.f32.partialorder %v1594, 0.0
        %vm1675 = vcmp.lt.f32.partialorder %v1595, 0.0
        %vm1676 = vcmp.lt.f32.partialorder %v1596, 0.0
        %vm1677 = vcmp.lt.f32.partialorder %v1597, 0.0
        %vm1678 = vcmp.lt.f32.partialorder %v1598, 0.0
        %vm1679 = vcmp.lt.f32.partialorder %v1599, 0.0
        %vm1680 = vcmp.lt.f32.partialorder %v1600, 0.0
        %v1681 = vsel %vm1665, 1, 0
        %v1682 = vsel %vm1666, 1, 0
        %v1683 = vsel %vm1667, 1, 0
        %v1684 = vsel %vm1668, 1, 0
        %v1685 = vsel %vm1669, 1, 0
        %v1686 = vsel %vm1670, 1, 0
        %v1687 = vsel %vm1671, 1, 0
        %v1688 = vsel %vm1672, 1, 0
        %v1689 = vsel %vm1673, 1, 0
        %v1690 = vsel %vm1674, 1, 0
        %v1691 = vsel %vm1675, 1, 0
        %v1692 = vsel %vm1676, 1, 0
        %v1693 = vsel %vm1677, 1, 0
        %v1694 = vsel %vm1678, 1, 0
        %v1695 = vsel %vm1679, 1, 0
        %v1696 = vsel %vm1680, 1, 0
        %v1697 = vcvt.s32.f32 %v1681
        %v1698 = vcvt.s32.f32 %v1682
        %v1699 = vcvt.s32.f32 %v1683
        %v1700 = vcvt.s32.f32 %v1684
        %v1701 = vcvt.s32.f32 %v1685
        %v1702 = vcvt.s32.f32 %v1686
        %v1703 = vcvt.s32.f32 %v1687
        %v1704 = vcvt.s32.f32 %v1688
        %v1705 = vcvt.s32.f32 %v1689
        %v1706 = vcvt.s32.f32 %v1690
        %v1707 = vcvt.s32.f32 %v1691
        %v1708 = vcvt.s32.f32 %v1692
        %v1709 = vcvt.s32.f32 %v1693
        %v1710 = vcvt.s32.f32 %v1694
        %v1711 = vcvt.s32.f32 %v1695
        %v1712 = vcvt.s32.f32 %v1696
        %v1713 = vpack.c.bf16 %v1698, %v1697
        %v1714 = vpack.c.bf16 %v1700, %v1699
        %v1715 = vpack.c.bf16 %v1702, %v1701
        %v1716 = vpack.c.bf16 %v1704, %v1703
        %v1717 = vpack.c.bf16 %v1706, %v1705
        %v1718 = vpack.c.bf16 %v1708, %v1707
        %v1719 = vpack.c.bf16 %v1710, %v1709
        %v1720 = vpack.c.bf16 %v1712, %v1711
        %v1721 = vpack.c.bf16 %v1636, %v1634
        %v1722 = vpack.c.bf16 %v1640, %v1638
        %v1723 = vpack.c.bf16 %v1644, %v1642
        %v1724 = vpack.c.bf16 %v1648, %v1646
        %v1725 = vpack.c.bf16 %v1652, %v1650
        %v1726 = vpack.c.bf16 %v1656, %v1654
        %v1727 = vpack.c.bf16 %v1660, %v1658
        %v1728 = vpack.c.bf16 %v1664, %v1662
        %1729 = vmatprep.subr.bf16.mxu0 0
        %1730 = vmatpush1.bf16.msra.mxu0 %v963
        %1731 = vmatprep.subr.bf16.mxu0 0
        %1732 = vmatpush1.bf16.msra.mxu0 %v964
        %1733 = vmatprep.subr.bf16.mxu0 0
        %1734 = vmatpush1.bf16.msra.mxu0 %v965
        %1735 = vmatprep.subr.bf16.mxu0 0
        %1736 = vmatpush1.bf16.msra.mxu0 %v966
        %1737 = vmatprep.subr.bf16.mxu0 0
        %1738 = vmatpush1.bf16.msra.mxu0 %v967
        %1739 = vmatprep.subr.bf16.mxu0 0
        %1740 = vmatpush1.bf16.msra.mxu0 %v968
        %1741 = vmatprep.subr.bf16.mxu0 0
        %1742 = vmatpush1.bf16.msra.mxu0 %v969
        %1743 = vmatprep.subr.bf16.mxu0 0
        %1744 = vmatpush1.bf16.msra.mxu0 %v970
        %1745 = vmatprep.subr.bf16.mxu0 0
        %1746 = vmatpush1.bf16.msra.mxu0 0
        %1747 = vmatprep.subr.bf16.mxu0 0
        %1748 = vmatpush1.bf16.msra.mxu0 0
        %1749 = vmatprep.subr.bf16.mxu0 0
        %1750 = vmatpush1.bf16.msra.mxu0 0
        %1751 = vmatprep.subr.bf16.mxu0 0
        %1752 = vmatpush1.bf16.msra.mxu0 0
        %1753 = vmatprep.subr.bf16.mxu0 0
        %1754 = vmatpush1.bf16.msra.mxu0 0
        %1755 = vmatprep.subr.bf16.mxu0 0
        %1756 = vmatpush1.bf16.msra.mxu0 0
        %1757 = vmatprep.subr.bf16.mxu0 0
        %1758 = vmatpush1.bf16.msra.mxu0 0
        %1759 = vmatprep.subr.bf16.mxu0 0
        %1760 = vmatpush1.bf16.msra.mxu0 0
        %1761 = vmatprep.mubr.bf16.mxu0 0
        %1762 = vmatmul.mubr.bf16.gmra.mrb[0].mxu0 %v1721
        %v1763 = vpop.f32.mrb[0].mxu0
        %v1764 = vadd.f32 0.0, %v1763
        %v1765 = vpop.f32.mrb[0].mxu0
        %v1766 = vpop.f32.mrb[0].mxu0
        %v1767 = vadd.f32 0.0, %v1766
        %v1768 = vpop.f32.mrb[0].mxu0
        %1769 = vmatprep.mubr.bf16.mxu0 0
        %1770 = vmatmul.mubr.bf16.gmra.mrb[0].mxu0 %v1722
        %v1771 = vpop.f32.mrb[0].mxu0
        %v1772 = vadd.f32 0.0, %v1771
        %v1773 = vpop.f32.mrb[0].mxu0
        %v1774 = vpop.f32.mrb[0].mxu0
        %v1775 = vadd.f32 0.0, %v1774
        %v1776 = vpop.f32.mrb[0].mxu0
        %1777 = vmatprep.mubr.bf16.mxu0 0
        %1778 = vmatmul.mubr.bf16.gmra.mrb[0].mxu0 %v1723
        %v1779 = vpop.f32.mrb[0].mxu0
        %v1780 = vadd.f32 0.0, %v1779
        %v1781 = vpop.f32.mrb[0].mxu0
        %v1782 = vpop.f32.mrb[0].mxu0
        %v1783 = vadd.f32 0.0, %v1782
        %v1784 = vpop.f32.mrb[0].mxu0
        %1785 = vmatprep.mubr.bf16.mxu0 0
        %1786 = vmatmul.mubr.bf16.gmra.mrb[0].mxu0 %v1724
        %v1787 = vpop.f32.mrb[0].mxu0
        %v1788 = vadd.f32 0.0, %v1787
        %v1789 = vpop.f32.mrb[0].mxu0
        %v1790 = vpop.f32.mrb[0].mxu0
        %v1791 = vadd.f32 0.0, %v1790
        %v1792 = vpop.f32.mrb[0].mxu0
        %1793 = vmatprep.mubr.bf16.mxu0 0
        %1794 = vmatmul.mubr.bf16.gmra.mrb[0].mxu0 %v1725
        %v1795 = vpop.f32.mrb[0].mxu0
        %v1796 = vadd.f32 0.0, %v1795
        %v1797 = vpop.f32.mrb[0].mxu0
        %v1798 = vpop.f32.mrb[0].mxu0
        %v1799 = vadd.f32 0.0, %v1798
        %v1800 = vpop.f32.mrb[0].mxu0
        %1801 = vmatprep.mubr.bf16.mxu0 0
        %1802 = vmatmul.mubr.bf16.gmra.mrb[0].mxu0 %v1726
        %v1803 = vpop.f32.mrb[0].mxu0
        %v1804 = vadd.f32 0.0, %v1803
        %v1805 = vpop.f32.mrb[0].mxu0
        %v1806 = vpop.f32.mrb[0].mxu0
        %v1807 = vadd.f32 0.0, %v1806
        %v1808 = vpop.f32.mrb[0].mxu0
        %1809 = vmatprep.mubr.bf16.mxu0 0
        %1810 = vmatmul.mubr.bf16.gmra.mrb[0].mxu0 %v1727
        %v1811 = vpop.f32.mrb[0].mxu0
        %v1812 = vadd.f32 0.0, %v1811
        %v1813 = vpop.f32.mrb[0].mxu0
        %v1814 = vpop.f32.mrb[0].mxu0
        %v1815 = vadd.f32 0.0, %v1814
        %v1816 = vpop.f32.mrb[0].mxu0
        %1817 = vmatprep.mubr.bf16.mxu0 0
        %1818 = vmatmul.mubr.bf16.gmra.mrb[0].mxu0 %v1728
        %v1819 = vpop.f32.mrb[0].mxu0
        %v1820 = vadd.f32 0.0, %v1819
        %v1821 = vpop.f32.mrb[0].mxu0
        %v1822 = vpop.f32.mrb[0].mxu0
        %v1823 = vadd.f32 0.0, %v1822
        %v1824 = vpop.f32.mrb[0].mxu0
        %1825 = vdwg.mxu0
        %1826 = vmatprep.subr.bf16.mxu0 0
        %1827 = vmatpush1.bf16.msra.mxu0 %v963
        %1828 = vmatprep.subr.bf16.mxu0 0
        %1829 = vmatpush1.bf16.msra.mxu0 %v964
        %1830 = vmatprep.subr.bf16.mxu0 0
        %1831 = vmatpush1.bf16.msra.mxu0 %v965
        %1832 = vmatprep.subr.bf16.mxu0 0
        %1833 = vmatpush1.bf16.msra.mxu0 %v966
        %1834 = vmatprep.subr.bf16.mxu0 0
        %1835 = vmatpush1.bf16.msra.mxu0 %v967
        %1836 = vmatprep.subr.bf16.mxu0 0
        %1837 = vmatpush1.bf16.msra.mxu0 %v968
        %1838 = vmatprep.subr.bf16.mxu0 0
        %1839 = vmatpush1.bf16.msra.mxu0 %v969
        %1840 = vmatprep.subr.bf16.mxu0 0
        %1841 = vmatpush1.bf16.msra.mxu0 %v970
        %1842 = vmatprep.subr.bf16.mxu0 0
        %1843 = vmatpush1.bf16.msra.mxu0 0
        %1844 = vmatprep.subr.bf16.mxu0 0
        %1845 = vmatpush1.bf16.msra.mxu0 0
        %1846 = vmatprep.subr.bf16.mxu0 0
        %1847 = vmatpush1.bf16.msra.mxu0 0
        %1848 = vmatprep.subr.bf16.mxu0 0
        %1849 = vmatpush1.bf16.msra.mxu0 0
        %1850 = vmatprep.subr.bf16.mxu0 0
        %1851 = vmatpush1.bf16.msra.mxu0 0
        %1852 = vmatprep.subr.bf16.mxu0 0
        %1853 = vmatpush1.bf16.msra.mxu0 0
        %1854 = vmatprep.subr.bf16.mxu0 0
        %1855 = vmatpush1.bf16.msra.mxu0 0
        %1856 = vmatprep.subr.bf16.mxu0 0
        %1857 = vmatpush1.bf16.msra.mxu0 0
        %1858 = vmatprep.mubr.bf16.mxu0 0
        %1859 = vmatmul.mubr.bf16.gmra.mrb[0].mxu0 %v1713
        %v1860 = vpop.f32.mrb[0].mxu0
        %v1861 = vadd.f32 0.0, %v1860
        %v1862 = vpop.f32.mrb[0].mxu0
        %v1863 = vpop.f32.mrb[0].mxu0
        %v1864 = vadd.f32 0.0, %v1863
        %v1865 = vpop.f32.mrb[0].mxu0
        %1866 = vmatprep.mubr.bf16.mxu0 0
        %1867 = vmatmul.mubr.bf16.gmra.mrb[0].mxu0 %v1714
        %v1868 = vpop.f32.mrb[0].mxu0
        %v1869 = vadd.f32 0.0, %v1868
        %v1870 = vpop.f32.mrb[0].mxu0
        %v1871 = vpop.f32.mrb[0].mxu0
        %v1872 = vadd.f32 0.0, %v1871
        %v1873 = vpop.f32.mrb[0].mxu0
        %1874 = vmatprep.mubr.bf16.mxu0 0
        %1875 = vmatmul.mubr.bf16.gmra.mrb[0].mxu0 %v1715
        %v1876 = vpop.f32.mrb[0].mxu0
        %v1877 = vadd.f32 0.0, %v1876
        %v1878 = vpop.f32.mrb[0].mxu0
        %v1879 = vpop.f32.mrb[0].mxu0
        %v1880 = vadd.f32 0.0, %v1879
        %v1881 = vpop.f32.mrb[0].mxu0
        %1882 = vmatprep.mubr.bf16.mxu0 0
        %1883 = vmatmul.mubr.bf16.gmra.mrb[0].mxu0 %v1716
        %v1884 = vpop.f32.mrb[0].mxu0
        %v1885 = vadd.f32 0.0, %v1884
        %v1886 = vpop.f32.mrb[0].mxu0
        %v1887 = vpop.f32.mrb[0].mxu0
        %v1888 = vadd.f32 0.0, %v1887
        %v1889 = vpop.f32.mrb[0].mxu0
        %1890 = vmatprep.mubr.bf16.mxu0 0
        %1891 = vmatmul.mubr.bf16.gmra.mrb[0].mxu0 %v1717
        %v1892 = vpop.f32.mrb[0].mxu0
        %v1893 = vadd.f32 0.0, %v1892
        %v1894 = vpop.f32.mrb[0].mxu0
        %v1895 = vpop.f32.mrb[0].mxu0
        %v1896 = vadd.f32 0.0, %v1895
        %v1897 = vpop.f32.mrb[0].mxu0
        %1898 = vmatprep.mubr.bf16.mxu0 0
        %1899 = vmatmul.mubr.bf16.gmra.mrb[0].mxu0 %v1718
        %v1900 = vpop.f32.mrb[0].mxu0
        %v1901 = vadd.f32 0.0, %v1900
        %v1902 = vpop.f32.mrb[0].mxu0
        %v1903 = vpop.f32.mrb[0].mxu0
        %v1904 = vadd.f32 0.0, %v1903
        %v1905 = vpop.f32.mrb[0].mxu0
        %1906 = vmatprep.mubr.bf16.mxu0 0
        %1907 = vmatmul.mubr.bf16.gmra.mrb[0].mxu0 %v1719
        %v1908 = vpop.f32.mrb[0].mxu0
        %v1909 = vadd.f32 0.0, %v1908
        %v1910 = vpop.f32.mrb[0].mxu0
        %v1911 = vpop.f32.mrb[0].mxu0
        %v1912 = vadd.f32 0.0, %v1911
        %v1913 = vpop.f32.mrb[0].mxu0
        %1914 = vmatprep.mubr.bf16.mxu0 0
        %1915 = vmatmul.mubr.bf16.gmra.mrb[0].mxu0 %v1720
        %v1916 = vpop.f32.mrb[0].mxu0
        %v1917 = vadd.f32 0.0, %v1916
        %v1918 = vpop.f32.mrb[0].mxu0
        %v1919 = vpop.f32.mrb[0].mxu0
        %v1920 = vadd.f32 0.0, %v1919
        %v1921 = vpop.f32.mrb[0].mxu0
        %1922 = vdwg.mxu0
        %v1923 = vmul.f32 %v1861, 0.5
        %v1924 = vmul.f32 %v1864, 0.5
        %v1925 = vmul.f32 %v1869, 0.5
        %v1926 = vmul.f32 %v1872, 0.5
        %v1927 = vmul.f32 %v1877, 0.5
        %v1928 = vmul.f32 %v1880, 0.5
        %v1929 = vmul.f32 %v1885, 0.5
        %v1930 = vmul.f32 %v1888, 0.5
        %v1931 = vmul.f32 %v1893, 0.5
        %v1932 = vmul.f32 %v1896, 0.5
        %v1933 = vmul.f32 %v1901, 0.5
        %v1934 = vmul.f32 %v1904, 0.5
        %v1935 = vmul.f32 %v1909, 0.5
        %v1936 = vmul.f32 %v1912, 0.5
        %v1937 = vmul.f32 %v1917, 0.5
        %v1938 = vmul.f32 %v1920, 0.5
        %v1939 = vfloor.f32 %v1923
        %v1940 = vfloor.f32 %v1924
        %v1941 = vfloor.f32 %v1925
        %v1942 = vfloor.f32 %v1926
        %v1943 = vfloor.f32 %v1927
        %v1944 = vfloor.f32 %v1928
        %v1945 = vfloor.f32 %v1929
        %v1946 = vfloor.f32 %v1930
        %v1947 = vfloor.f32 %v1931
        %v1948 = vfloor.f32 %v1932
        %v1949 = vfloor.f32 %v1933
        %v1950 = vfloor.f32 %v1934
        %v1951 = vfloor.f32 %v1935
        %v1952 = vfloor.f32 %v1936
        %v1953 = vfloor.f32 %v1937
        %v1954 = vfloor.f32 %v1938
        %v1955 = vmul.f32 %v1939, 2.0
        %v1956 = vmul.f32 %v1940, 2.0
        %v1957 = vmul.f32 %v1941, 2.0
        %v1958 = vmul.f32 %v1942, 2.0
        %v1959 = vmul.f32 %v1943, 2.0
        %v1960 = vmul.f32 %v1944, 2.0
        %v1961 = vmul.f32 %v1945, 2.0
        %v1962 = vmul.f32 %v1946, 2.0
        %v1963 = vmul.f32 %v1947, 2.0
        %v1964 = vmul.f32 %v1948, 2.0
        %v1965 = vmul.f32 %v1949, 2.0
        %v1966 = vmul.f32 %v1950, 2.0
        %v1967 = vmul.f32 %v1951, 2.0
        %v1968 = vmul.f32 %v1952, 2.0
        %v1969 = vmul.f32 %v1953, 2.0
        %v1970 = vmul.f32 %v1954, 2.0
        %v1971 = vsub.f32 %v1861, %v1955
        %v1972 = vsub.f32 %v1864, %v1956
        %v1973 = vsub.f32 %v1869, %v1957
        %v1974 = vsub.f32 %v1872, %v1958
        %v1975 = vsub.f32 %v1877, %v1959
        %v1976 = vsub.f32 %v1880, %v1960
        %v1977 = vsub.f32 %v1885, %v1961
        %v1978 = vsub.f32 %v1888, %v1962
        %v1979 = vsub.f32 %v1893, %v1963
        %v1980 = vsub.f32 %v1896, %v1964
        %v1981 = vsub.f32 %v1901, %v1965
        %v1982 = vsub.f32 %v1904, %v1966
        %v1983 = vsub.f32 %v1909, %v1967
        %v1984 = vsub.f32 %v1912, %v1968
        %v1985 = vsub.f32 %v1917, %v1969
        %v1986 = vsub.f32 %v1920, %v1970
        %v1987 = vmul.f32 %v1971, 2.0
        %v1988 = vmul.f32 %v1972, 2.0
        %v1989 = vmul.f32 %v1973, 2.0
        %v1990 = vmul.f32 %v1974, 2.0
        %v1991 = vmul.f32 %v1975, 2.0
        %v1992 = vmul.f32 %v1976, 2.0
        %v1993 = vmul.f32 %v1977, 2.0
        %v1994 = vmul.f32 %v1978, 2.0
        %v1995 = vmul.f32 %v1979, 2.0
        %v1996 = vmul.f32 %v1980, 2.0
        %v1997 = vmul.f32 %v1981, 2.0
        %v1998 = vmul.f32 %v1982, 2.0
        %v1999 = vmul.f32 %v1983, 2.0
        %v2000 = vmul.f32 %v1984, 2.0
        %v2001 = vmul.f32 %v1985, 2.0
        %v2002 = vmul.f32 %v1986, 2.0
        %v2003 = vsub.f32 1.0, %v1987
        %v2004 = vsub.f32 1.0, %v1988
        %v2005 = vsub.f32 1.0, %v1989
        %v2006 = vsub.f32 1.0, %v1990
        %v2007 = vsub.f32 1.0, %v1991
        %v2008 = vsub.f32 1.0, %v1992
        %v2009 = vsub.f32 1.0, %v1993
        %v2010 = vsub.f32 1.0, %v1994
        %v2011 = vsub.f32 1.0, %v1995
        %v2012 = vsub.f32 1.0, %v1996
        %v2013 = vsub.f32 1.0, %v1997
        %v2014 = vsub.f32 1.0, %v1998
        %v2015 = vsub.f32 1.0, %v1999
        %v2016 = vsub.f32 1.0, %v2000
        %v2017 = vsub.f32 1.0, %v2001
        %v2018 = vsub.f32 1.0, %v2002
        %v2019 = vmul.f32 %v1764, 1.442695
        %v2020 = vpow.pop %v2019
        %v2021 = vmul.f32 %v1767, 1.442695
        %v2022 = vpow.pop %v2021
        %v2023 = vmul.f32 %v1772, 1.442695
        %v2024 = vpow.pop %v2023
        %v2025 = vmul.f32 %v1775, 1.442695
        %v2026 = vpow.pop %v2025
        %v2027 = vmul.f32 %v1780, 1.442695
        %v2028 = vpow.pop %v2027
        %v2029 = vmul.f32 %v1783, 1.442695
        %v2030 = vpow.pop %v2029
        %v2031 = vmul.f32 %v1788, 1.442695
        %v2032 = vpow.pop %v2031
        %v2033 = vmul.f32 %v1791, 1.442695
        %v2034 = vpow.pop %v2033
        %v2035 = vmul.f32 %v1796, 1.442695
        %v2036 = vpow.pop %v2035
        %v2037 = vmul.f32 %v1799, 1.442695
        %v2038 = vpow.pop %v2037
        %v2039 = vmul.f32 %v1804, 1.442695
        %v2040 = vpow.pop %v2039
        %v2041 = vmul.f32 %v1807, 1.442695
        %v2042 = vpow.pop %v2041
        %v2043 = vmul.f32 %v1812, 1.442695
        %v2044 = vpow.pop %v2043
        %v2045 = vmul.f32 %v1815, 1.442695
        %v2046 = vpow.pop %v2045
        %v2047 = vmul.f32 %v1820, 1.442695
        %v2048 = vpow.pop %v2047
        %v2049 = vmul.f32 %v1823, 1.442695
        %v2050 = vpow.pop %v2049
        %v2051 = vmul.f32 %v2003, %v2020
        %v2052 = vmul.f32 %v2004, %v2022
        %v2053 = vmul.f32 %v2005, %v2024
        %v2054 = vmul.f32 %v2006, %v2026
        %v2055 = vmul.f32 %v2007, %v2028
        %v2056 = vmul.f32 %v2008, %v2030
        %v2057 = vmul.f32 %v2009, %v2032
        %v2058 = vmul.f32 %v2010, %v2034
        %v2059 = vmul.f32 %v2011, %v2036
        %v2060 = vmul.f32 %v2012, %v2038
        %v2061 = vmul.f32 %v2013, %v2040
        %v2062 = vmul.f32 %v2014, %v2042
        %v2063 = vmul.f32 %v2015, %v2044
        %v2064 = vmul.f32 %v2016, %v2046
        %v2065 = vmul.f32 %v2017, %v2048
        %v2066 = vmul.f32 %v2018, %v2050
        %v2067 = vmax.f32 %v2051, -0.999999
        %v2068 = vmax.f32 %v2052, -0.999999
        %v2069 = vmax.f32 %v2053, -0.999999
        %v2070 = vmax.f32 %v2054, -0.999999
        %v2071 = vmax.f32 %v2055, -0.999999
        %v2072 = vmax.f32 %v2056, -0.999999
        %v2073 = vmax.f32 %v2057, -0.999999
        %v2074 = vmax.f32 %v2058, -0.999999
        %v2075 = vmax.f32 %v2059, -0.999999
        %v2076 = vmax.f32 %v2060, -0.999999
        %v2077 = vmax.f32 %v2061, -0.999999
        %v2078 = vmax.f32 %v2062, -0.999999
        %v2079 = vmax.f32 %v2063, -0.999999
        %v2080 = vmax.f32 %v2064, -0.999999
        %v2081 = vmax.f32 %v2065, -0.999999
        %v2082 = vmax.f32 %v2066, -0.999999
        %v2083 = vmin.f32 %v2067, 0.999999
        %v2084 = vmin.f32 %v2068, 0.999999
        %v2085 = vmin.f32 %v2069, 0.999999
        %v2086 = vmin.f32 %v2070, 0.999999
        %v2087 = vmin.f32 %v2071, 0.999999
        %v2088 = vmin.f32 %v2072, 0.999999
        %v2089 = vmin.f32 %v2073, 0.999999
        %v2090 = vmin.f32 %v2074, 0.999999
        %v2091 = vmin.f32 %v2075, 0.999999
        %v2092 = vmin.f32 %v2076, 0.999999
        %v2093 = vmin.f32 %v2077, 0.999999
        %v2094 = vmin.f32 %v2078, 0.999999
        %v2095 = vmin.f32 %v2079, 0.999999
        %v2096 = vmin.f32 %v2080, 0.999999
        %v2097 = vmin.f32 %v2081, 0.999999
        %v2098 = vmin.f32 %v2082, 0.999999
        %v2099 = vadd.f32 %v2083, 1.0
        %v2100 = vadd.f32 %v2084, 1.0
        %v2101 = vadd.f32 %v2085, 1.0
        %v2102 = vadd.f32 %v2086, 1.0
        %v2103 = vadd.f32 %v2087, 1.0
        %v2104 = vadd.f32 %v2088, 1.0
        %v2105 = vadd.f32 %v2089, 1.0
        %v2106 = vadd.f32 %v2090, 1.0
        %v2107 = vadd.f32 %v2091, 1.0
        %v2108 = vadd.f32 %v2092, 1.0
        %v2109 = vadd.f32 %v2093, 1.0
        %v2110 = vadd.f32 %v2094, 1.0
        %v2111 = vadd.f32 %v2095, 1.0
        %v2112 = vadd.f32 %v2096, 1.0
        %v2113 = vadd.f32 %v2097, 1.0
        %v2114 = vadd.f32 %v2098, 1.0
        %v2115 = vsub.f32 1.0, %v2083
        %v2116 = vsub.f32 1.0, %v2084
        %v2117 = vsub.f32 1.0, %v2085
        %v2118 = vsub.f32 1.0, %v2086
        %v2119 = vsub.f32 1.0, %v2087
        %v2120 = vsub.f32 1.0, %v2088
        %v2121 = vsub.f32 1.0, %v2089
        %v2122 = vsub.f32 1.0, %v2090
        %v2123 = vsub.f32 1.0, %v2091
        %v2124 = vsub.f32 1.0, %v2092
        %v2125 = vsub.f32 1.0, %v2093
        %v2126 = vsub.f32 1.0, %v2094
        %v2127 = vsub.f32 1.0, %v2095
        %v2128 = vsub.f32 1.0, %v2096
        %v2129 = vsub.f32 1.0, %v2097
        %v2130 = vsub.f32 1.0, %v2098
        %v2131 = vrcp.pop %v2115
        %v2132 = vmul.f32 %v2099, %v2131
        %v2133 = vrcp.pop %v2116
        %v2134 = vmul.f32 %v2100, %v2133
        %v2135 = vrcp.pop %v2117
        %v2136 = vmul.f32 %v2101, %v2135
        %v2137 = vrcp.pop %v2118
        %v2138 = vmul.f32 %v2102, %v2137
        %v2139 = vrcp.pop %v2119
        %v2140 = vmul.f32 %v2103, %v2139
        %v2141 = vrcp.pop %v2120
        %v2142 = vmul.f32 %v2104, %v2141
        %v2143 = vrcp.pop %v2121
        %v2144 = vmul.f32 %v2105, %v2143
        %v2145 = vrcp.pop %v2122
        %v2146 = vmul.f32 %v2106, %v2145
        %v2147 = vrcp.pop %v2123
        %v2148 = vmul.f32 %v2107, %v2147
        %v2149 = vrcp.pop %v2124
        %v2150 = vmul.f32 %v2108, %v2149
        %v2151 = vrcp.pop %v2125
        %v2152 = vmul.f32 %v2109, %v2151
        %v2153 = vrcp.pop %v2126
        %v2154 = vmul.f32 %v2110, %v2153
        %v2155 = vrcp.pop %v2127
        %v2156 = vmul.f32 %v2111, %v2155
        %v2157 = vrcp.pop %v2128
        %v2158 = vmul.f32 %v2112, %v2157
        %v2159 = vrcp.pop %v2129
        %v2160 = vmul.f32 %v2113, %v2159
        %v2161 = vrcp.pop %v2130
        %v2162 = vmul.f32 %v2114, %v2161
        %v2163 = vlog2.pop %v2132
        %v2164 = vmul.f32 %v2163, 0.6931472
        %v2165 = vlog2.pop %v2134
        %v2166 = vmul.f32 %v2165, 0.6931472
        %v2167 = vlog2.pop %v2136
        %v2168 = vmul.f32 %v2167, 0.6931472
        %v2169 = vlog2.pop %v2138
        %v2170 = vmul.f32 %v2169, 0.6931472
        %v2171 = vlog2.pop %v2140
        %v2172 = vmul.f32 %v2171, 0.6931472
        %v2173 = vlog2.pop %v2142
        %v2174 = vmul.f32 %v2173, 0.6931472
        %v2175 = vlog2.pop %v2144
        %v2176 = vmul.f32 %v2175, 0.6931472
        %v2177 = vlog2.pop %v2146
        %v2178 = vmul.f32 %v2177, 0.6931472
        %v2179 = vlog2.pop %v2148
        %v2180 = vmul.f32 %v2179, 0.6931472
        %v2181 = vlog2.pop %v2150
        %v2182 = vmul.f32 %v2181, 0.6931472
        %v2183 = vlog2.pop %v2152
        %v2184 = vmul.f32 %v2183, 0.6931472
        %v2185 = vlog2.pop %v2154
        %v2186 = vmul.f32 %v2185, 0.6931472
        %v2187 = vlog2.pop %v2156
        %v2188 = vmul.f32 %v2187, 0.6931472
        %v2189 = vlog2.pop %v2158
        %v2190 = vmul.f32 %v2189, 0.6931472
        %v2191 = vlog2.pop %v2160
        %v2192 = vmul.f32 %v2191, 0.6931472
        %v2193 = vlog2.pop %v2162
        %v2194 = vmul.f32 %v2193, 0.6931472
        %v2195 = vmax.f32 %v1446, %v2164
        %v2196 = vmax.f32 %v1446, %v2166
        %v2197 = vmax.f32 %v1446, %v2168
        %v2198 = vmax.f32 %v1446, %v2170
        %v2199 = vmax.f32 %v1446, %v2172
        %v2200 = vmax.f32 %v1446, %v2174
        %v2201 = vmax.f32 %v1446, %v2176
        %v2202 = vmax.f32 %v1446, %v2178
        %v2203 = vmax.f32 %v1446, %v2180
        %v2204 = vmax.f32 %v1446, %v2182
        %v2205 = vmax.f32 %v1446, %v2184
        %v2206 = vmax.f32 %v1446, %v2186
        %v2207 = vmax.f32 %v1446, %v2188
        %v2208 = vmax.f32 %v1446, %v2190
        %v2209 = vmax.f32 %v1446, %v2192
        %v2210 = vmax.f32 %v1446, %v2194
        %v2211 = vmin.f32 %v1463, %v2195
        %v2212 = vmin.f32 %v1463, %v2196
        %v2213 = vmin.f32 %v1463, %v2197
        %v2214 = vmin.f32 %v1463, %v2198
        %v2215 = vmin.f32 %v1463, %v2199
        %v2216 = vmin.f32 %v1463, %v2200
        %v2217 = vmin.f32 %v1463, %v2201
        %v2218 = vmin.f32 %v1463, %v2202
        %v2219 = vmin.f32 %v1463, %v2203
        %v2220 = vmin.f32 %v1463, %v2204
        %v2221 = vmin.f32 %v1463, %v2205
        %v2222 = vmin.f32 %v1463, %v2206
        %v2223 = vmin.f32 %v1463, %v2207
        %v2224 = vmin.f32 %v1463, %v2208
        %v2225 = vmin.f32 %v1463, %v2209
        %v2226 = vmin.f32 %v1463, %v2210
        %v2227 = vpack.c.bf16 %v2212, %v2211
        %v2228 = vpack.c.bf16 %v2214, %v2213
        %v2229 = vpack.c.bf16 %v2216, %v2215
        %v2230 = vpack.c.bf16 %v2218, %v2217
        %v2231 = vpack.c.bf16 %v2220, %v2219
        %v2232 = vpack.c.bf16 %v2222, %v2221
        %v2233 = vpack.c.bf16 %v2224, %v2223
        %v2234 = vpack.c.bf16 %v2226, %v2225
        %2235 = vmatprep.subr.bf16.mxu0 0
        %2236 = vmatpush1.bf16.msra.mxu0 %v658
        %2237 = vmatprep.subr.bf16.mxu0 0
        %2238 = vmatpush1.bf16.msra.mxu0 %v659
        %2239 = vmatprep.subr.bf16.mxu0 0
        %2240 = vmatpush1.bf16.msra.mxu0 %v660
        %2241 = vmatprep.subr.bf16.mxu0 0
        %2242 = vmatpush1.bf16.msra.mxu0 %v661
        %2243 = vmatprep.subr.bf16.mxu0 0
        %2244 = vmatpush1.bf16.msra.mxu0 %v662
        %2245 = vmatprep.subr.bf16.mxu0 0
        %2246 = vmatpush1.bf16.msra.mxu0 %v663
        %2247 = vmatprep.subr.bf16.mxu0 0
        %2248 = vmatpush1.bf16.msra.mxu0 %v664
        %2249 = vmatprep.subr.bf16.mxu0 0
        %2250 = vmatpush1.bf16.msra.mxu0 %v665
        %2251 = vmatprep.subr.bf16.mxu0 0
        %2252 = vmatpush1.bf16.msra.mxu0 0
        %2253 = vmatprep.subr.bf16.mxu0 0
        %2254 = vmatpush1.bf16.msra.mxu0 0
        %2255 = vmatprep.subr.bf16.mxu0 0
        %2256 = vmatpush1.bf16.msra.mxu0 0
        %2257 = vmatprep.subr.bf16.mxu0 0
        %2258 = vmatpush1.bf16.msra.mxu0 0
        %2259 = vmatprep.subr.bf16.mxu0 0
        %2260 = vmatpush1.bf16.msra.mxu0 0
        %2261 = vmatprep.subr.bf16.mxu0 0
        %2262 = vmatpush1.bf16.msra.mxu0 0
        %2263 = vmatprep.subr.bf16.mxu0 0
        %2264 = vmatpush1.bf16.msra.mxu0 0
        %2265 = vmatprep.subr.bf16.mxu0 0
        %2266 = vmatpush1.bf16.msra.mxu0 0
        %2267 = vmatprep.mubr.bf16.mxu0 0
        %2268 = vmatmul.mubr.bf16.gmra.mrb[0].mxu0 %v2227
        %v2269 = vpop.f32.mrb[0].mxu0
        %v2270 = vadd.f32 %v524, %v2269
        %v2271 = vpop.f32.mrb[0].mxu0
        %v2272 = vpop.f32.mrb[0].mxu0
        %v2273 = vadd.f32 %v527, %v2272
        %v2274 = vpop.f32.mrb[0].mxu0
        %2275 = vmatprep.mubr.bf16.mxu0 0
        %2276 = vmatmul.mubr.bf16.gmra.mrb[0].mxu0 %v2228
        %v2277 = vpop.f32.mrb[0].mxu0
        %v2278 = vadd.f32 %v532, %v2277
        %v2279 = vpop.f32.mrb[0].mxu0
        %v2280 = vpop.f32.mrb[0].mxu0
        %v2281 = vadd.f32 %v535, %v2280
        %v2282 = vpop.f32.mrb[0].mxu0
        %2283 = vmatprep.mubr.bf16.mxu0 0
        %2284 = vmatmul.mubr.bf16.gmra.mrb[0].mxu0 %v2229
        %v2285 = vpop.f32.mrb[0].mxu0
        %v2286 = vadd.f32 %v540, %v2285
        %v2287 = vpop.f32.mrb[0].mxu0
        %v2288 = vpop.f32.mrb[0].mxu0
        %v2289 = vadd.f32 %v543, %v2288
        %v2290 = vpop.f32.mrb[0].mxu0
        %2291 = vmatprep.mubr.bf16.mxu0 0
        %2292 = vmatmul.mubr.bf16.gmra.mrb[0].mxu0 %v2230
        %v2293 = vpop.f32.mrb[0].mxu0
        %v2294 = vadd.f32 %v548, %v2293
        %v2295 = vpop.f32.mrb[0].mxu0
        %v2296 = vpop.f32.mrb[0].mxu0
        %v2297 = vadd.f32 %v551, %v2296
        %v2298 = vpop.f32.mrb[0].mxu0
        %2299 = vmatprep.mubr.bf16.mxu0 0
        %2300 = vmatmul.mubr.bf16.gmra.mrb[0].mxu0 %v2231
        %v2301 = vpop.f32.mrb[0].mxu0
        %v2302 = vadd.f32 %v556, %v2301
        %v2303 = vpop.f32.mrb[0].mxu0
        %v2304 = vpop.f32.mrb[0].mxu0
        %v2305 = vadd.f32 %v559, %v2304
        %v2306 = vpop.f32.mrb[0].mxu0
        %2307 = vmatprep.mubr.bf16.mxu0 0
        %2308 = vmatmul.mubr.bf16.gmra.mrb[0].mxu0 %v2232
        %v2309 = vpop.f32.mrb[0].mxu0
        %v2310 = vadd.f32 %v564, %v2309
        %v2311 = vpop.f32.mrb[0].mxu0
        %v2312 = vpop.f32.mrb[0].mxu0
        %v2313 = vadd.f32 %v567, %v2312
        %v2314 = vpop.f32.mrb[0].mxu0
        %2315 = vmatprep.mubr.bf16.mxu0 0
        %2316 = vmatmul.mubr.bf16.gmra.mrb[0].mxu0 %v2233
        %v2317 = vpop.f32.mrb[0].mxu0
        %v2318 = vadd.f32 %v572, %v2317
        %v2319 = vpop.f32.mrb[0].mxu0
        %v2320 = vpop.f32.mrb[0].mxu0
        %v2321 = vadd.f32 %v575, %v2320
        %v2322 = vpop.f32.mrb[0].mxu0
        %2323 = vmatprep.mubr.bf16.mxu0 0
        %2324 = vmatmul.mubr.bf16.gmra.mrb[0].mxu0 %v2234
        %v2325 = vpop.f32.mrb[0].mxu0
        %v2326 = vadd.f32 %v580, %v2325
        %v2327 = vpop.f32.mrb[0].mxu0
        %v2328 = vpop.f32.mrb[0].mxu0
        %v2329 = vadd.f32 %v583, %v2328
        %v2330 = vpop.f32.mrb[0].mxu0
        %2331 = vdwg.mxu0
        %v2332 = vtanh.pop %v2270
        %v2333 = vtanh.pop %v2273
        %v2334 = vtanh.pop %v2278
        %v2335 = vtanh.pop %v2281
        %v2336 = vtanh.pop %v2286
        %v2337 = vtanh.pop %v2289
        %v2338 = vtanh.pop %v2294
        %v2339 = vtanh.pop %v2297
        %v2340 = vtanh.pop %v2302
        %v2341 = vtanh.pop %v2305
        %v2342 = vtanh.pop %v2310
        %v2343 = vtanh.pop %v2313
        %v2344 = vtanh.pop %v2318
        %v2345 = vtanh.pop %v2321
        %v2346 = vtanh.pop %v2326
        %v2347 = vtanh.pop %v2329
        %v2348 = vand.u32 2147483647, %v2332
        %v2349 = vand.u32 2147483647, %v2333
        %v2350 = vand.u32 2147483647, %v2334
        %v2351 = vand.u32 2147483647, %v2335
        %v2352 = vand.u32 2147483647, %v2336
        %v2353 = vand.u32 2147483647, %v2337
        %v2354 = vand.u32 2147483647, %v2338
        %v2355 = vand.u32 2147483647, %v2339
        %v2356 = vand.u32 2147483647, %v2340
        %v2357 = vand.u32 2147483647, %v2341
        %v2358 = vand.u32 2147483647, %v2342
        %v2359 = vand.u32 2147483647, %v2343
        %v2360 = vand.u32 2147483647, %v2344
        %v2361 = vand.u32 2147483647, %v2345
        %v2362 = vand.u32 2147483647, %v2346
        %v2363 = vand.u32 2147483647, %v2347
        %v2364 = vmax.f32 %v2348, 1e-12
        %v2365 = vmax.f32 %v2349, 1e-12
        %v2366 = vmax.f32 %v2350, 1e-12
        %v2367 = vmax.f32 %v2351, 1e-12
        %v2368 = vmax.f32 %v2352, 1e-12
        %v2369 = vmax.f32 %v2353, 1e-12
        %v2370 = vmax.f32 %v2354, 1e-12
        %v2371 = vmax.f32 %v2355, 1e-12
        %v2372 = vmax.f32 %v2356, 1e-12
        %v2373 = vmax.f32 %v2357, 1e-12
        %v2374 = vmax.f32 %v2358, 1e-12
        %v2375 = vmax.f32 %v2359, 1e-12
        %v2376 = vmax.f32 %v2360, 1e-12
        %v2377 = vmax.f32 %v2361, 1e-12
        %v2378 = vmax.f32 %v2362, 1e-12
        %v2379 = vmax.f32 %v2363, 1e-12
        %v2380 = vlog2.pop %v2364
        %v2381 = vmul.f32 %v2380, 0.6931472
        %v2382 = vlog2.pop %v2365
        %v2383 = vmul.f32 %v2382, 0.6931472
        %v2384 = vlog2.pop %v2366
        %v2385 = vmul.f32 %v2384, 0.6931472
        %v2386 = vlog2.pop %v2367
        %v2387 = vmul.f32 %v2386, 0.6931472
        %v2388 = vlog2.pop %v2368
        %v2389 = vmul.f32 %v2388, 0.6931472
        %v2390 = vlog2.pop %v2369
        %v2391 = vmul.f32 %v2390, 0.6931472
        %v2392 = vlog2.pop %v2370
        %v2393 = vmul.f32 %v2392, 0.6931472
        %v2394 = vlog2.pop %v2371
        %v2395 = vmul.f32 %v2394, 0.6931472
        %v2396 = vlog2.pop %v2372
        %v2397 = vmul.f32 %v2396, 0.6931472
        %v2398 = vlog2.pop %v2373
        %v2399 = vmul.f32 %v2398, 0.6931472
        %v2400 = vlog2.pop %v2374
        %v2401 = vmul.f32 %v2400, 0.6931472
        %v2402 = vlog2.pop %v2375
        %v2403 = vmul.f32 %v2402, 0.6931472
        %v2404 = vlog2.pop %v2376
        %v2405 = vmul.f32 %v2404, 0.6931472
        %v2406 = vlog2.pop %v2377
        %v2407 = vmul.f32 %v2406, 0.6931472
        %v2408 = vlog2.pop %v2378
        %v2409 = vmul.f32 %v2408, 0.6931472
        %v2410 = vlog2.pop %v2379
        %v2411 = vmul.f32 %v2410, 0.6931472
        %vm2412 = vcmp.lt.f32.partialorder %v2332, 0.0
        %vm2413 = vcmp.lt.f32.partialorder %v2333, 0.0
        %vm2414 = vcmp.lt.f32.partialorder %v2334, 0.0
        %vm2415 = vcmp.lt.f32.partialorder %v2335, 0.0
        %vm2416 = vcmp.lt.f32.partialorder %v2336, 0.0
        %vm2417 = vcmp.lt.f32.partialorder %v2337, 0.0
        %vm2418 = vcmp.lt.f32.partialorder %v2338, 0.0
        %vm2419 = vcmp.lt.f32.partialorder %v2339, 0.0
        %vm2420 = vcmp.lt.f32.partialorder %v2340, 0.0
        %vm2421 = vcmp.lt.f32.partialorder %v2341, 0.0
        %vm2422 = vcmp.lt.f32.partialorder %v2342, 0.0
        %vm2423 = vcmp.lt.f32.partialorder %v2343, 0.0
        %vm2424 = vcmp.lt.f32.partialorder %v2344, 0.0
        %vm2425 = vcmp.lt.f32.partialorder %v2345, 0.0
        %vm2426 = vcmp.lt.f32.partialorder %v2346, 0.0
        %vm2427 = vcmp.lt.f32.partialorder %v2347, 0.0
        %v2428 = vsel %vm2412, 1, 0
        %v2429 = vsel %vm2413, 1, 0
        %v2430 = vsel %vm2414, 1, 0
        %v2431 = vsel %vm2415, 1, 0
        %v2432 = vsel %vm2416, 1, 0
        %v2433 = vsel %vm2417, 1, 0
        %v2434 = vsel %vm2418, 1, 0
        %v2435 = vsel %vm2419, 1, 0
        %v2436 = vsel %vm2420, 1, 0
        %v2437 = vsel %vm2421, 1, 0
        %v2438 = vsel %vm2422, 1, 0
        %v2439 = vsel %vm2423, 1, 0
        %v2440 = vsel %vm2424, 1, 0
        %v2441 = vsel %vm2425, 1, 0
        %v2442 = vsel %vm2426, 1, 0
        %v2443 = vsel %vm2427, 1, 0
        %v2444 = vcvt.s32.f32 %v2428
        %v2445 = vcvt.s32.f32 %v2429
        %v2446 = vcvt.s32.f32 %v2430
        %v2447 = vcvt.s32.f32 %v2431
        %v2448 = vcvt.s32.f32 %v2432
        %v2449 = vcvt.s32.f32 %v2433
        %v2450 = vcvt.s32.f32 %v2434
        %v2451 = vcvt.s32.f32 %v2435
        %v2452 = vcvt.s32.f32 %v2436
        %v2453 = vcvt.s32.f32 %v2437
        %v2454 = vcvt.s32.f32 %v2438
        %v2455 = vcvt.s32.f32 %v2439
        %v2456 = vcvt.s32.f32 %v2440
        %v2457 = vcvt.s32.f32 %v2441
        %v2458 = vcvt.s32.f32 %v2442
        %v2459 = vcvt.s32.f32 %v2443
        %v2460 = vpack.c.bf16 %v2445, %v2444
        %v2461 = vpack.c.bf16 %v2447, %v2446
        %v2462 = vpack.c.bf16 %v2449, %v2448
        %v2463 = vpack.c.bf16 %v2451, %v2450
        %v2464 = vpack.c.bf16 %v2453, %v2452
        %v2465 = vpack.c.bf16 %v2455, %v2454
        %v2466 = vpack.c.bf16 %v2457, %v2456
        %v2467 = vpack.c.bf16 %v2459, %v2458
        %v2468 = vpack.c.bf16 %v2383, %v2381
        %v2469 = vpack.c.bf16 %v2387, %v2385
        %v2470 = vpack.c.bf16 %v2391, %v2389
        %v2471 = vpack.c.bf16 %v2395, %v2393
        %v2472 = vpack.c.bf16 %v2399, %v2397
        %v2473 = vpack.c.bf16 %v2403, %v2401
        %v2474 = vpack.c.bf16 %v2407, %v2405
        %v2475 = vpack.c.bf16 %v2411, %v2409
        %2476 = vmatprep.subr.bf16.mxu0 0
        %2477 = vmatpush1.bf16.msra.mxu0 %v963
        %2478 = vmatprep.subr.bf16.mxu0 0
        %2479 = vmatpush1.bf16.msra.mxu0 %v964
        %2480 = vmatprep.subr.bf16.mxu0 0
        %2481 = vmatpush1.bf16.msra.mxu0 %v965
        %2482 = vmatprep.subr.bf16.mxu0 0
        %2483 = vmatpush1.bf16.msra.mxu0 %v966
        %2484 = vmatprep.subr.bf16.mxu0 0
        %2485 = vmatpush1.bf16.msra.mxu0 %v967
        %2486 = vmatprep.subr.bf16.mxu0 0
        %2487 = vmatpush1.bf16.msra.mxu0 %v968
        %2488 = vmatprep.subr.bf16.mxu0 0
        %2489 = vmatpush1.bf16.msra.mxu0 %v969
        %2490 = vmatprep.subr.bf16.mxu0 0
        %2491 = vmatpush1.bf16.msra.mxu0 %v970
        %2492 = vmatprep.subr.bf16.mxu0 0
        %2493 = vmatpush1.bf16.msra.mxu0 0
        %2494 = vmatprep.subr.bf16.mxu0 0
        %2495 = vmatpush1.bf16.msra.mxu0 0
        %2496 = vmatprep.subr.bf16.mxu0 0
        %2497 = vmatpush1.bf16.msra.mxu0 0
        %2498 = vmatprep.subr.bf16.mxu0 0
        %2499 = vmatpush1.bf16.msra.mxu0 0
        %2500 = vmatprep.subr.bf16.mxu0 0
        %2501 = vmatpush1.bf16.msra.mxu0 0
        %2502 = vmatprep.subr.bf16.mxu0 0
        %2503 = vmatpush1.bf16.msra.mxu0 0
        %2504 = vmatprep.subr.bf16.mxu0 0
        %2505 = vmatpush1.bf16.msra.mxu0 0
        %2506 = vmatprep.subr.bf16.mxu0 0
        %2507 = vmatpush1.bf16.msra.mxu0 0
        %2508 = vmatprep.mubr.bf16.mxu0 0
        %2509 = vmatmul.mubr.bf16.gmra.mrb[0].mxu0 %v2468
        %v2510 = vpop.f32.mrb[0].mxu0
        %v2511 = vadd.f32 0.0, %v2510
        %v2512 = vpop.f32.mrb[0].mxu0
        %v2513 = vpop.f32.mrb[0].mxu0
        %v2514 = vadd.f32 0.0, %v2513
        %v2515 = vpop.f32.mrb[0].mxu0
        %2516 = vmatprep.mubr.bf16.mxu0 0
        %2517 = vmatmul.mubr.bf16.gmra.mrb[0].mxu0 %v2469
        %v2518 = vpop.f32.mrb[0].mxu0
        %v2519 = vadd.f32 0.0, %v2518
        %v2520 = vpop.f32.mrb[0].mxu0
        %v2521 = vpop.f32.mrb[0].mxu0
        %v2522 = vadd.f32 0.0, %v2521
        %v2523 = vpop.f32.mrb[0].mxu0
        %2524 = vmatprep.mubr.bf16.mxu0 0
        %2525 = vmatmul.mubr.bf16.gmra.mrb[0].mxu0 %v2470
        %v2526 = vpop.f32.mrb[0].mxu0
        %v2527 = vadd.f32 0.0, %v2526
        %v2528 = vpop.f32.mrb[0].mxu0
        %v2529 = vpop.f32.mrb[0].mxu0
        %v2530 = vadd.f32 0.0, %v2529
        %v2531 = vpop.f32.mrb[0].mxu0
        %2532 = vmatprep.mubr.bf16.mxu0 0
        %2533 = vmatmul.mubr.bf16.gmra.mrb[0].mxu0 %v2471
        %v2534 = vpop.f32.mrb[0].mxu0
        %v2535 = vadd.f32 0.0, %v2534
        %v2536 = vpop.f32.mrb[0].mxu0
        %v2537 = vpop.f32.mrb[0].mxu0
        %v2538 = vadd.f32 0.0, %v2537
        %v2539 = vpop.f32.mrb[0].mxu0
        %2540 = vmatprep.mubr.bf16.mxu0 0
        %2541 = vmatmul.mubr.bf16.gmra.mrb[0].mxu0 %v2472
        %v2542 = vpop.f32.mrb[0].mxu0
        %v2543 = vadd.f32 0.0, %v2542
        %v2544 = vpop.f32.mrb[0].mxu0
        %v2545 = vpop.f32.mrb[0].mxu0
        %v2546 = vadd.f32 0.0, %v2545
        %v2547 = vpop.f32.mrb[0].mxu0
        %2548 = vmatprep.mubr.bf16.mxu0 0
        %2549 = vmatmul.mubr.bf16.gmra.mrb[0].mxu0 %v2473
        %v2550 = vpop.f32.mrb[0].mxu0
        %v2551 = vadd.f32 0.0, %v2550
        %v2552 = vpop.f32.mrb[0].mxu0
        %v2553 = vpop.f32.mrb[0].mxu0
        %v2554 = vadd.f32 0.0, %v2553
        %v2555 = vpop.f32.mrb[0].mxu0
        %2556 = vmatprep.mubr.bf16.mxu0 0
        %2557 = vmatmul.mubr.bf16.gmra.mrb[0].mxu0 %v2474
        %v2558 = vpop.f32.mrb[0].mxu0
        %v2559 = vadd.f32 0.0, %v2558
        %v2560 = vpop.f32.mrb[0].mxu0
        %v2561 = vpop.f32.mrb[0].mxu0
        %v2562 = vadd.f32 0.0, %v2561
        %v2563 = vpop.f32.mrb[0].mxu0
        %2564 = vmatprep.mubr.bf16.mxu0 0
        %2565 = vmatmul.mubr.bf16.gmra.mrb[0].mxu0 %v2475
        %v2566 = vpop.f32.mrb[0].mxu0
        %v2567 = vadd.f32 0.0, %v2566
        %v2568 = vpop.f32.mrb[0].mxu0
        %v2569 = vpop.f32.mrb[0].mxu0
        %v2570 = vadd.f32 0.0, %v2569
        %v2571 = vpop.f32.mrb[0].mxu0
        %2572 = vdwg.mxu0
        %2573 = vmatprep.subr.bf16.mxu0 0
        %2574 = vmatpush1.bf16.msra.mxu0 %v963
        %2575 = vmatprep.subr.bf16.mxu0 0
        %2576 = vmatpush1.bf16.msra.mxu0 %v964
        %2577 = vmatprep.subr.bf16.mxu0 0
        %2578 = vmatpush1.bf16.msra.mxu0 %v965
        %2579 = vmatprep.subr.bf16.mxu0 0
        %2580 = vmatpush1.bf16.msra.mxu0 %v966
        %2581 = vmatprep.subr.bf16.mxu0 0
        %2582 = vmatpush1.bf16.msra.mxu0 %v967
        %2583 = vmatprep.subr.bf16.mxu0 0
        %2584 = vmatpush1.bf16.msra.mxu0 %v968
        %2585 = vmatprep.subr.bf16.mxu0 0
        %2586 = vmatpush1.bf16.msra.mxu0 %v969
        %2587 = vmatprep.subr.bf16.mxu0 0
        %2588 = vmatpush1.bf16.msra.mxu0 %v970
        %2589 = vmatprep.subr.bf16.mxu0 0
        %2590 = vmatpush1.bf16.msra.mxu0 0
        %2591 = vmatprep.subr.bf16.mxu0 0
        %2592 = vmatpush1.bf16.msra.mxu0 0
        %2593 = vmatprep.subr.bf16.mxu0 0
        %2594 = vmatpush1.bf16.msra.mxu0 0
        %2595 = vmatprep.subr.bf16.mxu0 0
        %2596 = vmatpush1.bf16.msra.mxu0 0
        %2597 = vmatprep.subr.bf16.mxu0 0
        %2598 = vmatpush1.bf16.msra.mxu0 0
        %2599 = vmatprep.subr.bf16.mxu0 0
        %2600 = vmatpush1.bf16.msra.mxu0 0
        %2601 = vmatprep.subr.bf16.mxu0 0
        %2602 = vmatpush1.bf16.msra.mxu0 0
        %2603 = vmatprep.subr.bf16.mxu0 0
        %2604 = vmatpush1.bf16.msra.mxu0 0
        %2605 = vmatprep.mubr.bf16.mxu0 0
        %2606 = vmatmul.mubr.bf16.gmra.mrb[0].mxu0 %v2460
        %v2607 = vpop.f32.mrb[0].mxu0
        %v2608 = vadd.f32 0.0, %v2607
        %v2609 = vpop.f32.mrb[0].mxu0
        %v2610 = vpop.f32.mrb[0].mxu0
        %v2611 = vadd.f32 0.0, %v2610
        %v2612 = vpop.f32.mrb[0].mxu0
        %2613 = vmatprep.mubr.bf16.mxu0 0
        %2614 = vmatmul.mubr.bf16.gmra.mrb[0].mxu0 %v2461
        %v2615 = vpop.f32.mrb[0].mxu0
        %v2616 = vadd.f32 0.0, %v2615
        %v2617 = vpop.f32.mrb[0].mxu0
        %v2618 = vpop.f32.mrb[0].mxu0
        %v2619 = vadd.f32 0.0, %v2618
        %v2620 = vpop.f32.mrb[0].mxu0
        %2621 = vmatprep.mubr.bf16.mxu0 0
        %2622 = vmatmul.mubr.bf16.gmra.mrb[0].mxu0 %v2462
        %v2623 = vpop.f32.mrb[0].mxu0
        %v2624 = vadd.f32 0.0, %v2623
        %v2625 = vpop.f32.mrb[0].mxu0
        %v2626 = vpop.f32.mrb[0].mxu0
        %v2627 = vadd.f32 0.0, %v2626
        %v2628 = vpop.f32.mrb[0].mxu0
        %2629 = vmatprep.mubr.bf16.mxu0 0
        %2630 = vmatmul.mubr.bf16.gmra.mrb[0].mxu0 %v2463
        %v2631 = vpop.f32.mrb[0].mxu0
        %v2632 = vadd.f32 0.0, %v2631
        %v2633 = vpop.f32.mrb[0].mxu0
        %v2634 = vpop.f32.mrb[0].mxu0
        %v2635 = vadd.f32 0.0, %v2634
        %v2636 = vpop.f32.mrb[0].mxu0
        %2637 = vmatprep.mubr.bf16.mxu0 0
        %2638 = vmatmul.mubr.bf16.gmra.mrb[0].mxu0 %v2464
        %v2639 = vpop.f32.mrb[0].mxu0
        %v2640 = vadd.f32 0.0, %v2639
        %v2641 = vpop.f32.mrb[0].mxu0
        %v2642 = vpop.f32.mrb[0].mxu0
        %v2643 = vadd.f32 0.0, %v2642
        %v2644 = vpop.f32.mrb[0].mxu0
        %2645 = vmatprep.mubr.bf16.mxu0 0
        %2646 = vmatmul.mubr.bf16.gmra.mrb[0].mxu0 %v2465
        %v2647 = vpop.f32.mrb[0].mxu0
        %v2648 = vadd.f32 0.0, %v2647
        %v2649 = vpop.f32.mrb[0].mxu0
        %v2650 = vpop.f32.mrb[0].mxu0
        %v2651 = vadd.f32 0.0, %v2650
        %v2652 = vpop.f32.mrb[0].mxu0
        %2653 = vmatprep.mubr.bf16.mxu0 0
        %2654 = vmatmul.mubr.bf16.gmra.mrb[0].mxu0 %v2466
        %v2655 = vpop.f32.mrb[0].mxu0
        %v2656 = vadd.f32 0.0, %v2655
        %v2657 = vpop.f32.mrb[0].mxu0
        %v2658 = vpop.f32.mrb[0].mxu0
        %v2659 = vadd.f32 0.0, %v2658
        %v2660 = vpop.f32.mrb[0].mxu0
        %2661 = vmatprep.mubr.bf16.mxu0 0
        %2662 = vmatmul.mubr.bf16.gmra.mrb[0].mxu0 %v2467
        %v2663 = vpop.f32.mrb[0].mxu0
        %v2664 = vadd.f32 0.0, %v2663
        %v2665 = vpop.f32.mrb[0].mxu0
        %v2666 = vpop.f32.mrb[0].mxu0
        %v2667 = vadd.f32 0.0, %v2666
        %v2668 = vpop.f32.mrb[0].mxu0
        %2669 = vdwg.mxu0
        %v2670 = vmul.f32 %v2608, 0.5
        %v2671 = vmul.f32 %v2611, 0.5
        %v2672 = vmul.f32 %v2616, 0.5
        %v2673 = vmul.f32 %v2619, 0.5
        %v2674 = vmul.f32 %v2624, 0.5
        %v2675 = vmul.f32 %v2627, 0.5
        %v2676 = vmul.f32 %v2632, 0.5
        %v2677 = vmul.f32 %v2635, 0.5
        %v2678 = vmul.f32 %v2640, 0.5
        %v2679 = vmul.f32 %v2643, 0.5
        %v2680 = vmul.f32 %v2648, 0.5
        %v2681 = vmul.f32 %v2651, 0.5
        %v2682 = vmul.f32 %v2656, 0.5
        %v2683 = vmul.f32 %v2659, 0.5
        %v2684 = vmul.f32 %v2664, 0.5
        %v2685 = vmul.f32 %v2667, 0.5
        %v2686 = vfloor.f32 %v2670
        %v2687 = vfloor.f32 %v2671
        %v2688 = vfloor.f32 %v2672
        %v2689 = vfloor.f32 %v2673
        %v2690 = vfloor.f32 %v2674
        %v2691 = vfloor.f32 %v2675
        %v2692 = vfloor.f32 %v2676
        %v2693 = vfloor.f32 %v2677
        %v2694 = vfloor.f32 %v2678
        %v2695 = vfloor.f32 %v2679
        %v2696 = vfloor.f32 %v2680
        %v2697 = vfloor.f32 %v2681
        %v2698 = vfloor.f32 %v2682
        %v2699 = vfloor.f32 %v2683
        %v2700 = vfloor.f32 %v2684
        %v2701 = vfloor.f32 %v2685
        %v2702 = vmul.f32 %v2686, 2.0
        %v2703 = vmul.f32 %v2687, 2.0
        %v2704 = vmul.f32 %v2688, 2.0
        %v2705 = vmul.f32 %v2689, 2.0
        %v2706 = vmul.f32 %v2690, 2.0
        %v2707 = vmul.f32 %v2691, 2.0
        %v2708 = vmul.f32 %v2692, 2.0
        %v2709 = vmul.f32 %v2693, 2.0
        %v2710 = vmul.f32 %v2694, 2.0
        %v2711 = vmul.f32 %v2695, 2.0
        %v2712 = vmul.f32 %v2696, 2.0
        %v2713 = vmul.f32 %v2697, 2.0
        %v2714 = vmul.f32 %v2698, 2.0
        %v2715 = vmul.f32 %v2699, 2.0
        %v2716 = vmul.f32 %v2700, 2.0
        %v2717 = vmul.f32 %v2701, 2.0
        %v2718 = vsub.f32 %v2608, %v2702
        %v2719 = vsub.f32 %v2611, %v2703
        %v2720 = vsub.f32 %v2616, %v2704
        %v2721 = vsub.f32 %v2619, %v2705
        %v2722 = vsub.f32 %v2624, %v2706
        %v2723 = vsub.f32 %v2627, %v2707
        %v2724 = vsub.f32 %v2632, %v2708
        %v2725 = vsub.f32 %v2635, %v2709
        %v2726 = vsub.f32 %v2640, %v2710
        %v2727 = vsub.f32 %v2643, %v2711
        %v2728 = vsub.f32 %v2648, %v2712
        %v2729 = vsub.f32 %v2651, %v2713
        %v2730 = vsub.f32 %v2656, %v2714
        %v2731 = vsub.f32 %v2659, %v2715
        %v2732 = vsub.f32 %v2664, %v2716
        %v2733 = vsub.f32 %v2667, %v2717
        %v2734 = vmul.f32 %v2718, 2.0
        %v2735 = vmul.f32 %v2719, 2.0
        %v2736 = vmul.f32 %v2720, 2.0
        %v2737 = vmul.f32 %v2721, 2.0
        %v2738 = vmul.f32 %v2722, 2.0
        %v2739 = vmul.f32 %v2723, 2.0
        %v2740 = vmul.f32 %v2724, 2.0
        %v2741 = vmul.f32 %v2725, 2.0
        %v2742 = vmul.f32 %v2726, 2.0
        %v2743 = vmul.f32 %v2727, 2.0
        %v2744 = vmul.f32 %v2728, 2.0
        %v2745 = vmul.f32 %v2729, 2.0
        %v2746 = vmul.f32 %v2730, 2.0
        %v2747 = vmul.f32 %v2731, 2.0
        %v2748 = vmul.f32 %v2732, 2.0
        %v2749 = vmul.f32 %v2733, 2.0
        %v2750 = vsub.f32 1.0, %v2734
        %v2751 = vsub.f32 1.0, %v2735
        %v2752 = vsub.f32 1.0, %v2736
        %v2753 = vsub.f32 1.0, %v2737
        %v2754 = vsub.f32 1.0, %v2738
        %v2755 = vsub.f32 1.0, %v2739
        %v2756 = vsub.f32 1.0, %v2740
        %v2757 = vsub.f32 1.0, %v2741
        %v2758 = vsub.f32 1.0, %v2742
        %v2759 = vsub.f32 1.0, %v2743
        %v2760 = vsub.f32 1.0, %v2744
        %v2761 = vsub.f32 1.0, %v2745
        %v2762 = vsub.f32 1.0, %v2746
        %v2763 = vsub.f32 1.0, %v2747
        %v2764 = vsub.f32 1.0, %v2748
        %v2765 = vsub.f32 1.0, %v2749
        %v2766 = vmul.f32 %v2511, 1.442695
        %v2767 = vpow.pop %v2766
        %v2768 = vmul.f32 %v2514, 1.442695
        %v2769 = vpow.pop %v2768
        %v2770 = vmul.f32 %v2519, 1.442695
        %v2771 = vpow.pop %v2770
        %v2772 = vmul.f32 %v2522, 1.442695
        %v2773 = vpow.pop %v2772
        %v2774 = vmul.f32 %v2527, 1.442695
        %v2775 = vpow.pop %v2774
        %v2776 = vmul.f32 %v2530, 1.442695
        %v2777 = vpow.pop %v2776
        %v2778 = vmul.f32 %v2535, 1.442695
        %v2779 = vpow.pop %v2778
        %v2780 = vmul.f32 %v2538, 1.442695
        %v2781 = vpow.pop %v2780
        %v2782 = vmul.f32 %v2543, 1.442695
        %v2783 = vpow.pop %v2782
        %v2784 = vmul.f32 %v2546, 1.442695
        %v2785 = vpow.pop %v2784
        %v2786 = vmul.f32 %v2551, 1.442695
        %v2787 = vpow.pop %v2786
        %v2788 = vmul.f32 %v2554, 1.442695
        %v2789 = vpow.pop %v2788
        %v2790 = vmul.f32 %v2559, 1.442695
        %v2791 = vpow.pop %v2790
        %v2792 = vmul.f32 %v2562, 1.442695
        %v2793 = vpow.pop %v2792
        %v2794 = vmul.f32 %v2567, 1.442695
        %v2795 = vpow.pop %v2794
        %v2796 = vmul.f32 %v2570, 1.442695
        %v2797 = vpow.pop %v2796
        %v2798 = vmul.f32 %v2750, %v2767
        %v2799 = vmul.f32 %v2751, %v2769
        %v2800 = vmul.f32 %v2752, %v2771
        %v2801 = vmul.f32 %v2753, %v2773
        %v2802 = vmul.f32 %v2754, %v2775
        %v2803 = vmul.f32 %v2755, %v2777
        %v2804 = vmul.f32 %v2756, %v2779
        %v2805 = vmul.f32 %v2757, %v2781
        %v2806 = vmul.f32 %v2758, %v2783
        %v2807 = vmul.f32 %v2759, %v2785
        %v2808 = vmul.f32 %v2760, %v2787
        %v2809 = vmul.f32 %v2761, %v2789
        %v2810 = vmul.f32 %v2762, %v2791
        %v2811 = vmul.f32 %v2763, %v2793
        %v2812 = vmul.f32 %v2764, %v2795
        %v2813 = vmul.f32 %v2765, %v2797
        %v2814 = vmax.f32 %v2798, -0.999999
        %v2815 = vmax.f32 %v2799, -0.999999
        %v2816 = vmax.f32 %v2800, -0.999999
        %v2817 = vmax.f32 %v2801, -0.999999
        %v2818 = vmax.f32 %v2802, -0.999999
        %v2819 = vmax.f32 %v2803, -0.999999
        %v2820 = vmax.f32 %v2804, -0.999999
        %v2821 = vmax.f32 %v2805, -0.999999
        %v2822 = vmax.f32 %v2806, -0.999999
        %v2823 = vmax.f32 %v2807, -0.999999
        %v2824 = vmax.f32 %v2808, -0.999999
        %v2825 = vmax.f32 %v2809, -0.999999
        %v2826 = vmax.f32 %v2810, -0.999999
        %v2827 = vmax.f32 %v2811, -0.999999
        %v2828 = vmax.f32 %v2812, -0.999999
        %v2829 = vmax.f32 %v2813, -0.999999
        %v2830 = vmin.f32 %v2814, 0.999999
        %v2831 = vmin.f32 %v2815, 0.999999
        %v2832 = vmin.f32 %v2816, 0.999999
        %v2833 = vmin.f32 %v2817, 0.999999
        %v2834 = vmin.f32 %v2818, 0.999999
        %v2835 = vmin.f32 %v2819, 0.999999
        %v2836 = vmin.f32 %v2820, 0.999999
        %v2837 = vmin.f32 %v2821, 0.999999
        %v2838 = vmin.f32 %v2822, 0.999999
        %v2839 = vmin.f32 %v2823, 0.999999
        %v2840 = vmin.f32 %v2824, 0.999999
        %v2841 = vmin.f32 %v2825, 0.999999
        %v2842 = vmin.f32 %v2826, 0.999999
        %v2843 = vmin.f32 %v2827, 0.999999
        %v2844 = vmin.f32 %v2828, 0.999999
        %v2845 = vmin.f32 %v2829, 0.999999
        %v2846 = vadd.f32 %v2830, 1.0
        %v2847 = vadd.f32 %v2831, 1.0
        %v2848 = vadd.f32 %v2832, 1.0
        %v2849 = vadd.f32 %v2833, 1.0
        %v2850 = vadd.f32 %v2834, 1.0
        %v2851 = vadd.f32 %v2835, 1.0
        %v2852 = vadd.f32 %v2836, 1.0
        %v2853 = vadd.f32 %v2837, 1.0
        %v2854 = vadd.f32 %v2838, 1.0
        %v2855 = vadd.f32 %v2839, 1.0
        %v2856 = vadd.f32 %v2840, 1.0
        %v2857 = vadd.f32 %v2841, 1.0
        %v2858 = vadd.f32 %v2842, 1.0
        %v2859 = vadd.f32 %v2843, 1.0
        %v2860 = vadd.f32 %v2844, 1.0
        %v2861 = vadd.f32 %v2845, 1.0
        %v2862 = vsub.f32 1.0, %v2830
        %v2863 = vsub.f32 1.0, %v2831
        %v2864 = vsub.f32 1.0, %v2832
        %v2865 = vsub.f32 1.0, %v2833
        %v2866 = vsub.f32 1.0, %v2834
        %v2867 = vsub.f32 1.0, %v2835
        %v2868 = vsub.f32 1.0, %v2836
        %v2869 = vsub.f32 1.0, %v2837
        %v2870 = vsub.f32 1.0, %v2838
        %v2871 = vsub.f32 1.0, %v2839
        %v2872 = vsub.f32 1.0, %v2840
        %v2873 = vsub.f32 1.0, %v2841
        %v2874 = vsub.f32 1.0, %v2842
        %v2875 = vsub.f32 1.0, %v2843
        %v2876 = vsub.f32 1.0, %v2844
        %v2877 = vsub.f32 1.0, %v2845
        %v2878 = vrcp.pop %v2862
        %v2879 = vmul.f32 %v2846, %v2878
        %v2880 = vrcp.pop %v2863
        %v2881 = vmul.f32 %v2847, %v2880
        %v2882 = vrcp.pop %v2864
        %v2883 = vmul.f32 %v2848, %v2882
        %v2884 = vrcp.pop %v2865
        %v2885 = vmul.f32 %v2849, %v2884
        %v2886 = vrcp.pop %v2866
        %v2887 = vmul.f32 %v2850, %v2886
        %v2888 = vrcp.pop %v2867
        %v2889 = vmul.f32 %v2851, %v2888
        %v2890 = vrcp.pop %v2868
        %v2891 = vmul.f32 %v2852, %v2890
        %v2892 = vrcp.pop %v2869
        %v2893 = vmul.f32 %v2853, %v2892
        %v2894 = vrcp.pop %v2870
        %v2895 = vmul.f32 %v2854, %v2894
        %v2896 = vrcp.pop %v2871
        %v2897 = vmul.f32 %v2855, %v2896
        %v2898 = vrcp.pop %v2872
        %v2899 = vmul.f32 %v2856, %v2898
        %v2900 = vrcp.pop %v2873
        %v2901 = vmul.f32 %v2857, %v2900
        %v2902 = vrcp.pop %v2874
        %v2903 = vmul.f32 %v2858, %v2902
        %v2904 = vrcp.pop %v2875
        %v2905 = vmul.f32 %v2859, %v2904
        %v2906 = vrcp.pop %v2876
        %v2907 = vmul.f32 %v2860, %v2906
        %v2908 = vrcp.pop %v2877
        %v2909 = vmul.f32 %v2861, %v2908
        %v2910 = vlog2.pop %v2879
        %v2911 = vmul.f32 %v2910, 0.6931472
        %v2912 = vlog2.pop %v2881
        %v2913 = vmul.f32 %v2912, 0.6931472
        %v2914 = vlog2.pop %v2883
        %v2915 = vmul.f32 %v2914, 0.6931472
        %v2916 = vlog2.pop %v2885
        %v2917 = vmul.f32 %v2916, 0.6931472
        %v2918 = vlog2.pop %v2887
        %v2919 = vmul.f32 %v2918, 0.6931472
        %v2920 = vlog2.pop %v2889
        %v2921 = vmul.f32 %v2920, 0.6931472
        %v2922 = vlog2.pop %v2891
        %v2923 = vmul.f32 %v2922, 0.6931472
        %v2924 = vlog2.pop %v2893
        %v2925 = vmul.f32 %v2924, 0.6931472
        %v2926 = vlog2.pop %v2895
        %v2927 = vmul.f32 %v2926, 0.6931472
        %v2928 = vlog2.pop %v2897
        %v2929 = vmul.f32 %v2928, 0.6931472
        %v2930 = vlog2.pop %v2899
        %v2931 = vmul.f32 %v2930, 0.6931472
        %v2932 = vlog2.pop %v2901
        %v2933 = vmul.f32 %v2932, 0.6931472
        %v2934 = vlog2.pop %v2903
        %v2935 = vmul.f32 %v2934, 0.6931472
        %v2936 = vlog2.pop %v2905
        %v2937 = vmul.f32 %v2936, 0.6931472
        %v2938 = vlog2.pop %v2907
        %v2939 = vmul.f32 %v2938, 0.6931472
        %v2940 = vlog2.pop %v2909
        %v2941 = vmul.f32 %v2940, 0.6931472
        %v2942 = vmax.f32 %v1446, %v2911
        %v2943 = vmax.f32 %v1446, %v2913
        %v2944 = vmax.f32 %v1446, %v2915
        %v2945 = vmax.f32 %v1446, %v2917
        %v2946 = vmax.f32 %v1446, %v2919
        %v2947 = vmax.f32 %v1446, %v2921
        %v2948 = vmax.f32 %v1446, %v2923
        %v2949 = vmax.f32 %v1446, %v2925
        %v2950 = vmax.f32 %v1446, %v2927
        %v2951 = vmax.f32 %v1446, %v2929
        %v2952 = vmax.f32 %v1446, %v2931
        %v2953 = vmax.f32 %v1446, %v2933
        %v2954 = vmax.f32 %v1446, %v2935
        %v2955 = vmax.f32 %v1446, %v2937
        %v2956 = vmax.f32 %v1446, %v2939
        %v2957 = vmax.f32 %v1446, %v2941
        %v2958 = vmin.f32 %v1463, %v2942
        %v2959 = vmin.f32 %v1463, %v2943
        %v2960 = vmin.f32 %v1463, %v2944
        %v2961 = vmin.f32 %v1463, %v2945
        %v2962 = vmin.f32 %v1463, %v2946
        %v2963 = vmin.f32 %v1463, %v2947
        %v2964 = vmin.f32 %v1463, %v2948
        %v2965 = vmin.f32 %v1463, %v2949
        %v2966 = vmin.f32 %v1463, %v2950
        %v2967 = vmin.f32 %v1463, %v2951
        %v2968 = vmin.f32 %v1463, %v2952
        %v2969 = vmin.f32 %v1463, %v2953
        %v2970 = vmin.f32 %v1463, %v2954
        %v2971 = vmin.f32 %v1463, %v2955
        %v2972 = vmin.f32 %v1463, %v2956
        %v2973 = vmin.f32 %v1463, %v2957
        %v2974 = vpack.c.bf16 %v2959, %v2958
        %v2975 = vpack.c.bf16 %v2961, %v2960
        %v2976 = vpack.c.bf16 %v2963, %v2962
        %v2977 = vpack.c.bf16 %v2965, %v2964
        %v2978 = vpack.c.bf16 %v2967, %v2966
        %v2979 = vpack.c.bf16 %v2969, %v2968
        %v2980 = vpack.c.bf16 %v2971, %v2970
        %v2981 = vpack.c.bf16 %v2973, %v2972
        %2982 = vmatprep.subr.bf16.mxu0 0
        %2983 = vmatpush1.bf16.msra.mxu0 %v658
        %2984 = vmatprep.subr.bf16.mxu0 0
        %2985 = vmatpush1.bf16.msra.mxu0 %v659
        %2986 = vmatprep.subr.bf16.mxu0 0
        %2987 = vmatpush1.bf16.msra.mxu0 %v660
        %2988 = vmatprep.subr.bf16.mxu0 0
        %2989 = vmatpush1.bf16.msra.mxu0 %v661
        %2990 = vmatprep.subr.bf16.mxu0 0
        %2991 = vmatpush1.bf16.msra.mxu0 %v662
        %2992 = vmatprep.subr.bf16.mxu0 0
        %2993 = vmatpush1.bf16.msra.mxu0 %v663
        %2994 = vmatprep.subr.bf16.mxu0 0
        %2995 = vmatpush1.bf16.msra.mxu0 %v664
        %2996 = vmatprep.subr.bf16.mxu0 0
        %2997 = vmatpush1.bf16.msra.mxu0 %v665
        %2998 = vmatprep.subr.bf16.mxu0 0
        %2999 = vmatpush1.bf16.msra.mxu0 0
        %3000 = vmatprep.subr.bf16.mxu0 0
        %3001 = vmatpush1.bf16.msra.mxu0 0
        %3002 = vmatprep.subr.bf16.mxu0 0
        %3003 = vmatpush1.bf16.msra.mxu0 0
        %3004 = vmatprep.subr.bf16.mxu0 0
        %3005 = vmatpush1.bf16.msra.mxu0 0
        %3006 = vmatprep.subr.bf16.mxu0 0
        %3007 = vmatpush1.bf16.msra.mxu0 0
        %3008 = vmatprep.subr.bf16.mxu0 0
        %3009 = vmatpush1.bf16.msra.mxu0 0
        %3010 = vmatprep.subr.bf16.mxu0 0
        %3011 = vmatpush1.bf16.msra.mxu0 0
        %3012 = vmatprep.subr.bf16.mxu0 0
        %3013 = vmatpush1.bf16.msra.mxu0 0
        %3014 = vmatprep.mubr.bf16.mxu0 0
        %3015 = vmatmul.mubr.bf16.gmra.mrb[0].mxu0 %v2974
        %v3016 = vpop.f32.mrb[0].mxu0
        %v3017 = vadd.f32 %v524, %v3016
        %v3018 = vpop.f32.mrb[0].mxu0
        %v3019 = vpop.f32.mrb[0].mxu0
        %v3020 = vadd.f32 %v527, %v3019
        %v3021 = vpop.f32.mrb[0].mxu0
        %3022 = vmatprep.mubr.bf16.mxu0 0
        %3023 = vmatmul.mubr.bf16.gmra.mrb[0].mxu0 %v2975
        %v3024 = vpop.f32.mrb[0].mxu0
        %v3025 = vadd.f32 %v532, %v3024
        %v3026 = vpop.f32.mrb[0].mxu0
        %v3027 = vpop.f32.mrb[0].mxu0
        %v3028 = vadd.f32 %v535, %v3027
        %v3029 = vpop.f32.mrb[0].mxu0
        %3030 = vmatprep.mubr.bf16.mxu0 0
        %3031 = vmatmul.mubr.bf16.gmra.mrb[0].mxu0 %v2976
        %v3032 = vpop.f32.mrb[0].mxu0
        %v3033 = vadd.f32 %v540, %v3032
        %v3034 = vpop.f32.mrb[0].mxu0
        %v3035 = vpop.f32.mrb[0].mxu0
        %v3036 = vadd.f32 %v543, %v3035
        %v3037 = vpop.f32.mrb[0].mxu0
        %3038 = vmatprep.mubr.bf16.mxu0 0
        %3039 = vmatmul.mubr.bf16.gmra.mrb[0].mxu0 %v2977
        %v3040 = vpop.f32.mrb[0].mxu0
        %v3041 = vadd.f32 %v548, %v3040
        %v3042 = vpop.f32.mrb[0].mxu0
        %v3043 = vpop.f32.mrb[0].mxu0
        %v3044 = vadd.f32 %v551, %v3043
        %v3045 = vpop.f32.mrb[0].mxu0
        %3046 = vmatprep.mubr.bf16.mxu0 0
        %3047 = vmatmul.mubr.bf16.gmra.mrb[0].mxu0 %v2978
        %v3048 = vpop.f32.mrb[0].mxu0
        %v3049 = vadd.f32 %v556, %v3048
        %v3050 = vpop.f32.mrb[0].mxu0
        %v3051 = vpop.f32.mrb[0].mxu0
        %v3052 = vadd.f32 %v559, %v3051
        %v3053 = vpop.f32.mrb[0].mxu0
        %3054 = vmatprep.mubr.bf16.mxu0 0
        %3055 = vmatmul.mubr.bf16.gmra.mrb[0].mxu0 %v2979
        %v3056 = vpop.f32.mrb[0].mxu0
        %v3057 = vadd.f32 %v564, %v3056
        %v3058 = vpop.f32.mrb[0].mxu0
        %v3059 = vpop.f32.mrb[0].mxu0
        %v3060 = vadd.f32 %v567, %v3059
        %v3061 = vpop.f32.mrb[0].mxu0
        %3062 = vmatprep.mubr.bf16.mxu0 0
        %3063 = vmatmul.mubr.bf16.gmra.mrb[0].mxu0 %v2980
        %v3064 = vpop.f32.mrb[0].mxu0
        %v3065 = vadd.f32 %v572, %v3064
        %v3066 = vpop.f32.mrb[0].mxu0
        %v3067 = vpop.f32.mrb[0].mxu0
        %v3068 = vadd.f32 %v575, %v3067
        %v3069 = vpop.f32.mrb[0].mxu0
        %3070 = vmatprep.mubr.bf16.mxu0 0
        %3071 = vmatmul.mubr.bf16.gmra.mrb[0].mxu0 %v2981
        %v3072 = vpop.f32.mrb[0].mxu0
        %v3073 = vadd.f32 %v580, %v3072
        %v3074 = vpop.f32.mrb[0].mxu0
        %v3075 = vpop.f32.mrb[0].mxu0
        %v3076 = vadd.f32 %v583, %v3075
        %v3077 = vpop.f32.mrb[0].mxu0
        %3078 = vdwg.mxu0
        %v3079 = vtanh.pop %v3017
        %v3080 = vtanh.pop %v3020
        %v3081 = vtanh.pop %v3025
        %v3082 = vtanh.pop %v3028
        %v3083 = vtanh.pop %v3033
        %v3084 = vtanh.pop %v3036
        %v3085 = vtanh.pop %v3041
        %v3086 = vtanh.pop %v3044
        %v3087 = vtanh.pop %v3049
        %v3088 = vtanh.pop %v3052
        %v3089 = vtanh.pop %v3057
        %v3090 = vtanh.pop %v3060
        %v3091 = vtanh.pop %v3065
        %v3092 = vtanh.pop %v3068
        %v3093 = vtanh.pop %v3073
        %v3094 = vtanh.pop %v3076
        %v3095 = vand.u32 2147483647, %v3079
        %v3096 = vand.u32 2147483647, %v3080
        %v3097 = vand.u32 2147483647, %v3081
        %v3098 = vand.u32 2147483647, %v3082
        %v3099 = vand.u32 2147483647, %v3083
        %v3100 = vand.u32 2147483647, %v3084
        %v3101 = vand.u32 2147483647, %v3085
        %v3102 = vand.u32 2147483647, %v3086
        %v3103 = vand.u32 2147483647, %v3087
        %v3104 = vand.u32 2147483647, %v3088
        %v3105 = vand.u32 2147483647, %v3089
        %v3106 = vand.u32 2147483647, %v3090
        %v3107 = vand.u32 2147483647, %v3091
        %v3108 = vand.u32 2147483647, %v3092
        %v3109 = vand.u32 2147483647, %v3093
        %v3110 = vand.u32 2147483647, %v3094
        %v3111 = vmax.f32 %v3095, 1e-12
        %v3112 = vmax.f32 %v3096, 1e-12
        %v3113 = vmax.f32 %v3097, 1e-12
        %v3114 = vmax.f32 %v3098, 1e-12
        %v3115 = vmax.f32 %v3099, 1e-12
        %v3116 = vmax.f32 %v3100, 1e-12
        %v3117 = vmax.f32 %v3101, 1e-12
        %v3118 = vmax.f32 %v3102, 1e-12
        %v3119 = vmax.f32 %v3103, 1e-12
        %v3120 = vmax.f32 %v3104, 1e-12
        %v3121 = vmax.f32 %v3105, 1e-12
        %v3122 = vmax.f32 %v3106, 1e-12
        %v3123 = vmax.f32 %v3107, 1e-12
        %v3124 = vmax.f32 %v3108, 1e-12
        %v3125 = vmax.f32 %v3109, 1e-12
        %v3126 = vmax.f32 %v3110, 1e-12
        %v3127 = vlog2.pop %v3111
        %v3128 = vmul.f32 %v3127, 0.6931472
        %v3129 = vlog2.pop %v3112
        %v3130 = vmul.f32 %v3129, 0.6931472
        %v3131 = vlog2.pop %v3113
        %v3132 = vmul.f32 %v3131, 0.6931472
        %v3133 = vlog2.pop %v3114
        %v3134 = vmul.f32 %v3133, 0.6931472
        %v3135 = vlog2.pop %v3115
        %v3136 = vmul.f32 %v3135, 0.6931472
        %v3137 = vlog2.pop %v3116
        %v3138 = vmul.f32 %v3137, 0.6931472
        %v3139 = vlog2.pop %v3117
        %v3140 = vmul.f32 %v3139, 0.6931472
        %v3141 = vlog2.pop %v3118
        %v3142 = vmul.f32 %v3141, 0.6931472
        %v3143 = vlog2.pop %v3119
        %v3144 = vmul.f32 %v3143, 0.6931472
        %v3145 = vlog2.pop %v3120
        %v3146 = vmul.f32 %v3145, 0.6931472
        %v3147 = vlog2.pop %v3121
        %v3148 = vmul.f32 %v3147, 0.6931472
        %v3149 = vlog2.pop %v3122
        %v3150 = vmul.f32 %v3149, 0.6931472
        %v3151 = vlog2.pop %v3123
        %v3152 = vmul.f32 %v3151, 0.6931472
        %v3153 = vlog2.pop %v3124
        %v3154 = vmul.f32 %v3153, 0.6931472
        %v3155 = vlog2.pop %v3125
        %v3156 = vmul.f32 %v3155, 0.6931472
        %v3157 = vlog2.pop %v3126
        %v3158 = vmul.f32 %v3157, 0.6931472
        %vm3159 = vcmp.lt.f32.partialorder %v3079, 0.0
        %vm3160 = vcmp.lt.f32.partialorder %v3080, 0.0
        %vm3161 = vcmp.lt.f32.partialorder %v3081, 0.0
        %vm3162 = vcmp.lt.f32.partialorder %v3082, 0.0
        %vm3163 = vcmp.lt.f32.partialorder %v3083, 0.0
        %vm3164 = vcmp.lt.f32.partialorder %v3084, 0.0
        %vm3165 = vcmp.lt.f32.partialorder %v3085, 0.0
        %vm3166 = vcmp.lt.f32.partialorder %v3086, 0.0
        %vm3167 = vcmp.lt.f32.partialorder %v3087, 0.0
        %vm3168 = vcmp.lt.f32.partialorder %v3088, 0.0
        %vm3169 = vcmp.lt.f32.partialorder %v3089, 0.0
        %vm3170 = vcmp.lt.f32.partialorder %v3090, 0.0
        %vm3171 = vcmp.lt.f32.partialorder %v3091, 0.0
        %vm3172 = vcmp.lt.f32.partialorder %v3092, 0.0
        %vm3173 = vcmp.lt.f32.partialorder %v3093, 0.0
        %vm3174 = vcmp.lt.f32.partialorder %v3094, 0.0
        %v3175 = vsel %vm3159, 1, 0
        %v3176 = vsel %vm3160, 1, 0
        %v3177 = vsel %vm3161, 1, 0
        %v3178 = vsel %vm3162, 1, 0
        %v3179 = vsel %vm3163, 1, 0
        %v3180 = vsel %vm3164, 1, 0
        %v3181 = vsel %vm3165, 1, 0
        %v3182 = vsel %vm3166, 1, 0
        %v3183 = vsel %vm3167, 1, 0
        %v3184 = vsel %vm3168, 1, 0
        %v3185 = vsel %vm3169, 1, 0
        %v3186 = vsel %vm3170, 1, 0
        %v3187 = vsel %vm3171, 1, 0
        %v3188 = vsel %vm3172, 1, 0
        %v3189 = vsel %vm3173, 1, 0
        %v3190 = vsel %vm3174, 1, 0
        %v3191 = vcvt.s32.f32 %v3175
        %v3192 = vcvt.s32.f32 %v3176
        %v3193 = vcvt.s32.f32 %v3177
        %v3194 = vcvt.s32.f32 %v3178
        %v3195 = vcvt.s32.f32 %v3179
        %v3196 = vcvt.s32.f32 %v3180
        %v3197 = vcvt.s32.f32 %v3181
        %v3198 = vcvt.s32.f32 %v3182
        %v3199 = vcvt.s32.f32 %v3183
        %v3200 = vcvt.s32.f32 %v3184
        %v3201 = vcvt.s32.f32 %v3185
        %v3202 = vcvt.s32.f32 %v3186
        %v3203 = vcvt.s32.f32 %v3187
        %v3204 = vcvt.s32.f32 %v3188
        %v3205 = vcvt.s32.f32 %v3189
        %v3206 = vcvt.s32.f32 %v3190
        %v3207 = vpack.c.bf16 %v3192, %v3191
        %v3208 = vpack.c.bf16 %v3194, %v3193
        %v3209 = vpack.c.bf16 %v3196, %v3195
        %v3210 = vpack.c.bf16 %v3198, %v3197
        %v3211 = vpack.c.bf16 %v3200, %v3199
        %v3212 = vpack.c.bf16 %v3202, %v3201
        %v3213 = vpack.c.bf16 %v3204, %v3203
        %v3214 = vpack.c.bf16 %v3206, %v3205
        %v3215 = vpack.c.bf16 %v3130, %v3128
        %v3216 = vpack.c.bf16 %v3134, %v3132
        %v3217 = vpack.c.bf16 %v3138, %v3136
        %v3218 = vpack.c.bf16 %v3142, %v3140
        %v3219 = vpack.c.bf16 %v3146, %v3144
        %v3220 = vpack.c.bf16 %v3150, %v3148
        %v3221 = vpack.c.bf16 %v3154, %v3152
        %v3222 = vpack.c.bf16 %v3158, %v3156
        %3223 = vmatprep.subr.bf16.mxu0 0
        %3224 = vmatpush1.bf16.msra.mxu0 %v963
        %3225 = vmatprep.subr.bf16.mxu0 0
        %3226 = vmatpush1.bf16.msra.mxu0 %v964
        %3227 = vmatprep.subr.bf16.mxu0 0
        %3228 = vmatpush1.bf16.msra.mxu0 %v965
        %3229 = vmatprep.subr.bf16.mxu0 0
        %3230 = vmatpush1.bf16.msra.mxu0 %v966
        %3231 = vmatprep.subr.bf16.mxu0 0
        %3232 = vmatpush1.bf16.msra.mxu0 %v967
        %3233 = vmatprep.subr.bf16.mxu0 0
        %3234 = vmatpush1.bf16.msra.mxu0 %v968
        %3235 = vmatprep.subr.bf16.mxu0 0
        %3236 = vmatpush1.bf16.msra.mxu0 %v969
        %3237 = vmatprep.subr.bf16.mxu0 0
        %3238 = vmatpush1.bf16.msra.mxu0 %v970
        %3239 = vmatprep.subr.bf16.mxu0 0
        %3240 = vmatpush1.bf16.msra.mxu0 0
        %3241 = vmatprep.subr.bf16.mxu0 0
        %3242 = vmatpush1.bf16.msra.mxu0 0
        %3243 = vmatprep.subr.bf16.mxu0 0
        %3244 = vmatpush1.bf16.msra.mxu0 0
        %3245 = vmatprep.subr.bf16.mxu0 0
        %3246 = vmatpush1.bf16.msra.mxu0 0
        %3247 = vmatprep.subr.bf16.mxu0 0
        %3248 = vmatpush1.bf16.msra.mxu0 0
        %3249 = vmatprep.subr.bf16.mxu0 0
        %3250 = vmatpush1.bf16.msra.mxu0 0
        %3251 = vmatprep.subr.bf16.mxu0 0
        %3252 = vmatpush1.bf16.msra.mxu0 0
        %3253 = vmatprep.subr.bf16.mxu0 0
        %3254 = vmatpush1.bf16.msra.mxu0 0
        %3255 = vmatprep.mubr.bf16.mxu0 0
        %3256 = vmatmul.mubr.bf16.gmra.mrb[0].mxu0 %v3215
        %v3257 = vpop.f32.mrb[0].mxu0
        %v3258 = vadd.f32 0.0, %v3257
        %v3259 = vpop.f32.mrb[0].mxu0
        %v3260 = vpop.f32.mrb[0].mxu0
        %v3261 = vadd.f32 0.0, %v3260
        %v3262 = vpop.f32.mrb[0].mxu0
        %3263 = vmatprep.mubr.bf16.mxu0 0
        %3264 = vmatmul.mubr.bf16.gmra.mrb[0].mxu0 %v3216
        %v3265 = vpop.f32.mrb[0].mxu0
        %v3266 = vadd.f32 0.0, %v3265
        %v3267 = vpop.f32.mrb[0].mxu0
        %v3268 = vpop.f32.mrb[0].mxu0
        %v3269 = vadd.f32 0.0, %v3268
        %v3270 = vpop.f32.mrb[0].mxu0
        %3271 = vmatprep.mubr.bf16.mxu0 0
        %3272 = vmatmul.mubr.bf16.gmra.mrb[0].mxu0 %v3217
        %v3273 = vpop.f32.mrb[0].mxu0
        %v3274 = vadd.f32 0.0, %v3273
        %v3275 = vpop.f32.mrb[0].mxu0
        %v3276 = vpop.f32.mrb[0].mxu0
        %v3277 = vadd.f32 0.0, %v3276
        %v3278 = vpop.f32.mrb[0].mxu0
        %3279 = vmatprep.mubr.bf16.mxu0 0
        %3280 = vmatmul.mubr.bf16.gmra.mrb[0].mxu0 %v3218
        %v3281 = vpop.f32.mrb[0].mxu0
        %v3282 = vadd.f32 0.0, %v3281
        %v3283 = vpop.f32.mrb[0].mxu0
        %v3284 = vpop.f32.mrb[0].mxu0
        %v3285 = vadd.f32 0.0, %v3284
        %v3286 = vpop.f32.mrb[0].mxu0
        %3287 = vmatprep.mubr.bf16.mxu0 0
        %3288 = vmatmul.mubr.bf16.gmra.mrb[0].mxu0 %v3219
        %v3289 = vpop.f32.mrb[0].mxu0
        %v3290 = vadd.f32 0.0, %v3289
        %v3291 = vpop.f32.mrb[0].mxu0
        %v3292 = vpop.f32.mrb[0].mxu0
        %v3293 = vadd.f32 0.0, %v3292
        %v3294 = vpop.f32.mrb[0].mxu0
        %3295 = vmatprep.mubr.bf16.mxu0 0
        %3296 = vmatmul.mubr.bf16.gmra.mrb[0].mxu0 %v3220
        %v3297 = vpop.f32.mrb[0].mxu0
        %v3298 = vadd.f32 0.0, %v3297
        %v3299 = vpop.f32.mrb[0].mxu0
        %v3300 = vpop.f32.mrb[0].mxu0
        %v3301 = vadd.f32 0.0, %v3300
        %v3302 = vpop.f32.mrb[0].mxu0
        %3303 = vmatprep.mubr.bf16.mxu0 0
        %3304 = vmatmul.mubr.bf16.gmra.mrb[0].mxu0 %v3221
        %v3305 = vpop.f32.mrb[0].mxu0
        %v3306 = vadd.f32 0.0, %v3305
        %v3307 = vpop.f32.mrb[0].mxu0
        %v3308 = vpop.f32.mrb[0].mxu0
        %v3309 = vadd.f32 0.0, %v3308
        %v3310 = vpop.f32.mrb[0].mxu0
        %3311 = vmatprep.mubr.bf16.mxu0 0
        %3312 = vmatmul.mubr.bf16.gmra.mrb[0].mxu0 %v3222
        %v3313 = vpop.f32.mrb[0].mxu0
        %v3314 = vadd.f32 0.0, %v3313
        %v3315 = vpop.f32.mrb[0].mxu0
        %v3316 = vpop.f32.mrb[0].mxu0
        %v3317 = vadd.f32 0.0, %v3316
        %v3318 = vpop.f32.mrb[0].mxu0
        %3319 = vdwg.mxu0
        %3320 = vmatprep.subr.bf16.mxu0 0
        %3321 = vmatpush1.bf16.msra.mxu0 %v963
        %3322 = vmatprep.subr.bf16.mxu0 0
        %3323 = vmatpush1.bf16.msra.mxu0 %v964
        %3324 = vmatprep.subr.bf16.mxu0 0
        %3325 = vmatpush1.bf16.msra.mxu0 %v965
        %3326 = vmatprep.subr.bf16.mxu0 0
        %3327 = vmatpush1.bf16.msra.mxu0 %v966
        %3328 = vmatprep.subr.bf16.mxu0 0
        %3329 = vmatpush1.bf16.msra.mxu0 %v967
        %3330 = vmatprep.subr.bf16.mxu0 0
        %3331 = vmatpush1.bf16.msra.mxu0 %v968
        %3332 = vmatprep.subr.bf16.mxu0 0
        %3333 = vmatpush1.bf16.msra.mxu0 %v969
        %3334 = vmatprep.subr.bf16.mxu0 0
        %3335 = vmatpush1.bf16.msra.mxu0 %v970
        %3336 = vmatprep.subr.bf16.mxu0 0
        %3337 = vmatpush1.bf16.msra.mxu0 0
        %3338 = vmatprep.subr.bf16.mxu0 0
        %3339 = vmatpush1.bf16.msra.mxu0 0
        %3340 = vmatprep.subr.bf16.mxu0 0
        %3341 = vmatpush1.bf16.msra.mxu0 0
        %3342 = vmatprep.subr.bf16.mxu0 0
        %3343 = vmatpush1.bf16.msra.mxu0 0
        %3344 = vmatprep.subr.bf16.mxu0 0
        %3345 = vmatpush1.bf16.msra.mxu0 0
        %3346 = vmatprep.subr.bf16.mxu0 0
        %3347 = vmatpush1.bf16.msra.mxu0 0
        %3348 = vmatprep.subr.bf16.mxu0 0
        %3349 = vmatpush1.bf16.msra.mxu0 0
        %3350 = vmatprep.subr.bf16.mxu0 0
        %3351 = vmatpush1.bf16.msra.mxu0 0
        %3352 = vmatprep.mubr.bf16.mxu0 0
        %3353 = vmatmul.mubr.bf16.gmra.mrb[0].mxu0 %v3207
        %v3354 = vpop.f32.mrb[0].mxu0
        %v3355 = vadd.f32 0.0, %v3354
        %v3356 = vpop.f32.mrb[0].mxu0
        %v3357 = vpop.f32.mrb[0].mxu0
        %v3358 = vadd.f32 0.0, %v3357
        %v3359 = vpop.f32.mrb[0].mxu0
        %3360 = vmatprep.mubr.bf16.mxu0 0
        %3361 = vmatmul.mubr.bf16.gmra.mrb[0].mxu0 %v3208
        %v3362 = vpop.f32.mrb[0].mxu0
        %v3363 = vadd.f32 0.0, %v3362
        %v3364 = vpop.f32.mrb[0].mxu0
        %v3365 = vpop.f32.mrb[0].mxu0
        %v3366 = vadd.f32 0.0, %v3365
        %v3367 = vpop.f32.mrb[0].mxu0
        %3368 = vmatprep.mubr.bf16.mxu0 0
        %3369 = vmatmul.mubr.bf16.gmra.mrb[0].mxu0 %v3209
        %v3370 = vpop.f32.mrb[0].mxu0
        %v3371 = vadd.f32 0.0, %v3370
        %v3372 = vpop.f32.mrb[0].mxu0
        %v3373 = vpop.f32.mrb[0].mxu0
        %v3374 = vadd.f32 0.0, %v3373
        %v3375 = vpop.f32.mrb[0].mxu0
        %3376 = vmatprep.mubr.bf16.mxu0 0
        %3377 = vmatmul.mubr.bf16.gmra.mrb[0].mxu0 %v3210
        %v3378 = vpop.f32.mrb[0].mxu0
        %v3379 = vadd.f32 0.0, %v3378
        %v3380 = vpop.f32.mrb[0].mxu0
        %v3381 = vpop.f32.mrb[0].mxu0
        %v3382 = vadd.f32 0.0, %v3381
        %v3383 = vpop.f32.mrb[0].mxu0
        %3384 = vmatprep.mubr.bf16.mxu0 0
        %3385 = vmatmul.mubr.bf16.gmra.mrb[0].mxu0 %v3211
        %v3386 = vpop.f32.mrb[0].mxu0
        %v3387 = vadd.f32 0.0, %v3386
        %v3388 = vpop.f32.mrb[0].mxu0
        %v3389 = vpop.f32.mrb[0].mxu0
        %v3390 = vadd.f32 0.0, %v3389
        %v3391 = vpop.f32.mrb[0].mxu0
        %3392 = vmatprep.mubr.bf16.mxu0 0
        %3393 = vmatmul.mubr.bf16.gmra.mrb[0].mxu0 %v3212
        %v3394 = vpop.f32.mrb[0].mxu0
        %v3395 = vadd.f32 0.0, %v3394
        %v3396 = vpop.f32.mrb[0].mxu0
        %v3397 = vpop.f32.mrb[0].mxu0
        %v3398 = vadd.f32 0.0, %v3397
        %v3399 = vpop.f32.mrb[0].mxu0
        %3400 = vmatprep.mubr.bf16.mxu0 0
        %3401 = vmatmul.mubr.bf16.gmra.mrb[0].mxu0 %v3213
        %v3402 = vpop.f32.mrb[0].mxu0
        %v3403 = vadd.f32 0.0, %v3402
        %v3404 = vpop.f32.mrb[0].mxu0
        %v3405 = vpop.f32.mrb[0].mxu0
        %v3406 = vadd.f32 0.0, %v3405
        %v3407 = vpop.f32.mrb[0].mxu0
        %3408 = vmatprep.mubr.bf16.mxu0 0
        %3409 = vmatmul.mubr.bf16.gmra.mrb[0].mxu0 %v3214
        %v3410 = vpop.f32.mrb[0].mxu0
        %v3411 = vadd.f32 0.0, %v3410
        %v3412 = vpop.f32.mrb[0].mxu0
        %v3413 = vpop.f32.mrb[0].mxu0
        %v3414 = vadd.f32 0.0, %v3413
        %v3415 = vpop.f32.mrb[0].mxu0
        %3416 = vdwg.mxu0
        %v3417 = vmul.f32 %v3355, 0.5
        %v3418 = vmul.f32 %v3358, 0.5
        %v3419 = vmul.f32 %v3363, 0.5
        %v3420 = vmul.f32 %v3366, 0.5
        %v3421 = vmul.f32 %v3371, 0.5
        %v3422 = vmul.f32 %v3374, 0.5
        %v3423 = vmul.f32 %v3379, 0.5
        %v3424 = vmul.f32 %v3382, 0.5
        %v3425 = vmul.f32 %v3387, 0.5
        %v3426 = vmul.f32 %v3390, 0.5
        %v3427 = vmul.f32 %v3395, 0.5
        %v3428 = vmul.f32 %v3398, 0.5
        %v3429 = vmul.f32 %v3403, 0.5
        %v3430 = vmul.f32 %v3406, 0.5
        %v3431 = vmul.f32 %v3411, 0.5
        %v3432 = vmul.f32 %v3414, 0.5
        %v3433 = vfloor.f32 %v3417
        %v3434 = vfloor.f32 %v3418
        %v3435 = vfloor.f32 %v3419
        %v3436 = vfloor.f32 %v3420
        %v3437 = vfloor.f32 %v3421
        %v3438 = vfloor.f32 %v3422
        %v3439 = vfloor.f32 %v3423
        %v3440 = vfloor.f32 %v3424
        %v3441 = vfloor.f32 %v3425
        %v3442 = vfloor.f32 %v3426
        %v3443 = vfloor.f32 %v3427
        %v3444 = vfloor.f32 %v3428
        %v3445 = vfloor.f32 %v3429
        %v3446 = vfloor.f32 %v3430
        %v3447 = vfloor.f32 %v3431
        %v3448 = vfloor.f32 %v3432
        %v3449 = vmul.f32 %v3433, 2.0
        %v3450 = vmul.f32 %v3434, 2.0
        %v3451 = vmul.f32 %v3435, 2.0
        %v3452 = vmul.f32 %v3436, 2.0
        %v3453 = vmul.f32 %v3437, 2.0
        %v3454 = vmul.f32 %v3438, 2.0
        %v3455 = vmul.f32 %v3439, 2.0
        %v3456 = vmul.f32 %v3440, 2.0
        %v3457 = vmul.f32 %v3441, 2.0
        %v3458 = vmul.f32 %v3442, 2.0
        %v3459 = vmul.f32 %v3443, 2.0
        %v3460 = vmul.f32 %v3444, 2.0
        %v3461 = vmul.f32 %v3445, 2.0
        %v3462 = vmul.f32 %v3446, 2.0
        %v3463 = vmul.f32 %v3447, 2.0
        %v3464 = vmul.f32 %v3448, 2.0
        %v3465 = vsub.f32 %v3355, %v3449
        %v3466 = vsub.f32 %v3358, %v3450
        %v3467 = vsub.f32 %v3363, %v3451
        %v3468 = vsub.f32 %v3366, %v3452
        %v3469 = vsub.f32 %v3371, %v3453
        %v3470 = vsub.f32 %v3374, %v3454
        %v3471 = vsub.f32 %v3379, %v3455
        %v3472 = vsub.f32 %v3382, %v3456
        %v3473 = vsub.f32 %v3387, %v3457
        %v3474 = vsub.f32 %v3390, %v3458
        %v3475 = vsub.f32 %v3395, %v3459
        %v3476 = vsub.f32 %v3398, %v3460
        %v3477 = vsub.f32 %v3403, %v3461
        %v3478 = vsub.f32 %v3406, %v3462
        %v3479 = vsub.f32 %v3411, %v3463
        %v3480 = vsub.f32 %v3414, %v3464
        %v3481 = vmul.f32 %v3465, 2.0
        %v3482 = vmul.f32 %v3466, 2.0
        %v3483 = vmul.f32 %v3467, 2.0
        %v3484 = vmul.f32 %v3468, 2.0
        %v3485 = vmul.f32 %v3469, 2.0
        %v3486 = vmul.f32 %v3470, 2.0
        %v3487 = vmul.f32 %v3471, 2.0
        %v3488 = vmul.f32 %v3472, 2.0
        %v3489 = vmul.f32 %v3473, 2.0
        %v3490 = vmul.f32 %v3474, 2.0
        %v3491 = vmul.f32 %v3475, 2.0
        %v3492 = vmul.f32 %v3476, 2.0
        %v3493 = vmul.f32 %v3477, 2.0
        %v3494 = vmul.f32 %v3478, 2.0
        %v3495 = vmul.f32 %v3479, 2.0
        %v3496 = vmul.f32 %v3480, 2.0
        %v3497 = vsub.f32 1.0, %v3481
        %v3498 = vsub.f32 1.0, %v3482
        %v3499 = vsub.f32 1.0, %v3483
        %v3500 = vsub.f32 1.0, %v3484
        %v3501 = vsub.f32 1.0, %v3485
        %v3502 = vsub.f32 1.0, %v3486
        %v3503 = vsub.f32 1.0, %v3487
        %v3504 = vsub.f32 1.0, %v3488
        %v3505 = vsub.f32 1.0, %v3489
        %v3506 = vsub.f32 1.0, %v3490
        %v3507 = vsub.f32 1.0, %v3491
        %v3508 = vsub.f32 1.0, %v3492
        %v3509 = vsub.f32 1.0, %v3493
        %v3510 = vsub.f32 1.0, %v3494
        %v3511 = vsub.f32 1.0, %v3495
        %v3512 = vsub.f32 1.0, %v3496
        %v3513 = vmul.f32 %v3258, 1.442695
        %v3514 = vpow.pop %v3513
        %v3515 = vmul.f32 %v3261, 1.442695
        %v3516 = vpow.pop %v3515
        %v3517 = vmul.f32 %v3266, 1.442695
        %v3518 = vpow.pop %v3517
        %v3519 = vmul.f32 %v3269, 1.442695
        %v3520 = vpow.pop %v3519
        %v3521 = vmul.f32 %v3274, 1.442695
        %v3522 = vpow.pop %v3521
        %v3523 = vmul.f32 %v3277, 1.442695
        %v3524 = vpow.pop %v3523
        %v3525 = vmul.f32 %v3282, 1.442695
        %v3526 = vpow.pop %v3525
        %v3527 = vmul.f32 %v3285, 1.442695
        %v3528 = vpow.pop %v3527
        %v3529 = vmul.f32 %v3290, 1.442695
        %v3530 = vpow.pop %v3529
        %v3531 = vmul.f32 %v3293, 1.442695
        %v3532 = vpow.pop %v3531
        %v3533 = vmul.f32 %v3298, 1.442695
        %v3534 = vpow.pop %v3533
        %v3535 = vmul.f32 %v3301, 1.442695
        %v3536 = vpow.pop %v3535
        %v3537 = vmul.f32 %v3306, 1.442695
        %v3538 = vpow.pop %v3537
        %v3539 = vmul.f32 %v3309, 1.442695
        %v3540 = vpow.pop %v3539
        %v3541 = vmul.f32 %v3314, 1.442695
        %v3542 = vpow.pop %v3541
        %v3543 = vmul.f32 %v3317, 1.442695
        %v3544 = vpow.pop %v3543
        %v3545 = vmul.f32 %v3497, %v3514
        %v3546 = vmul.f32 %v3498, %v3516
        %v3547 = vmul.f32 %v3499, %v3518
        %v3548 = vmul.f32 %v3500, %v3520
        %v3549 = vmul.f32 %v3501, %v3522
        %v3550 = vmul.f32 %v3502, %v3524
        %v3551 = vmul.f32 %v3503, %v3526
        %v3552 = vmul.f32 %v3504, %v3528
        %v3553 = vmul.f32 %v3505, %v3530
        %v3554 = vmul.f32 %v3506, %v3532
        %v3555 = vmul.f32 %v3507, %v3534
        %v3556 = vmul.f32 %v3508, %v3536
        %v3557 = vmul.f32 %v3509, %v3538
        %v3558 = vmul.f32 %v3510, %v3540
        %v3559 = vmul.f32 %v3511, %v3542
        %v3560 = vmul.f32 %v3512, %v3544
        %v3561 = vmax.f32 %v3545, -0.999999
        %v3562 = vmax.f32 %v3546, -0.999999
        %v3563 = vmax.f32 %v3547, -0.999999
        %v3564 = vmax.f32 %v3548, -0.999999
        %v3565 = vmax.f32 %v3549, -0.999999
        %v3566 = vmax.f32 %v3550, -0.999999
        %v3567 = vmax.f32 %v3551, -0.999999
        %v3568 = vmax.f32 %v3552, -0.999999
        %v3569 = vmax.f32 %v3553, -0.999999
        %v3570 = vmax.f32 %v3554, -0.999999
        %v3571 = vmax.f32 %v3555, -0.999999
        %v3572 = vmax.f32 %v3556, -0.999999
        %v3573 = vmax.f32 %v3557, -0.999999
        %v3574 = vmax.f32 %v3558, -0.999999
        %v3575 = vmax.f32 %v3559, -0.999999
        %v3576 = vmax.f32 %v3560, -0.999999
        %v3577 = vmin.f32 %v3561, 0.999999
        %v3578 = vmin.f32 %v3562, 0.999999
        %v3579 = vmin.f32 %v3563, 0.999999
        %v3580 = vmin.f32 %v3564, 0.999999
        %v3581 = vmin.f32 %v3565, 0.999999
        %v3582 = vmin.f32 %v3566, 0.999999
        %v3583 = vmin.f32 %v3567, 0.999999
        %v3584 = vmin.f32 %v3568, 0.999999
        %v3585 = vmin.f32 %v3569, 0.999999
        %v3586 = vmin.f32 %v3570, 0.999999
        %v3587 = vmin.f32 %v3571, 0.999999
        %v3588 = vmin.f32 %v3572, 0.999999
        %v3589 = vmin.f32 %v3573, 0.999999
        %v3590 = vmin.f32 %v3574, 0.999999
        %v3591 = vmin.f32 %v3575, 0.999999
        %v3592 = vmin.f32 %v3576, 0.999999
        %v3593 = vadd.f32 %v3577, 1.0
        %v3594 = vadd.f32 %v3578, 1.0
        %v3595 = vadd.f32 %v3579, 1.0
        %v3596 = vadd.f32 %v3580, 1.0
        %v3597 = vadd.f32 %v3581, 1.0
        %v3598 = vadd.f32 %v3582, 1.0
        %v3599 = vadd.f32 %v3583, 1.0
        %v3600 = vadd.f32 %v3584, 1.0
        %v3601 = vadd.f32 %v3585, 1.0
        %v3602 = vadd.f32 %v3586, 1.0
        %v3603 = vadd.f32 %v3587, 1.0
        %v3604 = vadd.f32 %v3588, 1.0
        %v3605 = vadd.f32 %v3589, 1.0
        %v3606 = vadd.f32 %v3590, 1.0
        %v3607 = vadd.f32 %v3591, 1.0
        %v3608 = vadd.f32 %v3592, 1.0
        %v3609 = vsub.f32 1.0, %v3577
        %v3610 = vsub.f32 1.0, %v3578
        %v3611 = vsub.f32 1.0, %v3579
        %v3612 = vsub.f32 1.0, %v3580
        %v3613 = vsub.f32 1.0, %v3581
        %v3614 = vsub.f32 1.0, %v3582
        %v3615 = vsub.f32 1.0, %v3583
        %v3616 = vsub.f32 1.0, %v3584
        %v3617 = vsub.f32 1.0, %v3585
        %v3618 = vsub.f32 1.0, %v3586
        %v3619 = vsub.f32 1.0, %v3587
        %v3620 = vsub.f32 1.0, %v3588
        %v3621 = vsub.f32 1.0, %v3589
        %v3622 = vsub.f32 1.0, %v3590
        %v3623 = vsub.f32 1.0, %v3591
        %v3624 = vsub.f32 1.0, %v3592
        %v3625 = vrcp.pop %v3609
        %v3626 = vmul.f32 %v3593, %v3625
        %v3627 = vrcp.pop %v3610
        %v3628 = vmul.f32 %v3594, %v3627
        %v3629 = vrcp.pop %v3611
        %v3630 = vmul.f32 %v3595, %v3629
        %v3631 = vrcp.pop %v3612
        %v3632 = vmul.f32 %v3596, %v3631
        %v3633 = vrcp.pop %v3613
        %v3634 = vmul.f32 %v3597, %v3633
        %v3635 = vrcp.pop %v3614
        %v3636 = vmul.f32 %v3598, %v3635
        %v3637 = vrcp.pop %v3615
        %v3638 = vmul.f32 %v3599, %v3637
        %v3639 = vrcp.pop %v3616
        %v3640 = vmul.f32 %v3600, %v3639
        %v3641 = vrcp.pop %v3617
        %v3642 = vmul.f32 %v3601, %v3641
        %v3643 = vrcp.pop %v3618
        %v3644 = vmul.f32 %v3602, %v3643
        %v3645 = vrcp.pop %v3619
        %v3646 = vmul.f32 %v3603, %v3645
        %v3647 = vrcp.pop %v3620
        %v3648 = vmul.f32 %v3604, %v3647
        %v3649 = vrcp.pop %v3621
        %v3650 = vmul.f32 %v3605, %v3649
        %v3651 = vrcp.pop %v3622
        %v3652 = vmul.f32 %v3606, %v3651
        %v3653 = vrcp.pop %v3623
        %v3654 = vmul.f32 %v3607, %v3653
        %v3655 = vrcp.pop %v3624
        %v3656 = vmul.f32 %v3608, %v3655
        %v3657 = vlog2.pop %v3626
        %v3658 = vmul.f32 %v3657, 0.6931472
        %v3659 = vlog2.pop %v3628
        %v3660 = vmul.f32 %v3659, 0.6931472
        %v3661 = vlog2.pop %v3630
        %v3662 = vmul.f32 %v3661, 0.6931472
        %v3663 = vlog2.pop %v3632
        %v3664 = vmul.f32 %v3663, 0.6931472
        %v3665 = vlog2.pop %v3634
        %v3666 = vmul.f32 %v3665, 0.6931472
        %v3667 = vlog2.pop %v3636
        %v3668 = vmul.f32 %v3667, 0.6931472
        %v3669 = vlog2.pop %v3638
        %v3670 = vmul.f32 %v3669, 0.6931472
        %v3671 = vlog2.pop %v3640
        %v3672 = vmul.f32 %v3671, 0.6931472
        %v3673 = vlog2.pop %v3642
        %v3674 = vmul.f32 %v3673, 0.6931472
        %v3675 = vlog2.pop %v3644
        %v3676 = vmul.f32 %v3675, 0.6931472
        %v3677 = vlog2.pop %v3646
        %v3678 = vmul.f32 %v3677, 0.6931472
        %v3679 = vlog2.pop %v3648
        %v3680 = vmul.f32 %v3679, 0.6931472
        %v3681 = vlog2.pop %v3650
        %v3682 = vmul.f32 %v3681, 0.6931472
        %v3683 = vlog2.pop %v3652
        %v3684 = vmul.f32 %v3683, 0.6931472
        %v3685 = vlog2.pop %v3654
        %v3686 = vmul.f32 %v3685, 0.6931472
        %v3687 = vlog2.pop %v3656
        %v3688 = vmul.f32 %v3687, 0.6931472
        %v3689 = vmax.f32 %v1446, %v3658
        %v3690 = vmax.f32 %v1446, %v3660
        %v3691 = vmax.f32 %v1446, %v3662
        %v3692 = vmax.f32 %v1446, %v3664
        %v3693 = vmax.f32 %v1446, %v3666
        %v3694 = vmax.f32 %v1446, %v3668
        %v3695 = vmax.f32 %v1446, %v3670
        %v3696 = vmax.f32 %v1446, %v3672
        %v3697 = vmax.f32 %v1446, %v3674
        %v3698 = vmax.f32 %v1446, %v3676
        %v3699 = vmax.f32 %v1446, %v3678
        %v3700 = vmax.f32 %v1446, %v3680
        %v3701 = vmax.f32 %v1446, %v3682
        %v3702 = vmax.f32 %v1446, %v3684
        %v3703 = vmax.f32 %v1446, %v3686
        %v3704 = vmax.f32 %v1446, %v3688
        %v3705 = vmin.f32 %v1463, %v3689
        %v3706 = vmin.f32 %v1463, %v3690
        %v3707 = vmin.f32 %v1463, %v3691
        %v3708 = vmin.f32 %v1463, %v3692
        %v3709 = vmin.f32 %v1463, %v3693
        %v3710 = vmin.f32 %v1463, %v3694
        %v3711 = vmin.f32 %v1463, %v3695
        %v3712 = vmin.f32 %v1463, %v3696
        %v3713 = vmin.f32 %v1463, %v3697
        %v3714 = vmin.f32 %v1463, %v3698
        %v3715 = vmin.f32 %v1463, %v3699
        %v3716 = vmin.f32 %v1463, %v3700
        %v3717 = vmin.f32 %v1463, %v3701
        %v3718 = vmin.f32 %v1463, %v3702
        %v3719 = vmin.f32 %v1463, %v3703
        %v3720 = vmin.f32 %v1463, %v3704
        %v3721 = vpack.c.bf16 %v3706, %v3705
        %v3722 = vpack.c.bf16 %v3708, %v3707
        %v3723 = vpack.c.bf16 %v3710, %v3709
        %v3724 = vpack.c.bf16 %v3712, %v3711
        %v3725 = vpack.c.bf16 %v3714, %v3713
        %v3726 = vpack.c.bf16 %v3716, %v3715
        %v3727 = vpack.c.bf16 %v3718, %v3717
        %v3728 = vpack.c.bf16 %v3720, %v3719
        %3729 = vmatprep.subr.bf16.mxu0 0
        %3730 = vmatpush1.bf16.msra.mxu0 %v658
        %3731 = vmatprep.subr.bf16.mxu0 0
        %3732 = vmatpush1.bf16.msra.mxu0 %v659
        %3733 = vmatprep.subr.bf16.mxu0 0
        %3734 = vmatpush1.bf16.msra.mxu0 %v660
        %3735 = vmatprep.subr.bf16.mxu0 0
        %3736 = vmatpush1.bf16.msra.mxu0 %v661
        %3737 = vmatprep.subr.bf16.mxu0 0
        %3738 = vmatpush1.bf16.msra.mxu0 %v662
        %3739 = vmatprep.subr.bf16.mxu0 0
        %3740 = vmatpush1.bf16.msra.mxu0 %v663
        %3741 = vmatprep.subr.bf16.mxu0 0
        %3742 = vmatpush1.bf16.msra.mxu0 %v664
        %3743 = vmatprep.subr.bf16.mxu0 0
        %3744 = vmatpush1.bf16.msra.mxu0 %v665
        %3745 = vmatprep.subr.bf16.mxu0 0
        %3746 = vmatpush1.bf16.msra.mxu0 0
        %3747 = vmatprep.subr.bf16.mxu0 0
        %3748 = vmatpush1.bf16.msra.mxu0 0
        %3749 = vmatprep.subr.bf16.mxu0 0
        %3750 = vmatpush1.bf16.msra.mxu0 0
        %3751 = vmatprep.subr.bf16.mxu0 0
        %3752 = vmatpush1.bf16.msra.mxu0 0
        %3753 = vmatprep.subr.bf16.mxu0 0
        %3754 = vmatpush1.bf16.msra.mxu0 0
        %3755 = vmatprep.subr.bf16.mxu0 0
        %3756 = vmatpush1.bf16.msra.mxu0 0
        %3757 = vmatprep.subr.bf16.mxu0 0
        %3758 = vmatpush1.bf16.msra.mxu0 0
        %3759 = vmatprep.subr.bf16.mxu0 0
        %3760 = vmatpush1.bf16.msra.mxu0 0
        %3761 = vmatprep.mubr.bf16.mxu0 0
        %3762 = vmatmul.mubr.bf16.gmra.mrb[0].mxu0 %v3721
        %v3763 = vpop.f32.mrb[0].mxu0
        %v3764 = vadd.f32 %v524, %v3763
        %v3765 = vpop.f32.mrb[0].mxu0
        %v3766 = vpop.f32.mrb[0].mxu0
        %v3767 = vadd.f32 %v527, %v3766
        %v3768 = vpop.f32.mrb[0].mxu0
        %3769 = vmatprep.mubr.bf16.mxu0 0
        %3770 = vmatmul.mubr.bf16.gmra.mrb[0].mxu0 %v3722
        %v3771 = vpop.f32.mrb[0].mxu0
        %v3772 = vadd.f32 %v532, %v3771
        %v3773 = vpop.f32.mrb[0].mxu0
        %v3774 = vpop.f32.mrb[0].mxu0
        %v3775 = vadd.f32 %v535, %v3774
        %v3776 = vpop.f32.mrb[0].mxu0
        %3777 = vmatprep.mubr.bf16.mxu0 0
        %3778 = vmatmul.mubr.bf16.gmra.mrb[0].mxu0 %v3723
        %v3779 = vpop.f32.mrb[0].mxu0
        %v3780 = vadd.f32 %v540, %v3779
        %v3781 = vpop.f32.mrb[0].mxu0
        %v3782 = vpop.f32.mrb[0].mxu0
        %v3783 = vadd.f32 %v543, %v3782
        %v3784 = vpop.f32.mrb[0].mxu0
        %3785 = vmatprep.mubr.bf16.mxu0 0
        %3786 = vmatmul.mubr.bf16.gmra.mrb[0].mxu0 %v3724
        %v3787 = vpop.f32.mrb[0].mxu0
        %v3788 = vadd.f32 %v548, %v3787
        %v3789 = vpop.f32.mrb[0].mxu0
        %v3790 = vpop.f32.mrb[0].mxu0
        %v3791 = vadd.f32 %v551, %v3790
        %v3792 = vpop.f32.mrb[0].mxu0
        %3793 = vmatprep.mubr.bf16.mxu0 0
        %3794 = vmatmul.mubr.bf16.gmra.mrb[0].mxu0 %v3725
        %v3795 = vpop.f32.mrb[0].mxu0
        %v3796 = vadd.f32 %v556, %v3795
        %v3797 = vpop.f32.mrb[0].mxu0
        %v3798 = vpop.f32.mrb[0].mxu0
        %v3799 = vadd.f32 %v559, %v3798
        %v3800 = vpop.f32.mrb[0].mxu0
        %3801 = vmatprep.mubr.bf16.mxu0 0
        %3802 = vmatmul.mubr.bf16.gmra.mrb[0].mxu0 %v3726
        %v3803 = vpop.f32.mrb[0].mxu0
        %v3804 = vadd.f32 %v564, %v3803
        %v3805 = vpop.f32.mrb[0].mxu0
        %v3806 = vpop.f32.mrb[0].mxu0
        %v3807 = vadd.f32 %v567, %v3806
        %v3808 = vpop.f32.mrb[0].mxu0
        %3809 = vmatprep.mubr.bf16.mxu0 0
        %3810 = vmatmul.mubr.bf16.gmra.mrb[0].mxu0 %v3727
        %v3811 = vpop.f32.mrb[0].mxu0
        %v3812 = vadd.f32 %v572, %v3811
        %v3813 = vpop.f32.mrb[0].mxu0
        %v3814 = vpop.f32.mrb[0].mxu0
        %v3815 = vadd.f32 %v575, %v3814
        %v3816 = vpop.f32.mrb[0].mxu0
        %3817 = vmatprep.mubr.bf16.mxu0 0
        %3818 = vmatmul.mubr.bf16.gmra.mrb[0].mxu0 %v3728
        %v3819 = vpop.f32.mrb[0].mxu0
        %v3820 = vadd.f32 %v580, %v3819
        %v3821 = vpop.f32.mrb[0].mxu0
        %v3822 = vpop.f32.mrb[0].mxu0
        %v3823 = vadd.f32 %v583, %v3822
        %v3824 = vpop.f32.mrb[0].mxu0
        %3825 = vdwg.mxu0
        %v3826 = vtanh.pop %v3764
        %v3827 = vtanh.pop %v3767
        %v3828 = vtanh.pop %v3772
        %v3829 = vtanh.pop %v3775
        %v3830 = vtanh.pop %v3780
        %v3831 = vtanh.pop %v3783
        %v3832 = vtanh.pop %v3788
        %v3833 = vtanh.pop %v3791
        %v3834 = vtanh.pop %v3796
        %v3835 = vtanh.pop %v3799
        %v3836 = vtanh.pop %v3804
        %v3837 = vtanh.pop %v3807
        %v3838 = vtanh.pop %v3812
        %v3839 = vtanh.pop %v3815
        %v3840 = vtanh.pop %v3820
        %v3841 = vtanh.pop %v3823
        %v3842 = vand.u32 2147483647, %v3826
        %v3843 = vand.u32 2147483647, %v3827
        %v3844 = vand.u32 2147483647, %v3828
        %v3845 = vand.u32 2147483647, %v3829
        %v3846 = vand.u32 2147483647, %v3830
        %v3847 = vand.u32 2147483647, %v3831
        %v3848 = vand.u32 2147483647, %v3832
        %v3849 = vand.u32 2147483647, %v3833
        %v3850 = vand.u32 2147483647, %v3834
        %v3851 = vand.u32 2147483647, %v3835
        %v3852 = vand.u32 2147483647, %v3836
        %v3853 = vand.u32 2147483647, %v3837
        %v3854 = vand.u32 2147483647, %v3838
        %v3855 = vand.u32 2147483647, %v3839
        %v3856 = vand.u32 2147483647, %v3840
        %v3857 = vand.u32 2147483647, %v3841
        %v3858 = vmax.f32 %v3842, 1e-12
        %v3859 = vmax.f32 %v3843, 1e-12
        %v3860 = vmax.f32 %v3844, 1e-12
        %v3861 = vmax.f32 %v3845, 1e-12
        %v3862 = vmax.f32 %v3846, 1e-12
        %v3863 = vmax.f32 %v3847, 1e-12
        %v3864 = vmax.f32 %v3848, 1e-12
        %v3865 = vmax.f32 %v3849, 1e-12
        %v3866 = vmax.f32 %v3850, 1e-12
        %v3867 = vmax.f32 %v3851, 1e-12
        %v3868 = vmax.f32 %v3852, 1e-12
        %v3869 = vmax.f32 %v3853, 1e-12
        %v3870 = vmax.f32 %v3854, 1e-12
        %v3871 = vmax.f32 %v3855, 1e-12
        %v3872 = vmax.f32 %v3856, 1e-12
        %v3873 = vmax.f32 %v3857, 1e-12
        %v3874 = vlog2.pop %v3858
        %v3875 = vmul.f32 %v3874, 0.6931472
        %v3876 = vlog2.pop %v3859
        %v3877 = vmul.f32 %v3876, 0.6931472
        %v3878 = vlog2.pop %v3860
        %v3879 = vmul.f32 %v3878, 0.6931472
        %v3880 = vlog2.pop %v3861
        %v3881 = vmul.f32 %v3880, 0.6931472
        %v3882 = vlog2.pop %v3862
        %v3883 = vmul.f32 %v3882, 0.6931472
        %v3884 = vlog2.pop %v3863
        %v3885 = vmul.f32 %v3884, 0.6931472
        %v3886 = vlog2.pop %v3864
        %v3887 = vmul.f32 %v3886, 0.6931472
        %v3888 = vlog2.pop %v3865
        %v3889 = vmul.f32 %v3888, 0.6931472
        %v3890 = vlog2.pop %v3866
        %v3891 = vmul.f32 %v3890, 0.6931472
        %v3892 = vlog2.pop %v3867
        %v3893 = vmul.f32 %v3892, 0.6931472
        %v3894 = vlog2.pop %v3868
        %v3895 = vmul.f32 %v3894, 0.6931472
        %v3896 = vlog2.pop %v3869
        %v3897 = vmul.f32 %v3896, 0.6931472
        %v3898 = vlog2.pop %v3870
        %v3899 = vmul.f32 %v3898, 0.6931472
        %v3900 = vlog2.pop %v3871
        %v3901 = vmul.f32 %v3900, 0.6931472
        %v3902 = vlog2.pop %v3872
        %v3903 = vmul.f32 %v3902, 0.6931472
        %v3904 = vlog2.pop %v3873
        %v3905 = vmul.f32 %v3904, 0.6931472
        %vm3906 = vcmp.lt.f32.partialorder %v3826, 0.0
        %vm3907 = vcmp.lt.f32.partialorder %v3827, 0.0
        %vm3908 = vcmp.lt.f32.partialorder %v3828, 0.0
        %vm3909 = vcmp.lt.f32.partialorder %v3829, 0.0
        %vm3910 = vcmp.lt.f32.partialorder %v3830, 0.0
        %vm3911 = vcmp.lt.f32.partialorder %v3831, 0.0
        %vm3912 = vcmp.lt.f32.partialorder %v3832, 0.0
        %vm3913 = vcmp.lt.f32.partialorder %v3833, 0.0
        %vm3914 = vcmp.lt.f32.partialorder %v3834, 0.0
        %vm3915 = vcmp.lt.f32.partialorder %v3835, 0.0
        %vm3916 = vcmp.lt.f32.partialorder %v3836, 0.0
        %vm3917 = vcmp.lt.f32.partialorder %v3837, 0.0
        %vm3918 = vcmp.lt.f32.partialorder %v3838, 0.0
        %vm3919 = vcmp.lt.f32.partialorder %v3839, 0.0
        %vm3920 = vcmp.lt.f32.partialorder %v3840, 0.0
        %vm3921 = vcmp.lt.f32.partialorder %v3841, 0.0
        %v3922 = vsel %vm3906, 1, 0
        %v3923 = vsel %vm3907, 1, 0
        %v3924 = vsel %vm3908, 1, 0
        %v3925 = vsel %vm3909, 1, 0
        %v3926 = vsel %vm3910, 1, 0
        %v3927 = vsel %vm3911, 1, 0
        %v3928 = vsel %vm3912, 1, 0
        %v3929 = vsel %vm3913, 1, 0
        %v3930 = vsel %vm3914, 1, 0
        %v3931 = vsel %vm3915, 1, 0
        %v3932 = vsel %vm3916, 1, 0
        %v3933 = vsel %vm3917, 1, 0
        %v3934 = vsel %vm3918, 1, 0
        %v3935 = vsel %vm3919, 1, 0
        %v3936 = vsel %vm3920, 1, 0
        %v3937 = vsel %vm3921, 1, 0
        %v3938 = vcvt.s32.f32 %v3922
        %v3939 = vcvt.s32.f32 %v3923
        %v3940 = vcvt.s32.f32 %v3924
        %v3941 = vcvt.s32.f32 %v3925
        %v3942 = vcvt.s32.f32 %v3926
        %v3943 = vcvt.s32.f32 %v3927
        %v3944 = vcvt.s32.f32 %v3928
        %v3945 = vcvt.s32.f32 %v3929
        %v3946 = vcvt.s32.f32 %v3930
        %v3947 = vcvt.s32.f32 %v3931
        %v3948 = vcvt.s32.f32 %v3932
        %v3949 = vcvt.s32.f32 %v3933
        %v3950 = vcvt.s32.f32 %v3934
        %v3951 = vcvt.s32.f32 %v3935
        %v3952 = vcvt.s32.f32 %v3936
        %v3953 = vcvt.s32.f32 %v3937
        %v3954 = vpack.c.bf16 %v3939, %v3938
        %v3955 = vpack.c.bf16 %v3941, %v3940
        %v3956 = vpack.c.bf16 %v3943, %v3942
        %v3957 = vpack.c.bf16 %v3945, %v3944
        %v3958 = vpack.c.bf16 %v3947, %v3946
        %v3959 = vpack.c.bf16 %v3949, %v3948
        %v3960 = vpack.c.bf16 %v3951, %v3950
        %v3961 = vpack.c.bf16 %v3953, %v3952
        %v3962 = vpack.c.bf16 %v3877, %v3875
        %v3963 = vpack.c.bf16 %v3881, %v3879
        %v3964 = vpack.c.bf16 %v3885, %v3883
        %v3965 = vpack.c.bf16 %v3889, %v3887
        %v3966 = vpack.c.bf16 %v3893, %v3891
        %v3967 = vpack.c.bf16 %v3897, %v3895
        %v3968 = vpack.c.bf16 %v3901, %v3899
        %v3969 = vpack.c.bf16 %v3905, %v3903
        %3970 = vmatprep.subr.bf16.mxu0 0
        %3971 = vmatpush1.bf16.msra.mxu0 %v963
        %3972 = vmatprep.subr.bf16.mxu0 0
        %3973 = vmatpush1.bf16.msra.mxu0 %v964
        %3974 = vmatprep.subr.bf16.mxu0 0
        %3975 = vmatpush1.bf16.msra.mxu0 %v965
        %3976 = vmatprep.subr.bf16.mxu0 0
        %3977 = vmatpush1.bf16.msra.mxu0 %v966
        %3978 = vmatprep.subr.bf16.mxu0 0
        %3979 = vmatpush1.bf16.msra.mxu0 %v967
        %3980 = vmatprep.subr.bf16.mxu0 0
        %3981 = vmatpush1.bf16.msra.mxu0 %v968
        %3982 = vmatprep.subr.bf16.mxu0 0
        %3983 = vmatpush1.bf16.msra.mxu0 %v969
        %3984 = vmatprep.subr.bf16.mxu0 0
        %3985 = vmatpush1.bf16.msra.mxu0 %v970
        %3986 = vmatprep.subr.bf16.mxu0 0
        %3987 = vmatpush1.bf16.msra.mxu0 0
        %3988 = vmatprep.subr.bf16.mxu0 0
        %3989 = vmatpush1.bf16.msra.mxu0 0
        %3990 = vmatprep.subr.bf16.mxu0 0
        %3991 = vmatpush1.bf16.msra.mxu0 0
        %3992 = vmatprep.subr.bf16.mxu0 0
        %3993 = vmatpush1.bf16.msra.mxu0 0
        %3994 = vmatprep.subr.bf16.mxu0 0
        %3995 = vmatpush1.bf16.msra.mxu0 0
        %3996 = vmatprep.subr.bf16.mxu0 0
        %3997 = vmatpush1.bf16.msra.mxu0 0
        %3998 = vmatprep.subr.bf16.mxu0 0
        %3999 = vmatpush1.bf16.msra.mxu0 0
        %4000 = vmatprep.subr.bf16.mxu0 0
        %4001 = vmatpush1.bf16.msra.mxu0 0
        %4002 = vmatprep.mubr.bf16.mxu0 0
        %4003 = vmatmul.mubr.bf16.gmra.mrb[0].mxu0 %v3962
        %v4004 = vpop.f32.mrb[0].mxu0
        %v4005 = vadd.f32 0.0, %v4004
        %v4006 = vpop.f32.mrb[0].mxu0
        %v4007 = vpop.f32.mrb[0].mxu0
        %v4008 = vadd.f32 0.0, %v4007
        %v4009 = vpop.f32.mrb[0].mxu0
        %4010 = vmatprep.mubr.bf16.mxu0 0
        %4011 = vmatmul.mubr.bf16.gmra.mrb[0].mxu0 %v3963
        %v4012 = vpop.f32.mrb[0].mxu0
        %v4013 = vadd.f32 0.0, %v4012
        %v4014 = vpop.f32.mrb[0].mxu0
        %v4015 = vpop.f32.mrb[0].mxu0
        %v4016 = vadd.f32 0.0, %v4015
        %v4017 = vpop.f32.mrb[0].mxu0
        %4018 = vmatprep.mubr.bf16.mxu0 0
        %4019 = vmatmul.mubr.bf16.gmra.mrb[0].mxu0 %v3964
        %v4020 = vpop.f32.mrb[0].mxu0
        %v4021 = vadd.f32 0.0, %v4020
        %v4022 = vpop.f32.mrb[0].mxu0
        %v4023 = vpop.f32.mrb[0].mxu0
        %v4024 = vadd.f32 0.0, %v4023
        %v4025 = vpop.f32.mrb[0].mxu0
        %4026 = vmatprep.mubr.bf16.mxu0 0
        %4027 = vmatmul.mubr.bf16.gmra.mrb[0].mxu0 %v3965
        %v4028 = vpop.f32.mrb[0].mxu0
        %v4029 = vadd.f32 0.0, %v4028
        %v4030 = vpop.f32.mrb[0].mxu0
        %v4031 = vpop.f32.mrb[0].mxu0
        %v4032 = vadd.f32 0.0, %v4031
        %v4033 = vpop.f32.mrb[0].mxu0
        %4034 = vmatprep.mubr.bf16.mxu0 0
        %4035 = vmatmul.mubr.bf16.gmra.mrb[0].mxu0 %v3966
        %v4036 = vpop.f32.mrb[0].mxu0
        %v4037 = vadd.f32 0.0, %v4036
        %v4038 = vpop.f32.mrb[0].mxu0
        %v4039 = vpop.f32.mrb[0].mxu0
        %v4040 = vadd.f32 0.0, %v4039
        %v4041 = vpop.f32.mrb[0].mxu0
        %4042 = vmatprep.mubr.bf16.mxu0 0
        %4043 = vmatmul.mubr.bf16.gmra.mrb[0].mxu0 %v3967
        %v4044 = vpop.f32.mrb[0].mxu0
        %v4045 = vadd.f32 0.0, %v4044
        %v4046 = vpop.f32.mrb[0].mxu0
        %v4047 = vpop.f32.mrb[0].mxu0
        %v4048 = vadd.f32 0.0, %v4047
        %v4049 = vpop.f32.mrb[0].mxu0
        %4050 = vmatprep.mubr.bf16.mxu0 0
        %4051 = vmatmul.mubr.bf16.gmra.mrb[0].mxu0 %v3968
        %v4052 = vpop.f32.mrb[0].mxu0
        %v4053 = vadd.f32 0.0, %v4052
        %v4054 = vpop.f32.mrb[0].mxu0
        %v4055 = vpop.f32.mrb[0].mxu0
        %v4056 = vadd.f32 0.0, %v4055
        %v4057 = vpop.f32.mrb[0].mxu0
        %4058 = vmatprep.mubr.bf16.mxu0 0
        %4059 = vmatmul.mubr.bf16.gmra.mrb[0].mxu0 %v3969
        %v4060 = vpop.f32.mrb[0].mxu0
        %v4061 = vadd.f32 0.0, %v4060
        %v4062 = vpop.f32.mrb[0].mxu0
        %v4063 = vpop.f32.mrb[0].mxu0
        %v4064 = vadd.f32 0.0, %v4063
        %v4065 = vpop.f32.mrb[0].mxu0
        %4066 = vdwg.mxu0
        %4067 = vmatprep.subr.bf16.mxu0 0
        %4068 = vmatpush1.bf16.msra.mxu0 %v963
        %4069 = vmatprep.subr.bf16.mxu0 0
        %4070 = vmatpush1.bf16.msra.mxu0 %v964
        %4071 = vmatprep.subr.bf16.mxu0 0
        %4072 = vmatpush1.bf16.msra.mxu0 %v965
        %4073 = vmatprep.subr.bf16.mxu0 0
        %4074 = vmatpush1.bf16.msra.mxu0 %v966
        %4075 = vmatprep.subr.bf16.mxu0 0
        %4076 = vmatpush1.bf16.msra.mxu0 %v967
        %4077 = vmatprep.subr.bf16.mxu0 0
        %4078 = vmatpush1.bf16.msra.mxu0 %v968
        %4079 = vmatprep.subr.bf16.mxu0 0
        %4080 = vmatpush1.bf16.msra.mxu0 %v969
        %4081 = vmatprep.subr.bf16.mxu0 0
        %4082 = vmatpush1.bf16.msra.mxu0 %v970
        %4083 = vmatprep.subr.bf16.mxu0 0
        %4084 = vmatpush1.bf16.msra.mxu0 0
        %4085 = vmatprep.subr.bf16.mxu0 0
        %4086 = vmatpush1.bf16.msra.mxu0 0
        %4087 = vmatprep.subr.bf16.mxu0 0
        %4088 = vmatpush1.bf16.msra.mxu0 0
        %4089 = vmatprep.subr.bf16.mxu0 0
        %4090 = vmatpush1.bf16.msra.mxu0 0
        %4091 = vmatprep.subr.bf16.mxu0 0
        %4092 = vmatpush1.bf16.msra.mxu0 0
        %4093 = vmatprep.subr.bf16.mxu0 0
        %4094 = vmatpush1.bf16.msra.mxu0 0
        %4095 = vmatprep.subr.bf16.mxu0 0
        %4096 = vmatpush1.bf16.msra.mxu0 0
        %4097 = vmatprep.subr.bf16.mxu0 0
        %4098 = vmatpush1.bf16.msra.mxu0 0
        %4099 = vmatprep.mubr.bf16.mxu0 0
        %4100 = vmatmul.mubr.bf16.gmra.mrb[0].mxu0 %v3954
        %v4101 = vpop.f32.mrb[0].mxu0
        %v4102 = vadd.f32 0.0, %v4101
        %v4103 = vpop.f32.mrb[0].mxu0
        %v4104 = vpop.f32.mrb[0].mxu0
        %v4105 = vadd.f32 0.0, %v4104
        %v4106 = vpop.f32.mrb[0].mxu0
        %4107 = vmatprep.mubr.bf16.mxu0 0
        %4108 = vmatmul.mubr.bf16.gmra.mrb[0].mxu0 %v3955
        %v4109 = vpop.f32.mrb[0].mxu0
        %v4110 = vadd.f32 0.0, %v4109
        %v4111 = vpop.f32.mrb[0].mxu0
        %v4112 = vpop.f32.mrb[0].mxu0
        %v4113 = vadd.f32 0.0, %v4112
        %v4114 = vpop.f32.mrb[0].mxu0
        %4115 = vmatprep.mubr.bf16.mxu0 0
        %4116 = vmatmul.mubr.bf16.gmra.mrb[0].mxu0 %v3956
        %v4117 = vpop.f32.mrb[0].mxu0
        %v4118 = vadd.f32 0.0, %v4117
        %v4119 = vpop.f32.mrb[0].mxu0
        %v4120 = vpop.f32.mrb[0].mxu0
        %v4121 = vadd.f32 0.0, %v4120
        %v4122 = vpop.f32.mrb[0].mxu0
        %4123 = vmatprep.mubr.bf16.mxu0 0
        %4124 = vmatmul.mubr.bf16.gmra.mrb[0].mxu0 %v3957
        %v4125 = vpop.f32.mrb[0].mxu0
        %v4126 = vadd.f32 0.0, %v4125
        %v4127 = vpop.f32.mrb[0].mxu0
        %v4128 = vpop.f32.mrb[0].mxu0
        %v4129 = vadd.f32 0.0, %v4128
        %v4130 = vpop.f32.mrb[0].mxu0
        %4131 = vmatprep.mubr.bf16.mxu0 0
        %4132 = vmatmul.mubr.bf16.gmra.mrb[0].mxu0 %v3958
        %v4133 = vpop.f32.mrb[0].mxu0
        %v4134 = vadd.f32 0.0, %v4133
        %v4135 = vpop.f32.mrb[0].mxu0
        %v4136 = vpop.f32.mrb[0].mxu0
        %v4137 = vadd.f32 0.0, %v4136
        %v4138 = vpop.f32.mrb[0].mxu0
        %4139 = vmatprep.mubr.bf16.mxu0 0
        %4140 = vmatmul.mubr.bf16.gmra.mrb[0].mxu0 %v3959
        %v4141 = vpop.f32.mrb[0].mxu0
        %v4142 = vadd.f32 0.0, %v4141
        %v4143 = vpop.f32.mrb[0].mxu0
        %v4144 = vpop.f32.mrb[0].mxu0
        %v4145 = vadd.f32 0.0, %v4144
        %v4146 = vpop.f32.mrb[0].mxu0
        %4147 = vmatprep.mubr.bf16.mxu0 0
        %4148 = vmatmul.mubr.bf16.gmra.mrb[0].mxu0 %v3960
        %v4149 = vpop.f32.mrb[0].mxu0
        %v4150 = vadd.f32 0.0, %v4149
        %v4151 = vpop.f32.mrb[0].mxu0
        %v4152 = vpop.f32.mrb[0].mxu0
        %v4153 = vadd.f32 0.0, %v4152
        %v4154 = vpop.f32.mrb[0].mxu0
        %4155 = vmatprep.mubr.bf16.mxu0 0
        %4156 = vmatmul.mubr.bf16.gmra.mrb[0].mxu0 %v3961
        %v4157 = vpop.f32.mrb[0].mxu0
        %v4158 = vadd.f32 0.0, %v4157
        %v4159 = vpop.f32.mrb[0].mxu0
        %v4160 = vpop.f32.mrb[0].mxu0
        %v4161 = vadd.f32 0.0, %v4160
        %v4162 = vpop.f32.mrb[0].mxu0
        %4163 = vdwg.mxu0
        %v4164 = vmul.f32 %v4102, 0.5
        %v4165 = vmul.f32 %v4105, 0.5
        %v4166 = vmul.f32 %v4110, 0.5
        %v4167 = vmul.f32 %v4113, 0.5
        %v4168 = vmul.f32 %v4118, 0.5
        %v4169 = vmul.f32 %v4121, 0.5
        %v4170 = vmul.f32 %v4126, 0.5
        %v4171 = vmul.f32 %v4129, 0.5
        %v4172 = vmul.f32 %v4134, 0.5
        %v4173 = vmul.f32 %v4137, 0.5
        %v4174 = vmul.f32 %v4142, 0.5
        %v4175 = vmul.f32 %v4145, 0.5
        %v4176 = vmul.f32 %v4150, 0.5
        %v4177 = vmul.f32 %v4153, 0.5
        %v4178 = vmul.f32 %v4158, 0.5
        %v4179 = vmul.f32 %v4161, 0.5
        %v4180 = vfloor.f32 %v4164
        %v4181 = vfloor.f32 %v4165
        %v4182 = vfloor.f32 %v4166
        %v4183 = vfloor.f32 %v4167
        %v4184 = vfloor.f32 %v4168
        %v4185 = vfloor.f32 %v4169
        %v4186 = vfloor.f32 %v4170
        %v4187 = vfloor.f32 %v4171
        %v4188 = vfloor.f32 %v4172
        %v4189 = vfloor.f32 %v4173
        %v4190 = vfloor.f32 %v4174
        %v4191 = vfloor.f32 %v4175
        %v4192 = vfloor.f32 %v4176
        %v4193 = vfloor.f32 %v4177
        %v4194 = vfloor.f32 %v4178
        %v4195 = vfloor.f32 %v4179
        %v4196 = vmul.f32 %v4180, 2.0
        %v4197 = vmul.f32 %v4181, 2.0
        %v4198 = vmul.f32 %v4182, 2.0
        %v4199 = vmul.f32 %v4183, 2.0
        %v4200 = vmul.f32 %v4184, 2.0
        %v4201 = vmul.f32 %v4185, 2.0
        %v4202 = vmul.f32 %v4186, 2.0
        %v4203 = vmul.f32 %v4187, 2.0
        %v4204 = vmul.f32 %v4188, 2.0
        %v4205 = vmul.f32 %v4189, 2.0
        %v4206 = vmul.f32 %v4190, 2.0
        %v4207 = vmul.f32 %v4191, 2.0
        %v4208 = vmul.f32 %v4192, 2.0
        %v4209 = vmul.f32 %v4193, 2.0
        %v4210 = vmul.f32 %v4194, 2.0
        %v4211 = vmul.f32 %v4195, 2.0
        %v4212 = vsub.f32 %v4102, %v4196
        %v4213 = vsub.f32 %v4105, %v4197
        %v4214 = vsub.f32 %v4110, %v4198
        %v4215 = vsub.f32 %v4113, %v4199
        %v4216 = vsub.f32 %v4118, %v4200
        %v4217 = vsub.f32 %v4121, %v4201
        %v4218 = vsub.f32 %v4126, %v4202
        %v4219 = vsub.f32 %v4129, %v4203
        %v4220 = vsub.f32 %v4134, %v4204
        %v4221 = vsub.f32 %v4137, %v4205
        %v4222 = vsub.f32 %v4142, %v4206
        %v4223 = vsub.f32 %v4145, %v4207
        %v4224 = vsub.f32 %v4150, %v4208
        %v4225 = vsub.f32 %v4153, %v4209
        %v4226 = vsub.f32 %v4158, %v4210
        %v4227 = vsub.f32 %v4161, %v4211
        %v4228 = vmul.f32 %v4212, 2.0
        %v4229 = vmul.f32 %v4213, 2.0
        %v4230 = vmul.f32 %v4214, 2.0
        %v4231 = vmul.f32 %v4215, 2.0
        %v4232 = vmul.f32 %v4216, 2.0
        %v4233 = vmul.f32 %v4217, 2.0
        %v4234 = vmul.f32 %v4218, 2.0
        %v4235 = vmul.f32 %v4219, 2.0
        %v4236 = vmul.f32 %v4220, 2.0
        %v4237 = vmul.f32 %v4221, 2.0
        %v4238 = vmul.f32 %v4222, 2.0
        %v4239 = vmul.f32 %v4223, 2.0
        %v4240 = vmul.f32 %v4224, 2.0
        %v4241 = vmul.f32 %v4225, 2.0
        %v4242 = vmul.f32 %v4226, 2.0
        %v4243 = vmul.f32 %v4227, 2.0
        %v4244 = vsub.f32 1.0, %v4228
        %v4245 = vsub.f32 1.0, %v4229
        %v4246 = vsub.f32 1.0, %v4230
        %v4247 = vsub.f32 1.0, %v4231
        %v4248 = vsub.f32 1.0, %v4232
        %v4249 = vsub.f32 1.0, %v4233
        %v4250 = vsub.f32 1.0, %v4234
        %v4251 = vsub.f32 1.0, %v4235
        %v4252 = vsub.f32 1.0, %v4236
        %v4253 = vsub.f32 1.0, %v4237
        %v4254 = vsub.f32 1.0, %v4238
        %v4255 = vsub.f32 1.0, %v4239
        %v4256 = vsub.f32 1.0, %v4240
        %v4257 = vsub.f32 1.0, %v4241
        %v4258 = vsub.f32 1.0, %v4242
        %v4259 = vsub.f32 1.0, %v4243
        %v4260 = vmul.f32 %v4005, 1.442695
        %v4261 = vpow.pop %v4260
        %v4262 = vmul.f32 %v4008, 1.442695
        %v4263 = vpow.pop %v4262
        %v4264 = vmul.f32 %v4013, 1.442695
        %v4265 = vpow.pop %v4264
        %v4266 = vmul.f32 %v4016, 1.442695
        %v4267 = vpow.pop %v4266
        %v4268 = vmul.f32 %v4021, 1.442695
        %v4269 = vpow.pop %v4268
        %v4270 = vmul.f32 %v4024, 1.442695
        %v4271 = vpow.pop %v4270
        %v4272 = vmul.f32 %v4029, 1.442695
        %v4273 = vpow.pop %v4272
        %v4274 = vmul.f32 %v4032, 1.442695
        %v4275 = vpow.pop %v4274
        %v4276 = vmul.f32 %v4037, 1.442695
        %v4277 = vpow.pop %v4276
        %v4278 = vmul.f32 %v4040, 1.442695
        %v4279 = vpow.pop %v4278
        %v4280 = vmul.f32 %v4045, 1.442695
        %v4281 = vpow.pop %v4280
        %v4282 = vmul.f32 %v4048, 1.442695
        %v4283 = vpow.pop %v4282
        %v4284 = vmul.f32 %v4053, 1.442695
        %v4285 = vpow.pop %v4284
        %v4286 = vmul.f32 %v4056, 1.442695
        %v4287 = vpow.pop %v4286
        %v4288 = vmul.f32 %v4061, 1.442695
        %v4289 = vpow.pop %v4288
        %v4290 = vmul.f32 %v4064, 1.442695
        %v4291 = vpow.pop %v4290
        %v4292 = vmul.f32 %v4244, %v4261
        %v4293 = vmul.f32 %v4245, %v4263
        %v4294 = vmul.f32 %v4246, %v4265
        %v4295 = vmul.f32 %v4247, %v4267
        %v4296 = vmul.f32 %v4248, %v4269
        %v4297 = vmul.f32 %v4249, %v4271
        %v4298 = vmul.f32 %v4250, %v4273
        %v4299 = vmul.f32 %v4251, %v4275
        %v4300 = vmul.f32 %v4252, %v4277
        %v4301 = vmul.f32 %v4253, %v4279
        %v4302 = vmul.f32 %v4254, %v4281
        %v4303 = vmul.f32 %v4255, %v4283
        %v4304 = vmul.f32 %v4256, %v4285
        %v4305 = vmul.f32 %v4257, %v4287
        %v4306 = vmul.f32 %v4258, %v4289
        %v4307 = vmul.f32 %v4259, %v4291
        %v4308 = vmax.f32 %v4292, -0.999999
        %v4309 = vmax.f32 %v4293, -0.999999
        %v4310 = vmax.f32 %v4294, -0.999999
        %v4311 = vmax.f32 %v4295, -0.999999
        %v4312 = vmax.f32 %v4296, -0.999999
        %v4313 = vmax.f32 %v4297, -0.999999
        %v4314 = vmax.f32 %v4298, -0.999999
        %v4315 = vmax.f32 %v4299, -0.999999
        %v4316 = vmax.f32 %v4300, -0.999999
        %v4317 = vmax.f32 %v4301, -0.999999
        %v4318 = vmax.f32 %v4302, -0.999999
        %v4319 = vmax.f32 %v4303, -0.999999
        %v4320 = vmax.f32 %v4304, -0.999999
        %v4321 = vmax.f32 %v4305, -0.999999
        %v4322 = vmax.f32 %v4306, -0.999999
        %v4323 = vmax.f32 %v4307, -0.999999
        %v4324 = vmin.f32 %v4308, 0.999999
        %v4325 = vmin.f32 %v4309, 0.999999
        %v4326 = vmin.f32 %v4310, 0.999999
        %v4327 = vmin.f32 %v4311, 0.999999
        %v4328 = vmin.f32 %v4312, 0.999999
        %v4329 = vmin.f32 %v4313, 0.999999
        %v4330 = vmin.f32 %v4314, 0.999999
        %v4331 = vmin.f32 %v4315, 0.999999
        %v4332 = vmin.f32 %v4316, 0.999999
        %v4333 = vmin.f32 %v4317, 0.999999
        %v4334 = vmin.f32 %v4318, 0.999999
        %v4335 = vmin.f32 %v4319, 0.999999
        %v4336 = vmin.f32 %v4320, 0.999999
        %v4337 = vmin.f32 %v4321, 0.999999
        %v4338 = vmin.f32 %v4322, 0.999999
        %v4339 = vmin.f32 %v4323, 0.999999
        %v4340 = vadd.f32 %v4324, 1.0
        %v4341 = vadd.f32 %v4325, 1.0
        %v4342 = vadd.f32 %v4326, 1.0
        %v4343 = vadd.f32 %v4327, 1.0
        %v4344 = vadd.f32 %v4328, 1.0
        %v4345 = vadd.f32 %v4329, 1.0
        %v4346 = vadd.f32 %v4330, 1.0
        %v4347 = vadd.f32 %v4331, 1.0
        %v4348 = vadd.f32 %v4332, 1.0
        %v4349 = vadd.f32 %v4333, 1.0
        %v4350 = vadd.f32 %v4334, 1.0
        %v4351 = vadd.f32 %v4335, 1.0
        %v4352 = vadd.f32 %v4336, 1.0
        %v4353 = vadd.f32 %v4337, 1.0
        %v4354 = vadd.f32 %v4338, 1.0
        %v4355 = vadd.f32 %v4339, 1.0
        %v4356 = vsub.f32 1.0, %v4324
        %v4357 = vsub.f32 1.0, %v4325
        %v4358 = vsub.f32 1.0, %v4326
        %v4359 = vsub.f32 1.0, %v4327
        %v4360 = vsub.f32 1.0, %v4328
        %v4361 = vsub.f32 1.0, %v4329
        %v4362 = vsub.f32 1.0, %v4330
        %v4363 = vsub.f32 1.0, %v4331
        %v4364 = vsub.f32 1.0, %v4332
        %v4365 = vsub.f32 1.0, %v4333
        %v4366 = vsub.f32 1.0, %v4334
        %v4367 = vsub.f32 1.0, %v4335
        %v4368 = vsub.f32 1.0, %v4336
        %v4369 = vsub.f32 1.0, %v4337
        %v4370 = vsub.f32 1.0, %v4338
        %v4371 = vsub.f32 1.0, %v4339
        %v4372 = vrcp.pop %v4356
        %v4373 = vmul.f32 %v4340, %v4372
        %v4374 = vrcp.pop %v4357
        %v4375 = vmul.f32 %v4341, %v4374
        %v4376 = vrcp.pop %v4358
        %v4377 = vmul.f32 %v4342, %v4376
        %v4378 = vrcp.pop %v4359
        %v4379 = vmul.f32 %v4343, %v4378
        %v4380 = vrcp.pop %v4360
        %v4381 = vmul.f32 %v4344, %v4380
        %v4382 = vrcp.pop %v4361
        %v4383 = vmul.f32 %v4345, %v4382
        %v4384 = vrcp.pop %v4362
        %v4385 = vmul.f32 %v4346, %v4384
        %v4386 = vrcp.pop %v4363
        %v4387 = vmul.f32 %v4347, %v4386
        %v4388 = vrcp.pop %v4364
        %v4389 = vmul.f32 %v4348, %v4388
        %v4390 = vrcp.pop %v4365
        %v4391 = vmul.f32 %v4349, %v4390
        %v4392 = vrcp.pop %v4366
        %v4393 = vmul.f32 %v4350, %v4392
        %v4394 = vrcp.pop %v4367
        %v4395 = vmul.f32 %v4351, %v4394
        %v4396 = vrcp.pop %v4368
        %v4397 = vmul.f32 %v4352, %v4396
        %v4398 = vrcp.pop %v4369
        %v4399 = vmul.f32 %v4353, %v4398
        %v4400 = vrcp.pop %v4370
        %v4401 = vmul.f32 %v4354, %v4400
        %v4402 = vrcp.pop %v4371
        %v4403 = vmul.f32 %v4355, %v4402
        %v4404 = vlog2.pop %v4373
        %v4405 = vmul.f32 %v4404, 0.6931472
        %v4406 = vlog2.pop %v4375
        %v4407 = vmul.f32 %v4406, 0.6931472
        %v4408 = vlog2.pop %v4377
        %v4409 = vmul.f32 %v4408, 0.6931472
        %v4410 = vlog2.pop %v4379
        %v4411 = vmul.f32 %v4410, 0.6931472
        %v4412 = vlog2.pop %v4381
        %v4413 = vmul.f32 %v4412, 0.6931472
        %v4414 = vlog2.pop %v4383
        %v4415 = vmul.f32 %v4414, 0.6931472
        %v4416 = vlog2.pop %v4385
        %v4417 = vmul.f32 %v4416, 0.6931472
        %v4418 = vlog2.pop %v4387
        %v4419 = vmul.f32 %v4418, 0.6931472
        %v4420 = vlog2.pop %v4389
        %v4421 = vmul.f32 %v4420, 0.6931472
        %v4422 = vlog2.pop %v4391
        %v4423 = vmul.f32 %v4422, 0.6931472
        %v4424 = vlog2.pop %v4393
        %v4425 = vmul.f32 %v4424, 0.6931472
        %v4426 = vlog2.pop %v4395
        %v4427 = vmul.f32 %v4426, 0.6931472
        %v4428 = vlog2.pop %v4397
        %v4429 = vmul.f32 %v4428, 0.6931472
        %v4430 = vlog2.pop %v4399
        %v4431 = vmul.f32 %v4430, 0.6931472
        %v4432 = vlog2.pop %v4401
        %v4433 = vmul.f32 %v4432, 0.6931472
        %v4434 = vlog2.pop %v4403
        %v4435 = vmul.f32 %v4434, 0.6931472
        %v4436 = vmax.f32 %v1446, %v4405
        %v4437 = vmax.f32 %v1446, %v4407
        %v4438 = vmax.f32 %v1446, %v4409
        %v4439 = vmax.f32 %v1446, %v4411
        %v4440 = vmax.f32 %v1446, %v4413
        %v4441 = vmax.f32 %v1446, %v4415
        %v4442 = vmax.f32 %v1446, %v4417
        %v4443 = vmax.f32 %v1446, %v4419
        %v4444 = vmax.f32 %v1446, %v4421
        %v4445 = vmax.f32 %v1446, %v4423
        %v4446 = vmax.f32 %v1446, %v4425
        %v4447 = vmax.f32 %v1446, %v4427
        %v4448 = vmax.f32 %v1446, %v4429
        %v4449 = vmax.f32 %v1446, %v4431
        %v4450 = vmax.f32 %v1446, %v4433
        %v4451 = vmax.f32 %v1446, %v4435
        %v4452 = vmin.f32 %v1463, %v4436
        %v4453 = vmin.f32 %v1463, %v4437
        %v4454 = vmin.f32 %v1463, %v4438
        %v4455 = vmin.f32 %v1463, %v4439
        %v4456 = vmin.f32 %v1463, %v4440
        %v4457 = vmin.f32 %v1463, %v4441
        %v4458 = vmin.f32 %v1463, %v4442
        %v4459 = vmin.f32 %v1463, %v4443
        %v4460 = vmin.f32 %v1463, %v4444
        %v4461 = vmin.f32 %v1463, %v4445
        %v4462 = vmin.f32 %v1463, %v4446
        %v4463 = vmin.f32 %v1463, %v4447
        %v4464 = vmin.f32 %v1463, %v4448
        %v4465 = vmin.f32 %v1463, %v4449
        %v4466 = vmin.f32 %v1463, %v4450
        %v4467 = vmin.f32 %v1463, %v4451
        %v4468 = vpack.c.bf16 %v4453, %v4452
        %v4469 = vpack.c.bf16 %v4455, %v4454
        %v4470 = vpack.c.bf16 %v4457, %v4456
        %v4471 = vpack.c.bf16 %v4459, %v4458
        %v4472 = vpack.c.bf16 %v4461, %v4460
        %v4473 = vpack.c.bf16 %v4463, %v4462
        %v4474 = vpack.c.bf16 %v4465, %v4464
        %v4475 = vpack.c.bf16 %v4467, %v4466
        %v4476 = vld [vmem:[#allocation12] sm:$0xf]
        %v4477 = vld [vmem:[#allocation12 + $0x4] sm:$0xf]
        %v4478 = vld [vmem:[#allocation12 + $0x8] sm:$0xf]
        %v4479 = vld [vmem:[#allocation12 + $0xc] sm:$0xf]
        %v4480 = vld [vmem:[#allocation12 + $0x10] sm:$0xf]
        %v4481 = vld [vmem:[#allocation12 + $0x14] sm:$0xf]
        %v4482 = vld [vmem:[#allocation12 + $0x18] sm:$0xf]
        %v4483 = vld [vmem:[#allocation12 + $0x1c] sm:$0xf]
        %v4484 = vld [vmem:[#allocation12 + $0x20] sm:$0xf]
        %v4485 = vld [vmem:[#allocation12 + $0x24] sm:$0xf]
        %v4486 = vld [vmem:[#allocation12 + $0x28] sm:$0xf]
        %v4487 = vld [vmem:[#allocation12 + $0x2c] sm:$0xf]
        %v4488 = vld [vmem:[#allocation12 + $0x30] sm:$0xf]
        %v4489 = vld [vmem:[#allocation12 + $0x34] sm:$0xf]
        %v4490 = vld [vmem:[#allocation12 + $0x38] sm:$0xf]
        %v4491 = vld [vmem:[#allocation12 + $0x3c] sm:$0xf]
        %v4508 = vunpack.c.l.b16 %v4476
        %v4509 = vunpack.c.l.b16 %v4477
        %v4510 = vunpack.c.l.b16 %v4478
        %v4511 = vunpack.c.l.b16 %v4479
        %v4512 = vunpack.c.l.b16 %v4480
        %v4513 = vunpack.c.l.b16 %v4481
        %v4514 = vunpack.c.l.b16 %v4482
        %v4515 = vunpack.c.l.b16 %v4483
        %v4516 = vunpack.c.l.b16 %v4484
        %v4517 = vunpack.c.l.b16 %v4485
        %v4518 = vunpack.c.l.b16 %v4486
        %v4519 = vunpack.c.l.b16 %v4487
        %v4520 = vunpack.c.l.b16 %v4488
        %v4521 = vunpack.c.l.b16 %v4489
        %v4522 = vunpack.c.l.b16 %v4490
        %v4523 = vunpack.c.l.b16 %v4491
        %v4524 = vpack.c.b16 %v4509, %v4508
        %v4525 = vpack.c.b16 %v4511, %v4510
        %v4526 = vpack.c.b16 %v4513, %v4512
        %v4527 = vpack.c.b16 %v4515, %v4514
        %v4528 = vpack.c.b16 %v4517, %v4516
        %v4529 = vpack.c.b16 %v4519, %v4518
        %v4530 = vpack.c.b16 %v4521, %v4520
        %v4531 = vpack.c.b16 %v4523, %v4522
        %4540 = vmatprep.subr.bf16.mxu0 0
        %4541 = vmatpush1.bf16.msra.mxu0 %v4524
        %4542 = vmatprep.subr.bf16.mxu0 0
        %4543 = vmatpush1.bf16.msra.mxu0 %v4525
        %4544 = vmatprep.subr.bf16.mxu0 0
        %4545 = vmatpush1.bf16.msra.mxu0 %v4526
        %4546 = vmatprep.subr.bf16.mxu0 0
        %4547 = vmatpush1.bf16.msra.mxu0 %v4527
        %4548 = vmatprep.subr.bf16.mxu0 0
        %4549 = vmatpush1.bf16.msra.mxu0 %v4528
        %4550 = vmatprep.subr.bf16.mxu0 0
        %4551 = vmatpush1.bf16.msra.mxu0 %v4529
        %4552 = vmatprep.subr.bf16.mxu0 0
        %4553 = vmatpush1.bf16.msra.mxu0 %v4530
        %4554 = vmatprep.subr.bf16.mxu0 0
        %4555 = vmatpush1.bf16.msra.mxu0 %v4531
        %4556 = vmatprep.subr.bf16.mxu0 0
        %4557 = vmatpush1.bf16.msra.mxu0 0
        %4558 = vmatprep.subr.bf16.mxu0 0
        %4559 = vmatpush1.bf16.msra.mxu0 0
        %4560 = vmatprep.subr.bf16.mxu0 0
        %4561 = vmatpush1.bf16.msra.mxu0 0
        %4562 = vmatprep.subr.bf16.mxu0 0
        %4563 = vmatpush1.bf16.msra.mxu0 0
        %4564 = vmatprep.subr.bf16.mxu0 0
        %4565 = vmatpush1.bf16.msra.mxu0 0
        %4566 = vmatprep.subr.bf16.mxu0 0
        %4567 = vmatpush1.bf16.msra.mxu0 0
        %4568 = vmatprep.subr.bf16.mxu0 0
        %4569 = vmatpush1.bf16.msra.mxu0 0
        %4570 = vmatprep.subr.bf16.mxu0 0
        %4571 = vmatpush1.bf16.msra.mxu0 0
        %4572 = vmatprep.mubr.bf16.mxu0 0
        %4573 = vmatmul.mubr.bf16.gmra.mrb[0].mxu0 %v4468
        %v4574 = vpop.f32.mrb[0].mxu0
        %v4575 = vadd.f32 %v401, %v4574
        %v4576 = vpop.f32.mrb[0].mxu0
        %v4577 = vpop.f32.mrb[0].mxu0
        %v4578 = vadd.f32 %v402, %v4577
        %v4579 = vpop.f32.mrb[0].mxu0
        %4580 = vmatprep.mubr.bf16.mxu0 0
        %4581 = vmatmul.mubr.bf16.gmra.mrb[0].mxu0 %v4469
        %v4582 = vpop.f32.mrb[0].mxu0
        %v4583 = vadd.f32 %v403, %v4582
        %v4584 = vpop.f32.mrb[0].mxu0
        %v4585 = vpop.f32.mrb[0].mxu0
        %v4586 = vadd.f32 %v404, %v4585
        %v4587 = vpop.f32.mrb[0].mxu0
        %4588 = vmatprep.mubr.bf16.mxu0 0
        %4589 = vmatmul.mubr.bf16.gmra.mrb[0].mxu0 %v4470
        %v4590 = vpop.f32.mrb[0].mxu0
        %v4591 = vadd.f32 %v405, %v4590
        %v4592 = vpop.f32.mrb[0].mxu0
        %v4593 = vpop.f32.mrb[0].mxu0
        %v4594 = vadd.f32 %v406, %v4593
        %v4595 = vpop.f32.mrb[0].mxu0
        %4596 = vmatprep.mubr.bf16.mxu0 0
        %4597 = vmatmul.mubr.bf16.gmra.mrb[0].mxu0 %v4471
        %v4598 = vpop.f32.mrb[0].mxu0
        %v4599 = vadd.f32 %v407, %v4598
        %v4600 = vpop.f32.mrb[0].mxu0
        %v4601 = vpop.f32.mrb[0].mxu0
        %v4602 = vadd.f32 %v408, %v4601
        %v4603 = vpop.f32.mrb[0].mxu0
        %4604 = vmatprep.mubr.bf16.mxu0 0
        %4605 = vmatmul.mubr.bf16.gmra.mrb[0].mxu0 %v4472
        %v4606 = vpop.f32.mrb[0].mxu0
        %v4607 = vadd.f32 %v409, %v4606
        %v4608 = vpop.f32.mrb[0].mxu0
        %v4609 = vpop.f32.mrb[0].mxu0
        %v4610 = vadd.f32 %v410, %v4609
        %v4611 = vpop.f32.mrb[0].mxu0
        %4612 = vmatprep.mubr.bf16.mxu0 0
        %4613 = vmatmul.mubr.bf16.gmra.mrb[0].mxu0 %v4473
        %v4614 = vpop.f32.mrb[0].mxu0
        %v4615 = vadd.f32 %v411, %v4614
        %v4616 = vpop.f32.mrb[0].mxu0
        %v4617 = vpop.f32.mrb[0].mxu0
        %v4618 = vadd.f32 %v412, %v4617
        %v4619 = vpop.f32.mrb[0].mxu0
        %4620 = vmatprep.mubr.bf16.mxu0 0
        %4621 = vmatmul.mubr.bf16.gmra.mrb[0].mxu0 %v4474
        %v4622 = vpop.f32.mrb[0].mxu0
        %v4623 = vadd.f32 %v413, %v4622
        %v4624 = vpop.f32.mrb[0].mxu0
        %v4625 = vpop.f32.mrb[0].mxu0
        %v4626 = vadd.f32 %v414, %v4625
        %v4627 = vpop.f32.mrb[0].mxu0
        %4628 = vmatprep.mubr.bf16.mxu0 0
        %4629 = vmatmul.mubr.bf16.gmra.mrb[0].mxu0 %v4475
        %v4630 = vpop.f32.mrb[0].mxu0
        %v4631 = vadd.f32 %v415, %v4630
        %v4632 = vpop.f32.mrb[0].mxu0
        %v4633 = vpop.f32.mrb[0].mxu0
        %v4634 = vadd.f32 %v416, %v4633
        %v4635 = vpop.f32.mrb[0].mxu0
        %4636 = vdwg.mxu0
        %v4637 = vmul.f32 %v4575, 1.442695
        %v4638 = vpow.pop %v4637
        %v4639 = vmul.f32 %v4578, 1.442695
        %v4640 = vpow.pop %v4639
        %v4641 = vmul.f32 %v4583, 1.442695
        %v4642 = vpow.pop %v4641
        %v4643 = vmul.f32 %v4586, 1.442695
        %v4644 = vpow.pop %v4643
        %v4645 = vmul.f32 %v4591, 1.442695
        %v4646 = vpow.pop %v4645
        %v4647 = vmul.f32 %v4594, 1.442695
        %v4648 = vpow.pop %v4647
        %v4649 = vmul.f32 %v4599, 1.442695
        %v4650 = vpow.pop %v4649
        %v4651 = vmul.f32 %v4602, 1.442695
        %v4652 = vpow.pop %v4651
        %v4653 = vmul.f32 %v4607, 1.442695
        %v4654 = vpow.pop %v4653
        %v4655 = vmul.f32 %v4610, 1.442695
        %v4656 = vpow.pop %v4655
        %v4657 = vmul.f32 %v4615, 1.442695
        %v4658 = vpow.pop %v4657
        %v4659 = vmul.f32 %v4618, 1.442695
        %v4660 = vpow.pop %v4659
        %v4661 = vmul.f32 %v4623, 1.442695
        %v4662 = vpow.pop %v4661
        %v4663 = vmul.f32 %v4626, 1.442695
        %v4664 = vpow.pop %v4663
        %v4665 = vmul.f32 %v4631, 1.442695
        %v4666 = vpow.pop %v4665
        %v4667 = vmul.f32 %v4634, 1.442695
        %v4668 = vpow.pop %v4667
        %v4669 = vadd.f32 %v4638, 1.0
        %v4670 = vadd.f32 %v4640, 1.0
        %v4671 = vadd.f32 %v4642, 1.0
        %v4672 = vadd.f32 %v4644, 1.0
        %v4673 = vadd.f32 %v4646, 1.0
        %v4674 = vadd.f32 %v4648, 1.0
        %v4675 = vadd.f32 %v4650, 1.0
        %v4676 = vadd.f32 %v4652, 1.0
        %v4677 = vadd.f32 %v4654, 1.0
        %v4678 = vadd.f32 %v4656, 1.0
        %v4679 = vadd.f32 %v4658, 1.0
        %v4680 = vadd.f32 %v4660, 1.0
        %v4681 = vadd.f32 %v4662, 1.0
        %v4682 = vadd.f32 %v4664, 1.0
        %v4683 = vadd.f32 %v4666, 1.0
        %v4684 = vadd.f32 %v4668, 1.0
        %v4685 = vrcp.pop %v4669
        %v4686 = vmul.f32 1.0, %v4685
        %v4687 = vrcp.pop %v4670
        %v4688 = vmul.f32 1.0, %v4687
        %v4689 = vrcp.pop %v4671
        %v4690 = vmul.f32 1.0, %v4689
        %v4691 = vrcp.pop %v4672
        %v4692 = vmul.f32 1.0, %v4691
        %v4693 = vrcp.pop %v4673
        %v4694 = vmul.f32 1.0, %v4693
        %v4695 = vrcp.pop %v4674
        %v4696 = vmul.f32 1.0, %v4695
        %v4697 = vrcp.pop %v4675
        %v4698 = vmul.f32 1.0, %v4697
        %v4699 = vrcp.pop %v4676
        %v4700 = vmul.f32 1.0, %v4699
        %v4701 = vrcp.pop %v4677
        %v4702 = vmul.f32 1.0, %v4701
        %v4703 = vrcp.pop %v4678
        %v4704 = vmul.f32 1.0, %v4703
        %v4705 = vrcp.pop %v4679
        %v4706 = vmul.f32 1.0, %v4705
        %v4707 = vrcp.pop %v4680
        %v4708 = vmul.f32 1.0, %v4707
        %v4709 = vrcp.pop %v4681
        %v4710 = vmul.f32 1.0, %v4709
        %v4711 = vrcp.pop %v4682
        %v4712 = vmul.f32 1.0, %v4711
        %v4713 = vrcp.pop %v4683
        %v4714 = vmul.f32 1.0, %v4713
        %v4715 = vrcp.pop %v4684
        %v4716 = vmul.f32 1.0, %v4715
        %4717 = vst [vmem:[%s395] sm:$0xff] %v4686
        %4718 = vst [vmem:[%s395 + $0x8] sm:$0xff] %v4688
        %4719 = vst [vmem:[%s395 + $0x10] sm:$0xff] %v4690
        %4720 = vst [vmem:[%s395 + $0x18] sm:$0xff] %v4692
        %4721 = vst [vmem:[%s395 + $0x20] sm:$0xff] %v4694
        %4722 = vst [vmem:[%s395 + $0x28] sm:$0xff] %v4696
        %4723 = vst [vmem:[%s395 + $0x30] sm:$0xff] %v4698
        %4724 = vst [vmem:[%s395 + $0x38] sm:$0xff] %v4700
        %4725 = vst [vmem:[%s395 + $0x40] sm:$0xff] %v4702
        %4726 = vst [vmem:[%s395 + $0x48] sm:$0xff] %v4704
        %4727 = vst [vmem:[%s395 + $0x50] sm:$0xff] %v4706
        %4728 = vst [vmem:[%s395 + $0x58] sm:$0xff] %v4708
        %4729 = vst [vmem:[%s395 + $0x60] sm:$0xff] %v4710
        %4730 = vst [vmem:[%s395 + $0x68] sm:$0xff] %v4712
        %4731 = vst [vmem:[%s395 + $0x70] sm:$0xff] %v4714
        %4732 = vst [vmem:[%s395 + $0x78] sm:$0xff] %v4716
        %s4733 = sand.u32 %s195, 1
        %s4734 = scalar_lea.sflag [#allocation5], %s4733
        %s4735 = sand.u32 %s195, 1
        %s4736 = smul.addr %s4735, 128
        %s4737 = scalar_lea.vmem [#allocation14], %s4736
        // Predicated region
        $region73: #{tpu_custom_call.1} parent=47 // pred_check
          %p4738 = pneg %p205
        $region74: #{tpu_custom_call.1} parent=47 // pred_check_branch
          %4740 = sbr.rel (%p4738) target = $region76
        $region75: #{tpu_custom_call.1} parent=47 // pred_region
          %s4741 = smul.u32 16, %s30
          %s4743 = ssub.s32 2048, 2048
          %4744 = vsyncadd %s4734, %s4743
          %s4745 = smul.addr %s4741, 128
          %s4746 = scalar_lea.hbm %s7, %s4745
          %s4747 = sshll.u32 %s4737, 4
          %s4748 = int_to_ptr.vmem [resolvable:$true] %s4747
          %4753 = dma.vmem_to_hbm [thread:$0]  %s4748, 2048, %s4746, %s4734, 128, 128, 8
        $region76: #{tpu_custom_call.1} parent=47 // pred_fallthru
          _
      $region48: #{tpu_custom_call.1} parent=5 // pred_fallthru
        _
      %p4754 = scmp.le.s32.totalorder 2, %s25
      // Predicated region
      $region77: #{tpu_custom_call.1} parent=5 // pred_check
        %p4755 = pneg %p4754
      $region78: #{tpu_custom_call.1} parent=5 // pred_check_branch
        %4757 = sbr.rel (%p4755) target = $region80
      $region79: #{tpu_custom_call.1} parent=5 // pred_region
        %s4758 = ssub.s32 %s25, 2
        // Predicated region
        $region81: #{tpu_custom_call.1} parent=79 // pred_check
          %p4759 = pneg %p211
        $region82: #{tpu_custom_call.1} parent=79 // pred_check_branch
          %4761 = sbr.rel (%p4759) target = $region84
        $region83: #{tpu_custom_call.1} parent=79 // pred_region
          %s4762 = sand.u32 %s196, 1
          %s4763 = scalar_lea.sflag [#allocation5], %s4762
          %s4764 = sand.u32 %s196, 1
          %s4765 = smul.addr %s4764, 128
          %s4766 = scalar_lea.vmem [#allocation14], %s4765
          %4767 = dma.done %s4763, 2048
        $region84: #{tpu_custom_call.1} parent=79 // pred_fallthru
          _
      $region80: #{tpu_custom_call.1} parent=5 // pred_fallthru
        _
    $region6: #{tpu_custom_call.1} parent=1 // loop_footer
      %s29 = sadd.s32 1, %s25
    $region7: #{tpu_custom_call.1} parent=1 // loop_footer_branch
      %24 = sbr.rel target = $region3
    $region8: #{tpu_custom_call.1} parent=1 // loop_exit
      _
    %4768 = vsyncpa [#allocation4], 1
    %s4769 = scalar_lea.sflag [#allocation4], 1
    %4770 = vsyncpa %s4769, 1
    %4771 = vsyncpa [#allocation7], 1
    %s4772 = scalar_lea.sflag [#allocation7], 1
    %4773 = vsyncpa %s4772, 1
    %4774 = vsyncpa [#allocation10], 1
    %4775 = vsyncpa [#allocation13], 1
    %4776 = vsyncpa [#allocation5], 1
    %s4777 = scalar_lea.sflag [#allocation5], 1
    %4778 = vsyncpa %s4777, 1

</llo_original>
